<compile_context>
chip_gen: v7x
topology: tpu7x:2x2x1
jax: 0.10.0
libtpu: 0.0.40
codegen_flags: <defaults>
</compile_context>

<pallas_src>
import functools

import jax
import jax.numpy as jnp
import numpy as np
from jax.experimental import pallas as pl
from jax.experimental.pallas import tpu as pltpu


# ----------------------------- fused Pallas kernel -----------------------------

def _encoder_critic_kernel(*refs, n_conv, has_vector, ln_eps, mxu_dtype):
    """One grid step == one tile of TB samples, stacked along the row (sublane) axis
    with a fixed per-sample pitch P.  Everything below runs out of VMEM."""
    out_ref = refs[-1]
    it = iter(refs[:-1])
    xe_ref, xo_ref, act_ref = next(it), next(it), next(it)
    vec_ref = next(it) if has_vector else None
    g_refs, cb_refs = [], []
    for _ in range(n_conv):                              # conv layers
        g_refs.append(next(it))
        cb_refs.append(next(it))
    wfc_ref, bfc_ref, lng_ref, lnb_ref = next(it), next(it), next(it), next(it)
    wq1l_ref, wq1a_ref = next(it), next(it)
    wq1v_ref = next(it) if has_vector else None
    bq1_ref, wq2_ref, bq2_ref, wq3_ref, bq3_ref = (
        next(it), next(it), next(it), next(it), next(it))

    f32 = jnp.float32

    def mm(a, w):                                        # bf16 MXU operands, f32 accum
        return jnp.dot(a, w, preferred_element_type=f32)

    # ---- conv1 (3x3, stride 2) on pitched rows ------------------------------
    # Row taps kh=0,2 come from the even-row plane, kh=1 from the odd-row plane;
    # the kw taps and the stride-2 column step are folded into G1[kh].
    n = xe_ref.shape[0]                                  # TB * P pitched rows
    xe = xe_ref[...].astype(mxu_dtype)                   # one cast per tensor
    xo = xo_ref[...].astype(mxu_dtype)
    rows = n - 1
    g1 = g_refs[0]
    z = mm(xe[0:rows], g1[0]) + mm(xo[0:rows], g1[1]) + mm(xe[1:rows + 1], g1[2])
    x = jnp.maximum(z + cb_refs[0][...], 0.0).astype(mxu_dtype)

    # ---- conv2..conv4 (3x3, stride 1) on pitched rows ------------------------
    for layer in range(1, n_conv):
        g = g_refs[layer]
        rows = rows - 2
        z = mm(x[0:rows], g[0]) + mm(x[1:rows + 1], g[1]) + mm(x[2:rows + 2], g[2])
        x = jnp.maximum(z + cb_refs[layer][...], 0.0).astype(mxu_dtype)

    # ---- fc -> LayerNorm(eps=1e-5, affine) -> tanh, still on pitched rows ----
    # (row s*P holds sample s's result; other rows are never consumed downstream)
    hf = wfc_ref.shape[0]
    rq = rows - (hf - 1)
    zfc = mm(x[0:rq], wfc_ref[0])
    for h in range(1, hf):
        zfc = zfc + mm(x[h:h + rq], wfc_ref[h])
    zfc = zfc + bfc_ref[...]                             # (rq, latent) f32
    mu = jnp.mean(zfc, axis=-1, keepdims=True)
    var = jnp.mean((zfc - mu) ** 2, axis=-1, keepdims=True)
    latent = jnp.tanh((zfc - mu) * jax.lax.rsqrt(var + ln_eps)
                      * lng_ref[...] + lnb_ref[...])     # f32 VPU/EUP math (v5e-safe)

    # ---- twin Q, lane-packed: lanes [0:hid)=Q1, [hid:2*hid)=Q2, batched ------
    act = act_ref[...].astype(mxu_dtype)
    h1 = mm(latent.astype(mxu_dtype), wq1l_ref[...]) + mm(act[0:rq], wq1a_ref[...])
    if has_vector:
        vec = vec_ref[...].astype(mxu_dtype)
        h1 = h1 + mm(vec[0:rq], wq1v_ref[...])
    h1 = jnp.maximum(h1 + bq1_ref[...], 0.0).astype(mxu_dtype)
    h2 = jnp.maximum(mm(h1, wq2_ref[...]) + bq2_ref[...], 0.0).astype(mxu_dtype)
    q = mm(h2, wq3_ref[...]) + bq3_ref[...]              # (rq, 2)
    out_ref[...] = q.astype(out_ref.dtype)


# ----------------------------- parameter packing -------------------------------

def _row_conv_mats(w_oihw, wi, stride):
    """Per-kh "placement" matrices so a KxK conv becomes K row-matmuls.

    Activation layout: rows = H, lanes = (w, c) packed (lane index = w*Ci + ci).
        G[kh][w_in*Ci + ci, j*Co + co] = w[co, ci, kh, w_in - stride*j]  (0 if tap OOB)
    so  out_row[j of stride grid] = sum_kh x_row[stride*i + kh, :] @ G[kh].
    """
    co, ci, kh_n, kw_n = w_oihw.shape
    wo = (wi - kw_n) // stride + 1
    g = np.zeros((kh_n, wi * ci, wo * co), np.float32)
    for kh in range(kh_n):
        for j in range(wo):
            for kw in range(kw_n):
                w_in = stride * j + kw
                g[kh, w_in * ci:(w_in + 1) * ci, j * co:(j + 1) * co] = \
                    w_oihw[:, :, kh, kw].T
    return g, wo


def _pad_rows_to(a, mult):
    pad = (-a.shape[0]) % mult
    return np.pad(a, ((0, pad), (0, 0))) if pad else a


def pack_params(params, *, mxu_dtype=jnp.bfloat16):
    """Torch-layout parameters -> kernel-ready packed weights (built once, host side)."""
    conv_w = [np.asarray(w, np.float32) for w in params["conv_w"]]
    conv_b = [np.asarray(b, np.float32) for b in params["conv_b"]]
    strides = tuple(params["conv_strides"])
    # Hard architecture assumption (documented per review): 4x 3x3 convs, strides (2,1,1,1).
    assert len(conv_w) == 4 and strides == (2, 1, 1, 1) and conv_w[0].shape[-1] == 3, \
        "packing assumes the CARES encoder: 4x 3x3 convs with strides (2,1,1,1)"
    H, W = params["img_hw"]
    cin = conv_w[0].shape[1]
    nfil = conv_w[0].shape[0]

    hs, ws = [H], [W]
    g_list, cb_list = [], []
    for wt, bt, s in zip(conv_w, conv_b, strides):
        g, wo = _row_conv_mats(wt, ws[-1], s)
        hs.append((hs[-1] - wt.shape[2]) // s + 1)
        ws.append(wo)
        g_list.append(jnp.asarray(g, mxu_dtype))
        cb_list.append(jnp.asarray(np.tile(bt, wo)[None, :], jnp.float32))
    hos = tuple(hs[1:])
    hf, wf = hs[-1], ws[-1]

    # fc: fold the NCHW flatten order (c, h, w) -> our in-kernel (h, w, c) order.
    fcw = np.asarray(params["fc_w"], np.float32)         # (latent, F*hf*wf), torch layout
    lat = fcw.shape[0]
    assert fcw.shape[1] == nfil * hf * wf
    wfc = fcw.reshape(lat, nfil, hf, wf).transpose(2, 3, 1, 0).reshape(hf, wf * nfil, lat)

    # twin Q packed into 2*hidden lanes.
    q1, q2 = params["q1"], params["q2"]
    hid = q1["w1"].shape[0]
    a_dim = int(params["action_dim"])
    v_dim = int(params["vector_dim"])
    w1p = np.concatenate([np.asarray(q1["w1"], np.float32).T,
                          np.asarray(q2["w1"], np.float32).T], axis=1)   # (V+L+A, 2h)
    assert w1p.shape[0] == v_dim + lat + a_dim
    wq1_vec = _pad_rows_to(w1p[:v_dim], 8) if v_dim else None
    wq1_lat = w1p[v_dim:v_dim + lat]
    wq1_act = _pad_rows_to(w1p[v_dim + lat:], 8)         # pad tiny K up to a sublane tile
    w2p = np.zeros((2 * hid, 2 * hid), np.float32)
    w2p[:hid, :hid] = np.asarray(q1["w2"], np.float32).T
    w2p[hid:, hid:] = np.asarray(q2["w2"], np.float32).T
    w3p = np.zeros((2 * hid, 2), np.float32)
    w3p[:hid, 0] = np.asarray(q1["w3"], np.float32)[0]
    w3p[hid:, 1] = np.asarray(q2["w3"], np.float32)[0]

    f32 = jnp.float32
    return {
        "img_hw": (H, W), "in_channels": cin, "hos": hos,
        "action_dim": a_dim, "vector_dim": v_dim,
        "ln_eps": 1e-5, "mxu_dtype": mxu_dtype,
        "g": g_list, "cb": cb_list,
        "wfc": jnp.asarray(wfc, mxu_dtype),
        "bfc": jnp.asarray(np.asarray(params["fc_b"], np.float32)[None, :], f32),
        "lng": jnp.asarray(np.asarray(params["ln_g"], np.float32)[None, :], f32),
        "lnb": jnp.asarray(np.asarray(params["ln_b"], np.float32)[None, :], f32),
        "wq1_lat": jnp.asarray(wq1_lat, mxu_dtype),
        "wq1_act": jnp.asarray(wq1_act, mxu_dtype),
        "wq1_vec": jnp.asarray(wq1_vec, mxu_dtype) if v_dim else None,
        "bq1": jnp.asarray(np.concatenate([np.asarray(q1["b1"], np.float32),
                                           np.asarray(q2["b1"], np.float32)])[None, :], f32),
        "wq2": jnp.asarray(w2p, mxu_dtype),
        "bq2": jnp.asarray(np.concatenate([np.asarray(q1["b2"], np.float32),
                                           np.asarray(q2["b2"], np.float32)])[None, :], f32),
        "wq3": jnp.asarray(w3p, mxu_dtype),
        "bq3": jnp.asarray(np.array([[float(q1["b3"][0]), float(q2["b3"][0])]],
                                    np.float32), f32),
    }


# ------------------------------- forward wrapper --------------------------------

def _cost_estimate(packed, n_tiles, n_rows, rq, args, out_bytes):
    fl = 0
    rows = n_rows
    for li, g in enumerate(packed["g"]):
        rows = rows - 1 if li == 0 else rows - 2
        taps, kin, kout = g.shape
        fl += 2 * int(taps) * rows * int(kin) * int(kout)
    hf, kin, lat = packed["wfc"].shape
    fl += 2 * int(hf) * rq * int(kin) * int(lat)
    qws = [packed["wq1_lat"], packed["wq1_act"], packed["wq2"], packed["wq3"]]
    if packed["wq1_vec"] is not None:
        qws.append(packed["wq1_vec"])
    for w in qws:
        fl += 2 * rq * int(w.shape[0]) * int(w.shape[1])
    bytes_accessed = sum(int(a.size) * a.dtype.itemsize for a in args) + out_bytes
    return pl.CostEstimate(flops=n_tiles * fl, transcendentals=n_tiles * rq * int(lat),
                           bytes_accessed=int(bytes_accessed))


def encoder_critic_forward(packed, state, action, detach_encoder=False, tile_batch=32):
    """Forward-value equivalent of EncoderCritic.forward(state, action, detach_encoder).

    detach_encoder only affects gradients in PyTorch -> forward no-op here.
    """
    del detach_encoder
    img = state["image"].astype(jnp.float32)             # NCHW, like PyTorch
    B, C, H, W = img.shape
    assert (C, (H, W)) == (packed["in_channels"], packed["img_hw"]), \
        "packed parameters were built for a different image shape"
    assert action.shape[-1] == packed["action_dim"]

    n_conv = len(packed["g"])
    hf = int(packed["wfc"].shape[0])
    P = (H + 1) // 2                                      # per-sample row pitch (even plane)

    tb = max(1, min(int(tile_batch), B))                  # samples per grid step
    n_tiles = (B + tb - 1) // tb
    b_pad = n_tiles * tb
    n_rows = tb * P                                       # pitched rows per tile
    rq = n_rows - 1 - 2 * (n_conv - 1) - (hf - 1)         # head rows after the tap shrinks
    # Validity of the pitched layout (each sample's taps stay inside its own P rows,
    # and the last sample's head row is still produced after the per-layer shrinks).
    assert packed["hos"][0] + 1 <= P and (tb - 1) * P + 1 <= rq

    # Tiny boundary repack of the raw image (only activation data that touches HBM):
    # lanes = (w, c); even/odd row planes so the stride-2 conv1 only needs stride-1
    # row slices; samples stacked along rows with pitch P.
    x = jnp.transpose(img, (0, 2, 3, 1)).reshape(B, H, W * C)
    xe = x[:, 0::2, :]                                    # (B, P, W*C)
    xo = x[:, 1::2, :]
    if xo.shape[1] < P:                                   # odd H: pad odd plane to pitch P
        xo = jnp.pad(xo, ((0, 0), (0, P - xo.shape[1]), (0, 0)))

    def pad_batch(a):
        return a if b_pad == B else jnp.pad(a, ((0, b_pad - B),) + ((0, 0),) * (a.ndim - 1))

    xe = pad_batch(xe).reshape(n_tiles, n_rows, W * C)
    xo = pad_batch(xo).reshape(n_tiles, n_rows, W * C)

    def pitched_vec(v, k_pad):                            # (B, k) -> (n_tiles, TB*P, k_pad)
        v = v.astype(jnp.float32)
        if v.shape[-1] < k_pad:
            v = jnp.pad(v, ((0, 0), (0, k_pad - v.shape[-1])))
        v = pad_batch(v).reshape(n_tiles, tb, 1, k_pad)
        return jnp.broadcast_to(v, (n_tiles, tb, P, k_pad)).reshape(n_tiles, n_rows, k_pad)

    act = pitched_vec(action, packed["wq1_act"].shape[0])
    has_vector = packed["wq1_vec"] is not None
    if has_vector:
        assert state["vector"].shape[-1] == packed["vector_dim"]
        vec = pitched_vec(state["vector"], packed["wq1_vec"].shape[0])

    # argument order must match the kernel's unpacking order
    args = [xe, xo, act]
    if has_vector:
        args.append(vec)
    for g, cb in zip(packed["g"], packed["cb"]):
        args += [g, cb]
    args += [packed["wfc"], packed["bfc"], packed["lng"], packed["lnb"],
             packed["wq1_lat"], packed["wq1_act"]]
    if has_vector:
        args.append(packed["wq1_vec"])
    args += [packed["bq1"], packed["wq2"], packed["bq2"], packed["wq3"], packed["bq3"]]

    def tile_spec(a):        # one tile of TB samples per grid step; tile dim squeezed away
        nd = a.ndim
        return pl.BlockSpec((None,) + a.shape[1:],
                            lambda t, _n=nd: (t,) + (0,) * (_n - 1))

    def const_spec(a):       # whole array resident in VMEM, fetched once for all steps
        z = (0,) * a.ndim
        return pl.BlockSpec(a.shape, lambda t, _z=z: _z)

    n_sample = 4 if has_vector else 3
    in_specs = ([tile_spec(a) for a in args[:n_sample]]
                + [const_spec(a) for a in args[n_sample:]])

    kernel = functools.partial(
        _encoder_critic_kernel,
        n_conv=n_conv, has_vector=has_vector,
        ln_eps=packed["ln_eps"], mxu_dtype=packed["mxu_dtype"])

    out = pl.pallas_call(
        kernel,
        out_shape=jax.ShapeDtypeStruct((n_tiles, rq, 2), jnp.float32),
        grid=(n_tiles,),
        in_specs=in_specs,
        out_specs=pl.BlockSpec((None, rq, 2), lambda t: (t, 0, 0)),
        compiler_params=pltpu.CompilerParams(
            dimension_semantics=("parallel",),            # v7x: shard tiles over both TCs
            vmem_limit_bytes=32 * 1024 * 1024),
        cost_estimate=_cost_estimate(packed, n_tiles, n_rows, rq, args,
                                     out_bytes=n_tiles * rq * 2 * 4),
    )(*args)

    # Row s*P of each tile is the only valid head row for sample s; strided slice + drop
    # the batch padding in plain XLA (tiny: 2 lanes x rq rows per tile).
    q = out[:, 0:(tb - 1) * P + 1:P, :].reshape(b_pad, 2)[:B]
    return q[:, 0:1], q[:, 1:2]                           # (q1, q2), each (B, 1)


# --------------------------- params init & JAX reference -------------------------

def init_params(key, *, in_channels=3, num_filters=32, latent_dim=32, action_dim=4,
                hidden_dim=64, img_hw=24, kernel=3, vector_dim=0):
    # TODO(synk): hlp.weight_init uses (delta-)orthogonal init; deterministic
    # scaled-normal init is used for this synthetic, self-contained script.
    ks = iter(jax.random.split(key, 32))

    def nrm(shape, scale=0.1):
        return scale * jax.random.normal(next(ks), shape, dtype=jnp.float32)

    strides = (2, 1, 1, 1)
    conv_w, conv_b = [], []
    cin, h = in_channels, img_hw
    for s in strides:
        conv_w.append(nrm((num_filters, cin, kernel, kernel)))     # OIHW (torch)
        conv_b.append(nrm((num_filters,)))
        h = (h - kernel) // s + 1
        cin = num_filters
    n_flatten = num_filters * h * h
    in_dim = vector_dim + latent_dim + action_dim

    params = {
        "conv_w": conv_w, "conv_b": conv_b, "conv_strides": strides,
        "img_hw": (img_hw, img_hw),
        "fc_w": nrm((latent_dim, n_flatten)), "fc_b": nrm((latent_dim,)),
        "ln_g": 1.0 + nrm((latent_dim,)), "ln_b": nrm((latent_dim,)),
        "action_dim": action_dim, "vector_dim": vector_dim,
    }
    for name in ("q1", "q2"):
        params[name] = {
            "w1": nrm((hidden_dim, in_dim), 0.3), "b1": nrm((hidden_dim,)),
            "w2": nrm((hidden_dim, hidden_dim), 0.3), "b2": nrm((hidden_dim,)),
            "w3": nrm((1, hidden_dim), 0.3), "b3": nrm((1,)),
        }
    return params


def reference_forward(params, state, action):
    """Pure-JAX f32 mirror of the PyTorch module (for correctness checking)."""
    x = state["image"].astype(jnp.float32)
    for w, b, s in zip(params["conv_w"], params["conv_b"], params["conv_strides"]):
        x = jax.lax.conv_general_dilated(x, w, (s, s), "VALID",
                                         dimension_numbers=("NCHW", "OIHW", "NCHW"))
        x = jnp.maximum(x + b[None, :, None, None], 0.0)
    x = x.reshape(x.shape[0], -1)                        # torch .view(B, -1), NCHW order
    z = x @ params["fc_w"].T + params["fc_b"]
    mu = z.mean(-1, keepdims=True)
    var = ((z - mu) ** 2).mean(-1, keepdims=True)
    latent = jnp.tanh((z - mu) / jnp.sqrt(var + 1e-5) * params["ln_g"] + params["ln_b"])
    obs = latent
    if params["vector_dim"]:
        obs = jnp.concatenate([state["vector"], obs], axis=1)
    oa = jnp.concatenate([obs, action], axis=1)
    qs = []
    for q in (params["q1"], params["q2"]):
        h = jnp.maximum(oa @ q["w1"].T + q["b1"], 0.0)
        h = jnp.maximum(h @ q["w2"].T + q["b2"], 0.0)
        qs.append(h @ q["w3"].T + q["b3"])
    return qs[0], qs[1]


# ------------------------------------- main --------------------------------------

if __name__ == "__main__":
    key = jax.random.PRNGKey(0)
    pk, ik, ak = jax.random.split(key, 3)

    B, C, HW, ACT = 12, 3, 24, 4        # B=12 with TB=8 -> 2 grid tiles + batch padding
    TB = 8
    params = init_params(pk, in_channels=C, img_hw=HW, action_dim=ACT,
                         num_filters=32, latent_dim=32, hidden_dim=64)
    packed = pack_params(params, mxu_dtype=jnp.bfloat16)   # bf16 MXU operands, f32 math

    image = jax.random.uniform(ik, (B, C, HW, HW), dtype=jnp.float32)      # NCHW
    action = jax.random.uniform(ak, (B, ACT), dtype=jnp.float32,
                                minval=-1.0, maxval=1.0)

    fwd = jax.jit(lambda im, ac: encoder_critic_forward(
        packed, {"image": im}, ac, tile_batch=TB))
    q1, q2 = fwd(image, action)
    jax.block_until_ready((q1, q2))

    assert q1.shape == (B, 1) and q2.shape == (B, 1)
    assert bool(jnp.all(jnp.isfinite(q1))) and bool(jnp.all(jnp.isfinite(q2)))

    # correctness vs. pure-JAX f32 reference (loose tol: kernel uses bf16 MXU operands)
    r1, r2 = reference_forward(params, {"image": image}, action)
    np.testing.assert_allclose(np.asarray(q1), np.asarray(r1), rtol=0.1, atol=0.05)
    np.testing.assert_allclose(np.asarray(q2), np.asarray(r2), rtol=0.1, atol=0.05)

    print("KERNEL_OK")
</pallas_src>

<mosaic_0001>
module attributes {stable_mosaic.version = 11 : i64} {
  func.func @_encoder_critic_kernel(%arg0: i32, %arg1: memref<1x96x72xf32, #tpu.memory_space<vmem>>, %arg2: memref<1x96x72xf32, #tpu.memory_space<vmem>>, %arg3: memref<1x96x8xf32, #tpu.memory_space<vmem>>, %arg4: memref<3x72x352xbf16, #tpu.memory_space<vmem>>, %arg5: memref<1x352xf32, #tpu.memory_space<vmem>>, %arg6: memref<3x352x288xbf16, #tpu.memory_space<vmem>>, %arg7: memref<1x288xf32, #tpu.memory_space<vmem>>, %arg8: memref<3x288x224xbf16, #tpu.memory_space<vmem>>, %arg9: memref<1x224xf32, #tpu.memory_space<vmem>>, %arg10: memref<3x224x160xbf16, #tpu.memory_space<vmem>>, %arg11: memref<1x160xf32, #tpu.memory_space<vmem>>, %arg12: memref<5x160x32xbf16, #tpu.memory_space<vmem>>, %arg13: memref<1x32xf32, #tpu.memory_space<vmem>>, %arg14: memref<1x32xf32, #tpu.memory_space<vmem>>, %arg15: memref<1x32xf32, #tpu.memory_space<vmem>>, %arg16: memref<32x128xbf16, #tpu.memory_space<vmem>>, %arg17: memref<8x128xbf16, #tpu.memory_space<vmem>>, %arg18: memref<1x128xf32, #tpu.memory_space<vmem>>, %arg19: memref<128x128xbf16, #tpu.memory_space<vmem>>, %arg20: memref<1x128xf32, #tpu.memory_space<vmem>>, %arg21: memref<128x2xbf16, #tpu.memory_space<vmem>>, %arg22: memref<1x2xf32, #tpu.memory_space<vmem>>, %arg23: memref<1x85x2xf32, #tpu.memory_space<vmem>>) attributes {dimension_semantics = [#tpu.dimension_semantics<parallel>], iteration_bounds = array<i64: 2>, scalar_prefetch = 0 : i64, scratch_operands = 0 : i64, tpu.core_type = #tpu.core_type<tc>, window_params = [{transform_indices = @transform_0, window_bounds = array<i64: 1, 96, 72>}, {transform_indices = @transform_1, window_bounds = array<i64: 1, 96, 72>}, {transform_indices = @transform_2, window_bounds = array<i64: 1, 96, 8>}, {pipeline_mode = #tpu.pipeline_mode<synchronous>, transform_indices = @transform_3, window_bounds = array<i64: 3, 72, 352>}, {pipeline_mode = #tpu.pipeline_mode<synchronous>, transform_indices = @transform_4, window_bounds = array<i64: 1, 352>}, {pipeline_mode = #tpu.pipeline_mode<synchronous>, transform_indices = @transform_5, window_bounds = array<i64: 3, 352, 288>}, {pipeline_mode = #tpu.pipeline_mode<synchronous>, transform_indices = @transform_6, window_bounds = array<i64: 1, 288>}, {pipeline_mode = #tpu.pipeline_mode<synchronous>, transform_indices = @transform_7, window_bounds = array<i64: 3, 288, 224>}, {pipeline_mode = #tpu.pipeline_mode<synchronous>, transform_indices = @transform_8, window_bounds = array<i64: 1, 224>}, {pipeline_mode = #tpu.pipeline_mode<synchronous>, transform_indices = @transform_9, window_bounds = array<i64: 3, 224, 160>}, {pipeline_mode = #tpu.pipeline_mode<synchronous>, transform_indices = @transform_10, window_bounds = array<i64: 1, 160>}, {pipeline_mode = #tpu.pipeline_mode<synchronous>, transform_indices = @transform_11, window_bounds = array<i64: 5, 160, 32>}, {pipeline_mode = #tpu.pipeline_mode<synchronous>, transform_indices = @transform_12, window_bounds = array<i64: 1, 32>}, {pipeline_mode = #tpu.pipeline_mode<synchronous>, transform_indices = @transform_13, window_bounds = array<i64: 1, 32>}, {pipeline_mode = #tpu.pipeline_mode<synchronous>, transform_indices = @transform_14, window_bounds = array<i64: 1, 32>}, {pipeline_mode = #tpu.pipeline_mode<synchronous>, transform_indices = @transform_15, window_bounds = array<i64: 32, 128>}, {pipeline_mode = #tpu.pipeline_mode<synchronous>, transform_indices = @transform_16, window_bounds = array<i64: 8, 128>}, {pipeline_mode = #tpu.pipeline_mode<synchronous>, transform_indices = @transform_17, window_bounds = array<i64: 1, 128>}, {pipeline_mode = #tpu.pipeline_mode<synchronous>, transform_indices = @transform_18, window_bounds = array<i64: 128, 128>}, {pipeline_mode = #tpu.pipeline_mode<synchronous>, transform_indices = @transform_19, window_bounds = array<i64: 1, 128>}, {pipeline_mode = #tpu.pipeline_mode<synchronous>, transform_indices = @transform_20, window_bounds = array<i64: 128, 2>}, {pipeline_mode = #tpu.pipeline_mode<synchronous>, transform_indices = @transform_21, window_bounds = array<i64: 1, 2>}, {transform_indices = @transform_22, window_bounds = array<i64: 1, 85, 2>}]} {
    %c0 = arith.constant 0 : index
    %c0_0 = arith.constant 0 : index
    %c0_1 = arith.constant 0 : index
    %0 = vector.load %arg1[%c0, %c0_0, %c0_1] : memref<1x96x72xf32, #tpu.memory_space<vmem>>, vector<1x96x72xf32>
    %1 = vector.shape_cast %0 : vector<1x96x72xf32> to vector<96x72xf32>
    %2 = arith.truncf %1 : vector<96x72xf32> to vector<96x72xbf16>
    %c0_2 = arith.constant 0 : index
    %c0_3 = arith.constant 0 : index
    %c0_4 = arith.constant 0 : index
    %3 = vector.load %arg2[%c0_2, %c0_3, %c0_4] : memref<1x96x72xf32, #tpu.memory_space<vmem>>, vector<1x96x72xf32>
    %4 = vector.shape_cast %3 : vector<1x96x72xf32> to vector<96x72xf32>
    %5 = arith.truncf %4 : vector<96x72xf32> to vector<96x72xbf16>
    %6 = vector.extract_strided_slice %2 {offsets = [0, 0], sizes = [95, 72], strides = [1, 1]} : vector<96x72xbf16> to vector<95x72xbf16>
    %c0_5 = arith.constant 0 : index
    %c0_6 = arith.constant 0 : index
    %c0_7 = arith.constant 0 : index
    %7 = vector.load %arg4[%c0_5, %c0_6, %c0_7] : memref<3x72x352xbf16, #tpu.memory_space<vmem>>, vector<1x72x352xbf16>
    %8 = vector.shape_cast %7 : vector<1x72x352xbf16> to vector<72x352xbf16>
    %cst = arith.constant dense<0.000000e+00> : vector<95x352xf32>
    %9 = tpu.matmul %6, %8, %cst {dimension_numbers = #tpu.dot_dimension_numbers<[1], [0], [0], [1], [0, 0, 1, 1], [], []>} : vector<95x72xbf16>, vector<72x352xbf16>, vector<95x352xf32> -> vector<95x352xf32>
    %10 = vector.extract_strided_slice %5 {offsets = [0, 0], sizes = [95, 72], strides = [1, 1]} : vector<96x72xbf16> to vector<95x72xbf16>
    %c1 = arith.constant 1 : index
    %c0_8 = arith.constant 0 : index
    %c0_9 = arith.constant 0 : index
    %11 = vector.load %arg4[%c1, %c0_8, %c0_9] : memref<3x72x352xbf16, #tpu.memory_space<vmem>>, vector<1x72x352xbf16>
    %12 = vector.shape_cast %11 : vector<1x72x352xbf16> to vector<72x352xbf16>
    %cst_10 = arith.constant dense<0.000000e+00> : vector<95x352xf32>
    %13 = tpu.matmul %10, %12, %cst_10 {dimension_numbers = #tpu.dot_dimension_numbers<[1], [0], [0], [1], [0, 0, 1, 1], [], []>} : vector<95x72xbf16>, vector<72x352xbf16>, vector<95x352xf32> -> vector<95x352xf32>
    %14 = arith.addf %9, %13 : vector<95x352xf32>
    %15 = vector.extract_strided_slice %2 {offsets = [1, 0], sizes = [95, 72], strides = [1, 1]} : vector<96x72xbf16> to vector<95x72xbf16>
    %c2 = arith.constant 2 : index
    %c0_11 = arith.constant 0 : index
    %c0_12 = arith.constant 0 : index
    %16 = vector.load %arg4[%c2, %c0_11, %c0_12] : memref<3x72x352xbf16, #tpu.memory_space<vmem>>, vector<1x72x352xbf16>
    %17 = vector.shape_cast %16 : vector<1x72x352xbf16> to vector<72x352xbf16>
    %cst_13 = arith.constant dense<0.000000e+00> : vector<95x352xf32>
    %18 = tpu.matmul %15, %17, %cst_13 {dimension_numbers = #tpu.dot_dimension_numbers<[1], [0], [0], [1], [0, 0, 1, 1], [], []>} : vector<95x72xbf16>, vector<72x352xbf16>, vector<95x352xf32> -> vector<95x352xf32>
    %19 = arith.addf %14, %18 : vector<95x352xf32>
    %c0_14 = arith.constant 0 : index
    %c0_15 = arith.constant 0 : index
    %20 = vector.load %arg5[%c0_14, %c0_15] : memref<1x352xf32, #tpu.memory_space<vmem>>, vector<1x352xf32>
    %21 = vector.broadcast %20 : vector<1x352xf32> to vector<95x352xf32>
    %22 = arith.addf %19, %21 : vector<95x352xf32>
    %cst_16 = arith.constant 0.000000e+00 : f32
    %23 = vector.broadcast %cst_16 : f32 to vector<95x352xf32>
    %24 = arith.maximumf %22, %23 : vector<95x352xf32>
    %25 = arith.truncf %24 : vector<95x352xf32> to vector<95x352xbf16>
    %26 = vector.extract_strided_slice %25 {offsets = [0, 0], sizes = [93, 352], strides = [1, 1]} : vector<95x352xbf16> to vector<93x352xbf16>
    %c0_17 = arith.constant 0 : index
    %c0_18 = arith.constant 0 : index
    %c0_19 = arith.constant 0 : index
    %27 = vector.load %arg6[%c0_17, %c0_18, %c0_19] : memref<3x352x288xbf16, #tpu.memory_space<vmem>>, vector<1x352x288xbf16>
    %28 = vector.shape_cast %27 : vector<1x352x288xbf16> to vector<352x288xbf16>
    %cst_20 = arith.constant dense<0.000000e+00> : vector<93x288xf32>
    %29 = tpu.matmul %26, %28, %cst_20 {dimension_numbers = #tpu.dot_dimension_numbers<[1], [0], [0], [1], [0, 0, 1, 1], [], []>} : vector<93x352xbf16>, vector<352x288xbf16>, vector<93x288xf32> -> vector<93x288xf32>
    %30 = vector.extract_strided_slice %25 {offsets = [1, 0], sizes = [93, 352], strides = [1, 1]} : vector<95x352xbf16> to vector<93x352xbf16>
    %c1_21 = arith.constant 1 : index
    %c0_22 = arith.constant 0 : index
    %c0_23 = arith.constant 0 : index
    %31 = vector.load %arg6[%c1_21, %c0_22, %c0_23] : memref<3x352x288xbf16, #tpu.memory_space<vmem>>, vector<1x352x288xbf16>
    %32 = vector.shape_cast %31 : vector<1x352x288xbf16> to vector<352x288xbf16>
    %cst_24 = arith.constant dense<0.000000e+00> : vector<93x288xf32>
    %33 = tpu.matmul %30, %32, %cst_24 {dimension_numbers = #tpu.dot_dimension_numbers<[1], [0], [0], [1], [0, 0, 1, 1], [], []>} : vector<93x352xbf16>, vector<352x288xbf16>, vector<93x288xf32> -> vector<93x288xf32>
    %34 = arith.addf %29, %33 : vector<93x288xf32>
    %35 = vector.extract_strided_slice %25 {offsets = [2, 0], sizes = [93, 352], strides = [1, 1]} : vector<95x352xbf16> to vector<93x352xbf16>
    %c2_25 = arith.constant 2 : index
    %c0_26 = arith.constant 0 : index
    %c0_27 = arith.constant 0 : index
    %36 = vector.load %arg6[%c2_25, %c0_26, %c0_27] : memref<3x352x288xbf16, #tpu.memory_space<vmem>>, vector<1x352x288xbf16>
    %37 = vector.shape_cast %36 : vector<1x352x288xbf16> to vector<352x288xbf16>
    %cst_28 = arith.constant dense<0.000000e+00> : vector<93x288xf32>
    %38 = tpu.matmul %35, %37, %cst_28 {dimension_numbers = #tpu.dot_dimension_numbers<[1], [0], [0], [1], [0, 0, 1, 1], [], []>} : vector<93x352xbf16>, vector<352x288xbf16>, vector<93x288xf32> -> vector<93x288xf32>
    %39 = arith.addf %34, %38 : vector<93x288xf32>
    %c0_29 = arith.constant 0 : index
    %c0_30 = arith.constant 0 : index
    %40 = vector.load %arg7[%c0_29, %c0_30] : memref<1x288xf32, #tpu.memory_space<vmem>>, vector<1x288xf32>
    %41 = vector.broadcast %40 : vector<1x288xf32> to vector<93x288xf32>
    %42 = arith.addf %39, %41 : vector<93x288xf32>
    %cst_31 = arith.constant 0.000000e+00 : f32
    %43 = vector.broadcast %cst_31 : f32 to vector<93x288xf32>
    %44 = arith.maximumf %42, %43 : vector<93x288xf32>
    %45 = arith.truncf %44 : vector<93x288xf32> to vector<93x288xbf16>
    %46 = vector.extract_strided_slice %45 {offsets = [0, 0], sizes = [91, 288], strides = [1, 1]} : vector<93x288xbf16> to vector<91x288xbf16>
    %c0_32 = arith.constant 0 : index
    %c0_33 = arith.constant 0 : index
    %c0_34 = arith.constant 0 : index
    %47 = vector.load %arg8[%c0_32, %c0_33, %c0_34] : memref<3x288x224xbf16, #tpu.memory_space<vmem>>, vector<1x288x224xbf16>
    %48 = vector.shape_cast %47 : vector<1x288x224xbf16> to vector<288x224xbf16>
    %cst_35 = arith.constant dense<0.000000e+00> : vector<91x224xf32>
    %49 = tpu.matmul %46, %48, %cst_35 {dimension_numbers = #tpu.dot_dimension_numbers<[1], [0], [0], [1], [0, 0, 1, 1], [], []>} : vector<91x288xbf16>, vector<288x224xbf16>, vector<91x224xf32> -> vector<91x224xf32>
    %50 = vector.extract_strided_slice %45 {offsets = [1, 0], sizes = [91, 288], strides = [1, 1]} : vector<93x288xbf16> to vector<91x288xbf16>
    %c1_36 = arith.constant 1 : index
    %c0_37 = arith.constant 0 : index
    %c0_38 = arith.constant 0 : index
    %51 = vector.load %arg8[%c1_36, %c0_37, %c0_38] : memref<3x288x224xbf16, #tpu.memory_space<vmem>>, vector<1x288x224xbf16>
    %52 = vector.shape_cast %51 : vector<1x288x224xbf16> to vector<288x224xbf16>
    %cst_39 = arith.constant dense<0.000000e+00> : vector<91x224xf32>
    %53 = tpu.matmul %50, %52, %cst_39 {dimension_numbers = #tpu.dot_dimension_numbers<[1], [0], [0], [1], [0, 0, 1, 1], [], []>} : vector<91x288xbf16>, vector<288x224xbf16>, vector<91x224xf32> -> vector<91x224xf32>
    %54 = arith.addf %49, %53 : vector<91x224xf32>
    %55 = vector.extract_strided_slice %45 {offsets = [2, 0], sizes = [91, 288], strides = [1, 1]} : vector<93x288xbf16> to vector<91x288xbf16>
    %c2_40 = arith.constant 2 : index
    %c0_41 = arith.constant 0 : index
    %c0_42 = arith.constant 0 : index
    %56 = vector.load %arg8[%c2_40, %c0_41, %c0_42] : memref<3x288x224xbf16, #tpu.memory_space<vmem>>, vector<1x288x224xbf16>
    %57 = vector.shape_cast %56 : vector<1x288x224xbf16> to vector<288x224xbf16>
    %cst_43 = arith.constant dense<0.000000e+00> : vector<91x224xf32>
    %58 = tpu.matmul %55, %57, %cst_43 {dimension_numbers = #tpu.dot_dimension_numbers<[1], [0], [0], [1], [0, 0, 1, 1], [], []>} : vector<91x288xbf16>, vector<288x224xbf16>, vector<91x224xf32> -> vector<91x224xf32>
    %59 = arith.addf %54, %58 : vector<91x224xf32>
    %c0_44 = arith.constant 0 : index
    %c0_45 = arith.constant 0 : index
    %60 = vector.load %arg9[%c0_44, %c0_45] : memref<1x224xf32, #tpu.memory_space<vmem>>, vector<1x224xf32>
    %61 = vector.broadcast %60 : vector<1x224xf32> to vector<91x224xf32>
    %62 = arith.addf %59, %61 : vector<91x224xf32>
    %cst_46 = arith.constant 0.000000e+00 : f32
    %63 = vector.broadcast %cst_46 : f32 to vector<91x224xf32>
    %64 = arith.maximumf %62, %63 : vector<91x224xf32>
    %65 = arith.truncf %64 : vector<91x224xf32> to vector<91x224xbf16>
    %66 = vector.extract_strided_slice %65 {offsets = [0, 0], sizes = [89, 224], strides = [1, 1]} : vector<91x224xbf16> to vector<89x224xbf16>
    %c0_47 = arith.constant 0 : index
    %c0_48 = arith.constant 0 : index
    %c0_49 = arith.constant 0 : index
    %67 = vector.load %arg10[%c0_47, %c0_48, %c0_49] : memref<3x224x160xbf16, #tpu.memory_space<vmem>>, vector<1x224x160xbf16>
    %68 = vector.shape_cast %67 : vector<1x224x160xbf16> to vector<224x160xbf16>
    %cst_50 = arith.constant dense<0.000000e+00> : vector<89x160xf32>
    %69 = tpu.matmul %66, %68, %cst_50 {dimension_numbers = #tpu.dot_dimension_numbers<[1], [0], [0], [1], [0, 0, 1, 1], [], []>} : vector<89x224xbf16>, vector<224x160xbf16>, vector<89x160xf32> -> vector<89x160xf32>
    %70 = vector.extract_strided_slice %65 {offsets = [1, 0], sizes = [89, 224], strides = [1, 1]} : vector<91x224xbf16> to vector<89x224xbf16>
    %c1_51 = arith.constant 1 : index
    %c0_52 = arith.constant 0 : index
    %c0_53 = arith.constant 0 : index
    %71 = vector.load %arg10[%c1_51, %c0_52, %c0_53] : memref<3x224x160xbf16, #tpu.memory_space<vmem>>, vector<1x224x160xbf16>
    %72 = vector.shape_cast %71 : vector<1x224x160xbf16> to vector<224x160xbf16>
    %cst_54 = arith.constant dense<0.000000e+00> : vector<89x160xf32>
    %73 = tpu.matmul %70, %72, %cst_54 {dimension_numbers = #tpu.dot_dimension_numbers<[1], [0], [0], [1], [0, 0, 1, 1], [], []>} : vector<89x224xbf16>, vector<224x160xbf16>, vector<89x160xf32> -> vector<89x160xf32>
    %74 = arith.addf %69, %73 : vector<89x160xf32>
    %75 = vector.extract_strided_slice %65 {offsets = [2, 0], sizes = [89, 224], strides = [1, 1]} : vector<91x224xbf16> to vector<89x224xbf16>
    %c2_55 = arith.constant 2 : index
    %c0_56 = arith.constant 0 : index
    %c0_57 = arith.constant 0 : index
    %76 = vector.load %arg10[%c2_55, %c0_56, %c0_57] : memref<3x224x160xbf16, #tpu.memory_space<vmem>>, vector<1x224x160xbf16>
    %77 = vector.shape_cast %76 : vector<1x224x160xbf16> to vector<224x160xbf16>
    %cst_58 = arith.constant dense<0.000000e+00> : vector<89x160xf32>
    %78 = tpu.matmul %75, %77, %cst_58 {dimension_numbers = #tpu.dot_dimension_numbers<[1], [0], [0], [1], [0, 0, 1, 1], [], []>} : vector<89x224xbf16>, vector<224x160xbf16>, vector<89x160xf32> -> vector<89x160xf32>
    %79 = arith.addf %74, %78 : vector<89x160xf32>
    %c0_59 = arith.constant 0 : index
    %c0_60 = arith.constant 0 : index
    %80 = vector.load %arg11[%c0_59, %c0_60] : memref<1x160xf32, #tpu.memory_space<vmem>>, vector<1x160xf32>
    %81 = vector.broadcast %80 : vector<1x160xf32> to vector<89x160xf32>
    %82 = arith.addf %79, %81 : vector<89x160xf32>
    %cst_61 = arith.constant 0.000000e+00 : f32
    %83 = vector.broadcast %cst_61 : f32 to vector<89x160xf32>
    %84 = arith.maximumf %82, %83 : vector<89x160xf32>
    %85 = arith.truncf %84 : vector<89x160xf32> to vector<89x160xbf16>
    %86 = vector.extract_strided_slice %85 {offsets = [0, 0], sizes = [85, 160], strides = [1, 1]} : vector<89x160xbf16> to vector<85x160xbf16>
    %c0_62 = arith.constant 0 : index
    %c0_63 = arith.constant 0 : index
    %c0_64 = arith.constant 0 : index
    %87 = vector.load %arg12[%c0_62, %c0_63, %c0_64] : memref<5x160x32xbf16, #tpu.memory_space<vmem>>, vector<1x160x32xbf16>
    %88 = vector.shape_cast %87 : vector<1x160x32xbf16> to vector<160x32xbf16>
    %cst_65 = arith.constant dense<0.000000e+00> : vector<85x32xf32>
    %89 = tpu.matmul %86, %88, %cst_65 {dimension_numbers = #tpu.dot_dimension_numbers<[1], [0], [0], [1], [0, 0, 1, 1], [], []>} : vector<85x160xbf16>, vector<160x32xbf16>, vector<85x32xf32> -> vector<85x32xf32>
    %90 = vector.extract_strided_slice %85 {offsets = [1, 0], sizes = [85, 160], strides = [1, 1]} : vector<89x160xbf16> to vector<85x160xbf16>
    %c1_66 = arith.constant 1 : index
    %c0_67 = arith.constant 0 : index
    %c0_68 = arith.constant 0 : index
    %91 = vector.load %arg12[%c1_66, %c0_67, %c0_68] : memref<5x160x32xbf16, #tpu.memory_space<vmem>>, vector<1x160x32xbf16>
    %92 = vector.shape_cast %91 : vector<1x160x32xbf16> to vector<160x32xbf16>
    %cst_69 = arith.constant dense<0.000000e+00> : vector<85x32xf32>
    %93 = tpu.matmul %90, %92, %cst_69 {dimension_numbers = #tpu.dot_dimension_numbers<[1], [0], [0], [1], [0, 0, 1, 1], [], []>} : vector<85x160xbf16>, vector<160x32xbf16>, vector<85x32xf32> -> vector<85x32xf32>
    %94 = arith.addf %89, %93 : vector<85x32xf32>
    %95 = vector.extract_strided_slice %85 {offsets = [2, 0], sizes = [85, 160], strides = [1, 1]} : vector<89x160xbf16> to vector<85x160xbf16>
    %c2_70 = arith.constant 2 : index
    %c0_71 = arith.constant 0 : index
    %c0_72 = arith.constant 0 : index
    %96 = vector.load %arg12[%c2_70, %c0_71, %c0_72] : memref<5x160x32xbf16, #tpu.memory_space<vmem>>, vector<1x160x32xbf16>
    %97 = vector.shape_cast %96 : vector<1x160x32xbf16> to vector<160x32xbf16>
    %cst_73 = arith.constant dense<0.000000e+00> : vector<85x32xf32>
    %98 = tpu.matmul %95, %97, %cst_73 {dimension_numbers = #tpu.dot_dimension_numbers<[1], [0], [0], [1], [0, 0, 1, 1], [], []>} : vector<85x160xbf16>, vector<160x32xbf16>, vector<85x32xf32> -> vector<85x32xf32>
    %99 = arith.addf %94, %98 : vector<85x32xf32>
    %100 = vector.extract_strided_slice %85 {offsets = [3, 0], sizes = [85, 160], strides = [1, 1]} : vector<89x160xbf16> to vector<85x160xbf16>
    %c3 = arith.constant 3 : index
    %c0_74 = arith.constant 0 : index
    %c0_75 = arith.constant 0 : index
    %101 = vector.load %arg12[%c3, %c0_74, %c0_75] : memref<5x160x32xbf16, #tpu.memory_space<vmem>>, vector<1x160x32xbf16>
    %102 = vector.shape_cast %101 : vector<1x160x32xbf16> to vector<160x32xbf16>
    %cst_76 = arith.constant dense<0.000000e+00> : vector<85x32xf32>
    %103 = tpu.matmul %100, %102, %cst_76 {dimension_numbers = #tpu.dot_dimension_numbers<[1], [0], [0], [1], [0, 0, 1, 1], [], []>} : vector<85x160xbf16>, vector<160x32xbf16>, vector<85x32xf32> -> vector<85x32xf32>
    %104 = arith.addf %99, %103 : vector<85x32xf32>
    %105 = vector.extract_strided_slice %85 {offsets = [4, 0], sizes = [85, 160], strides = [1, 1]} : vector<89x160xbf16> to vector<85x160xbf16>
    %c4 = arith.constant 4 : index
    %c0_77 = arith.constant 0 : index
    %c0_78 = arith.constant 0 : index
    %106 = vector.load %arg12[%c4, %c0_77, %c0_78] : memref<5x160x32xbf16, #tpu.memory_space<vmem>>, vector<1x160x32xbf16>
    %107 = vector.shape_cast %106 : vector<1x160x32xbf16> to vector<160x32xbf16>
    %cst_79 = arith.constant dense<0.000000e+00> : vector<85x32xf32>
    %108 = tpu.matmul %105, %107, %cst_79 {dimension_numbers = #tpu.dot_dimension_numbers<[1], [0], [0], [1], [0, 0, 1, 1], [], []>} : vector<85x160xbf16>, vector<160x32xbf16>, vector<85x32xf32> -> vector<85x32xf32>
    %109 = arith.addf %104, %108 : vector<85x32xf32>
    %c0_80 = arith.constant 0 : index
    %c0_81 = arith.constant 0 : index
    %110 = vector.load %arg13[%c0_80, %c0_81] : memref<1x32xf32, #tpu.memory_space<vmem>>, vector<1x32xf32>
    %111 = vector.broadcast %110 : vector<1x32xf32> to vector<85x32xf32>
    %112 = arith.addf %109, %111 : vector<85x32xf32>
    %cst_82 = arith.constant dense<0.000000e+00> : vector<85xf32>
    %113 = vector.multi_reduction <add>, %112, %cst_82 [1] : vector<85x32xf32> to vector<85xf32>
    %114 = vector.shape_cast %113 : vector<85xf32> to vector<85x1xf32>
    %cst_83 = arith.constant 3.200000e+01 : f32
    %115 = vector.broadcast %cst_83 : f32 to vector<85x1xf32>
    %116 = arith.divf %114, %115 : vector<85x1xf32>
    %117 = vector.broadcast %116 : vector<85x1xf32> to vector<85x32xf32>
    %118 = arith.subf %112, %117 : vector<85x32xf32>
    %119 = arith.mulf %118, %118 : vector<85x32xf32>
    %cst_84 = arith.constant dense<0.000000e+00> : vector<85xf32>
    %120 = vector.multi_reduction <add>, %119, %cst_84 [1] : vector<85x32xf32> to vector<85xf32>
    %121 = vector.shape_cast %120 : vector<85xf32> to vector<85x1xf32>
    %cst_85 = arith.constant 3.200000e+01 : f32
    %122 = vector.broadcast %cst_85 : f32 to vector<85x1xf32>
    %123 = arith.divf %121, %122 : vector<85x1xf32>
    %124 = vector.broadcast %116 : vector<85x1xf32> to vector<85x32xf32>
    %125 = arith.subf %112, %124 : vector<85x32xf32>
    %cst_86 = arith.constant 9.99999974E-6 : f32
    %126 = vector.broadcast %cst_86 : f32 to vector<85x1xf32>
    %127 = arith.addf %123, %126 : vector<85x1xf32>
    %128 = math.rsqrt %127 : vector<85x1xf32>
    %129 = vector.broadcast %128 : vector<85x1xf32> to vector<85x32xf32>
    %130 = arith.mulf %125, %129 : vector<85x32xf32>
    %c0_87 = arith.constant 0 : index
    %c0_88 = arith.constant 0 : index
    %131 = vector.load %arg14[%c0_87, %c0_88] : memref<1x32xf32, #tpu.memory_space<vmem>>, vector<1x32xf32>
    %132 = vector.broadcast %131 : vector<1x32xf32> to vector<85x32xf32>
    %133 = arith.mulf %130, %132 : vector<85x32xf32>
    %c0_89 = arith.constant 0 : index
    %c0_90 = arith.constant 0 : index
    %134 = vector.load %arg15[%c0_89, %c0_90] : memref<1x32xf32, #tpu.memory_space<vmem>>, vector<1x32xf32>
    %135 = vector.broadcast %134 : vector<1x32xf32> to vector<85x32xf32>
    %136 = arith.addf %133, %135 : vector<85x32xf32>
    %137 = math.tanh %136 : vector<85x32xf32>
    %c0_91 = arith.constant 0 : index
    %c0_92 = arith.constant 0 : index
    %c0_93 = arith.constant 0 : index
    %138 = vector.load %arg3[%c0_91, %c0_92, %c0_93] : memref<1x96x8xf32, #tpu.memory_space<vmem>>, vector<1x96x8xf32>
    %139 = vector.shape_cast %138 : vector<1x96x8xf32> to vector<96x8xf32>
    %140 = arith.truncf %139 : vector<96x8xf32> to vector<96x8xbf16>
    %141 = arith.truncf %137 : vector<85x32xf32> to vector<85x32xbf16>
    %c0_94 = arith.constant 0 : index
    %c0_95 = arith.constant 0 : index
    %142 = vector.load %arg16[%c0_94, %c0_95] : memref<32x128xbf16, #tpu.memory_space<vmem>>, vector<32x128xbf16>
    %cst_96 = arith.constant dense<0.000000e+00> : vector<85x128xf32>
    %143 = tpu.matmul %141, %142, %cst_96 {dimension_numbers = #tpu.dot_dimension_numbers<[1], [0], [0], [1], [0, 0, 1, 1], [], []>} : vector<85x32xbf16>, vector<32x128xbf16>, vector<85x128xf32> -> vector<85x128xf32>
    %144 = vector.extract_strided_slice %140 {offsets = [0, 0], sizes = [85, 8], strides = [1, 1]} : vector<96x8xbf16> to vector<85x8xbf16>
    %c0_97 = arith.constant 0 : index
    %c0_98 = arith.constant 0 : index
    %145 = vector.load %arg17[%c0_97, %c0_98] : memref<8x128xbf16, #tpu.memory_space<vmem>>, vector<8x128xbf16>
    %cst_99 = arith.constant dense<0.000000e+00> : vector<85x128xf32>
    %146 = tpu.matmul %144, %145, %cst_99 {dimension_numbers = #tpu.dot_dimension_numbers<[1], [0], [0], [1], [0, 0, 1, 1], [], []>} : vector<85x8xbf16>, vector<8x128xbf16>, vector<85x128xf32> -> vector<85x128xf32>
    %147 = arith.addf %143, %146 : vector<85x128xf32>
    %c0_100 = arith.constant 0 : index
    %c0_101 = arith.constant 0 : index
    %148 = vector.load %arg18[%c0_100, %c0_101] : memref<1x128xf32, #tpu.memory_space<vmem>>, vector<1x128xf32>
    %149 = vector.broadcast %148 : vector<1x128xf32> to vector<85x128xf32>
    %150 = arith.addf %147, %149 : vector<85x128xf32>
    %cst_102 = arith.constant 0.000000e+00 : f32
    %151 = vector.broadcast %cst_102 : f32 to vector<85x128xf32>
    %152 = arith.maximumf %150, %151 : vector<85x128xf32>
    %153 = arith.truncf %152 : vector<85x128xf32> to vector<85x128xbf16>
    %c0_103 = arith.constant 0 : index
    %c0_104 = arith.constant 0 : index
    %154 = vector.load %arg19[%c0_103, %c0_104] : memref<128x128xbf16, #tpu.memory_space<vmem>>, vector<128x128xbf16>
    %cst_105 = arith.constant dense<0.000000e+00> : vector<85x128xf32>
    %155 = tpu.matmul %153, %154, %cst_105 {dimension_numbers = #tpu.dot_dimension_numbers<[1], [0], [0], [1], [0, 0, 1, 1], [], []>} : vector<85x128xbf16>, vector<128x128xbf16>, vector<85x128xf32> -> vector<85x128xf32>
    %c0_106 = arith.constant 0 : index
    %c0_107 = arith.constant 0 : index
    %156 = vector.load %arg20[%c0_106, %c0_107] : memref<1x128xf32, #tpu.memory_space<vmem>>, vector<1x128xf32>
    %157 = vector.broadcast %156 : vector<1x128xf32> to vector<85x128xf32>
    %158 = arith.addf %155, %157 : vector<85x128xf32>
    %cst_108 = arith.constant 0.000000e+00 : f32
    %159 = vector.broadcast %cst_108 : f32 to vector<85x128xf32>
    %160 = arith.maximumf %158, %159 : vector<85x128xf32>
    %161 = arith.truncf %160 : vector<85x128xf32> to vector<85x128xbf16>
    %c0_109 = arith.constant 0 : index
    %c0_110 = arith.constant 0 : index
    %162 = vector.load %arg21[%c0_109, %c0_110] : memref<128x2xbf16, #tpu.memory_space<vmem>>, vector<128x2xbf16>
    %cst_111 = arith.constant dense<0.000000e+00> : vector<85x2xf32>
    %163 = tpu.matmul %161, %162, %cst_111 {dimension_numbers = #tpu.dot_dimension_numbers<[1], [0], [0], [1], [0, 0, 1, 1], [], []>} : vector<85x128xbf16>, vector<128x2xbf16>, vector<85x2xf32> -> vector<85x2xf32>
    %c0_112 = arith.constant 0 : index
    %c0_113 = arith.constant 0 : index
    %164 = vector.load %arg22[%c0_112, %c0_113] : memref<1x2xf32, #tpu.memory_space<vmem>>, vector<1x2xf32>
    %165 = vector.broadcast %164 : vector<1x2xf32> to vector<85x2xf32>
    %166 = arith.addf %163, %165 : vector<85x2xf32>
    %c0_114 = arith.constant 0 : index
    %c0_115 = arith.constant 0 : index
    %c0_116 = arith.constant 0 : index
    %167 = vector.load %arg23[%c0_114, %c0_115, %c0_116] : memref<1x85x2xf32, #tpu.memory_space<vmem>>, vector<1x85x2xf32>
    %168 = vector.shape_cast %167 : vector<1x85x2xf32> to vector<85x2xf32>
    %169 = vector.shape_cast %166 : vector<85x2xf32> to vector<1x85x2xf32>
    tpu.vector_store %arg23[%c0_114, %c0_115, %c0_116], %169 {strides = array<i32>} : memref<1x85x2xf32, #tpu.memory_space<vmem>>, vector<1x85x2xf32>,
    return
  }
  func.func @transform_0(%arg0: i32) -> (i32, i32, i32) {
    %c0_i32 = arith.constant 0 : i32
    %c0_i32_0 = arith.constant 0 : i32
    %c0_i32_1 = arith.constant 0 : i32
    return %arg0, %c0_i32, %c0_i32_0 : i32, i32, i32
  }
  func.func @transform_1(%arg0: i32) -> (i32, i32, i32) {
    %c0_i32 = arith.constant 0 : i32
    %c0_i32_0 = arith.constant 0 : i32
    %c0_i32_1 = arith.constant 0 : i32
    return %arg0, %c0_i32, %c0_i32_0 : i32, i32, i32
  }
  func.func @transform_2(%arg0: i32) -> (i32, i32, i32) {
    %c0_i32 = arith.constant 0 : i32
    %c0_i32_0 = arith.constant 0 : i32
    %c0_i32_1 = arith.constant 0 : i32
    return %arg0, %c0_i32, %c0_i32_0 : i32, i32, i32
  }
  func.func @transform_3(%arg0: i32) -> (i32, i32, i32) {
    %c0_i32 = arith.constant 0 : i32
    %c0_i32_0 = arith.constant 0 : i32
    %c0_i32_1 = arith.constant 0 : i32
    %c0_i32_2 = arith.constant 0 : i32
    return %c0_i32, %c0_i32_0, %c0_i32_1 : i32, i32, i32
  }
  func.func @transform_4(%arg0: i32) -> (i32, i32) {
    %c0_i32 = arith.constant 0 : i32
    %c0_i32_0 = arith.constant 0 : i32
    %c0_i32_1 = arith.constant 0 : i32
    return %c0_i32, %c0_i32_0 : i32, i32
  }
  func.func @transform_5(%arg0: i32) -> (i32, i32, i32) {
    %c0_i32 = arith.constant 0 : i32
    %c0_i32_0 = arith.constant 0 : i32
    %c0_i32_1 = arith.constant 0 : i32
    %c0_i32_2 = arith.constant 0 : i32
    return %c0_i32, %c0_i32_0, %c0_i32_1 : i32, i32, i32
  }
  func.func @transform_6(%arg0: i32) -> (i32, i32) {
    %c0_i32 = arith.constant 0 : i32
    %c0_i32_0 = arith.constant 0 : i32
    %c0_i32_1 = arith.constant 0 : i32
    return %c0_i32, %c0_i32_0 : i32, i32
  }
  func.func @transform_7(%arg0: i32) -> (i32, i32, i32) {
    %c0_i32 = arith.constant 0 : i32
    %c0_i32_0 = arith.constant 0 : i32
    %c0_i32_1 = arith.constant 0 : i32
    %c0_i32_2 = arith.constant 0 : i32
    return %c0_i32, %c0_i32_0, %c0_i32_1 : i32, i32, i32
  }
  func.func @transform_8(%arg0: i32) -> (i32, i32) {
    %c0_i32 = arith.constant 0 : i32
    %c0_i32_0 = arith.constant 0 : i32
    %c0_i32_1 = arith.constant 0 : i32
    return %c0_i32, %c0_i32_0 : i32, i32
  }
  func.func @transform_9(%arg0: i32) -> (i32, i32, i32) {
    %c0_i32 = arith.constant 0 : i32
    %c0_i32_0 = arith.constant 0 : i32
    %c0_i32_1 = arith.constant 0 : i32
    %c0_i32_2 = arith.constant 0 : i32
    return %c0_i32, %c0_i32_0, %c0_i32_1 : i32, i32, i32
  }
  func.func @transform_10(%arg0: i32) -> (i32, i32) {
    %c0_i32 = arith.constant 0 : i32
    %c0_i32_0 = arith.constant 0 : i32
    %c0_i32_1 = arith.constant 0 : i32
    return %c0_i32, %c0_i32_0 : i32, i32
  }
  func.func @transform_11(%arg0: i32) -> (i32, i32, i32) {
    %c0_i32 = arith.constant 0 : i32
    %c0_i32_0 = arith.constant 0 : i32
    %c0_i32_1 = arith.constant 0 : i32
    %c0_i32_2 = arith.constant 0 : i32
    return %c0_i32, %c0_i32_0, %c0_i32_1 : i32, i32, i32
  }
  func.func @transform_12(%arg0: i32) -> (i32, i32) {
    %c0_i32 = arith.constant 0 : i32
    %c0_i32_0 = arith.constant 0 : i32
    %c0_i32_1 = arith.constant 0 : i32
    return %c0_i32, %c0_i32_0 : i32, i32
  }
  func.func @transform_13(%arg0: i32) -> (i32, i32) {
    %c0_i32 = arith.constant 0 : i32
    %c0_i32_0 = arith.constant 0 : i32
    %c0_i32_1 = arith.constant 0 : i32
    return %c0_i32, %c0_i32_0 : i32, i32
  }
  func.func @transform_14(%arg0: i32) -> (i32, i32) {
    %c0_i32 = arith.constant 0 : i32
    %c0_i32_0 = arith.constant 0 : i32
    %c0_i32_1 = arith.constant 0 : i32
    return %c0_i32, %c0_i32_0 : i32, i32
  }
  func.func @transform_15(%arg0: i32) -> (i32, i32) {
    %c0_i32 = arith.constant 0 : i32
    %c0_i32_0 = arith.constant 0 : i32
    %c0_i32_1 = arith.constant 0 : i32
    return %c0_i32, %c0_i32_0 : i32, i32
  }
  func.func @transform_16(%arg0: i32) -> (i32, i32) {
    %c0_i32 = arith.constant 0 : i32
    %c0_i32_0 = arith.constant 0 : i32
    %c0_i32_1 = arith.constant 0 : i32
    return %c0_i32, %c0_i32_0 : i32, i32
  }
  func.func @transform_17(%arg0: i32) -> (i32, i32) {
    %c0_i32 = arith.constant 0 : i32
    %c0_i32_0 = arith.constant 0 : i32
    %c0_i32_1 = arith.constant 0 : i32
    return %c0_i32, %c0_i32_0 : i32, i32
  }
  func.func @transform_18(%arg0: i32) -> (i32, i32) {
    %c0_i32 = arith.constant 0 : i32
    %c0_i32_0 = arith.constant 0 : i32
    %c0_i32_1 = arith.constant 0 : i32
    return %c0_i32, %c0_i32_0 : i32, i32
  }
  func.func @transform_19(%arg0: i32) -> (i32, i32) {
    %c0_i32 = arith.constant 0 : i32
    %c0_i32_0 = arith.constant 0 : i32
    %c0_i32_1 = arith.constant 0 : i32
    return %c0_i32, %c0_i32_0 : i32, i32
  }
  func.func @transform_20(%arg0: i32) -> (i32, i32) {
    %c0_i32 = arith.constant 0 : i32
    %c0_i32_0 = arith.constant 0 : i32
    %c0_i32_1 = arith.constant 0 : i32
    return %c0_i32, %c0_i32_0 : i32, i32
  }
  func.func @transform_21(%arg0: i32) -> (i32, i32) {
    %c0_i32 = arith.constant 0 : i32
    %c0_i32_0 = arith.constant 0 : i32
    %c0_i32_1 = arith.constant 0 : i32
    return %c0_i32, %c0_i32_0 : i32, i32
  }
  func.func @transform_22(%arg0: i32) -> (i32, i32, i32) {
    %c0_i32 = arith.constant 0 : i32
    %c0_i32_0 = arith.constant 0 : i32
    %c0_i32_1 = arith.constant 0 : i32
    return %arg0, %c0_i32, %c0_i32_0 : i32, i32, i32
  }
}

</mosaic_0001>

<llo_original>
// kernel: _lambda_.1
$region0: #{_lambda_.1}
  #allocation0 [shape = 'u32[]', space=smem, size = 0x4, offset = 0x4, fixed_abs, tag = 'smem constant byte address 0x4 - core index']
  #allocation1 [shape = 'u32[144,128]{1,0:T(1,128)}', space=vmem, size = 0x12000, scoped, tag = 'internal scratch']
  %s0 = inlined_call_operand.vmem [shape: f32[2,96,72], index: 0, kind: input, shape index: {}]
  %s1 = inlined_call_operand.vmem [shape: f32[2,96,72], index: 1, kind: input, shape index: {}]
  %s2 = inlined_call_operand.vmem [shape: f32[2,96,8], index: 2, kind: input, shape index: {}]
  %s3 = inlined_call_operand.vmem [shape: bf16[3,72,352], index: 3, kind: input, shape index: {}]
  %s4 = inlined_call_operand.vmem [shape: f32[1,352], index: 4, kind: input, shape index: {}]
  %s5 = inlined_call_operand.vmem [shape: bf16[3,352,288], index: 5, kind: input, shape index: {}]
  %s6 = inlined_call_operand.vmem [shape: f32[1,288], index: 6, kind: input, shape index: {}]
  %s7 = inlined_call_operand.vmem [shape: bf16[3,288,224], index: 7, kind: input, shape index: {}]
  %s8 = inlined_call_operand.vmem [shape: f32[1,224], index: 8, kind: input, shape index: {}]
  %s9 = inlined_call_operand.vmem [shape: bf16[3,224,160], index: 9, kind: input, shape index: {}]
  %s10 = inlined_call_operand.vmem [shape: f32[1,160], index: 10, kind: input, shape index: {}]
  %s11 = inlined_call_operand.vmem [shape: bf16[5,160,32], index: 11, kind: input, shape index: {}]
  %s12 = inlined_call_operand.vmem [shape: f32[1,32], index: 12, kind: input, shape index: {}]
  %s13 = inlined_call_operand.vmem [shape: f32[1,32], index: 13, kind: input, shape index: {}]
  %s14 = inlined_call_operand.vmem [shape: f32[1,32], index: 14, kind: input, shape index: {}]
  %s15 = inlined_call_operand.vmem [shape: bf16[32,128], index: 15, kind: input, shape index: {}]
  %s16 = inlined_call_operand.vmem [shape: bf16[8,128], index: 16, kind: input, shape index: {}]
  %s17 = inlined_call_operand.vmem [shape: f32[1,128], index: 17, kind: input, shape index: {}]
  %s18 = inlined_call_operand.vmem [shape: bf16[128,128], index: 18, kind: input, shape index: {}]
  %s19 = inlined_call_operand.vmem [shape: f32[1,128], index: 19, kind: input, shape index: {}]
  %s20 = inlined_call_operand.vmem [shape: bf16[128,2], index: 20, kind: input, shape index: {}]
  %s21 = inlined_call_operand.vmem [shape: f32[1,2], index: 21, kind: input, shape index: {}]
  %s22 = inlined_call_operand.vmem [shape: f32[2,85,2], index: 22, kind: output, shape index: {}]
  %s23 = sld [smem:[#allocation0]]
  $region121: #{_lambda_.1} parent=0
    _
  %s25 = ssub.s32 1, %s23
  %s26 = scalar_select 0, %s25, %s23
  loop: start=0, step=1, limit=4
  $region2: #{_lambda_.1} parent=0 // loop_pre_header
    _
  $region3: #{_lambda_.1} parent=0 // loop_header
    %s28 = sphi 0, %s32
    %p29 = scmp.ge.s32.totalorder %s28, 4
    %s38 = sphi 0, %s40
    %s41 = sphi 0, %s38
    %s42 = sphi 0, %s41
    %s58 = sphi 0, %s42
    %s64 = sphi 0, %s66
    %s67 = sphi 0, %s64
    %s68 = sphi 0, %s67
    %s84 = sphi 0, %s68
    %s90 = sphi 0, %s92
    %s93 = sphi 0, %s90
    %s94 = sphi 0, %s93
    %s110 = sphi 0, %s94
    %s114 = sphi 0, %s114
    %s116 = sphi 0, %s114
    %s117 = sphi 0, %s116
    %s131 = sphi 0, %s117
    %s135 = sphi 0, %s135
    %s137 = sphi 0, %s135
    %s138 = sphi 0, %s137
    %s152 = sphi 0, %s138
    %s156 = sphi 0, %s156
    %s158 = sphi 0, %s156
    %s159 = sphi 0, %s158
    %s173 = sphi 0, %s159
    %s177 = sphi 0, %s177
    %s179 = sphi 0, %s177
    %s180 = sphi 0, %s179
    %s194 = sphi 0, %s180
    %s198 = sphi 0, %s198
    %s200 = sphi 0, %s198
    %s201 = sphi 0, %s200
    %s215 = sphi 0, %s201
    %s219 = sphi 0, %s219
    %s221 = sphi 0, %s219
    %s222 = sphi 0, %s221
    %s236 = sphi 0, %s222
    %s240 = sphi 0, %s240
    %s242 = sphi 0, %s240
    %s243 = sphi 0, %s242
    %s257 = sphi 0, %s243
    %s261 = sphi 0, %s261
    %s263 = sphi 0, %s261
    %s264 = sphi 0, %s263
    %s278 = sphi 0, %s264
    %s282 = sphi 0, %s282
    %s284 = sphi 0, %s282
    %s285 = sphi 0, %s284
    %s299 = sphi 0, %s285
    %s303 = sphi 0, %s303
    %s305 = sphi 0, %s303
    %s306 = sphi 0, %s305
    %s320 = sphi 0, %s306
    %s324 = sphi 0, %s324
    %s326 = sphi 0, %s324
    %s327 = sphi 0, %s326
    %s341 = sphi 0, %s327
    %s345 = sphi 0, %s345
    %s347 = sphi 0, %s345
    %s348 = sphi 0, %s347
    %s362 = sphi 0, %s348
    %s366 = sphi 0, %s366
    %s368 = sphi 0, %s366
    %s369 = sphi 0, %s368
    %s383 = sphi 0, %s369
    %s387 = sphi 0, %s387
    %s389 = sphi 0, %s387
    %s390 = sphi 0, %s389
    %s404 = sphi 0, %s390
    %s408 = sphi 0, %s408
    %s410 = sphi 0, %s408
    %s411 = sphi 0, %s410
    %s425 = sphi 0, %s411
    %s429 = sphi 0, %s429
    %s431 = sphi 0, %s429
    %s432 = sphi 0, %s431
    %s446 = sphi 0, %s432
    %s450 = sphi 0, %s450
    %s452 = sphi 0, %s450
    %s453 = sphi 0, %s452
    %s467 = sphi 0, %s453
    %s471 = sphi 0, %s471
    %s473 = sphi 0, %s471
    %s474 = sphi 0, %s473
    %s488 = sphi 0, %s474
    %s492 = sphi 0, %s492
    %s494 = sphi 0, %s492
    %s495 = sphi 0, %s494
    %s509 = sphi 0, %s495
    %s515 = sphi 0, %s517
    %s518 = sphi 0, %s515
    %s519 = sphi 0, %s518
    %s535 = sphi 0, %s519
  $region4: #{_lambda_.1} parent=0 // loop_header_branch
    %31 = sbr.rel (%p29) target = $region8
  $region5: #{_lambda_.1} parent=0 // loop_body
    %s33 = ssub.s32 %s28, 1
    %s34 = ssub.s32 %s28, 2
    %s35 = sadd.s32 %s28, 1
    %s36 = ssub.s32 %s28, %s35
    %p37 = scmp.eq.s32.totalorder %s36, 0
    %s39 = sadd.s32 %s38, 1
    %s40 = scalar_select %p37, %s38, %s39
    %p43 = pneg %p37
    %p44 = scmp.eq.s32.totalorder %s28, 1
    %p45 = por %p43, %p44
    %p46 = scmp.ne.s32.totalorder %s38, %s41
    %p47 = scmp.eq.s32.totalorder %s28, 0
    %p48 = por %p46, %p47
    %p49 = scmp.ne.s32.totalorder %s38, %s41
    %p50 = scmp.eq.s32.totalorder %s33, 1
    %p51 = por %p49, %p50
    %p52 = scmp.ne.s32.totalorder %s41, %s42
    %p53 = scmp.eq.s32.totalorder %s33, 0
    %p54 = por %p52, %p53
    %p55 = scmp.ne.s32.totalorder %s41, %s42
    %p56 = scmp.eq.s32.totalorder %s34, 1
    %p57 = por %p55, %p56
    %p59 = scmp.ne.s32.totalorder %s42, %s58
    %p60 = scmp.eq.s32.totalorder %s34, 0
    %p61 = por %p59, %p60
    %s62 = ssub.s32 %s28, %s35
    %p63 = scmp.eq.s32.totalorder %s62, 0
    %s65 = sadd.s32 %s64, 1
    %s66 = scalar_select %p63, %s64, %s65
    %p69 = pneg %p63
    %p70 = scmp.eq.s32.totalorder %s28, 1
    %p71 = por %p69, %p70
    %p72 = scmp.ne.s32.totalorder %s64, %s67
    %p73 = scmp.eq.s32.totalorder %s28, 0
    %p74 = por %p72, %p73
    %p75 = scmp.ne.s32.totalorder %s64, %s67
    %p76 = scmp.eq.s32.totalorder %s33, 1
    %p77 = por %p75, %p76
    %p78 = scmp.ne.s32.totalorder %s67, %s68
    %p79 = scmp.eq.s32.totalorder %s33, 0
    %p80 = por %p78, %p79
    %p81 = scmp.ne.s32.totalorder %s67, %s68
    %p82 = scmp.eq.s32.totalorder %s34, 1
    %p83 = por %p81, %p82
    %p85 = scmp.ne.s32.totalorder %s68, %s84
    %p86 = scmp.eq.s32.totalorder %s34, 0
    %p87 = por %p85, %p86
    %s88 = ssub.s32 %s28, %s35
    %p89 = scmp.eq.s32.totalorder %s88, 0
    %s91 = sadd.s32 %s90, 1
    %s92 = scalar_select %p89, %s90, %s91
    %p95 = pneg %p89
    %p96 = scmp.eq.s32.totalorder %s28, 1
    %p97 = por %p95, %p96
    %p98 = scmp.ne.s32.totalorder %s90, %s93
    %p99 = scmp.eq.s32.totalorder %s28, 0
    %p100 = por %p98, %p99
    %p101 = scmp.ne.s32.totalorder %s90, %s93
    %p102 = scmp.eq.s32.totalorder %s33, 1
    %p103 = por %p101, %p102
    %p104 = scmp.ne.s32.totalorder %s93, %s94
    %p105 = scmp.eq.s32.totalorder %s33, 0
    %p106 = por %p104, %p105
    %p107 = scmp.ne.s32.totalorder %s93, %s94
    %p108 = scmp.eq.s32.totalorder %s34, 1
    %p109 = por %p107, %p108
    %p111 = scmp.ne.s32.totalorder %s94, %s110
    %p112 = scmp.eq.s32.totalorder %s34, 0
    %p113 = por %p111, %p112
    %s115 = sadd.s32 %s114, 1
    %p118 = scmp.eq.s32.totalorder %s28, 1
    %p119 = scmp.ne.s32.totalorder %s114, %s116
    %p120 = scmp.eq.s32.totalorder %s28, 0
    %p121 = por %p119, %p120
    %p122 = scmp.ne.s32.totalorder %s114, %s116
    %p123 = scmp.eq.s32.totalorder %s33, 1
    %p124 = por %p122, %p123
    %p125 = scmp.ne.s32.totalorder %s116, %s117
    %p126 = scmp.eq.s32.totalorder %s33, 0
    %p127 = por %p125, %p126
    %p128 = scmp.ne.s32.totalorder %s116, %s117
    %p129 = scmp.eq.s32.totalorder %s34, 1
    %p130 = por %p128, %p129
    %p132 = scmp.ne.s32.totalorder %s117, %s131
    %p133 = scmp.eq.s32.totalorder %s34, 0
    %p134 = por %p132, %p133
    %s136 = sadd.s32 %s135, 1
    %p139 = scmp.eq.s32.totalorder %s28, 1
    %p140 = scmp.ne.s32.totalorder %s135, %s137
    %p141 = scmp.eq.s32.totalorder %s28, 0
    %p142 = por %p140, %p141
    %p143 = scmp.ne.s32.totalorder %s135, %s137
    %p144 = scmp.eq.s32.totalorder %s33, 1
    %p145 = por %p143, %p144
    %p146 = scmp.ne.s32.totalorder %s137, %s138
    %p147 = scmp.eq.s32.totalorder %s33, 0
    %p148 = por %p146, %p147
    %p149 = scmp.ne.s32.totalorder %s137, %s138
    %p150 = scmp.eq.s32.totalorder %s34, 1
    %p151 = por %p149, %p150
    %p153 = scmp.ne.s32.totalorder %s138, %s152
    %p154 = scmp.eq.s32.totalorder %s34, 0
    %p155 = por %p153, %p154
    %s157 = sadd.s32 %s156, 1
    %p160 = scmp.eq.s32.totalorder %s28, 1
    %p161 = scmp.ne.s32.totalorder %s156, %s158
    %p162 = scmp.eq.s32.totalorder %s28, 0
    %p163 = por %p161, %p162
    %p164 = scmp.ne.s32.totalorder %s156, %s158
    %p165 = scmp.eq.s32.totalorder %s33, 1
    %p166 = por %p164, %p165
    %p167 = scmp.ne.s32.totalorder %s158, %s159
    %p168 = scmp.eq.s32.totalorder %s33, 0
    %p169 = por %p167, %p168
    %p170 = scmp.ne.s32.totalorder %s158, %s159
    %p171 = scmp.eq.s32.totalorder %s34, 1
    %p172 = por %p170, %p171
    %p174 = scmp.ne.s32.totalorder %s159, %s173
    %p175 = scmp.eq.s32.totalorder %s34, 0
    %p176 = por %p174, %p175
    %s178 = sadd.s32 %s177, 1
    %p181 = scmp.eq.s32.totalorder %s28, 1
    %p182 = scmp.ne.s32.totalorder %s177, %s179
    %p183 = scmp.eq.s32.totalorder %s28, 0
    %p184 = por %p182, %p183
    %p185 = scmp.ne.s32.totalorder %s177, %s179
    %p186 = scmp.eq.s32.totalorder %s33, 1
    %p187 = por %p185, %p186
    %p188 = scmp.ne.s32.totalorder %s179, %s180
    %p189 = scmp.eq.s32.totalorder %s33, 0
    %p190 = por %p188, %p189
    %p191 = scmp.ne.s32.totalorder %s179, %s180
    %p192 = scmp.eq.s32.totalorder %s34, 1
    %p193 = por %p191, %p192
    %p195 = scmp.ne.s32.totalorder %s180, %s194
    %p196 = scmp.eq.s32.totalorder %s34, 0
    %p197 = por %p195, %p196
    %s199 = sadd.s32 %s198, 1
    %p202 = scmp.eq.s32.totalorder %s28, 1
    %p203 = scmp.ne.s32.totalorder %s198, %s200
    %p204 = scmp.eq.s32.totalorder %s28, 0
    %p205 = por %p203, %p204
    %p206 = scmp.ne.s32.totalorder %s198, %s200
    %p207 = scmp.eq.s32.totalorder %s33, 1
    %p208 = por %p206, %p207
    %p209 = scmp.ne.s32.totalorder %s200, %s201
    %p210 = scmp.eq.s32.totalorder %s33, 0
    %p211 = por %p209, %p210
    %p212 = scmp.ne.s32.totalorder %s200, %s201
    %p213 = scmp.eq.s32.totalorder %s34, 1
    %p214 = por %p212, %p213
    %p216 = scmp.ne.s32.totalorder %s201, %s215
    %p217 = scmp.eq.s32.totalorder %s34, 0
    %p218 = por %p216, %p217
    %s220 = sadd.s32 %s219, 1
    %p223 = scmp.eq.s32.totalorder %s28, 1
    %p224 = scmp.ne.s32.totalorder %s219, %s221
    %p225 = scmp.eq.s32.totalorder %s28, 0
    %p226 = por %p224, %p225
    %p227 = scmp.ne.s32.totalorder %s219, %s221
    %p228 = scmp.eq.s32.totalorder %s33, 1
    %p229 = por %p227, %p228
    %p230 = scmp.ne.s32.totalorder %s221, %s222
    %p231 = scmp.eq.s32.totalorder %s33, 0
    %p232 = por %p230, %p231
    %p233 = scmp.ne.s32.totalorder %s221, %s222
    %p234 = scmp.eq.s32.totalorder %s34, 1
    %p235 = por %p233, %p234
    %p237 = scmp.ne.s32.totalorder %s222, %s236
    %p238 = scmp.eq.s32.totalorder %s34, 0
    %p239 = por %p237, %p238
    %s241 = sadd.s32 %s240, 1
    %p244 = scmp.eq.s32.totalorder %s28, 1
    %p245 = scmp.ne.s32.totalorder %s240, %s242
    %p246 = scmp.eq.s32.totalorder %s28, 0
    %p247 = por %p245, %p246
    %p248 = scmp.ne.s32.totalorder %s240, %s242
    %p249 = scmp.eq.s32.totalorder %s33, 1
    %p250 = por %p248, %p249
    %p251 = scmp.ne.s32.totalorder %s242, %s243
    %p252 = scmp.eq.s32.totalorder %s33, 0
    %p253 = por %p251, %p252
    %p254 = scmp.ne.s32.totalorder %s242, %s243
    %p255 = scmp.eq.s32.totalorder %s34, 1
    %p256 = por %p254, %p255
    %p258 = scmp.ne.s32.totalorder %s243, %s257
    %p259 = scmp.eq.s32.totalorder %s34, 0
    %p260 = por %p258, %p259
    %s262 = sadd.s32 %s261, 1
    %p265 = scmp.eq.s32.totalorder %s28, 1
    %p266 = scmp.ne.s32.totalorder %s261, %s263
    %p267 = scmp.eq.s32.totalorder %s28, 0
    %p268 = por %p266, %p267
    %p269 = scmp.ne.s32.totalorder %s261, %s263
    %p270 = scmp.eq.s32.totalorder %s33, 1
    %p271 = por %p269, %p270
    %p272 = scmp.ne.s32.totalorder %s263, %s264
    %p273 = scmp.eq.s32.totalorder %s33, 0
    %p274 = por %p272, %p273
    %p275 = scmp.ne.s32.totalorder %s263, %s264
    %p276 = scmp.eq.s32.totalorder %s34, 1
    %p277 = por %p275, %p276
    %p279 = scmp.ne.s32.totalorder %s264, %s278
    %p280 = scmp.eq.s32.totalorder %s34, 0
    %p281 = por %p279, %p280
    %s283 = sadd.s32 %s282, 1
    %p286 = scmp.eq.s32.totalorder %s28, 1
    %p287 = scmp.ne.s32.totalorder %s282, %s284
    %p288 = scmp.eq.s32.totalorder %s28, 0
    %p289 = por %p287, %p288
    %p290 = scmp.ne.s32.totalorder %s282, %s284
    %p291 = scmp.eq.s32.totalorder %s33, 1
    %p292 = por %p290, %p291
    %p293 = scmp.ne.s32.totalorder %s284, %s285
    %p294 = scmp.eq.s32.totalorder %s33, 0
    %p295 = por %p293, %p294
    %p296 = scmp.ne.s32.totalorder %s284, %s285
    %p297 = scmp.eq.s32.totalorder %s34, 1
    %p298 = por %p296, %p297
    %p300 = scmp.ne.s32.totalorder %s285, %s299
    %p301 = scmp.eq.s32.totalorder %s34, 0
    %p302 = por %p300, %p301
    %s304 = sadd.s32 %s303, 1
    %p307 = scmp.eq.s32.totalorder %s28, 1
    %p308 = scmp.ne.s32.totalorder %s303, %s305
    %p309 = scmp.eq.s32.totalorder %s28, 0
    %p310 = por %p308, %p309
    %p311 = scmp.ne.s32.totalorder %s303, %s305
    %p312 = scmp.eq.s32.totalorder %s33, 1
    %p313 = por %p311, %p312
    %p314 = scmp.ne.s32.totalorder %s305, %s306
    %p315 = scmp.eq.s32.totalorder %s33, 0
    %p316 = por %p314, %p315
    %p317 = scmp.ne.s32.totalorder %s305, %s306
    %p318 = scmp.eq.s32.totalorder %s34, 1
    %p319 = por %p317, %p318
    %p321 = scmp.ne.s32.totalorder %s306, %s320
    %p322 = scmp.eq.s32.totalorder %s34, 0
    %p323 = por %p321, %p322
    %s325 = sadd.s32 %s324, 1
    %p328 = scmp.eq.s32.totalorder %s28, 1
    %p329 = scmp.ne.s32.totalorder %s324, %s326
    %p330 = scmp.eq.s32.totalorder %s28, 0
    %p331 = por %p329, %p330
    %p332 = scmp.ne.s32.totalorder %s324, %s326
    %p333 = scmp.eq.s32.totalorder %s33, 1
    %p334 = por %p332, %p333
    %p335 = scmp.ne.s32.totalorder %s326, %s327
    %p336 = scmp.eq.s32.totalorder %s33, 0
    %p337 = por %p335, %p336
    %p338 = scmp.ne.s32.totalorder %s326, %s327
    %p339 = scmp.eq.s32.totalorder %s34, 1
    %p340 = por %p338, %p339
    %p342 = scmp.ne.s32.totalorder %s327, %s341
    %p343 = scmp.eq.s32.totalorder %s34, 0
    %p344 = por %p342, %p343
    %s346 = sadd.s32 %s345, 1
    %p349 = scmp.eq.s32.totalorder %s28, 1
    %p350 = scmp.ne.s32.totalorder %s345, %s347
    %p351 = scmp.eq.s32.totalorder %s28, 0
    %p352 = por %p350, %p351
    %p353 = scmp.ne.s32.totalorder %s345, %s347
    %p354 = scmp.eq.s32.totalorder %s33, 1
    %p355 = por %p353, %p354
    %p356 = scmp.ne.s32.totalorder %s347, %s348
    %p357 = scmp.eq.s32.totalorder %s33, 0
    %p358 = por %p356, %p357
    %p359 = scmp.ne.s32.totalorder %s347, %s348
    %p360 = scmp.eq.s32.totalorder %s34, 1
    %p361 = por %p359, %p360
    %p363 = scmp.ne.s32.totalorder %s348, %s362
    %p364 = scmp.eq.s32.totalorder %s34, 0
    %p365 = por %p363, %p364
    %s367 = sadd.s32 %s366, 1
    %p370 = scmp.eq.s32.totalorder %s28, 1
    %p371 = scmp.ne.s32.totalorder %s366, %s368
    %p372 = scmp.eq.s32.totalorder %s28, 0
    %p373 = por %p371, %p372
    %p374 = scmp.ne.s32.totalorder %s366, %s368
    %p375 = scmp.eq.s32.totalorder %s33, 1
    %p376 = por %p374, %p375
    %p377 = scmp.ne.s32.totalorder %s368, %s369
    %p378 = scmp.eq.s32.totalorder %s33, 0
    %p379 = por %p377, %p378
    %p380 = scmp.ne.s32.totalorder %s368, %s369
    %p381 = scmp.eq.s32.totalorder %s34, 1
    %p382 = por %p380, %p381
    %p384 = scmp.ne.s32.totalorder %s369, %s383
    %p385 = scmp.eq.s32.totalorder %s34, 0
    %p386 = por %p384, %p385
    %s388 = sadd.s32 %s387, 1
    %p391 = scmp.eq.s32.totalorder %s28, 1
    %p392 = scmp.ne.s32.totalorder %s387, %s389
    %p393 = scmp.eq.s32.totalorder %s28, 0
    %p394 = por %p392, %p393
    %p395 = scmp.ne.s32.totalorder %s387, %s389
    %p396 = scmp.eq.s32.totalorder %s33, 1
    %p397 = por %p395, %p396
    %p398 = scmp.ne.s32.totalorder %s389, %s390
    %p399 = scmp.eq.s32.totalorder %s33, 0
    %p400 = por %p398, %p399
    %p401 = scmp.ne.s32.totalorder %s389, %s390
    %p402 = scmp.eq.s32.totalorder %s34, 1
    %p403 = por %p401, %p402
    %p405 = scmp.ne.s32.totalorder %s390, %s404
    %p406 = scmp.eq.s32.totalorder %s34, 0
    %p407 = por %p405, %p406
    %s409 = sadd.s32 %s408, 1
    %p412 = scmp.eq.s32.totalorder %s28, 1
    %p413 = scmp.ne.s32.totalorder %s408, %s410
    %p414 = scmp.eq.s32.totalorder %s28, 0
    %p415 = por %p413, %p414
    %p416 = scmp.ne.s32.totalorder %s408, %s410
    %p417 = scmp.eq.s32.totalorder %s33, 1
    %p418 = por %p416, %p417
    %p419 = scmp.ne.s32.totalorder %s410, %s411
    %p420 = scmp.eq.s32.totalorder %s33, 0
    %p421 = por %p419, %p420
    %p422 = scmp.ne.s32.totalorder %s410, %s411
    %p423 = scmp.eq.s32.totalorder %s34, 1
    %p424 = por %p422, %p423
    %p426 = scmp.ne.s32.totalorder %s411, %s425
    %p427 = scmp.eq.s32.totalorder %s34, 0
    %p428 = por %p426, %p427
    %s430 = sadd.s32 %s429, 1
    %p433 = scmp.eq.s32.totalorder %s28, 1
    %p434 = scmp.ne.s32.totalorder %s429, %s431
    %p435 = scmp.eq.s32.totalorder %s28, 0
    %p436 = por %p434, %p435
    %p437 = scmp.ne.s32.totalorder %s429, %s431
    %p438 = scmp.eq.s32.totalorder %s33, 1
    %p439 = por %p437, %p438
    %p440 = scmp.ne.s32.totalorder %s431, %s432
    %p441 = scmp.eq.s32.totalorder %s33, 0
    %p442 = por %p440, %p441
    %p443 = scmp.ne.s32.totalorder %s431, %s432
    %p444 = scmp.eq.s32.totalorder %s34, 1
    %p445 = por %p443, %p444
    %p447 = scmp.ne.s32.totalorder %s432, %s446
    %p448 = scmp.eq.s32.totalorder %s34, 0
    %p449 = por %p447, %p448
    %s451 = sadd.s32 %s450, 1
    %p454 = scmp.eq.s32.totalorder %s28, 1
    %p455 = scmp.ne.s32.totalorder %s450, %s452
    %p456 = scmp.eq.s32.totalorder %s28, 0
    %p457 = por %p455, %p456
    %p458 = scmp.ne.s32.totalorder %s450, %s452
    %p459 = scmp.eq.s32.totalorder %s33, 1
    %p460 = por %p458, %p459
    %p461 = scmp.ne.s32.totalorder %s452, %s453
    %p462 = scmp.eq.s32.totalorder %s33, 0
    %p463 = por %p461, %p462
    %p464 = scmp.ne.s32.totalorder %s452, %s453
    %p465 = scmp.eq.s32.totalorder %s34, 1
    %p466 = por %p464, %p465
    %p468 = scmp.ne.s32.totalorder %s453, %s467
    %p469 = scmp.eq.s32.totalorder %s34, 0
    %p470 = por %p468, %p469
    %s472 = sadd.s32 %s471, 1
    %p475 = scmp.eq.s32.totalorder %s28, 1
    %p476 = scmp.ne.s32.totalorder %s471, %s473
    %p477 = scmp.eq.s32.totalorder %s28, 0
    %p478 = por %p476, %p477
    %p479 = scmp.ne.s32.totalorder %s471, %s473
    %p480 = scmp.eq.s32.totalorder %s33, 1
    %p481 = por %p479, %p480
    %p482 = scmp.ne.s32.totalorder %s473, %s474
    %p483 = scmp.eq.s32.totalorder %s33, 0
    %p484 = por %p482, %p483
    %p485 = scmp.ne.s32.totalorder %s473, %s474
    %p486 = scmp.eq.s32.totalorder %s34, 1
    %p487 = por %p485, %p486
    %p489 = scmp.ne.s32.totalorder %s474, %s488
    %p490 = scmp.eq.s32.totalorder %s34, 0
    %p491 = por %p489, %p490
    %s493 = sadd.s32 %s492, 1
    %p496 = scmp.eq.s32.totalorder %s28, 1
    %p497 = scmp.ne.s32.totalorder %s492, %s494
    %p498 = scmp.eq.s32.totalorder %s28, 0
    %p499 = por %p497, %p498
    %p500 = scmp.ne.s32.totalorder %s492, %s494
    %p501 = scmp.eq.s32.totalorder %s33, 1
    %p502 = por %p500, %p501
    %p503 = scmp.ne.s32.totalorder %s494, %s495
    %p504 = scmp.eq.s32.totalorder %s33, 0
    %p505 = por %p503, %p504
    %p506 = scmp.ne.s32.totalorder %s494, %s495
    %p507 = scmp.eq.s32.totalorder %s34, 1
    %p508 = por %p506, %p507
    %p510 = scmp.ne.s32.totalorder %s495, %s509
    %p511 = scmp.eq.s32.totalorder %s34, 0
    %p512 = por %p510, %p511
    %s513 = ssub.s32 %s28, %s35
    %p514 = scmp.eq.s32.totalorder %s513, 0
    %s516 = sadd.s32 %s515, 1
    %s517 = scalar_select %p514, %s515, %s516
    %p520 = pneg %p514
    %p521 = scmp.eq.s32.totalorder %s28, 1
    %p522 = por %p520, %p521
    %p523 = scmp.ne.s32.totalorder %s515, %s518
    %p524 = scmp.eq.s32.totalorder %s28, 0
    %p525 = por %p523, %p524
    %p526 = scmp.ne.s32.totalorder %s515, %s518
    %p527 = scmp.eq.s32.totalorder %s33, 1
    %p528 = por %p526, %p527
    %p529 = scmp.ne.s32.totalorder %s518, %s519
    %p530 = scmp.eq.s32.totalorder %s33, 0
    %p531 = por %p529, %p530
    %p532 = scmp.ne.s32.totalorder %s518, %s519
    %p533 = scmp.eq.s32.totalorder %s34, 1
    %p534 = por %p532, %p533
    %p536 = scmp.ne.s32.totalorder %s519, %s535
    %p537 = scmp.eq.s32.totalorder %s34, 0
    %p538 = por %p536, %p537
    %p539 = scmp.le.s32.totalorder 1, %s28
    %p540 = scmp.lt.s32.totalorder %s28, 3
    %p541 = pnand %p539, %p540
    %p542 = pneg %p541
    // Predicated region
    $region9: #{_lambda_.1} parent=5 // pred_check
      _
    $region10: #{_lambda_.1} parent=5 // pred_check_branch
      %544 = sbr.rel (%p541) target = $region12
    $region11: #{_lambda_.1} parent=5 // pred_region
      %s545 = ssub.s32 %s28, 1
      // Predicated region
      $region13: #{_lambda_.1} parent=11 // pred_check
        %p546 = pneg %p127
      $region14: #{_lambda_.1} parent=11 // pred_check_branch
        %548 = sbr.rel (%p546) target = $region16
      $region15: #{_lambda_.1} parent=11 // pred_region
        _
      $region16: #{_lambda_.1} parent=11 // pred_fallthru
        _
      // Predicated region
      $region17: #{_lambda_.1} parent=11 // pred_check
        %p549 = pneg %p148
      $region18: #{_lambda_.1} parent=11 // pred_check_branch
        %551 = sbr.rel (%p549) target = $region20
      $region19: #{_lambda_.1} parent=11 // pred_region
        _
      $region20: #{_lambda_.1} parent=11 // pred_fallthru
        _
      // Predicated region
      $region21: #{_lambda_.1} parent=11 // pred_check
        %p552 = pneg %p169
      $region22: #{_lambda_.1} parent=11 // pred_check_branch
        %554 = sbr.rel (%p552) target = $region24
      $region23: #{_lambda_.1} parent=11 // pred_region
        _
      $region24: #{_lambda_.1} parent=11 // pred_fallthru
        _
      // Predicated region
      $region25: #{_lambda_.1} parent=11 // pred_check
        %p555 = pneg %p190
      $region26: #{_lambda_.1} parent=11 // pred_check_branch
        %557 = sbr.rel (%p555) target = $region28
      $region27: #{_lambda_.1} parent=11 // pred_region
        _
      $region28: #{_lambda_.1} parent=11 // pred_fallthru
        _
      // Predicated region
      $region29: #{_lambda_.1} parent=11 // pred_check
        %p558 = pneg %p211
      $region30: #{_lambda_.1} parent=11 // pred_check_branch
        %560 = sbr.rel (%p558) target = $region32
      $region31: #{_lambda_.1} parent=11 // pred_region
        _
      $region32: #{_lambda_.1} parent=11 // pred_fallthru
        _
      // Predicated region
      $region33: #{_lambda_.1} parent=11 // pred_check
        %p561 = pneg %p232
      $region34: #{_lambda_.1} parent=11 // pred_check_branch
        %563 = sbr.rel (%p561) target = $region36
      $region35: #{_lambda_.1} parent=11 // pred_region
        _
      $region36: #{_lambda_.1} parent=11 // pred_fallthru
        _
      // Predicated region
      $region37: #{_lambda_.1} parent=11 // pred_check
        %p564 = pneg %p253
      $region38: #{_lambda_.1} parent=11 // pred_check_branch
        %566 = sbr.rel (%p564) target = $region40
      $region39: #{_lambda_.1} parent=11 // pred_region
        _
      $region40: #{_lambda_.1} parent=11 // pred_fallthru
        _
      // Predicated region
      $region41: #{_lambda_.1} parent=11 // pred_check
        %p567 = pneg %p274
      $region42: #{_lambda_.1} parent=11 // pred_check_branch
        %569 = sbr.rel (%p567) target = $region44
      $region43: #{_lambda_.1} parent=11 // pred_region
        _
      $region44: #{_lambda_.1} parent=11 // pred_fallthru
        _
      // Predicated region
      $region45: #{_lambda_.1} parent=11 // pred_check
        %p570 = pneg %p295
      $region46: #{_lambda_.1} parent=11 // pred_check_branch
        %572 = sbr.rel (%p570) target = $region48
      $region47: #{_lambda_.1} parent=11 // pred_region
        _
      $region48: #{_lambda_.1} parent=11 // pred_fallthru
        _
      // Predicated region
      $region49: #{_lambda_.1} parent=11 // pred_check
        %p573 = pneg %p316
      $region50: #{_lambda_.1} parent=11 // pred_check_branch
        %575 = sbr.rel (%p573) target = $region52
      $region51: #{_lambda_.1} parent=11 // pred_region
        _
      $region52: #{_lambda_.1} parent=11 // pred_fallthru
        _
      // Predicated region
      $region53: #{_lambda_.1} parent=11 // pred_check
        %p576 = pneg %p337
      $region54: #{_lambda_.1} parent=11 // pred_check_branch
        %578 = sbr.rel (%p576) target = $region56
      $region55: #{_lambda_.1} parent=11 // pred_region
        _
      $region56: #{_lambda_.1} parent=11 // pred_fallthru
        _
      // Predicated region
      $region57: #{_lambda_.1} parent=11 // pred_check
        %p579 = pneg %p358
      $region58: #{_lambda_.1} parent=11 // pred_check_branch
        %581 = sbr.rel (%p579) target = $region60
      $region59: #{_lambda_.1} parent=11 // pred_region
        _
      $region60: #{_lambda_.1} parent=11 // pred_fallthru
        _
      // Predicated region
      $region61: #{_lambda_.1} parent=11 // pred_check
        %p582 = pneg %p379
      $region62: #{_lambda_.1} parent=11 // pred_check_branch
        %584 = sbr.rel (%p582) target = $region64
      $region63: #{_lambda_.1} parent=11 // pred_region
        _
      $region64: #{_lambda_.1} parent=11 // pred_fallthru
        _
      // Predicated region
      $region65: #{_lambda_.1} parent=11 // pred_check
        %p585 = pneg %p400
      $region66: #{_lambda_.1} parent=11 // pred_check_branch
        %587 = sbr.rel (%p585) target = $region68
      $region67: #{_lambda_.1} parent=11 // pred_region
        _
      $region68: #{_lambda_.1} parent=11 // pred_fallthru
        _
      // Predicated region
      $region69: #{_lambda_.1} parent=11 // pred_check
        %p588 = pneg %p421
      $region70: #{_lambda_.1} parent=11 // pred_check_branch
        %590 = sbr.rel (%p588) target = $region72
      $region71: #{_lambda_.1} parent=11 // pred_region
        _
      $region72: #{_lambda_.1} parent=11 // pred_fallthru
        _
      // Predicated region
      $region73: #{_lambda_.1} parent=11 // pred_check
        %p591 = pneg %p442
      $region74: #{_lambda_.1} parent=11 // pred_check_branch
        %593 = sbr.rel (%p591) target = $region76
      $region75: #{_lambda_.1} parent=11 // pred_region
        _
      $region76: #{_lambda_.1} parent=11 // pred_fallthru
        _
      // Predicated region
      $region77: #{_lambda_.1} parent=11 // pred_check
        %p594 = pneg %p463
      $region78: #{_lambda_.1} parent=11 // pred_check_branch
        %596 = sbr.rel (%p594) target = $region80
      $region79: #{_lambda_.1} parent=11 // pred_region
        _
      $region80: #{_lambda_.1} parent=11 // pred_fallthru
        _
      // Predicated region
      $region81: #{_lambda_.1} parent=11 // pred_check
        %p597 = pneg %p484
      $region82: #{_lambda_.1} parent=11 // pred_check_branch
        %599 = sbr.rel (%p597) target = $region84
      $region83: #{_lambda_.1} parent=11 // pred_region
        _
      $region84: #{_lambda_.1} parent=11 // pred_fallthru
        _
      // Predicated region
      $region85: #{_lambda_.1} parent=11 // pred_check
        %p600 = pneg %p505
      $region86: #{_lambda_.1} parent=11 // pred_check_branch
        %602 = sbr.rel (%p600) target = $region88
      $region87: #{_lambda_.1} parent=11 // pred_region
        _
      $region88: #{_lambda_.1} parent=11 // pred_fallthru
        _
    $region12: #{_lambda_.1} parent=5 // pred_fallthru
      _
    %p603 = scmp.lt.s32.totalorder %s28, 2
    // Predicated region
    $region89: #{_lambda_.1} parent=5 // pred_check
      %p604 = pneg %p603
    $region90: #{_lambda_.1} parent=5 // pred_check_branch
      %606 = sbr.rel (%p604) target = $region92
    $region91: #{_lambda_.1} parent=5 // pred_region
      // Predicated region
      $region93: #{_lambda_.1} parent=91 // pred_check
        %p607 = pneg %p48
      $region94: #{_lambda_.1} parent=91 // pred_check_branch
        %609 = sbr.rel (%p607) target = $region96
      $region95: #{_lambda_.1} parent=91 // pred_region
        %p610 = scmp.lt.s32.totalorder %s28, 1
        %s611 = scalar_select %p610, %s28, 1
        %s612 = smul.addr %s611, 12
        %s613 = smul.addr %s612, 8
        %s614 = scalar_lea.vmem %s0, %s613
      $region96: #{_lambda_.1} parent=91 // pred_fallthru
        _
      // Predicated region
      $region97: #{_lambda_.1} parent=91 // pred_check
        %p615 = pneg %p74
      $region98: #{_lambda_.1} parent=91 // pred_check_branch
        %617 = sbr.rel (%p615) target = $region100
      $region99: #{_lambda_.1} parent=91 // pred_region
        %p618 = scmp.lt.s32.totalorder %s28, 1
        %s619 = scalar_select %p618, %s28, 1
        %s620 = smul.addr %s619, 12
        %s621 = smul.addr %s620, 8
        %s622 = scalar_lea.vmem %s1, %s621
      $region100: #{_lambda_.1} parent=91 // pred_fallthru
        _
      // Predicated region
      $region101: #{_lambda_.1} parent=91 // pred_check
        %p623 = pneg %p100
      $region102: #{_lambda_.1} parent=91 // pred_check_branch
        %625 = sbr.rel (%p623) target = $region104
      $region103: #{_lambda_.1} parent=91 // pred_region
        %p626 = scmp.lt.s32.totalorder %s28, 1
        %s627 = scalar_select %p626, %s28, 1
        %s628 = smul.addr %s627, 12
        %s629 = smul.addr %s628, 8
        %s630 = scalar_lea.vmem %s2, %s629
      $region104: #{_lambda_.1} parent=91 // pred_fallthru
        _
    $region92: #{_lambda_.1} parent=5 // pred_fallthru
      _
    %p631 = scmp.le.s32.totalorder 1, %s28
    %p632 = scmp.lt.s32.totalorder %s28, 3
    %p633 = pnand %p631, %p632
    %p634 = pneg %p633
    // Predicated region
    $region105: #{_lambda_.1} parent=5 // pred_check
      _
    $region106: #{_lambda_.1} parent=5 // pred_check_branch
      %636 = sbr.rel (%p633) target = $region108
    $region107: #{_lambda_.1} parent=5 // pred_region
      %s637 = ssub.s32 %s28, 1
      %p638 = scmp.lt.s32.totalorder %s33, 1
      %s639 = scalar_select %p638, %s33, 1
      %s640 = smul.addr %s639, 12
      %s641 = smul.addr %s640, 8
      %s642 = scalar_lea.vmem %s0, %s641
      %p643 = pneg %p54
      %p644 = pneg %p51
      %p645 = scmp.lt.s32.totalorder %s33, 1
      %s646 = scalar_select %p645, %s33, 1
      %s647 = smul.addr %s646, 12
      %s648 = smul.addr %s647, 8
      %s649 = scalar_lea.vmem %s1, %s648
      %p650 = pneg %p80
      %p651 = pneg %p77
      %p652 = scmp.lt.s32.totalorder %s33, 1
      %s653 = scalar_select %p652, %s33, 1
      %s654 = smul.addr %s653, 12
      %s655 = smul.addr %s654, 8
      %s656 = scalar_lea.vmem %s2, %s655
      %p657 = pneg %p106
      %p658 = pneg %p103
      %p659 = pneg %p127
      %p660 = pneg %p124
      %p661 = pneg %p148
      %p662 = pneg %p145
      %p663 = pneg %p169
      %p664 = pneg %p166
      %p665 = pneg %p190
      %p666 = pneg %p187
      %p667 = pneg %p211
      %p668 = pneg %p208
      %p669 = pneg %p232
      %p670 = pneg %p229
      %p671 = pneg %p253
      %p672 = pneg %p250
      %p673 = pneg %p274
      %p674 = pneg %p271
      %p675 = pneg %p295
      %p676 = pneg %p292
      %p677 = pneg %p316
      %p678 = pneg %p313
      %p679 = pneg %p337
      %p680 = pneg %p334
      %p681 = pneg %p358
      %p682 = pneg %p355
      %p683 = pneg %p379
      %p684 = pneg %p376
      %p685 = pneg %p400
      %p686 = pneg %p397
      %p687 = pneg %p421
      %p688 = pneg %p418
      %p689 = pneg %p442
      %p690 = pneg %p439
      %p691 = pneg %p463
      %p692 = pneg %p460
      %p693 = pneg %p484
      %p694 = pneg %p481
      %p695 = pneg %p505
      %p696 = pneg %p502
      %p697 = pneg %p531
      %p698 = pneg %p528
      %p699 = scmp.lt.s32.totalorder %s33, 1
      %s700 = scalar_select %p699, %s33, 1
      %s701 = smul.addr %s700, 11
      %s702 = smul.addr %s701, 8
      %s703 = scalar_lea.vmem %s22, %s702
      %p704 = scmp.lt.s32.totalorder %s33, 1
      %s705 = scalar_select %p704, %s33, 1
      %s706 = smul.addr %s705, 12
      %s707 = smul.addr %s706, 8
      %s708 = scalar_lea.vmem %s0, %s707
      %p709 = scmp.lt.s32.totalorder %s33, 1
      %s710 = scalar_select %p709, %s33, 1
      %s711 = smul.addr %s710, 12
      %s712 = smul.addr %s711, 8
      %s713 = scalar_lea.vmem %s1, %s712
      %p714 = scmp.lt.s32.totalorder %s33, 1
      %s715 = scalar_select %p714, %s33, 1
      %s716 = smul.addr %s715, 12
      %s717 = smul.addr %s716, 8
      %s718 = scalar_lea.vmem %s2, %s717
      %p719 = scmp.lt.s32.totalorder %s33, 1
      %s720 = scalar_select %p719, %s33, 1
      %s721 = smul.addr %s720, 11
      %s722 = smul.addr %s721, 8
      %s723 = scalar_lea.vmem %s22, %s722
      %v725 = vld [vmem:[%s708] sm:$0xff]
      %v726 = vld [vmem:[%s708 + $0x8] sm:$0xff]
      %v727 = vld [vmem:[%s708 + $0x10] sm:$0xff]
      %v728 = vld [vmem:[%s708 + $0x18] sm:$0xff]
      %v729 = vld [vmem:[%s708 + $0x20] sm:$0xff]
      %v730 = vld [vmem:[%s708 + $0x28] sm:$0xff]
      %v731 = vld [vmem:[%s708 + $0x30] sm:$0xff]
      %v732 = vld [vmem:[%s708 + $0x38] sm:$0xff]
      %v733 = vld [vmem:[%s708 + $0x40] sm:$0xff]
      %v734 = vld [vmem:[%s708 + $0x48] sm:$0xff]
      %v735 = vld [vmem:[%s708 + $0x50] sm:$0xff]
      %v736 = vld [vmem:[%s708 + $0x58] sm:$0xff]
      %v737 = vpack.c.bf16 %v726, %v725
      %v738 = vpack.c.bf16 %v728, %v727
      %v739 = vpack.c.bf16 %v730, %v729
      %v740 = vpack.c.bf16 %v732, %v731
      %v741 = vpack.c.bf16 %v734, %v733
      %v742 = vpack.c.bf16 %v736, %v735
      %v743 = vld [vmem:[%s713] sm:$0xff]
      %v744 = vld [vmem:[%s713 + $0x8] sm:$0xff]
      %v745 = vld [vmem:[%s713 + $0x10] sm:$0xff]
      %v746 = vld [vmem:[%s713 + $0x18] sm:$0xff]
      %v747 = vld [vmem:[%s713 + $0x20] sm:$0xff]
      %v748 = vld [vmem:[%s713 + $0x28] sm:$0xff]
      %v749 = vld [vmem:[%s713 + $0x30] sm:$0xff]
      %v750 = vld [vmem:[%s713 + $0x38] sm:$0xff]
      %v751 = vld [vmem:[%s713 + $0x40] sm:$0xff]
      %v752 = vld [vmem:[%s713 + $0x48] sm:$0xff]
      %v753 = vld [vmem:[%s713 + $0x50] sm:$0xff]
      %v754 = vld [vmem:[%s713 + $0x58] sm:$0xff]
      %v755 = vpack.c.bf16 %v744, %v743
      %v756 = vpack.c.bf16 %v746, %v745
      %v757 = vpack.c.bf16 %v748, %v747
      %v758 = vpack.c.bf16 %v750, %v749
      %v759 = vpack.c.bf16 %v752, %v751
      %v760 = vpack.c.bf16 %v754, %v753
      %v761 = vld [vmem:[%s3] sm:$0xff]
      %v762 = vld [vmem:[%s3 + $0x8] sm:$0xf]
      %v763 = vld [vmem:[%s3 + $0xc] sm:$0xff]
      %v764 = vld [vmem:[%s3 + $0x14] sm:$0xf]
      %v765 = vld [vmem:[%s3 + $0x18] sm:$0xff]
      %v766 = vld [vmem:[%s3 + $0x20] sm:$0xf]
      %v767 = vld [vmem:[%s3 + $0x24] sm:$0xff]
      %v768 = vld [vmem:[%s3 + $0x2c] sm:$0xf]
      %v769 = vld [vmem:[%s3 + $0x30] sm:$0xff]
      %v770 = vld [vmem:[%s3 + $0x38] sm:$0xf]
      %v771 = vld [vmem:[%s3 + $0x3c] sm:$0xff]
      %v772 = vld [vmem:[%s3 + $0x44] sm:$0xf]
      %v773 = vld [vmem:[%s3 + $0x48] sm:$0xff]
      %v774 = vld [vmem:[%s3 + $0x50] sm:$0xf]
      %v775 = vld [vmem:[%s3 + $0x54] sm:$0xff]
      %v776 = vld [vmem:[%s3 + $0x5c] sm:$0xf]
      %v777 = vld [vmem:[%s3 + $0x60] sm:$0xff]
      %v778 = vld [vmem:[%s3 + $0x68] sm:$0xf]
      %s779 = scalar_lea.vmem %s3, 108
      %v780 = vld [vmem:[%s779] sm:$0xff]
      %v781 = vld [vmem:[%s779 + $0x8] sm:$0xf]
      %v782 = vld [vmem:[%s779 + $0xc] sm:$0xff]
      %v783 = vld [vmem:[%s779 + $0x14] sm:$0xf]
      %v784 = vld [vmem:[%s779 + $0x18] sm:$0xff]
      %v785 = vld [vmem:[%s779 + $0x20] sm:$0xf]
      %v786 = vld [vmem:[%s779 + $0x24] sm:$0xff]
      %v787 = vld [vmem:[%s779 + $0x2c] sm:$0xf]
      %v788 = vld [vmem:[%s779 + $0x30] sm:$0xff]
      %v789 = vld [vmem:[%s779 + $0x38] sm:$0xf]
      %v790 = vld [vmem:[%s779 + $0x3c] sm:$0xff]
      %v791 = vld [vmem:[%s779 + $0x44] sm:$0xf]
      %v792 = vld [vmem:[%s779 + $0x48] sm:$0xff]
      %v793 = vld [vmem:[%s779 + $0x50] sm:$0xf]
      %v794 = vld [vmem:[%s779 + $0x54] sm:$0xff]
      %v795 = vld [vmem:[%s779 + $0x5c] sm:$0xf]
      %v796 = vld [vmem:[%s779 + $0x60] sm:$0xff]
      %v797 = vld [vmem:[%s779 + $0x68] sm:$0xf]
      %v816 = vunpack.c.l.b16 %v780
      %v817 = vunpack.c.h.b16 %v780
      %v818 = vunpack.c.l.b16 %v781
      %v819 = vunpack.c.l.b16 %v782
      %v820 = vunpack.c.h.b16 %v782
      %v821 = vunpack.c.l.b16 %v783
      %v822 = vunpack.c.l.b16 %v784
      %v823 = vunpack.c.h.b16 %v784
      %v824 = vunpack.c.l.b16 %v785
      %v825 = vunpack.c.l.b16 %v786
      %v826 = vunpack.c.h.b16 %v786
      %v827 = vunpack.c.l.b16 %v787
      %v828 = vunpack.c.l.b16 %v788
      %v829 = vunpack.c.h.b16 %v788
      %v830 = vunpack.c.l.b16 %v789
      %v831 = vunpack.c.l.b16 %v790
      %v832 = vunpack.c.h.b16 %v790
      %v833 = vunpack.c.l.b16 %v791
      %v834 = vunpack.c.l.b16 %v792
      %v835 = vunpack.c.h.b16 %v792
      %v836 = vunpack.c.l.b16 %v793
      %v837 = vunpack.c.l.b16 %v794
      %v838 = vunpack.c.h.b16 %v794
      %v839 = vunpack.c.l.b16 %v795
      %v840 = vunpack.c.l.b16 %v796
      %v841 = vunpack.c.h.b16 %v796
      %v842 = vunpack.c.l.b16 %v797
      %v843 = vpack.c.b16 %v819, %v816
      %v844 = vpack.c.b16 %v820, %v817
      %v845 = vpack.c.b16 %v821, %v818
      %v846 = vpack.c.b16 %v825, %v822
      %v847 = vpack.c.b16 %v826, %v823
      %v848 = vpack.c.b16 %v827, %v824
      %v849 = vpack.c.b16 %v831, %v828
      %v850 = vpack.c.b16 %v832, %v829
      %v851 = vpack.c.b16 %v833, %v830
      %v852 = vpack.c.b16 %v837, %v834
      %v853 = vpack.c.b16 %v838, %v835
      %v854 = vpack.c.b16 %v839, %v836
      %v855 = vpack.c.b16 %v840, %v840
      %v856 = vpack.c.b16 %v841, %v841
      %v857 = vpack.c.b16 %v842, %v842
      %vm870 = vcmask 588800
      %v872 = vsel %vm870, %v755, 0
      %v875 = vsel %vm870, %v756, 0
      %v878 = vsel %vm870, %v757, 0
      %v881 = vsel %vm870, %v758, 0
      %v884 = vsel %vm870, %v759, 0
      %v887 = vsel %vm870, %v760, 0
      %vm889 = vcmask 1043456
      %v891 = vsel %vm889, %v855, 0
      %v894 = vsel %vm889, %v856, 0
      %v897 = vsel %vm889, %v857, 0
      %899 = vmatprep.subr.bf16.mxu0 %v844
      %900 = vmatpush1.bf16.msra.mxu0 %v843
      %901 = vmatprep.subr.bf16.mxu0 %v847
      %902 = vmatpush1.bf16.msra.mxu0 %v846
      %903 = vmatprep.subr.bf16.mxu0 %v850
      %904 = vmatpush1.bf16.msra.mxu0 %v849
      %905 = vmatprep.subr.bf16.mxu0 %v853
      %906 = vmatpush1.bf16.msra.mxu0 %v852
      %907 = vmatprep.subr.bf16.mxu0 %v894
      %908 = vmatpush1.bf16.msra.mxu0 %v891
      %909 = vmatprep.subr.bf16.mxu0 0
      %910 = vmatpush1.bf16.msra.mxu0 0
      %911 = vmatprep.subr.bf16.mxu0 0
      %912 = vmatpush1.bf16.msra.mxu0 0
      %913 = vmatprep.subr.bf16.mxu0 0
      %914 = vmatpush1.bf16.msra.mxu0 0
      %915 = vmatprep.subr.bf16.mxu0 0
      %916 = vmatpush1.bf16.msra.mxu0 0
      %917 = vmatprep.subr.bf16.mxu0 0
      %918 = vmatpush1.bf16.msra.mxu0 0
      %919 = vmatprep.subr.bf16.mxu0 0
      %920 = vmatpush1.bf16.msra.mxu0 0
      %921 = vmatprep.subr.bf16.mxu0 0
      %922 = vmatpush1.bf16.msra.mxu0 0
      %923 = vmatprep.subr.bf16.mxu0 0
      %924 = vmatpush1.bf16.msra.mxu0 0
      %925 = vmatprep.subr.bf16.mxu0 0
      %926 = vmatpush1.bf16.msra.mxu0 0
      %927 = vmatprep.subr.bf16.mxu0 0
      %928 = vmatpush1.bf16.msra.mxu0 0
      %929 = vmatprep.subr.bf16.mxu0 0
      %930 = vmatpush1.bf16.msra.mxu0 0
      %931 = vmatprep.mubr.bf16.mxu0 0
      %932 = vmatmul.mubr.bf16.gmra.mrb[0].mxu0 %v872
      %v933 = vpop.f32.mrb[0].mxu0
      %v934 = vadd.f32 0.0, %v933
      %v935 = vpop.f32.mrb[0].mxu0
      %v936 = vadd.f32 0.0, %v935
      %v937 = vpop.f32.mrb[0].mxu0
      %v938 = vadd.f32 0.0, %v937
      %v939 = vpop.f32.mrb[0].mxu0
      %v940 = vadd.f32 0.0, %v939
      %941 = vmatprep.mubr.bf16.mxu0 0
      %942 = vmatmul.mubr.bf16.gmra.mrb[0].mxu0 %v875
      %v943 = vpop.f32.mrb[0].mxu0
      %v944 = vadd.f32 0.0, %v943
      %v945 = vpop.f32.mrb[0].mxu0
      %v946 = vadd.f32 0.0, %v945
      %v947 = vpop.f32.mrb[0].mxu0
      %v948 = vadd.f32 0.0, %v947
      %v949 = vpop.f32.mrb[0].mxu0
      %v950 = vadd.f32 0.0, %v949
      %951 = vmatprep.mubr.bf16.mxu0 0
      %952 = vmatmul.mubr.bf16.gmra.mrb[0].mxu0 %v878
      %v953 = vpop.f32.mrb[0].mxu0
      %v954 = vadd.f32 0.0, %v953
      %v955 = vpop.f32.mrb[0].mxu0
      %v956 = vadd.f32 0.0, %v955
      %v957 = vpop.f32.mrb[0].mxu0
      %v958 = vadd.f32 0.0, %v957
      %v959 = vpop.f32.mrb[0].mxu0
      %v960 = vadd.f32 0.0, %v959
      %961 = vmatprep.mubr.bf16.mxu0 0
      %962 = vmatmul.mubr.bf16.gmra.mrb[0].mxu0 %v881
      %v963 = vpop.f32.mrb[0].mxu0
      %v964 = vadd.f32 0.0, %v963
      %v965 = vpop.f32.mrb[0].mxu0
      %v966 = vadd.f32 0.0, %v965
      %v967 = vpop.f32.mrb[0].mxu0
      %v968 = vadd.f32 0.0, %v967
      %v969 = vpop.f32.mrb[0].mxu0
      %v970 = vadd.f32 0.0, %v969
      %971 = vmatprep.mubr.bf16.mxu0 0
      %972 = vmatmul.mubr.bf16.gmra.mrb[0].mxu0 %v884
      %v973 = vpop.f32.mrb[0].mxu0
      %v974 = vadd.f32 0.0, %v973
      %v975 = vpop.f32.mrb[0].mxu0
      %v976 = vadd.f32 0.0, %v975
      %v977 = vpop.f32.mrb[0].mxu0
      %v978 = vadd.f32 0.0, %v977
      %v979 = vpop.f32.mrb[0].mxu0
      %v980 = vadd.f32 0.0, %v979
      %981 = vmatprep.mubr.bf16.mxu0 0
      %982 = vmatmul.mubr.bf16.gmra.mrb[0].mxu0 %v887
      %v983 = vpop.f32.mrb[0].mxu0
      %v984 = vadd.f32 0.0, %v983
      %v985 = vpop.f32.mrb[0].mxu0
      %v986 = vadd.f32 0.0, %v985
      %v987 = vpop.f32.mrb[0].mxu0
      %v988 = vadd.f32 0.0, %v987
      %v989 = vpop.f32.mrb[0].mxu0
      %v990 = vadd.f32 0.0, %v989
      %991 = vdwg.mxu0
      %992 = vmatprep.subr.bf16.mxu0 0
      %993 = vmatpush1.bf16.msra.mxu0 %v845
      %994 = vmatprep.subr.bf16.mxu0 0
      %995 = vmatpush1.bf16.msra.mxu0 %v848
      %996 = vmatprep.subr.bf16.mxu0 0
      %997 = vmatpush1.bf16.msra.mxu0 %v851
      %998 = vmatprep.subr.bf16.mxu0 0
      %999 = vmatpush1.bf16.msra.mxu0 %v854
      %1000 = vmatprep.subr.bf16.mxu0 0
      %1001 = vmatpush1.bf16.msra.mxu0 %v897
      %1002 = vmatprep.subr.bf16.mxu0 0
      %1003 = vmatpush1.bf16.msra.mxu0 0
      %1004 = vmatprep.subr.bf16.mxu0 0
      %1005 = vmatpush1.bf16.msra.mxu0 0
      %1006 = vmatprep.subr.bf16.mxu0 0
      %1007 = vmatpush1.bf16.msra.mxu0 0
      %1008 = vmatprep.subr.bf16.mxu0 0
      %1009 = vmatpush1.bf16.msra.mxu0 0
      %1010 = vmatprep.subr.bf16.mxu0 0
      %1011 = vmatpush1.bf16.msra.mxu0 0
      %1012 = vmatprep.subr.bf16.mxu0 0
      %1013 = vmatpush1.bf16.msra.mxu0 0
      %1014 = vmatprep.subr.bf16.mxu0 0
      %1015 = vmatpush1.bf16.msra.mxu0 0
      %1016 = vmatprep.subr.bf16.mxu0 0
      %1017 = vmatpush1.bf16.msra.mxu0 0
      %1018 = vmatprep.subr.bf16.mxu0 0
      %1019 = vmatpush1.bf16.msra.mxu0 0
      %1020 = vmatprep.subr.bf16.mxu0 0
      %1021 = vmatpush1.bf16.msra.mxu0 0
      %1022 = vmatprep.subr.bf16.mxu0 0
      %1023 = vmatpush1.bf16.msra.mxu0 0
      %1024 = vmatprep.mubr.bf16.mxu0 0
      %1025 = vmatmul.mubr.bf16.gmra.mrb[0].mxu0 %v872
      %v1026 = vpop.f32.mrb[0].mxu0
      %v1027 = vadd.f32 0.0, %v1026
      %v1028 = vpop.f32.mrb[0].mxu0
      %v1029 = vpop.f32.mrb[0].mxu0
      %v1030 = vadd.f32 0.0, %v1029
      %v1031 = vpop.f32.mrb[0].mxu0
      %1032 = vmatprep.mubr.bf16.mxu0 0
      %1033 = vmatmul.mubr.bf16.gmra.mrb[0].mxu0 %v875
      %v1034 = vpop.f32.mrb[0].mxu0
      %v1035 = vadd.f32 0.0, %v1034
      %v1036 = vpop.f32.mrb[0].mxu0
      %v1037 = vpop.f32.mrb[0].mxu0
      %v1038 = vadd.f32 0.0, %v1037
      %v1039 = vpop.f32.mrb[0].mxu0
      %1040 = vmatprep.mubr.bf16.mxu0 0
      %1041 = vmatmul.mubr.bf16.gmra.mrb[0].mxu0 %v878
      %v1042 = vpop.f32.mrb[0].mxu0
      %v1043 = vadd.f32 0.0, %v1042
      %v1044 = vpop.f32.mrb[0].mxu0
      %v1045 = vpop.f32.mrb[0].mxu0
      %v1046 = vadd.f32 0.0, %v1045
      %v1047 = vpop.f32.mrb[0].mxu0
      %1048 = vmatprep.mubr.bf16.mxu0 0
      %1049 = vmatmul.mubr.bf16.gmra.mrb[0].mxu0 %v881
      %v1050 = vpop.f32.mrb[0].mxu0
      %v1051 = vadd.f32 0.0, %v1050
      %v1052 = vpop.f32.mrb[0].mxu0
      %v1053 = vpop.f32.mrb[0].mxu0
      %v1054 = vadd.f32 0.0, %v1053
      %v1055 = vpop.f32.mrb[0].mxu0
      %1056 = vmatprep.mubr.bf16.mxu0 0
      %1057 = vmatmul.mubr.bf16.gmra.mrb[0].mxu0 %v884
      %v1058 = vpop.f32.mrb[0].mxu0
      %v1059 = vadd.f32 0.0, %v1058
      %v1060 = vpop.f32.mrb[0].mxu0
      %v1061 = vpop.f32.mrb[0].mxu0
      %v1062 = vadd.f32 0.0, %v1061
      %v1063 = vpop.f32.mrb[0].mxu0
      %1064 = vmatprep.mubr.bf16.mxu0 0
      %1065 = vmatmul.mubr.bf16.gmra.mrb[0].mxu0 %v887
      %v1066 = vpop.f32.mrb[0].mxu0
      %v1067 = vadd.f32 0.0, %v1066
      %v1068 = vpop.f32.mrb[0].mxu0
      %v1069 = vpop.f32.mrb[0].mxu0
      %v1070 = vadd.f32 0.0, %v1069
      %v1071 = vpop.f32.mrb[0].mxu0
      %1072 = vdwg.mxu0
      %v1091 = vunpack.c.l.b16 %v761
      %v1092 = vunpack.c.h.b16 %v761
      %v1093 = vunpack.c.l.b16 %v762
      %v1094 = vunpack.c.l.b16 %v763
      %v1095 = vunpack.c.h.b16 %v763
      %v1096 = vunpack.c.l.b16 %v764
      %v1097 = vunpack.c.l.b16 %v765
      %v1098 = vunpack.c.h.b16 %v765
      %v1099 = vunpack.c.l.b16 %v766
      %v1100 = vunpack.c.l.b16 %v767
      %v1101 = vunpack.c.h.b16 %v767
      %v1102 = vunpack.c.l.b16 %v768
      %v1103 = vunpack.c.l.b16 %v769
      %v1104 = vunpack.c.h.b16 %v769
      %v1105 = vunpack.c.l.b16 %v770
      %v1106 = vunpack.c.l.b16 %v771
      %v1107 = vunpack.c.h.b16 %v771
      %v1108 = vunpack.c.l.b16 %v772
      %v1109 = vunpack.c.l.b16 %v773
      %v1110 = vunpack.c.h.b16 %v773
      %v1111 = vunpack.c.l.b16 %v774
      %v1112 = vunpack.c.l.b16 %v775
      %v1113 = vunpack.c.h.b16 %v775
      %v1114 = vunpack.c.l.b16 %v776
      %v1115 = vunpack.c.l.b16 %v777
      %v1116 = vunpack.c.h.b16 %v777
      %v1117 = vunpack.c.l.b16 %v778
      %v1118 = vpack.c.b16 %v1094, %v1091
      %v1119 = vpack.c.b16 %v1095, %v1092
      %v1120 = vpack.c.b16 %v1096, %v1093
      %v1121 = vpack.c.b16 %v1100, %v1097
      %v1122 = vpack.c.b16 %v1101, %v1098
      %v1123 = vpack.c.b16 %v1102, %v1099
      %v1124 = vpack.c.b16 %v1106, %v1103
      %v1125 = vpack.c.b16 %v1107, %v1104
      %v1126 = vpack.c.b16 %v1108, %v1105
      %v1127 = vpack.c.b16 %v1112, %v1109
      %v1128 = vpack.c.b16 %v1113, %v1110
      %v1129 = vpack.c.b16 %v1114, %v1111
      %v1130 = vpack.c.b16 %v1115, %v1115
      %v1131 = vpack.c.b16 %v1116, %v1116
      %v1132 = vpack.c.b16 %v1117, %v1117
      %v1146 = vsel %vm870, %v737, 0
      %v1149 = vsel %vm870, %v738, 0
      %v1152 = vsel %vm870, %v739, 0
      %v1155 = vsel %vm870, %v740, 0
      %v1158 = vsel %vm870, %v741, 0
      %v1161 = vsel %vm870, %v742, 0
      %v1164 = vsel %vm889, %v1130, 0
      %v1167 = vsel %vm889, %v1131, 0
      %v1170 = vsel %vm889, %v1132, 0
      %1172 = vmatprep.subr.bf16.mxu0 %v1119
      %1173 = vmatpush1.bf16.msra.mxu0 %v1118
      %1174 = vmatprep.subr.bf16.mxu0 %v1122
      %1175 = vmatpush1.bf16.msra.mxu0 %v1121
      %1176 = vmatprep.subr.bf16.mxu0 %v1125
      %1177 = vmatpush1.bf16.msra.mxu0 %v1124
      %1178 = vmatprep.subr.bf16.mxu0 %v1128
      %1179 = vmatpush1.bf16.msra.mxu0 %v1127
      %1180 = vmatprep.subr.bf16.mxu0 %v1167
      %1181 = vmatpush1.bf16.msra.mxu0 %v1164
      %1182 = vmatprep.subr.bf16.mxu0 0
      %1183 = vmatpush1.bf16.msra.mxu0 0
      %1184 = vmatprep.subr.bf16.mxu0 0
      %1185 = vmatpush1.bf16.msra.mxu0 0
      %1186 = vmatprep.subr.bf16.mxu0 0
      %1187 = vmatpush1.bf16.msra.mxu0 0
      %1188 = vmatprep.subr.bf16.mxu0 0
      %1189 = vmatpush1.bf16.msra.mxu0 0
      %1190 = vmatprep.subr.bf16.mxu0 0
      %1191 = vmatpush1.bf16.msra.mxu0 0
      %1192 = vmatprep.subr.bf16.mxu0 0
      %1193 = vmatpush1.bf16.msra.mxu0 0
      %1194 = vmatprep.subr.bf16.mxu0 0
      %1195 = vmatpush1.bf16.msra.mxu0 0
      %1196 = vmatprep.subr.bf16.mxu0 0
      %1197 = vmatpush1.bf16.msra.mxu0 0
      %1198 = vmatprep.subr.bf16.mxu0 0
      %1199 = vmatpush1.bf16.msra.mxu0 0
      %1200 = vmatprep.subr.bf16.mxu0 0
      %1201 = vmatpush1.bf16.msra.mxu0 0
      %1202 = vmatprep.subr.bf16.mxu0 0
      %1203 = vmatpush1.bf16.msra.mxu0 0
      %1204 = vmatprep.mubr.bf16.mxu0 0
      %1205 = vmatmul.mubr.bf16.gmra.mrb[0].mxu0 %v1146
      %v1206 = vpop.f32.mrb[0].mxu0
      %v1207 = vadd.f32 %v934, %v1206
      %v1208 = vpop.f32.mrb[0].mxu0
      %v1209 = vadd.f32 %v936, %v1208
      %v1210 = vpop.f32.mrb[0].mxu0
      %v1211 = vadd.f32 %v938, %v1210
      %v1212 = vpop.f32.mrb[0].mxu0
      %v1213 = vadd.f32 %v940, %v1212
      %1214 = vmatprep.mubr.bf16.mxu0 0
      %1215 = vmatmul.mubr.bf16.gmra.mrb[0].mxu0 %v1149
      %v1216 = vpop.f32.mrb[0].mxu0
      %v1217 = vadd.f32 %v944, %v1216
      %v1218 = vpop.f32.mrb[0].mxu0
      %v1219 = vadd.f32 %v946, %v1218
      %v1220 = vpop.f32.mrb[0].mxu0
      %v1221 = vadd.f32 %v948, %v1220
      %v1222 = vpop.f32.mrb[0].mxu0
      %v1223 = vadd.f32 %v950, %v1222
      %1224 = vmatprep.mubr.bf16.mxu0 0
      %1225 = vmatmul.mubr.bf16.gmra.mrb[0].mxu0 %v1152
      %v1226 = vpop.f32.mrb[0].mxu0
      %v1227 = vadd.f32 %v954, %v1226
      %v1228 = vpop.f32.mrb[0].mxu0
      %v1229 = vadd.f32 %v956, %v1228
      %v1230 = vpop.f32.mrb[0].mxu0
      %v1231 = vadd.f32 %v958, %v1230
      %v1232 = vpop.f32.mrb[0].mxu0
      %v1233 = vadd.f32 %v960, %v1232
      %1234 = vmatprep.mubr.bf16.mxu0 0
      %1235 = vmatmul.mubr.bf16.gmra.mrb[0].mxu0 %v1155
      %v1236 = vpop.f32.mrb[0].mxu0
      %v1237 = vadd.f32 %v964, %v1236
      %v1238 = vpop.f32.mrb[0].mxu0
      %v1239 = vadd.f32 %v966, %v1238
      %v1240 = vpop.f32.mrb[0].mxu0
      %v1241 = vadd.f32 %v968, %v1240
      %v1242 = vpop.f32.mrb[0].mxu0
      %v1243 = vadd.f32 %v970, %v1242
      %1244 = vmatprep.mubr.bf16.mxu0 0
      %1245 = vmatmul.mubr.bf16.gmra.mrb[0].mxu0 %v1158
      %v1246 = vpop.f32.mrb[0].mxu0
      %v1247 = vadd.f32 %v974, %v1246
      %v1248 = vpop.f32.mrb[0].mxu0
      %v1249 = vadd.f32 %v976, %v1248
      %v1250 = vpop.f32.mrb[0].mxu0
      %v1251 = vadd.f32 %v978, %v1250
      %v1252 = vpop.f32.mrb[0].mxu0
      %v1253 = vadd.f32 %v980, %v1252
      %1254 = vmatprep.mubr.bf16.mxu0 0
      %1255 = vmatmul.mubr.bf16.gmra.mrb[0].mxu0 %v1161
      %v1256 = vpop.f32.mrb[0].mxu0
      %v1257 = vadd.f32 %v984, %v1256
      %v1258 = vpop.f32.mrb[0].mxu0
      %v1259 = vadd.f32 %v986, %v1258
      %v1260 = vpop.f32.mrb[0].mxu0
      %v1261 = vadd.f32 %v988, %v1260
      %v1262 = vpop.f32.mrb[0].mxu0
      %v1263 = vadd.f32 %v990, %v1262
      %1264 = vdwg.mxu0
      %1265 = vmatprep.subr.bf16.mxu0 0
      %1266 = vmatpush1.bf16.msra.mxu0 %v1120
      %1267 = vmatprep.subr.bf16.mxu0 0
      %1268 = vmatpush1.bf16.msra.mxu0 %v1123
      %1269 = vmatprep.subr.bf16.mxu0 0
      %1270 = vmatpush1.bf16.msra.mxu0 %v1126
      %1271 = vmatprep.subr.bf16.mxu0 0
      %1272 = vmatpush1.bf16.msra.mxu0 %v1129
      %1273 = vmatprep.subr.bf16.mxu0 0
      %1274 = vmatpush1.bf16.msra.mxu0 %v1170
      %1275 = vmatprep.subr.bf16.mxu0 0
      %1276 = vmatpush1.bf16.msra.mxu0 0
      %1277 = vmatprep.subr.bf16.mxu0 0
      %1278 = vmatpush1.bf16.msra.mxu0 0
      %1279 = vmatprep.subr.bf16.mxu0 0
      %1280 = vmatpush1.bf16.msra.mxu0 0
      %1281 = vmatprep.subr.bf16.mxu0 0
      %1282 = vmatpush1.bf16.msra.mxu0 0
      %1283 = vmatprep.subr.bf16.mxu0 0
      %1284 = vmatpush1.bf16.msra.mxu0 0
      %1285 = vmatprep.subr.bf16.mxu0 0
      %1286 = vmatpush1.bf16.msra.mxu0 0
      %1287 = vmatprep.subr.bf16.mxu0 0
      %1288 = vmatpush1.bf16.msra.mxu0 0
      %1289 = vmatprep.subr.bf16.mxu0 0
      %1290 = vmatpush1.bf16.msra.mxu0 0
      %1291 = vmatprep.subr.bf16.mxu0 0
      %1292 = vmatpush1.bf16.msra.mxu0 0
      %1293 = vmatprep.subr.bf16.mxu0 0
      %1294 = vmatpush1.bf16.msra.mxu0 0
      %1295 = vmatprep.subr.bf16.mxu0 0
      %1296 = vmatpush1.bf16.msra.mxu0 0
      %1297 = vmatprep.mubr.bf16.mxu0 0
      %1298 = vmatmul.mubr.bf16.gmra.mrb[0].mxu0 %v1146
      %v1299 = vpop.f32.mrb[0].mxu0
      %v1300 = vadd.f32 %v1027, %v1299
      %v1301 = vpop.f32.mrb[0].mxu0
      %v1302 = vpop.f32.mrb[0].mxu0
      %v1303 = vadd.f32 %v1030, %v1302
      %v1304 = vpop.f32.mrb[0].mxu0
      %1305 = vmatprep.mubr.bf16.mxu0 0
      %1306 = vmatmul.mubr.bf16.gmra.mrb[0].mxu0 %v1149
      %v1307 = vpop.f32.mrb[0].mxu0
      %v1308 = vadd.f32 %v1035, %v1307
      %v1309 = vpop.f32.mrb[0].mxu0
      %v1310 = vpop.f32.mrb[0].mxu0
      %v1311 = vadd.f32 %v1038, %v1310
      %v1312 = vpop.f32.mrb[0].mxu0
      %1313 = vmatprep.mubr.bf16.mxu0 0
      %1314 = vmatmul.mubr.bf16.gmra.mrb[0].mxu0 %v1152
      %v1315 = vpop.f32.mrb[0].mxu0
      %v1316 = vadd.f32 %v1043, %v1315
      %v1317 = vpop.f32.mrb[0].mxu0
      %v1318 = vpop.f32.mrb[0].mxu0
      %v1319 = vadd.f32 %v1046, %v1318
      %v1320 = vpop.f32.mrb[0].mxu0
      %1321 = vmatprep.mubr.bf16.mxu0 0
      %1322 = vmatmul.mubr.bf16.gmra.mrb[0].mxu0 %v1155
      %v1323 = vpop.f32.mrb[0].mxu0
      %v1324 = vadd.f32 %v1051, %v1323
      %v1325 = vpop.f32.mrb[0].mxu0
      %v1326 = vpop.f32.mrb[0].mxu0
      %v1327 = vadd.f32 %v1054, %v1326
      %v1328 = vpop.f32.mrb[0].mxu0
      %1329 = vmatprep.mubr.bf16.mxu0 0
      %1330 = vmatmul.mubr.bf16.gmra.mrb[0].mxu0 %v1158
      %v1331 = vpop.f32.mrb[0].mxu0
      %v1332 = vadd.f32 %v1059, %v1331
      %v1333 = vpop.f32.mrb[0].mxu0
      %v1334 = vpop.f32.mrb[0].mxu0
      %v1335 = vadd.f32 %v1062, %v1334
      %v1336 = vpop.f32.mrb[0].mxu0
      %1337 = vmatprep.mubr.bf16.mxu0 0
      %1338 = vmatmul.mubr.bf16.gmra.mrb[0].mxu0 %v1161
      %v1339 = vpop.f32.mrb[0].mxu0
      %v1340 = vadd.f32 %v1067, %v1339
      %v1341 = vpop.f32.mrb[0].mxu0
      %v1342 = vpop.f32.mrb[0].mxu0
      %v1343 = vadd.f32 %v1070, %v1342
      %v1344 = vpop.f32.mrb[0].mxu0
      %1345 = vdwg.mxu0
      %s1346 = scalar_lea.vmem %s3, 216
      %v1347 = vld [vmem:[%s1346] sm:$0xff]
      %v1348 = vld [vmem:[%s1346 + $0x8] sm:$0xf]
      %v1349 = vld [vmem:[%s1346 + $0xc] sm:$0xff]
      %v1350 = vld [vmem:[%s1346 + $0x14] sm:$0xf]
      %v1351 = vld [vmem:[%s1346 + $0x18] sm:$0xff]
      %v1352 = vld [vmem:[%s1346 + $0x20] sm:$0xf]
      %v1353 = vld [vmem:[%s1346 + $0x24] sm:$0xff]
      %v1354 = vld [vmem:[%s1346 + $0x2c] sm:$0xf]
      %v1355 = vld [vmem:[%s1346 + $0x30] sm:$0xff]
      %v1356 = vld [vmem:[%s1346 + $0x38] sm:$0xf]
      %v1357 = vld [vmem:[%s1346 + $0x3c] sm:$0xff]
      %v1358 = vld [vmem:[%s1346 + $0x44] sm:$0xf]
      %v1359 = vld [vmem:[%s1346 + $0x48] sm:$0xff]
      %v1360 = vld [vmem:[%s1346 + $0x50] sm:$0xf]
      %v1361 = vld [vmem:[%s1346 + $0x54] sm:$0xff]
      %v1362 = vld [vmem:[%s1346 + $0x5c] sm:$0xf]
      %v1363 = vld [vmem:[%s1346 + $0x60] sm:$0xff]
      %v1364 = vld [vmem:[%s1346 + $0x68] sm:$0xf]
      %vm1365 = vsmask.f32 7424
      %v1366 = vshrl.u32 %v737, 16
      %v1368 = vshll.u32 %v737, 16
      %v1370 = vrot.slane %v1368, 1
      %v1371 = vor.u32 %v1366, %v1370
      %v1372 = vshll.u32 %v738, 16
      %v1374 = vrot.slane %v1372, 1
      %v1375 = vsel %vm1365, %v1371, %v1374
      %v1376 = vshrl.u32 %v738, 16
      %v1378 = vor.u32 %v1376, %v1374
      %v1379 = vshll.u32 %v739, 16
      %v1381 = vrot.slane %v1379, 1
      %v1382 = vsel %vm1365, %v1378, %v1381
      %v1383 = vshrl.u32 %v739, 16
      %v1385 = vor.u32 %v1383, %v1381
      %v1386 = vshll.u32 %v740, 16
      %v1388 = vrot.slane %v1386, 1
      %v1389 = vsel %vm1365, %v1385, %v1388
      %v1390 = vshrl.u32 %v740, 16
      %v1392 = vor.u32 %v1390, %v1388
      %v1393 = vshll.u32 %v741, 16
      %v1395 = vrot.slane %v1393, 1
      %v1396 = vsel %vm1365, %v1392, %v1395
      %v1397 = vshrl.u32 %v741, 16
      %v1399 = vor.u32 %v1397, %v1395
      %v1400 = vshll.u32 %v742, 16
      %v1402 = vrot.slane %v1400, 1
      %v1403 = vsel %vm1365, %v1399, %v1402
      %v1404 = vshrl.u32 %v742, 16
      %v1406 = vor.u32 %v1404, %v1402
      %v1425 = vunpack.c.l.b16 %v1347
      %v1426 = vunpack.c.h.b16 %v1347
      %v1427 = vunpack.c.l.b16 %v1348
      %v1428 = vunpack.c.l.b16 %v1349
      %v1429 = vunpack.c.h.b16 %v1349
      %v1430 = vunpack.c.l.b16 %v1350
      %v1431 = vunpack.c.l.b16 %v1351
      %v1432 = vunpack.c.h.b16 %v1351
      %v1433 = vunpack.c.l.b16 %v1352
      %v1434 = vunpack.c.l.b16 %v1353
      %v1435 = vunpack.c.h.b16 %v1353
      %v1436 = vunpack.c.l.b16 %v1354
      %v1437 = vunpack.c.l.b16 %v1355
      %v1438 = vunpack.c.h.b16 %v1355
      %v1439 = vunpack.c.l.b16 %v1356
      %v1440 = vunpack.c.l.b16 %v1357
      %v1441 = vunpack.c.h.b16 %v1357
      %v1442 = vunpack.c.l.b16 %v1358
      %v1443 = vunpack.c.l.b16 %v1359
      %v1444 = vunpack.c.h.b16 %v1359
      %v1445 = vunpack.c.l.b16 %v1360
      %v1446 = vunpack.c.l.b16 %v1361
      %v1447 = vunpack.c.h.b16 %v1361
      %v1448 = vunpack.c.l.b16 %v1362
      %v1449 = vunpack.c.l.b16 %v1363
      %v1450 = vunpack.c.h.b16 %v1363
      %v1451 = vunpack.c.l.b16 %v1364
      %v1452 = vpack.c.b16 %v1428, %v1425
      %v1453 = vpack.c.b16 %v1429, %v1426
      %v1454 = vpack.c.b16 %v1430, %v1427
      %v1455 = vpack.c.b16 %v1434, %v1431
      %v1456 = vpack.c.b16 %v1435, %v1432
      %v1457 = vpack.c.b16 %v1436, %v1433
      %v1458 = vpack.c.b16 %v1440, %v1437
      %v1459 = vpack.c.b16 %v1441, %v1438
      %v1460 = vpack.c.b16 %v1442, %v1439
      %v1461 = vpack.c.b16 %v1446, %v1443
      %v1462 = vpack.c.b16 %v1447, %v1444
      %v1463 = vpack.c.b16 %v1448, %v1445
      %v1464 = vpack.c.b16 %v1449, %v1449
      %v1465 = vpack.c.b16 %v1450, %v1450
      %v1466 = vpack.c.b16 %v1451, %v1451
      %v1480 = vsel %vm870, %v1375, 0
      %v1483 = vsel %vm870, %v1382, 0
      %v1486 = vsel %vm870, %v1389, 0
      %v1489 = vsel %vm870, %v1396, 0
      %v1492 = vsel %vm870, %v1403, 0
      %v1495 = vsel %vm870, %v1406, 0
      %v1498 = vsel %vm889, %v1464, 0
      %v1501 = vsel %vm889, %v1465, 0
      %v1504 = vsel %vm889, %v1466, 0
      %1506 = vmatprep.subr.bf16.mxu0 %v1453
      %1507 = vmatpush1.bf16.msra.mxu0 %v1452
      %1508 = vmatprep.subr.bf16.mxu0 %v1456
      %1509 = vmatpush1.bf16.msra.mxu0 %v1455
      %1510 = vmatprep.subr.bf16.mxu0 %v1459
      %1511 = vmatpush1.bf16.msra.mxu0 %v1458
      %1512 = vmatprep.subr.bf16.mxu0 %v1462
      %1513 = vmatpush1.bf16.msra.mxu0 %v1461
      %1514 = vmatprep.subr.bf16.mxu0 %v1501
      %1515 = vmatpush1.bf16.msra.mxu0 %v1498
      %1516 = vmatprep.subr.bf16.mxu0 0
      %1517 = vmatpush1.bf16.msra.mxu0 0
      %1518 = vmatprep.subr.bf16.mxu0 0
      %1519 = vmatpush1.bf16.msra.mxu0 0
      %1520 = vmatprep.subr.bf16.mxu0 0
      %1521 = vmatpush1.bf16.msra.mxu0 0
      %1522 = vmatprep.subr.bf16.mxu0 0
      %1523 = vmatpush1.bf16.msra.mxu0 0
      %1524 = vmatprep.subr.bf16.mxu0 0
      %1525 = vmatpush1.bf16.msra.mxu0 0
      %1526 = vmatprep.subr.bf16.mxu0 0
      %1527 = vmatpush1.bf16.msra.mxu0 0
      %1528 = vmatprep.subr.bf16.mxu0 0
      %1529 = vmatpush1.bf16.msra.mxu0 0
      %1530 = vmatprep.subr.bf16.mxu0 0
      %1531 = vmatpush1.bf16.msra.mxu0 0
      %1532 = vmatprep.subr.bf16.mxu0 0
      %1533 = vmatpush1.bf16.msra.mxu0 0
      %1534 = vmatprep.subr.bf16.mxu0 0
      %1535 = vmatpush1.bf16.msra.mxu0 0
      %1536 = vmatprep.subr.bf16.mxu0 0
      %1537 = vmatpush1.bf16.msra.mxu0 0
      %1538 = vmatprep.mubr.bf16.mxu0 0
      %1539 = vmatmul.mubr.bf16.gmra.mrb[0].mxu0 %v1480
      %v1540 = vpop.f32.mrb[0].mxu0
      %v1541 = vadd.f32 0.0, %v1540
      %v1542 = vpop.f32.mrb[0].mxu0
      %v1543 = vadd.f32 0.0, %v1542
      %v1544 = vpop.f32.mrb[0].mxu0
      %v1545 = vadd.f32 0.0, %v1544
      %v1546 = vpop.f32.mrb[0].mxu0
      %v1547 = vadd.f32 0.0, %v1546
      %1548 = vmatprep.mubr.bf16.mxu0 0
      %1549 = vmatmul.mubr.bf16.gmra.mrb[0].mxu0 %v1483
      %v1550 = vpop.f32.mrb[0].mxu0
      %v1551 = vadd.f32 0.0, %v1550
      %v1552 = vpop.f32.mrb[0].mxu0
      %v1553 = vadd.f32 0.0, %v1552
      %v1554 = vpop.f32.mrb[0].mxu0
      %v1555 = vadd.f32 0.0, %v1554
      %v1556 = vpop.f32.mrb[0].mxu0
      %v1557 = vadd.f32 0.0, %v1556
      %1558 = vmatprep.mubr.bf16.mxu0 0
      %1559 = vmatmul.mubr.bf16.gmra.mrb[0].mxu0 %v1486
      %v1560 = vpop.f32.mrb[0].mxu0
      %v1561 = vadd.f32 0.0, %v1560
      %v1562 = vpop.f32.mrb[0].mxu0
      %v1563 = vadd.f32 0.0, %v1562
      %v1564 = vpop.f32.mrb[0].mxu0
      %v1565 = vadd.f32 0.0, %v1564
      %v1566 = vpop.f32.mrb[0].mxu0
      %v1567 = vadd.f32 0.0, %v1566
      %1568 = vmatprep.mubr.bf16.mxu0 0
      %1569 = vmatmul.mubr.bf16.gmra.mrb[0].mxu0 %v1489
      %v1570 = vpop.f32.mrb[0].mxu0
      %v1571 = vadd.f32 0.0, %v1570
      %v1572 = vpop.f32.mrb[0].mxu0
      %v1573 = vadd.f32 0.0, %v1572
      %v1574 = vpop.f32.mrb[0].mxu0
      %v1575 = vadd.f32 0.0, %v1574
      %v1576 = vpop.f32.mrb[0].mxu0
      %v1577 = vadd.f32 0.0, %v1576
      %1578 = vmatprep.mubr.bf16.mxu0 0
      %1579 = vmatmul.mubr.bf16.gmra.mrb[0].mxu0 %v1492
      %v1580 = vpop.f32.mrb[0].mxu0
      %v1581 = vadd.f32 0.0, %v1580
      %v1582 = vpop.f32.mrb[0].mxu0
      %v1583 = vadd.f32 0.0, %v1582
      %v1584 = vpop.f32.mrb[0].mxu0
      %v1585 = vadd.f32 0.0, %v1584
      %v1586 = vpop.f32.mrb[0].mxu0
      %v1587 = vadd.f32 0.0, %v1586
      %1588 = vmatprep.mubr.bf16.mxu0 0
      %1589 = vmatmul.mubr.bf16.gmra.mrb[0].mxu0 %v1495
      %v1590 = vpop.f32.mrb[0].mxu0
      %v1591 = vadd.f32 0.0, %v1590
      %v1592 = vpop.f32.mrb[0].mxu0
      %v1593 = vadd.f32 0.0, %v1592
      %v1594 = vpop.f32.mrb[0].mxu0
      %v1595 = vadd.f32 0.0, %v1594
      %v1596 = vpop.f32.mrb[0].mxu0
      %v1597 = vadd.f32 0.0, %v1596
      %1598 = vdwg.mxu0
      %1599 = vmatprep.subr.bf16.mxu0 0
      %1600 = vmatpush1.bf16.msra.mxu0 %v1454
      %1601 = vmatprep.subr.bf16.mxu0 0
      %1602 = vmatpush1.bf16.msra.mxu0 %v1457
      %1603 = vmatprep.subr.bf16.mxu0 0
      %1604 = vmatpush1.bf16.msra.mxu0 %v1460
      %1605 = vmatprep.subr.bf16.mxu0 0
      %1606 = vmatpush1.bf16.msra.mxu0 %v1463
      %1607 = vmatprep.subr.bf16.mxu0 0
      %1608 = vmatpush1.bf16.msra.mxu0 %v1504
      %1609 = vmatprep.subr.bf16.mxu0 0
      %1610 = vmatpush1.bf16.msra.mxu0 0
      %1611 = vmatprep.subr.bf16.mxu0 0
      %1612 = vmatpush1.bf16.msra.mxu0 0
      %1613 = vmatprep.subr.bf16.mxu0 0
      %1614 = vmatpush1.bf16.msra.mxu0 0
      %1615 = vmatprep.subr.bf16.mxu0 0
      %1616 = vmatpush1.bf16.msra.mxu0 0
      %1617 = vmatprep.subr.bf16.mxu0 0
      %1618 = vmatpush1.bf16.msra.mxu0 0
      %1619 = vmatprep.subr.bf16.mxu0 0
      %1620 = vmatpush1.bf16.msra.mxu0 0
      %1621 = vmatprep.subr.bf16.mxu0 0
      %1622 = vmatpush1.bf16.msra.mxu0 0
      %1623 = vmatprep.subr.bf16.mxu0 0
      %1624 = vmatpush1.bf16.msra.mxu0 0
      %1625 = vmatprep.subr.bf16.mxu0 0
      %1626 = vmatpush1.bf16.msra.mxu0 0
      %1627 = vmatprep.subr.bf16.mxu0 0
      %1628 = vmatpush1.bf16.msra.mxu0 0
      %1629 = vmatprep.subr.bf16.mxu0 0
      %1630 = vmatpush1.bf16.msra.mxu0 0
      %1631 = vmatprep.mubr.bf16.mxu0 0
      %1632 = vmatmul.mubr.bf16.gmra.mrb[0].mxu0 %v1480
      %v1633 = vpop.f32.mrb[0].mxu0
      %v1634 = vadd.f32 0.0, %v1633
      %v1635 = vpop.f32.mrb[0].mxu0
      %v1636 = vpop.f32.mrb[0].mxu0
      %v1637 = vadd.f32 0.0, %v1636
      %v1638 = vpop.f32.mrb[0].mxu0
      %1639 = vmatprep.mubr.bf16.mxu0 0
      %1640 = vmatmul.mubr.bf16.gmra.mrb[0].mxu0 %v1483
      %v1641 = vpop.f32.mrb[0].mxu0
      %v1642 = vadd.f32 0.0, %v1641
      %v1643 = vpop.f32.mrb[0].mxu0
      %v1644 = vpop.f32.mrb[0].mxu0
      %v1645 = vadd.f32 0.0, %v1644
      %v1646 = vpop.f32.mrb[0].mxu0
      %1647 = vmatprep.mubr.bf16.mxu0 0
      %1648 = vmatmul.mubr.bf16.gmra.mrb[0].mxu0 %v1486
      %v1649 = vpop.f32.mrb[0].mxu0
      %v1650 = vadd.f32 0.0, %v1649
      %v1651 = vpop.f32.mrb[0].mxu0
      %v1652 = vpop.f32.mrb[0].mxu0
      %v1653 = vadd.f32 0.0, %v1652
      %v1654 = vpop.f32.mrb[0].mxu0
      %1655 = vmatprep.mubr.bf16.mxu0 0
      %1656 = vmatmul.mubr.bf16.gmra.mrb[0].mxu0 %v1489
      %v1657 = vpop.f32.mrb[0].mxu0
      %v1658 = vadd.f32 0.0, %v1657
      %v1659 = vpop.f32.mrb[0].mxu0
      %v1660 = vpop.f32.mrb[0].mxu0
      %v1661 = vadd.f32 0.0, %v1660
      %v1662 = vpop.f32.mrb[0].mxu0
      %1663 = vmatprep.mubr.bf16.mxu0 0
      %1664 = vmatmul.mubr.bf16.gmra.mrb[0].mxu0 %v1492
      %v1665 = vpop.f32.mrb[0].mxu0
      %v1666 = vadd.f32 0.0, %v1665
      %v1667 = vpop.f32.mrb[0].mxu0
      %v1668 = vpop.f32.mrb[0].mxu0
      %v1669 = vadd.f32 0.0, %v1668
      %v1670 = vpop.f32.mrb[0].mxu0
      %1671 = vmatprep.mubr.bf16.mxu0 0
      %1672 = vmatmul.mubr.bf16.gmra.mrb[0].mxu0 %v1495
      %v1673 = vpop.f32.mrb[0].mxu0
      %v1674 = vadd.f32 0.0, %v1673
      %v1675 = vpop.f32.mrb[0].mxu0
      %v1676 = vpop.f32.mrb[0].mxu0
      %v1677 = vadd.f32 0.0, %v1676
      %v1678 = vpop.f32.mrb[0].mxu0
      %1679 = vdwg.mxu0
      %v1680 = vadd.f32 %v1207, %v1541
      %v1681 = vadd.f32 %v1209, %v1543
      %v1682 = vadd.f32 %v1300, %v1634
      %v1683 = vadd.f32 %v1211, %v1545
      %v1684 = vadd.f32 %v1213, %v1547
      %v1685 = vadd.f32 %v1303, %v1637
      %v1686 = vadd.f32 %v1217, %v1551
      %v1687 = vadd.f32 %v1219, %v1553
      %v1688 = vadd.f32 %v1308, %v1642
      %v1689 = vadd.f32 %v1221, %v1555
      %v1690 = vadd.f32 %v1223, %v1557
      %v1691 = vadd.f32 %v1311, %v1645
      %v1692 = vadd.f32 %v1227, %v1561
      %v1693 = vadd.f32 %v1229, %v1563
      %v1694 = vadd.f32 %v1316, %v1650
      %v1695 = vadd.f32 %v1231, %v1565
      %v1696 = vadd.f32 %v1233, %v1567
      %v1697 = vadd.f32 %v1319, %v1653
      %v1698 = vadd.f32 %v1237, %v1571
      %v1699 = vadd.f32 %v1239, %v1573
      %v1700 = vadd.f32 %v1324, %v1658
      %v1701 = vadd.f32 %v1241, %v1575
      %v1702 = vadd.f32 %v1243, %v1577
      %v1703 = vadd.f32 %v1327, %v1661
      %v1704 = vadd.f32 %v1247, %v1581
      %v1705 = vadd.f32 %v1249, %v1583
      %v1706 = vadd.f32 %v1332, %v1666
      %v1707 = vadd.f32 %v1251, %v1585
      %v1708 = vadd.f32 %v1253, %v1587
      %v1709 = vadd.f32 %v1335, %v1669
      %v1710 = vadd.f32 %v1257, %v1591
      %v1711 = vadd.f32 %v1259, %v1593
      %v1712 = vadd.f32 %v1340, %v1674
      %v1713 = vadd.f32 %v1261, %v1595
      %v1714 = vadd.f32 %v1263, %v1597
      %v1715 = vadd.f32 %v1343, %v1677
      %v1716 = vld [vmem:[%s4] sm:$0x7]
      %v1718 = vlaneseq
      %v1719 = vshrl.u32 %v1718, 7
      %v1720 = vsub.s32 0, %v1719
      %v1721 = vrot.slane %v1716, %v1720
      %v1722 = vlaneseq
      %v1723 = vshrl.u32 %v1722, 7
      %v1724 = vsub.s32 1, %v1723
      %v1725 = vrot.slane %v1716, %v1724
      %v1726 = vlaneseq
      %v1727 = vshrl.u32 %v1726, 7
      %v1728 = vsub.s32 2, %v1727
      %v1729 = vrot.slane %v1716, %v1728
      %v1733 = vadd.f32 %v1680, %v1721
      %v1734 = vadd.f32 %v1681, %v1725
      %v1735 = vadd.f32 %v1682, %v1729
      %v1736 = vadd.f32 %v1683, %v1721
      %v1737 = vadd.f32 %v1684, %v1725
      %v1738 = vadd.f32 %v1685, %v1729
      %v1739 = vadd.f32 %v1686, %v1721
      %v1740 = vadd.f32 %v1687, %v1725
      %v1741 = vadd.f32 %v1688, %v1729
      %v1742 = vadd.f32 %v1689, %v1721
      %v1743 = vadd.f32 %v1690, %v1725
      %v1744 = vadd.f32 %v1691, %v1729
      %v1745 = vadd.f32 %v1692, %v1721
      %v1746 = vadd.f32 %v1693, %v1725
      %v1747 = vadd.f32 %v1694, %v1729
      %v1748 = vadd.f32 %v1695, %v1721
      %v1749 = vadd.f32 %v1696, %v1725
      %v1750 = vadd.f32 %v1697, %v1729
      %v1751 = vadd.f32 %v1698, %v1721
      %v1752 = vadd.f32 %v1699, %v1725
      %v1753 = vadd.f32 %v1700, %v1729
      %v1754 = vadd.f32 %v1701, %v1721
      %v1755 = vadd.f32 %v1702, %v1725
      %v1756 = vadd.f32 %v1703, %v1729
      %v1757 = vadd.f32 %v1704, %v1721
      %v1758 = vadd.f32 %v1705, %v1725
      %v1759 = vadd.f32 %v1706, %v1729
      %v1760 = vadd.f32 %v1707, %v1721
      %v1761 = vadd.f32 %v1708, %v1725
      %v1762 = vadd.f32 %v1709, %v1729
      %v1763 = vadd.f32 %v1710, %v1721
      %v1764 = vadd.f32 %v1711, %v1725
      %v1765 = vadd.f32 %v1712, %v1729
      %v1766 = vadd.f32 %v1713, %v1721
      %v1767 = vadd.f32 %v1714, %v1725
      %v1768 = vadd.f32 %v1715, %v1729
      %v1769 = vmax.f32 %v1733, 0.0
      %v1770 = vmax.f32 %v1734, 0.0
      %v1771 = vmax.f32 %v1735, 0.0
      %v1772 = vmax.f32 %v1736, 0.0
      %v1773 = vmax.f32 %v1737, 0.0
      %v1774 = vmax.f32 %v1738, 0.0
      %v1775 = vmax.f32 %v1739, 0.0
      %v1776 = vmax.f32 %v1740, 0.0
      %v1777 = vmax.f32 %v1741, 0.0
      %v1778 = vmax.f32 %v1742, 0.0
      %v1779 = vmax.f32 %v1743, 0.0
      %v1780 = vmax.f32 %v1744, 0.0
      %v1781 = vmax.f32 %v1745, 0.0
      %v1782 = vmax.f32 %v1746, 0.0
      %v1783 = vmax.f32 %v1747, 0.0
      %v1784 = vmax.f32 %v1748, 0.0
      %v1785 = vmax.f32 %v1749, 0.0
      %v1786 = vmax.f32 %v1750, 0.0
      %v1787 = vmax.f32 %v1751, 0.0
      %v1788 = vmax.f32 %v1752, 0.0
      %v1789 = vmax.f32 %v1753, 0.0
      %v1790 = vmax.f32 %v1754, 0.0
      %v1791 = vmax.f32 %v1755, 0.0
      %v1792 = vmax.f32 %v1756, 0.0
      %v1793 = vmax.f32 %v1757, 0.0
      %v1794 = vmax.f32 %v1758, 0.0
      %v1795 = vmax.f32 %v1759, 0.0
      %v1796 = vmax.f32 %v1760, 0.0
      %v1797 = vmax.f32 %v1761, 0.0
      %v1798 = vmax.f32 %v1762, 0.0
      %v1799 = vmax.f32 %v1763, 0.0
      %v1800 = vmax.f32 %v1764, 0.0
      %v1801 = vmax.f32 %v1765, 0.0
      %v1802 = vmax.f32 %v1766, 0.0
      %v1803 = vmax.f32 %v1767, 0.0
      %v1804 = vmax.f32 %v1768, 0.0
      %v1805 = vpack.c.bf16 %v1772, %v1769
      %v1806 = vpack.c.bf16 %v1773, %v1770
      %v1807 = vpack.c.bf16 %v1774, %v1771
      %v1808 = vpack.c.bf16 %v1778, %v1775
      %v1809 = vpack.c.bf16 %v1779, %v1776
      %v1810 = vpack.c.bf16 %v1780, %v1777
      %v1811 = vpack.c.bf16 %v1784, %v1781
      %v1812 = vpack.c.bf16 %v1785, %v1782
      %v1813 = vpack.c.bf16 %v1786, %v1783
      %v1814 = vpack.c.bf16 %v1790, %v1787
      %v1815 = vpack.c.bf16 %v1791, %v1788
      %v1816 = vpack.c.bf16 %v1792, %v1789
      %v1817 = vpack.c.bf16 %v1796, %v1793
      %v1818 = vpack.c.bf16 %v1797, %v1794
      %v1819 = vpack.c.bf16 %v1798, %v1795
      %v1820 = vpack.c.bf16 %v1802, %v1799
      %v1821 = vpack.c.bf16 %v1803, %v1800
      %v1822 = vpack.c.bf16 %v1804, %v1801
      %v1823 = vld [vmem:[%s5] sm:$0xff]
      %v1824 = vld [vmem:[%s5 + $0x8] sm:$0xf]
      %v1825 = vld [vmem:[%s5 + $0xc] sm:$0xff]
      %v1826 = vld [vmem:[%s5 + $0x14] sm:$0xf]
      %v1827 = vld [vmem:[%s5 + $0x18] sm:$0xff]
      %v1828 = vld [vmem:[%s5 + $0x20] sm:$0xf]
      %v1829 = vld [vmem:[%s5 + $0x24] sm:$0xff]
      %v1830 = vld [vmem:[%s5 + $0x2c] sm:$0xf]
      %v1831 = vld [vmem:[%s5 + $0x30] sm:$0xff]
      %v1832 = vld [vmem:[%s5 + $0x38] sm:$0xf]
      %v1833 = vld [vmem:[%s5 + $0x3c] sm:$0xff]
      %v1834 = vld [vmem:[%s5 + $0x44] sm:$0xf]
      %v1835 = vld [vmem:[%s5 + $0x48] sm:$0xff]
      %v1836 = vld [vmem:[%s5 + $0x50] sm:$0xf]
      %v1837 = vld [vmem:[%s5 + $0x54] sm:$0xff]
      %v1838 = vld [vmem:[%s5 + $0x5c] sm:$0xf]
      %v1839 = vld [vmem:[%s5 + $0x60] sm:$0xff]
      %v1840 = vld [vmem:[%s5 + $0x68] sm:$0xf]
      %v1841 = vld [vmem:[%s5 + $0x6c] sm:$0xff]
      %v1842 = vld [vmem:[%s5 + $0x74] sm:$0xf]
      %v1843 = vld [vmem:[%s5 + $0x78] sm:$0xff]
      %v1844 = vld [vmem:[%s5 + $0x80] sm:$0xf]
      %v1845 = vld [vmem:[%s5 + $0x84] sm:$0xff]
      %v1846 = vld [vmem:[%s5 + $0x8c] sm:$0xf]
      %v1847 = vld [vmem:[%s5 + $0x90] sm:$0xff]
      %v1848 = vld [vmem:[%s5 + $0x98] sm:$0xf]
      %v1849 = vld [vmem:[%s5 + $0x9c] sm:$0xff]
      %v1850 = vld [vmem:[%s5 + $0xa4] sm:$0xf]
      %v1851 = vld [vmem:[%s5 + $0xa8] sm:$0xff]
      %v1852 = vld [vmem:[%s5 + $0xb0] sm:$0xf]
      %v1853 = vld [vmem:[%s5 + $0xb4] sm:$0xff]
      %v1854 = vld [vmem:[%s5 + $0xbc] sm:$0xf]
      %v1855 = vld [vmem:[%s5 + $0xc0] sm:$0xff]
      %v1856 = vld [vmem:[%s5 + $0xc8] sm:$0xf]
      %v1857 = vld [vmem:[%s5 + $0xcc] sm:$0xff]
      %v1858 = vld [vmem:[%s5 + $0xd4] sm:$0xf]
      %v1859 = vld [vmem:[%s5 + $0xd8] sm:$0xff]
      %v1860 = vld [vmem:[%s5 + $0xe0] sm:$0xf]
      %v1861 = vld [vmem:[%s5 + $0xe4] sm:$0xff]
      %v1862 = vld [vmem:[%s5 + $0xec] sm:$0xf]
      %v1863 = vld [vmem:[%s5 + $0xf0] sm:$0xff]
      %v1864 = vld [vmem:[%s5 + $0xf8] sm:$0xf]
      %v1865 = vld [vmem:[%s5 + $0xfc] sm:$0xff]
      %v1866 = vld [vmem:[%s5 + $0x104] sm:$0xf]
      %v1867 = vld [vmem:[%s5 + $0x108] sm:$0xff]
      %v1868 = vld [vmem:[%s5 + $0x110] sm:$0xf]
      %v1869 = vld [vmem:[%s5 + $0x114] sm:$0xff]
      %v1870 = vld [vmem:[%s5 + $0x11c] sm:$0xf]
      %v1871 = vld [vmem:[%s5 + $0x120] sm:$0xff]
      %v1872 = vld [vmem:[%s5 + $0x128] sm:$0xf]
      %v1873 = vld [vmem:[%s5 + $0x12c] sm:$0xff]
      %v1874 = vld [vmem:[%s5 + $0x134] sm:$0xf]
      %v1875 = vld [vmem:[%s5 + $0x138] sm:$0xff]
      %v1876 = vld [vmem:[%s5 + $0x140] sm:$0xf]
      %v1877 = vld [vmem:[%s5 + $0x144] sm:$0xff]
      %v1878 = vld [vmem:[%s5 + $0x14c] sm:$0xf]
      %v1879 = vld [vmem:[%s5 + $0x150] sm:$0xff]
      %v1880 = vld [vmem:[%s5 + $0x158] sm:$0xf]
      %v1881 = vld [vmem:[%s5 + $0x15c] sm:$0xff]
      %v1882 = vld [vmem:[%s5 + $0x164] sm:$0xf]
      %v1883 = vld [vmem:[%s5 + $0x168] sm:$0xff]
      %v1884 = vld [vmem:[%s5 + $0x170] sm:$0xf]
      %v1885 = vld [vmem:[%s5 + $0x174] sm:$0xff]
      %v1886 = vld [vmem:[%s5 + $0x17c] sm:$0xf]
      %v1887 = vld [vmem:[%s5 + $0x180] sm:$0xff]
      %v1888 = vld [vmem:[%s5 + $0x188] sm:$0xf]
      %v1889 = vld [vmem:[%s5 + $0x18c] sm:$0xff]
      %v1890 = vld [vmem:[%s5 + $0x194] sm:$0xf]
      %v1891 = vld [vmem:[%s5 + $0x198] sm:$0xff]
      %v1892 = vld [vmem:[%s5 + $0x1a0] sm:$0xf]
      %v1893 = vld [vmem:[%s5 + $0x1a4] sm:$0xff]
      %v1894 = vld [vmem:[%s5 + $0x1ac] sm:$0xf]
      %v1895 = vld [vmem:[%s5 + $0x1b0] sm:$0xff]
      %v1896 = vld [vmem:[%s5 + $0x1b8] sm:$0xf]
      %v1897 = vld [vmem:[%s5 + $0x1bc] sm:$0xff]
      %v1898 = vld [vmem:[%s5 + $0x1c4] sm:$0xf]
      %v1899 = vld [vmem:[%s5 + $0x1c8] sm:$0xff]
      %v1900 = vld [vmem:[%s5 + $0x1d0] sm:$0xf]
      %v1901 = vld [vmem:[%s5 + $0x1d4] sm:$0xff]
      %v1902 = vld [vmem:[%s5 + $0x1dc] sm:$0xf]
      %v1903 = vld [vmem:[%s5 + $0x1e0] sm:$0xff]
      %v1904 = vld [vmem:[%s5 + $0x1e8] sm:$0xf]
      %v1905 = vld [vmem:[%s5 + $0x1ec] sm:$0xff]
      %v1906 = vld [vmem:[%s5 + $0x1f4] sm:$0xf]
      %v1907 = vld [vmem:[%s5 + $0x1f8] sm:$0xff]
      %v1908 = vld [vmem:[%s5 + $0x200] sm:$0xf]
      %v1909 = vld [vmem:[%s5 + $0x204] sm:$0xff]
      %v1910 = vld [vmem:[%s5 + $0x20c] sm:$0xf]
      %s1911 = scalar_lea.vmem %s5, 528
      %v1912 = vld [vmem:[%s1911] sm:$0xff]
      %v1913 = vld [vmem:[%s1911 + $0x8] sm:$0xf]
      %v1914 = vld [vmem:[%s1911 + $0xc] sm:$0xff]
      %v1915 = vld [vmem:[%s1911 + $0x14] sm:$0xf]
      %v1916 = vld [vmem:[%s1911 + $0x18] sm:$0xff]
      %v1917 = vld [vmem:[%s1911 + $0x20] sm:$0xf]
      %v1918 = vld [vmem:[%s1911 + $0x24] sm:$0xff]
      %v1919 = vld [vmem:[%s1911 + $0x2c] sm:$0xf]
      %v1920 = vld [vmem:[%s1911 + $0x30] sm:$0xff]
      %v1921 = vld [vmem:[%s1911 + $0x38] sm:$0xf]
      %v1922 = vld [vmem:[%s1911 + $0x3c] sm:$0xff]
      %v1923 = vld [vmem:[%s1911 + $0x44] sm:$0xf]
      %v1924 = vld [vmem:[%s1911 + $0x48] sm:$0xff]
      %v1925 = vld [vmem:[%s1911 + $0x50] sm:$0xf]
      %v1926 = vld [vmem:[%s1911 + $0x54] sm:$0xff]
      %v1927 = vld [vmem:[%s1911 + $0x5c] sm:$0xf]
      %v1928 = vld [vmem:[%s1911 + $0x60] sm:$0xff]
      %v1929 = vld [vmem:[%s1911 + $0x68] sm:$0xf]
      %v1930 = vld [vmem:[%s1911 + $0x6c] sm:$0xff]
      %v1931 = vld [vmem:[%s1911 + $0x74] sm:$0xf]
      %v1932 = vld [vmem:[%s1911 + $0x78] sm:$0xff]
      %v1933 = vld [vmem:[%s1911 + $0x80] sm:$0xf]
      %v1934 = vld [vmem:[%s1911 + $0x84] sm:$0xff]
      %v1935 = vld [vmem:[%s1911 + $0x8c] sm:$0xf]
      %v1936 = vld [vmem:[%s1911 + $0x90] sm:$0xff]
      %v1937 = vld [vmem:[%s1911 + $0x98] sm:$0xf]
      %v1938 = vld [vmem:[%s1911 + $0x9c] sm:$0xff]
      %v1939 = vld [vmem:[%s1911 + $0xa4] sm:$0xf]
      %v1940 = vld [vmem:[%s1911 + $0xa8] sm:$0xff]
      %v1941 = vld [vmem:[%s1911 + $0xb0] sm:$0xf]
      %v1942 = vld [vmem:[%s1911 + $0xb4] sm:$0xff]
      %v1943 = vld [vmem:[%s1911 + $0xbc] sm:$0xf]
      %v1944 = vld [vmem:[%s1911 + $0xc0] sm:$0xff]
      %v1945 = vld [vmem:[%s1911 + $0xc8] sm:$0xf]
      %v1946 = vld [vmem:[%s1911 + $0xcc] sm:$0xff]
      %v1947 = vld [vmem:[%s1911 + $0xd4] sm:$0xf]
      %v1948 = vld [vmem:[%s1911 + $0xd8] sm:$0xff]
      %v1949 = vld [vmem:[%s1911 + $0xe0] sm:$0xf]
      %v1950 = vld [vmem:[%s1911 + $0xe4] sm:$0xff]
      %v1951 = vld [vmem:[%s1911 + $0xec] sm:$0xf]
      %v1952 = vld [vmem:[%s1911 + $0xf0] sm:$0xff]
      %v1953 = vld [vmem:[%s1911 + $0xf8] sm:$0xf]
      %v1954 = vld [vmem:[%s1911 + $0xfc] sm:$0xff]
      %v1955 = vld [vmem:[%s1911 + $0x104] sm:$0xf]
      %v1956 = vld [vmem:[%s1911 + $0x108] sm:$0xff]
      %v1957 = vld [vmem:[%s1911 + $0x110] sm:$0xf]
      %v1958 = vld [vmem:[%s1911 + $0x114] sm:$0xff]
      %v1959 = vld [vmem:[%s1911 + $0x11c] sm:$0xf]
      %v1960 = vld [vmem:[%s1911 + $0x120] sm:$0xff]
      %v1961 = vld [vmem:[%s1911 + $0x128] sm:$0xf]
      %v1962 = vld [vmem:[%s1911 + $0x12c] sm:$0xff]
      %v1963 = vld [vmem:[%s1911 + $0x134] sm:$0xf]
      %v1964 = vld [vmem:[%s1911 + $0x138] sm:$0xff]
      %v1965 = vld [vmem:[%s1911 + $0x140] sm:$0xf]
      %v1966 = vld [vmem:[%s1911 + $0x144] sm:$0xff]
      %v1967 = vld [vmem:[%s1911 + $0x14c] sm:$0xf]
      %v1968 = vld [vmem:[%s1911 + $0x150] sm:$0xff]
      %v1969 = vld [vmem:[%s1911 + $0x158] sm:$0xf]
      %v1970 = vld [vmem:[%s1911 + $0x15c] sm:$0xff]
      %v1971 = vld [vmem:[%s1911 + $0x164] sm:$0xf]
      %v1972 = vld [vmem:[%s1911 + $0x168] sm:$0xff]
      %v1973 = vld [vmem:[%s1911 + $0x170] sm:$0xf]
      %v1974 = vld [vmem:[%s1911 + $0x174] sm:$0xff]
      %v1975 = vld [vmem:[%s1911 + $0x17c] sm:$0xf]
      %v1976 = vld [vmem:[%s1911 + $0x180] sm:$0xff]
      %v1977 = vld [vmem:[%s1911 + $0x188] sm:$0xf]
      %v1978 = vld [vmem:[%s1911 + $0x18c] sm:$0xff]
      %v1979 = vld [vmem:[%s1911 + $0x194] sm:$0xf]
      %v1980 = vld [vmem:[%s1911 + $0x198] sm:$0xff]
      %v1981 = vld [vmem:[%s1911 + $0x1a0] sm:$0xf]
      %v1982 = vld [vmem:[%s1911 + $0x1a4] sm:$0xff]
      %v1983 = vld [vmem:[%s1911 + $0x1ac] sm:$0xf]
      %v1984 = vld [vmem:[%s1911 + $0x1b0] sm:$0xff]
      %v1985 = vld [vmem:[%s1911 + $0x1b8] sm:$0xf]
      %v1986 = vld [vmem:[%s1911 + $0x1bc] sm:$0xff]
      %v1987 = vld [vmem:[%s1911 + $0x1c4] sm:$0xf]
      %v1988 = vld [vmem:[%s1911 + $0x1c8] sm:$0xff]
      %v1989 = vld [vmem:[%s1911 + $0x1d0] sm:$0xf]
      %v1990 = vld [vmem:[%s1911 + $0x1d4] sm:$0xff]
      %v1991 = vld [vmem:[%s1911 + $0x1dc] sm:$0xf]
      %v1992 = vld [vmem:[%s1911 + $0x1e0] sm:$0xff]
      %v1993 = vld [vmem:[%s1911 + $0x1e8] sm:$0xf]
      %v1994 = vld [vmem:[%s1911 + $0x1ec] sm:$0xff]
      %v1995 = vld [vmem:[%s1911 + $0x1f4] sm:$0xf]
      %v1996 = vld [vmem:[%s1911 + $0x1f8] sm:$0xff]
      %v1997 = vld [vmem:[%s1911 + $0x200] sm:$0xf]
      %v1998 = vld [vmem:[%s1911 + $0x204] sm:$0xff]
      %v1999 = vld [vmem:[%s1911 + $0x20c] sm:$0xf]
      %v2001 = vshrl.u32 %v1805, 16
      %v2003 = vshll.u32 %v1805, 16
      %v2005 = vrot.slane %v2003, 1
      %v2006 = vor.u32 %v2001, %v2005
      %v2008 = vshll.u32 %v1808, 16
      %v2010 = vrot.slane %v2008, 1
      %v2011 = vsel %vm1365, %v2006, %v2010
      %v2013 = vshrl.u32 %v1806, 16
      %v2015 = vshll.u32 %v1806, 16
      %v2017 = vrot.slane %v2015, 1
      %v2018 = vor.u32 %v2013, %v2017
      %v2020 = vshll.u32 %v1809, 16
      %v2022 = vrot.slane %v2020, 1
      %v2023 = vsel %vm1365, %v2018, %v2022
      %v2025 = vshrl.u32 %v1807, 16
      %v2027 = vshll.u32 %v1807, 16
      %v2029 = vrot.slane %v2027, 1
      %v2030 = vor.u32 %v2025, %v2029
      %v2032 = vshll.u32 %v1810, 16
      %v2034 = vrot.slane %v2032, 1
      %v2035 = vsel %vm1365, %v2030, %v2034
      %v2036 = vshrl.u32 %v1808, 16
      %v2038 = vor.u32 %v2036, %v2010
      %v2040 = vshll.u32 %v1811, 16
      %v2042 = vrot.slane %v2040, 1
      %v2043 = vsel %vm1365, %v2038, %v2042
      %v2044 = vshrl.u32 %v1809, 16
      %v2046 = vor.u32 %v2044, %v2022
      %v2048 = vshll.u32 %v1812, 16
      %v2050 = vrot.slane %v2048, 1
      %v2051 = vsel %vm1365, %v2046, %v2050
      %v2052 = vshrl.u32 %v1810, 16
      %v2054 = vor.u32 %v2052, %v2034
      %v2056 = vshll.u32 %v1813, 16
      %v2058 = vrot.slane %v2056, 1
      %v2059 = vsel %vm1365, %v2054, %v2058
      %v2060 = vshrl.u32 %v1811, 16
      %v2062 = vor.u32 %v2060, %v2042
      %v2064 = vshll.u32 %v1814, 16
      %v2066 = vrot.slane %v2064, 1
      %v2067 = vsel %vm1365, %v2062, %v2066
      %v2068 = vshrl.u32 %v1812, 16
      %v2070 = vor.u32 %v2068, %v2050
      %v2072 = vshll.u32 %v1815, 16
      %v2074 = vrot.slane %v2072, 1
      %v2075 = vsel %vm1365, %v2070, %v2074
      %v2076 = vshrl.u32 %v1813, 16
      %v2078 = vor.u32 %v2076, %v2058
      %v2080 = vshll.u32 %v1816, 16
      %v2082 = vrot.slane %v2080, 1
      %v2083 = vsel %vm1365, %v2078, %v2082
      %v2084 = vshrl.u32 %v1814, 16
      %v2086 = vor.u32 %v2084, %v2066
      %v2088 = vshll.u32 %v1817, 16
      %v2090 = vrot.slane %v2088, 1
      %v2091 = vsel %vm1365, %v2086, %v2090
      %v2092 = vshrl.u32 %v1815, 16
      %v2094 = vor.u32 %v2092, %v2074
      %v2096 = vshll.u32 %v1818, 16
      %v2098 = vrot.slane %v2096, 1
      %v2099 = vsel %vm1365, %v2094, %v2098
      %v2100 = vshrl.u32 %v1816, 16
      %v2102 = vor.u32 %v2100, %v2082
      %v2104 = vshll.u32 %v1819, 16
      %v2106 = vrot.slane %v2104, 1
      %v2107 = vsel %vm1365, %v2102, %v2106
      %v2108 = vshrl.u32 %v1817, 16
      %v2110 = vor.u32 %v2108, %v2090
      %v2112 = vshll.u32 %v1820, 16
      %v2114 = vrot.slane %v2112, 1
      %v2115 = vsel %vm1365, %v2110, %v2114
      %v2116 = vshrl.u32 %v1818, 16
      %v2118 = vor.u32 %v2116, %v2098
      %v2120 = vshll.u32 %v1821, 16
      %v2122 = vrot.slane %v2120, 1
      %v2123 = vsel %vm1365, %v2118, %v2122
      %v2124 = vshrl.u32 %v1819, 16
      %v2126 = vor.u32 %v2124, %v2106
      %v2128 = vshll.u32 %v1822, 16
      %v2130 = vrot.slane %v2128, 1
      %v2131 = vsel %vm1365, %v2126, %v2130
      %v2132 = vshrl.u32 %v1820, 16
      %v2134 = vor.u32 %v2132, %v2114
      %v2135 = vshrl.u32 %v1821, 16
      %v2137 = vor.u32 %v2135, %v2122
      %v2138 = vshrl.u32 %v1822, 16
      %v2140 = vor.u32 %v2138, %v2130
      %v2241 = vunpack.c.l.b16 %v1912
      %v2242 = vunpack.c.h.b16 %v1912
      %v2243 = vunpack.c.l.b16 %v1913
      %v2244 = vunpack.c.l.b16 %v1914
      %v2245 = vunpack.c.h.b16 %v1914
      %v2246 = vunpack.c.l.b16 %v1915
      %v2247 = vunpack.c.l.b16 %v1916
      %v2248 = vunpack.c.h.b16 %v1916
      %v2249 = vunpack.c.l.b16 %v1917
      %v2250 = vunpack.c.l.b16 %v1918
      %v2251 = vunpack.c.h.b16 %v1918
      %v2252 = vunpack.c.l.b16 %v1919
      %v2253 = vunpack.c.l.b16 %v1920
      %v2254 = vunpack.c.h.b16 %v1920
      %v2255 = vunpack.c.l.b16 %v1921
      %v2256 = vunpack.c.l.b16 %v1922
      %v2257 = vunpack.c.h.b16 %v1922
      %v2258 = vunpack.c.l.b16 %v1923
      %v2259 = vunpack.c.l.b16 %v1924
      %v2260 = vunpack.c.h.b16 %v1924
      %v2261 = vunpack.c.l.b16 %v1925
      %v2262 = vunpack.c.l.b16 %v1926
      %v2263 = vunpack.c.h.b16 %v1926
      %v2264 = vunpack.c.l.b16 %v1927
      %v2265 = vunpack.c.l.b16 %v1928
      %v2266 = vunpack.c.h.b16 %v1928
      %v2267 = vunpack.c.l.b16 %v1929
      %v2268 = vunpack.c.l.b16 %v1930
      %v2269 = vunpack.c.h.b16 %v1930
      %v2270 = vunpack.c.l.b16 %v1931
      %v2271 = vunpack.c.l.b16 %v1932
      %v2272 = vunpack.c.h.b16 %v1932
      %v2273 = vunpack.c.l.b16 %v1933
      %v2274 = vunpack.c.l.b16 %v1934
      %v2275 = vunpack.c.h.b16 %v1934
      %v2276 = vunpack.c.l.b16 %v1935
      %v2277 = vunpack.c.l.b16 %v1936
      %v2278 = vunpack.c.h.b16 %v1936
      %v2279 = vunpack.c.l.b16 %v1937
      %v2280 = vunpack.c.l.b16 %v1938
      %v2281 = vunpack.c.h.b16 %v1938
      %v2282 = vunpack.c.l.b16 %v1939
      %v2283 = vunpack.c.l.b16 %v1940
      %v2284 = vunpack.c.h.b16 %v1940
      %v2285 = vunpack.c.l.b16 %v1941
      %v2286 = vunpack.c.l.b16 %v1942
      %v2287 = vunpack.c.h.b16 %v1942
      %v2288 = vunpack.c.l.b16 %v1943
      %v2289 = vunpack.c.l.b16 %v1944
      %v2290 = vunpack.c.h.b16 %v1944
      %v2291 = vunpack.c.l.b16 %v1945
      %v2292 = vunpack.c.l.b16 %v1946
      %v2293 = vunpack.c.h.b16 %v1946
      %v2294 = vunpack.c.l.b16 %v1947
      %v2295 = vunpack.c.l.b16 %v1948
      %v2296 = vunpack.c.h.b16 %v1948
      %v2297 = vunpack.c.l.b16 %v1949
      %v2298 = vunpack.c.l.b16 %v1950
      %v2299 = vunpack.c.h.b16 %v1950
      %v2300 = vunpack.c.l.b16 %v1951
      %v2301 = vunpack.c.l.b16 %v1952
      %v2302 = vunpack.c.h.b16 %v1952
      %v2303 = vunpack.c.l.b16 %v1953
      %v2304 = vunpack.c.l.b16 %v1954
      %v2305 = vunpack.c.h.b16 %v1954
      %v2306 = vunpack.c.l.b16 %v1955
      %v2307 = vunpack.c.l.b16 %v1956
      %v2308 = vunpack.c.h.b16 %v1956
      %v2309 = vunpack.c.l.b16 %v1957
      %v2310 = vunpack.c.l.b16 %v1958
      %v2311 = vunpack.c.h.b16 %v1958
      %v2312 = vunpack.c.l.b16 %v1959
      %v2313 = vunpack.c.l.b16 %v1960
      %v2314 = vunpack.c.h.b16 %v1960
      %v2315 = vunpack.c.l.b16 %v1961
      %v2316 = vunpack.c.l.b16 %v1962
      %v2317 = vunpack.c.h.b16 %v1962
      %v2318 = vunpack.c.l.b16 %v1963
      %v2319 = vunpack.c.l.b16 %v1964
      %v2320 = vunpack.c.h.b16 %v1964
      %v2321 = vunpack.c.l.b16 %v1965
      %v2322 = vunpack.c.l.b16 %v1966
      %v2323 = vunpack.c.h.b16 %v1966
      %v2324 = vunpack.c.l.b16 %v1967
      %v2325 = vunpack.c.l.b16 %v1968
      %v2326 = vunpack.c.h.b16 %v1968
      %v2327 = vunpack.c.l.b16 %v1969
      %v2328 = vunpack.c.l.b16 %v1970
      %v2329 = vunpack.c.h.b16 %v1970
      %v2330 = vunpack.c.l.b16 %v1971
      %v2331 = vunpack.c.l.b16 %v1972
      %v2332 = vunpack.c.h.b16 %v1972
      %v2333 = vunpack.c.l.b16 %v1973
      %v2334 = vunpack.c.l.b16 %v1974
      %v2335 = vunpack.c.h.b16 %v1974
      %v2336 = vunpack.c.l.b16 %v1975
      %v2337 = vunpack.c.l.b16 %v1976
      %v2338 = vunpack.c.h.b16 %v1976
      %v2339 = vunpack.c.l.b16 %v1977
      %v2340 = vunpack.c.l.b16 %v1978
      %v2341 = vunpack.c.h.b16 %v1978
      %v2342 = vunpack.c.l.b16 %v1979
      %v2343 = vunpack.c.l.b16 %v1980
      %v2344 = vunpack.c.h.b16 %v1980
      %v2345 = vunpack.c.l.b16 %v1981
      %v2346 = vunpack.c.l.b16 %v1982
      %v2347 = vunpack.c.h.b16 %v1982
      %v2348 = vunpack.c.l.b16 %v1983
      %v2349 = vunpack.c.l.b16 %v1984
      %v2350 = vunpack.c.h.b16 %v1984
      %v2351 = vunpack.c.l.b16 %v1985
      %v2352 = vunpack.c.l.b16 %v1986
      %v2353 = vunpack.c.h.b16 %v1986
      %v2354 = vunpack.c.l.b16 %v1987
      %v2355 = vunpack.c.l.b16 %v1988
      %v2356 = vunpack.c.h.b16 %v1988
      %v2357 = vunpack.c.l.b16 %v1989
      %v2358 = vunpack.c.l.b16 %v1990
      %v2359 = vunpack.c.h.b16 %v1990
      %v2360 = vunpack.c.l.b16 %v1991
      %v2361 = vunpack.c.l.b16 %v1992
      %v2362 = vunpack.c.h.b16 %v1992
      %v2363 = vunpack.c.l.b16 %v1993
      %v2364 = vunpack.c.l.b16 %v1994
      %v2365 = vunpack.c.h.b16 %v1994
      %v2366 = vunpack.c.l.b16 %v1995
      %v2367 = vunpack.c.l.b16 %v1996
      %v2368 = vunpack.c.h.b16 %v1996
      %v2369 = vunpack.c.l.b16 %v1997
      %v2370 = vunpack.c.l.b16 %v1998
      %v2371 = vunpack.c.h.b16 %v1998
      %v2372 = vunpack.c.l.b16 %v1999
      %v2373 = vpack.c.b16 %v2244, %v2241
      %v2374 = vpack.c.b16 %v2245, %v2242
      %v2375 = vpack.c.b16 %v2246, %v2243
      %v2376 = vpack.c.b16 %v2250, %v2247
      %v2377 = vpack.c.b16 %v2251, %v2248
      %v2378 = vpack.c.b16 %v2252, %v2249
      %v2379 = vpack.c.b16 %v2256, %v2253
      %v2380 = vpack.c.b16 %v2257, %v2254
      %v2381 = vpack.c.b16 %v2258, %v2255
      %v2382 = vpack.c.b16 %v2262, %v2259
      %v2383 = vpack.c.b16 %v2263, %v2260
      %v2384 = vpack.c.b16 %v2264, %v2261
      %v2385 = vpack.c.b16 %v2268, %v2265
      %v2386 = vpack.c.b16 %v2269, %v2266
      %v2387 = vpack.c.b16 %v2270, %v2267
      %v2388 = vpack.c.b16 %v2274, %v2271
      %v2389 = vpack.c.b16 %v2275, %v2272
      %v2390 = vpack.c.b16 %v2276, %v2273
      %v2391 = vpack.c.b16 %v2280, %v2277
      %v2392 = vpack.c.b16 %v2281, %v2278
      %v2393 = vpack.c.b16 %v2282, %v2279
      %v2394 = vpack.c.b16 %v2286, %v2283
      %v2395 = vpack.c.b16 %v2287, %v2284
      %v2396 = vpack.c.b16 %v2288, %v2285
      %v2397 = vpack.c.b16 %v2292, %v2289
      %v2398 = vpack.c.b16 %v2293, %v2290
      %v2399 = vpack.c.b16 %v2294, %v2291
      %v2400 = vpack.c.b16 %v2298, %v2295
      %v2401 = vpack.c.b16 %v2299, %v2296
      %v2402 = vpack.c.b16 %v2300, %v2297
      %v2403 = vpack.c.b16 %v2304, %v2301
      %v2404 = vpack.c.b16 %v2305, %v2302
      %v2405 = vpack.c.b16 %v2306, %v2303
      %v2406 = vpack.c.b16 %v2310, %v2307
      %v2407 = vpack.c.b16 %v2311, %v2308
      %v2408 = vpack.c.b16 %v2312, %v2309
      %v2409 = vpack.c.b16 %v2316, %v2313
      %v2410 = vpack.c.b16 %v2317, %v2314
      %v2411 = vpack.c.b16 %v2318, %v2315
      %v2412 = vpack.c.b16 %v2322, %v2319
      %v2413 = vpack.c.b16 %v2323, %v2320
      %v2414 = vpack.c.b16 %v2324, %v2321
      %v2415 = vpack.c.b16 %v2328, %v2325
      %v2416 = vpack.c.b16 %v2329, %v2326
      %v2417 = vpack.c.b16 %v2330, %v2327
      %v2418 = vpack.c.b16 %v2334, %v2331
      %v2419 = vpack.c.b16 %v2335, %v2332
      %v2420 = vpack.c.b16 %v2336, %v2333
      %v2421 = vpack.c.b16 %v2340, %v2337
      %v2422 = vpack.c.b16 %v2341, %v2338
      %v2423 = vpack.c.b16 %v2342, %v2339
      %v2424 = vpack.c.b16 %v2346, %v2343
      %v2425 = vpack.c.b16 %v2347, %v2344
      %v2426 = vpack.c.b16 %v2348, %v2345
      %v2427 = vpack.c.b16 %v2352, %v2349
      %v2428 = vpack.c.b16 %v2353, %v2350
      %v2429 = vpack.c.b16 %v2354, %v2351
      %v2430 = vpack.c.b16 %v2358, %v2355
      %v2431 = vpack.c.b16 %v2359, %v2356
      %v2432 = vpack.c.b16 %v2360, %v2357
      %v2433 = vpack.c.b16 %v2364, %v2361
      %v2434 = vpack.c.b16 %v2365, %v2362
      %v2435 = vpack.c.b16 %v2366, %v2363
      %v2436 = vpack.c.b16 %v2370, %v2367
      %v2437 = vpack.c.b16 %v2371, %v2368
      %v2438 = vpack.c.b16 %v2372, %v2369
      %vm2505 = vcmask 785408
      %v2507 = vsel %vm2505, %v2035, 0
      %v2510 = vsel %vm2505, %v2059, 0
      %v2513 = vsel %vm2505, %v2083, 0
      %v2516 = vsel %vm2505, %v2107, 0
      %v2519 = vsel %vm2505, %v2131, 0
      %v2522 = vsel %vm2505, %v2140, 0
      %2524 = vmatprep.subr.bf16.mxu0 %v2374
      %2525 = vmatpush1.bf16.msra.mxu0 %v2373
      %2526 = vmatprep.subr.bf16.mxu0 %v2377
      %2527 = vmatpush1.bf16.msra.mxu0 %v2376
      %2528 = vmatprep.subr.bf16.mxu0 %v2380
      %2529 = vmatpush1.bf16.msra.mxu0 %v2379
      %2530 = vmatprep.subr.bf16.mxu0 %v2383
      %2531 = vmatpush1.bf16.msra.mxu0 %v2382
      %2532 = vmatprep.subr.bf16.mxu0 %v2386
      %2533 = vmatpush1.bf16.msra.mxu0 %v2385
      %2534 = vmatprep.subr.bf16.mxu0 %v2389
      %2535 = vmatpush1.bf16.msra.mxu0 %v2388
      %2536 = vmatprep.subr.bf16.mxu0 %v2392
      %2537 = vmatpush1.bf16.msra.mxu0 %v2391
      %2538 = vmatprep.subr.bf16.mxu0 %v2395
      %2539 = vmatpush1.bf16.msra.mxu0 %v2394
      %2540 = vmatprep.subr.bf16.mxu0 %v2398
      %2541 = vmatpush1.bf16.msra.mxu0 %v2397
      %2542 = vmatprep.subr.bf16.mxu0 %v2401
      %2543 = vmatpush1.bf16.msra.mxu0 %v2400
      %2544 = vmatprep.subr.bf16.mxu0 %v2404
      %2545 = vmatpush1.bf16.msra.mxu0 %v2403
      %2546 = vmatprep.subr.bf16.mxu0 %v2407
      %2547 = vmatpush1.bf16.msra.mxu0 %v2406
      %2548 = vmatprep.subr.bf16.mxu0 %v2410
      %2549 = vmatpush1.bf16.msra.mxu0 %v2409
      %2550 = vmatprep.subr.bf16.mxu0 %v2413
      %2551 = vmatpush1.bf16.msra.mxu0 %v2412
      %2552 = vmatprep.subr.bf16.mxu0 %v2416
      %2553 = vmatpush1.bf16.msra.mxu0 %v2415
      %2554 = vmatprep.subr.bf16.mxu0 %v2419
      %2555 = vmatpush1.bf16.msra.mxu0 %v2418
      %2556 = vmatprep.mubr.bf16.mxu0 %v2023
      %2557 = vmatmul.mubr.bf16.gmra.mrb[0].mxu0 %v2011
      %v2558 = vpop.f32.mrb[0].mxu0
      %v2559 = vadd.f32 0.0, %v2558
      %v2560 = vpop.f32.mrb[0].mxu0
      %v2561 = vadd.f32 0.0, %v2560
      %v2562 = vpop.f32.mrb[0].mxu0
      %v2563 = vadd.f32 0.0, %v2562
      %v2564 = vpop.f32.mrb[0].mxu0
      %v2565 = vadd.f32 0.0, %v2564
      %2566 = vmatprep.mubr.bf16.mxu0 %v2051
      %2567 = vmatmul.mubr.bf16.gmra.mrb[0].mxu0 %v2043
      %v2568 = vpop.f32.mrb[0].mxu0
      %v2569 = vadd.f32 0.0, %v2568
      %v2570 = vpop.f32.mrb[0].mxu0
      %v2571 = vadd.f32 0.0, %v2570
      %v2572 = vpop.f32.mrb[0].mxu0
      %v2573 = vadd.f32 0.0, %v2572
      %v2574 = vpop.f32.mrb[0].mxu0
      %v2575 = vadd.f32 0.0, %v2574
      %2576 = vmatprep.mubr.bf16.mxu0 %v2075
      %2577 = vmatmul.mubr.bf16.gmra.mrb[0].mxu0 %v2067
      %v2578 = vpop.f32.mrb[0].mxu0
      %v2579 = vadd.f32 0.0, %v2578
      %v2580 = vpop.f32.mrb[0].mxu0
      %v2581 = vadd.f32 0.0, %v2580
      %v2582 = vpop.f32.mrb[0].mxu0
      %v2583 = vadd.f32 0.0, %v2582
      %v2584 = vpop.f32.mrb[0].mxu0
      %v2585 = vadd.f32 0.0, %v2584
      %2586 = vmatprep.mubr.bf16.mxu0 %v2099
      %2587 = vmatmul.mubr.bf16.gmra.mrb[0].mxu0 %v2091
      %v2588 = vpop.f32.mrb[0].mxu0
      %v2589 = vadd.f32 0.0, %v2588
      %v2590 = vpop.f32.mrb[0].mxu0
      %v2591 = vadd.f32 0.0, %v2590
      %v2592 = vpop.f32.mrb[0].mxu0
      %v2593 = vadd.f32 0.0, %v2592
      %v2594 = vpop.f32.mrb[0].mxu0
      %v2595 = vadd.f32 0.0, %v2594
      %2596 = vmatprep.mubr.bf16.mxu0 %v2123
      %2597 = vmatmul.mubr.bf16.gmra.mrb[0].mxu0 %v2115
      %v2598 = vpop.f32.mrb[0].mxu0
      %v2599 = vadd.f32 0.0, %v2598
      %v2600 = vpop.f32.mrb[0].mxu0
      %v2601 = vadd.f32 0.0, %v2600
      %v2602 = vpop.f32.mrb[0].mxu0
      %v2603 = vadd.f32 0.0, %v2602
      %v2604 = vpop.f32.mrb[0].mxu0
      %v2605 = vadd.f32 0.0, %v2604
      %2606 = vmatprep.mubr.bf16.mxu0 %v2137
      %2607 = vmatmul.mubr.bf16.gmra.mrb[0].mxu0 %v2134
      %v2608 = vpop.f32.mrb[0].mxu0
      %v2609 = vadd.f32 0.0, %v2608
      %v2610 = vpop.f32.mrb[0].mxu0
      %v2611 = vadd.f32 0.0, %v2610
      %v2612 = vpop.f32.mrb[0].mxu0
      %v2613 = vadd.f32 0.0, %v2612
      %v2614 = vpop.f32.mrb[0].mxu0
      %v2615 = vadd.f32 0.0, %v2614
      %2616 = vdwg.mxu0
      %2617 = vmatprep.subr.bf16.mxu0 %v2422
      %2618 = vmatpush1.bf16.msra.mxu0 %v2421
      %2619 = vmatprep.subr.bf16.mxu0 %v2425
      %2620 = vmatpush1.bf16.msra.mxu0 %v2424
      %2621 = vmatprep.subr.bf16.mxu0 %v2428
      %2622 = vmatpush1.bf16.msra.mxu0 %v2427
      %2623 = vmatprep.subr.bf16.mxu0 %v2431
      %2624 = vmatpush1.bf16.msra.mxu0 %v2430
      %2625 = vmatprep.subr.bf16.mxu0 %v2434
      %2626 = vmatpush1.bf16.msra.mxu0 %v2433
      %2627 = vmatprep.subr.bf16.mxu0 %v2437
      %2628 = vmatpush1.bf16.msra.mxu0 %v2436
      %2629 = vmatprep.subr.bf16.mxu0 0
      %2630 = vmatpush1.bf16.msra.mxu0 0
      %2631 = vmatprep.subr.bf16.mxu0 0
      %2632 = vmatpush1.bf16.msra.mxu0 0
      %2633 = vmatprep.subr.bf16.mxu0 0
      %2634 = vmatpush1.bf16.msra.mxu0 0
      %2635 = vmatprep.subr.bf16.mxu0 0
      %2636 = vmatpush1.bf16.msra.mxu0 0
      %2637 = vmatprep.subr.bf16.mxu0 0
      %2638 = vmatpush1.bf16.msra.mxu0 0
      %2639 = vmatprep.subr.bf16.mxu0 0
      %2640 = vmatpush1.bf16.msra.mxu0 0
      %2641 = vmatprep.subr.bf16.mxu0 0
      %2642 = vmatpush1.bf16.msra.mxu0 0
      %2643 = vmatprep.subr.bf16.mxu0 0
      %2644 = vmatpush1.bf16.msra.mxu0 0
      %2645 = vmatprep.subr.bf16.mxu0 0
      %2646 = vmatpush1.bf16.msra.mxu0 0
      %2647 = vmatprep.subr.bf16.mxu0 0
      %2648 = vmatpush1.bf16.msra.mxu0 0
      %2649 = vmatprep.mubr.bf16.mxu0 0
      %2650 = vmatmul.mubr.bf16.gmra.mrb[0].mxu0 %v2507
      %v2651 = vpop.f32.mrb[0].mxu0
      %v2652 = vadd.f32 %v2559, %v2651
      %v2653 = vpop.f32.mrb[0].mxu0
      %v2654 = vadd.f32 %v2561, %v2653
      %v2655 = vpop.f32.mrb[0].mxu0
      %v2656 = vadd.f32 %v2563, %v2655
      %v2657 = vpop.f32.mrb[0].mxu0
      %v2658 = vadd.f32 %v2565, %v2657
      %2659 = vmatprep.mubr.bf16.mxu0 0
      %2660 = vmatmul.mubr.bf16.gmra.mrb[0].mxu0 %v2510
      %v2661 = vpop.f32.mrb[0].mxu0
      %v2662 = vadd.f32 %v2569, %v2661
      %v2663 = vpop.f32.mrb[0].mxu0
      %v2664 = vadd.f32 %v2571, %v2663
      %v2665 = vpop.f32.mrb[0].mxu0
      %v2666 = vadd.f32 %v2573, %v2665
      %v2667 = vpop.f32.mrb[0].mxu0
      %v2668 = vadd.f32 %v2575, %v2667
      %2669 = vmatprep.mubr.bf16.mxu0 0
      %2670 = vmatmul.mubr.bf16.gmra.mrb[0].mxu0 %v2513
      %v2671 = vpop.f32.mrb[0].mxu0
      %v2672 = vadd.f32 %v2579, %v2671
      %v2673 = vpop.f32.mrb[0].mxu0
      %v2674 = vadd.f32 %v2581, %v2673
      %v2675 = vpop.f32.mrb[0].mxu0
      %v2676 = vadd.f32 %v2583, %v2675
      %v2677 = vpop.f32.mrb[0].mxu0
      %v2678 = vadd.f32 %v2585, %v2677
      %2679 = vmatprep.mubr.bf16.mxu0 0
      %2680 = vmatmul.mubr.bf16.gmra.mrb[0].mxu0 %v2516
      %v2681 = vpop.f32.mrb[0].mxu0
      %v2682 = vadd.f32 %v2589, %v2681
      %v2683 = vpop.f32.mrb[0].mxu0
      %v2684 = vadd.f32 %v2591, %v2683
      %v2685 = vpop.f32.mrb[0].mxu0
      %v2686 = vadd.f32 %v2593, %v2685
      %v2687 = vpop.f32.mrb[0].mxu0
      %v2688 = vadd.f32 %v2595, %v2687
      %2689 = vmatprep.mubr.bf16.mxu0 0
      %2690 = vmatmul.mubr.bf16.gmra.mrb[0].mxu0 %v2519
      %v2691 = vpop.f32.mrb[0].mxu0
      %v2692 = vadd.f32 %v2599, %v2691
      %v2693 = vpop.f32.mrb[0].mxu0
      %v2694 = vadd.f32 %v2601, %v2693
      %v2695 = vpop.f32.mrb[0].mxu0
      %v2696 = vadd.f32 %v2603, %v2695
      %v2697 = vpop.f32.mrb[0].mxu0
      %v2698 = vadd.f32 %v2605, %v2697
      %2699 = vmatprep.mubr.bf16.mxu0 0
      %2700 = vmatmul.mubr.bf16.gmra.mrb[0].mxu0 %v2522
      %v2701 = vpop.f32.mrb[0].mxu0
      %v2702 = vadd.f32 %v2609, %v2701
      %v2703 = vpop.f32.mrb[0].mxu0
      %v2704 = vadd.f32 %v2611, %v2703
      %v2705 = vpop.f32.mrb[0].mxu0
      %v2706 = vadd.f32 %v2613, %v2705
      %v2707 = vpop.f32.mrb[0].mxu0
      %v2708 = vadd.f32 %v2615, %v2707
      %2709 = vdwg.mxu0
      %2710 = vmatprep.subr.bf16.mxu0 0
      %2711 = vmatpush1.bf16.msra.mxu0 %v2375
      %2712 = vmatprep.subr.bf16.mxu0 0
      %2713 = vmatpush1.bf16.msra.mxu0 %v2378
      %2714 = vmatprep.subr.bf16.mxu0 0
      %2715 = vmatpush1.bf16.msra.mxu0 %v2381
      %2716 = vmatprep.subr.bf16.mxu0 0
      %2717 = vmatpush1.bf16.msra.mxu0 %v2384
      %2718 = vmatprep.subr.bf16.mxu0 0
      %2719 = vmatpush1.bf16.msra.mxu0 %v2387
      %2720 = vmatprep.subr.bf16.mxu0 0
      %2721 = vmatpush1.bf16.msra.mxu0 %v2390
      %2722 = vmatprep.subr.bf16.mxu0 0
      %2723 = vmatpush1.bf16.msra.mxu0 %v2393
      %2724 = vmatprep.subr.bf16.mxu0 0
      %2725 = vmatpush1.bf16.msra.mxu0 %v2396
      %2726 = vmatprep.subr.bf16.mxu0 0
      %2727 = vmatpush1.bf16.msra.mxu0 %v2399
      %2728 = vmatprep.subr.bf16.mxu0 0
      %2729 = vmatpush1.bf16.msra.mxu0 %v2402
      %2730 = vmatprep.subr.bf16.mxu0 0
      %2731 = vmatpush1.bf16.msra.mxu0 %v2405
      %2732 = vmatprep.subr.bf16.mxu0 0
      %2733 = vmatpush1.bf16.msra.mxu0 %v2408
      %2734 = vmatprep.subr.bf16.mxu0 0
      %2735 = vmatpush1.bf16.msra.mxu0 %v2411
      %2736 = vmatprep.subr.bf16.mxu0 0
      %2737 = vmatpush1.bf16.msra.mxu0 %v2414
      %2738 = vmatprep.subr.bf16.mxu0 0
      %2739 = vmatpush1.bf16.msra.mxu0 %v2417
      %2740 = vmatprep.subr.bf16.mxu0 0
      %2741 = vmatpush1.bf16.msra.mxu0 %v2420
      %2742 = vmatprep.mubr.bf16.mxu0 %v2023
      %2743 = vmatmul.mubr.bf16.gmra.mrb[0].mxu0 %v2011
      %v2744 = vpop.f32.mrb[0].mxu0
      %v2745 = vadd.f32 0.0, %v2744
      %v2746 = vpop.f32.mrb[0].mxu0
      %v2747 = vpop.f32.mrb[0].mxu0
      %v2748 = vadd.f32 0.0, %v2747
      %v2749 = vpop.f32.mrb[0].mxu0
      %2750 = vmatprep.mubr.bf16.mxu0 %v2051
      %2751 = vmatmul.mubr.bf16.gmra.mrb[0].mxu0 %v2043
      %v2752 = vpop.f32.mrb[0].mxu0
      %v2753 = vadd.f32 0.0, %v2752
      %v2754 = vpop.f32.mrb[0].mxu0
      %v2755 = vpop.f32.mrb[0].mxu0
      %v2756 = vadd.f32 0.0, %v2755
      %v2757 = vpop.f32.mrb[0].mxu0
      %2758 = vmatprep.mubr.bf16.mxu0 %v2075
      %2759 = vmatmul.mubr.bf16.gmra.mrb[0].mxu0 %v2067
      %v2760 = vpop.f32.mrb[0].mxu0
      %v2761 = vadd.f32 0.0, %v2760
      %v2762 = vpop.f32.mrb[0].mxu0
      %v2763 = vpop.f32.mrb[0].mxu0
      %v2764 = vadd.f32 0.0, %v2763
      %v2765 = vpop.f32.mrb[0].mxu0
      %2766 = vmatprep.mubr.bf16.mxu0 %v2099
      %2767 = vmatmul.mubr.bf16.gmra.mrb[0].mxu0 %v2091
      %v2768 = vpop.f32.mrb[0].mxu0
      %v2769 = vadd.f32 0.0, %v2768
      %v2770 = vpop.f32.mrb[0].mxu0
      %v2771 = vpop.f32.mrb[0].mxu0
      %v2772 = vadd.f32 0.0, %v2771
      %v2773 = vpop.f32.mrb[0].mxu0
      %2774 = vmatprep.mubr.bf16.mxu0 %v2123
      %2775 = vmatmul.mubr.bf16.gmra.mrb[0].mxu0 %v2115
      %v2776 = vpop.f32.mrb[0].mxu0
      %v2777 = vadd.f32 0.0, %v2776
      %v2778 = vpop.f32.mrb[0].mxu0
      %v2779 = vpop.f32.mrb[0].mxu0
      %v2780 = vadd.f32 0.0, %v2779
      %v2781 = vpop.f32.mrb[0].mxu0
      %2782 = vmatprep.mubr.bf16.mxu0 %v2137
      %2783 = vmatmul.mubr.bf16.gmra.mrb[0].mxu0 %v2134
      %v2784 = vpop.f32.mrb[0].mxu0
      %v2785 = vadd.f32 0.0, %v2784
      %v2786 = vpop.f32.mrb[0].mxu0
      %v2787 = vpop.f32.mrb[0].mxu0
      %v2788 = vadd.f32 0.0, %v2787
      %v2789 = vpop.f32.mrb[0].mxu0
      %2790 = vdwg.mxu0
      %2791 = vmatprep.subr.bf16.mxu0 0
      %2792 = vmatpush1.bf16.msra.mxu0 %v2423
      %2793 = vmatprep.subr.bf16.mxu0 0
      %2794 = vmatpush1.bf16.msra.mxu0 %v2426
      %2795 = vmatprep.subr.bf16.mxu0 0
      %2796 = vmatpush1.bf16.msra.mxu0 %v2429
      %2797 = vmatprep.subr.bf16.mxu0 0
      %2798 = vmatpush1.bf16.msra.mxu0 %v2432
      %2799 = vmatprep.subr.bf16.mxu0 0
      %2800 = vmatpush1.bf16.msra.mxu0 %v2435
      %2801 = vmatprep.subr.bf16.mxu0 0
      %2802 = vmatpush1.bf16.msra.mxu0 %v2438
      %2803 = vmatprep.subr.bf16.mxu0 0
      %2804 = vmatpush1.bf16.msra.mxu0 0
      %2805 = vmatprep.subr.bf16.mxu0 0
      %2806 = vmatpush1.bf16.msra.mxu0 0
      %2807 = vmatprep.subr.bf16.mxu0 0
      %2808 = vmatpush1.bf16.msra.mxu0 0
      %2809 = vmatprep.subr.bf16.mxu0 0
      %2810 = vmatpush1.bf16.msra.mxu0 0
      %2811 = vmatprep.subr.bf16.mxu0 0
      %2812 = vmatpush1.bf16.msra.mxu0 0
      %2813 = vmatprep.subr.bf16.mxu0 0
      %2814 = vmatpush1.bf16.msra.mxu0 0
      %2815 = vmatprep.subr.bf16.mxu0 0
      %2816 = vmatpush1.bf16.msra.mxu0 0
      %2817 = vmatprep.subr.bf16.mxu0 0
      %2818 = vmatpush1.bf16.msra.mxu0 0
      %2819 = vmatprep.subr.bf16.mxu0 0
      %2820 = vmatpush1.bf16.msra.mxu0 0
      %2821 = vmatprep.subr.bf16.mxu0 0
      %2822 = vmatpush1.bf16.msra.mxu0 0
      %2823 = vmatprep.mubr.bf16.mxu0 0
      %2824 = vmatmul.mubr.bf16.gmra.mrb[0].mxu0 %v2507
      %v2825 = vpop.f32.mrb[0].mxu0
      %v2826 = vadd.f32 %v2745, %v2825
      %v2827 = vpop.f32.mrb[0].mxu0
      %v2828 = vpop.f32.mrb[0].mxu0
      %v2829 = vadd.f32 %v2748, %v2828
      %v2830 = vpop.f32.mrb[0].mxu0
      %2831 = vmatprep.mubr.bf16.mxu0 0
      %2832 = vmatmul.mubr.bf16.gmra.mrb[0].mxu0 %v2510
      %v2833 = vpop.f32.mrb[0].mxu0
      %v2834 = vadd.f32 %v2753, %v2833
      %v2835 = vpop.f32.mrb[0].mxu0
      %v2836 = vpop.f32.mrb[0].mxu0
      %v2837 = vadd.f32 %v2756, %v2836
      %v2838 = vpop.f32.mrb[0].mxu0
      %2839 = vmatprep.mubr.bf16.mxu0 0
      %2840 = vmatmul.mubr.bf16.gmra.mrb[0].mxu0 %v2513
      %v2841 = vpop.f32.mrb[0].mxu0
      %v2842 = vadd.f32 %v2761, %v2841
      %v2843 = vpop.f32.mrb[0].mxu0
      %v2844 = vpop.f32.mrb[0].mxu0
      %v2845 = vadd.f32 %v2764, %v2844
      %v2846 = vpop.f32.mrb[0].mxu0
      %2847 = vmatprep.mubr.bf16.mxu0 0
      %2848 = vmatmul.mubr.bf16.gmra.mrb[0].mxu0 %v2516
      %v2849 = vpop.f32.mrb[0].mxu0
      %v2850 = vadd.f32 %v2769, %v2849
      %v2851 = vpop.f32.mrb[0].mxu0
      %v2852 = vpop.f32.mrb[0].mxu0
      %v2853 = vadd.f32 %v2772, %v2852
      %v2854 = vpop.f32.mrb[0].mxu0
      %2855 = vmatprep.mubr.bf16.mxu0 0
      %2856 = vmatmul.mubr.bf16.gmra.mrb[0].mxu0 %v2519
      %v2857 = vpop.f32.mrb[0].mxu0
      %v2858 = vadd.f32 %v2777, %v2857
      %v2859 = vpop.f32.mrb[0].mxu0
      %v2860 = vpop.f32.mrb[0].mxu0
      %v2861 = vadd.f32 %v2780, %v2860
      %v2862 = vpop.f32.mrb[0].mxu0
      %2863 = vmatprep.mubr.bf16.mxu0 0
      %2864 = vmatmul.mubr.bf16.gmra.mrb[0].mxu0 %v2522
      %v2865 = vpop.f32.mrb[0].mxu0
      %v2866 = vadd.f32 %v2785, %v2865
      %v2867 = vpop.f32.mrb[0].mxu0
      %v2868 = vpop.f32.mrb[0].mxu0
      %v2869 = vadd.f32 %v2788, %v2868
      %v2870 = vpop.f32.mrb[0].mxu0
      %2871 = vdwg.mxu0
      %v2960 = vunpack.c.l.b16 %v1823
      %v2961 = vunpack.c.h.b16 %v1823
      %v2962 = vunpack.c.l.b16 %v1824
      %v2963 = vunpack.c.l.b16 %v1825
      %v2964 = vunpack.c.h.b16 %v1825
      %v2965 = vunpack.c.l.b16 %v1826
      %v2966 = vunpack.c.l.b16 %v1827
      %v2967 = vunpack.c.h.b16 %v1827
      %v2968 = vunpack.c.l.b16 %v1828
      %v2969 = vunpack.c.l.b16 %v1829
      %v2970 = vunpack.c.h.b16 %v1829
      %v2971 = vunpack.c.l.b16 %v1830
      %v2972 = vunpack.c.l.b16 %v1831
      %v2973 = vunpack.c.h.b16 %v1831
      %v2974 = vunpack.c.l.b16 %v1832
      %v2975 = vunpack.c.l.b16 %v1833
      %v2976 = vunpack.c.h.b16 %v1833
      %v2977 = vunpack.c.l.b16 %v1834
      %v2978 = vunpack.c.l.b16 %v1835
      %v2979 = vunpack.c.h.b16 %v1835
      %v2980 = vunpack.c.l.b16 %v1836
      %v2981 = vunpack.c.l.b16 %v1837
      %v2982 = vunpack.c.h.b16 %v1837
      %v2983 = vunpack.c.l.b16 %v1838
      %v2984 = vunpack.c.l.b16 %v1839
      %v2985 = vunpack.c.h.b16 %v1839
      %v2986 = vunpack.c.l.b16 %v1840
      %v2987 = vunpack.c.l.b16 %v1841
      %v2988 = vunpack.c.h.b16 %v1841
      %v2989 = vunpack.c.l.b16 %v1842
      %v2990 = vunpack.c.l.b16 %v1843
      %v2991 = vunpack.c.h.b16 %v1843
      %v2992 = vunpack.c.l.b16 %v1844
      %v2993 = vunpack.c.l.b16 %v1845
      %v2994 = vunpack.c.h.b16 %v1845
      %v2995 = vunpack.c.l.b16 %v1846
      %v2996 = vunpack.c.l.b16 %v1847
      %v2997 = vunpack.c.h.b16 %v1847
      %v2998 = vunpack.c.l.b16 %v1848
      %v2999 = vunpack.c.l.b16 %v1849
      %v3000 = vunpack.c.h.b16 %v1849
      %v3001 = vunpack.c.l.b16 %v1850
      %v3002 = vunpack.c.l.b16 %v1851
      %v3003 = vunpack.c.h.b16 %v1851
      %v3004 = vunpack.c.l.b16 %v1852
      %v3005 = vunpack.c.l.b16 %v1853
      %v3006 = vunpack.c.h.b16 %v1853
      %v3007 = vunpack.c.l.b16 %v1854
      %v3008 = vunpack.c.l.b16 %v1855
      %v3009 = vunpack.c.h.b16 %v1855
      %v3010 = vunpack.c.l.b16 %v1856
      %v3011 = vunpack.c.l.b16 %v1857
      %v3012 = vunpack.c.h.b16 %v1857
      %v3013 = vunpack.c.l.b16 %v1858
      %v3014 = vunpack.c.l.b16 %v1859
      %v3015 = vunpack.c.h.b16 %v1859
      %v3016 = vunpack.c.l.b16 %v1860
      %v3017 = vunpack.c.l.b16 %v1861
      %v3018 = vunpack.c.h.b16 %v1861
      %v3019 = vunpack.c.l.b16 %v1862
      %v3020 = vunpack.c.l.b16 %v1863
      %v3021 = vunpack.c.h.b16 %v1863
      %v3022 = vunpack.c.l.b16 %v1864
      %v3023 = vunpack.c.l.b16 %v1865
      %v3024 = vunpack.c.h.b16 %v1865
      %v3025 = vunpack.c.l.b16 %v1866
      %v3026 = vunpack.c.l.b16 %v1867
      %v3027 = vunpack.c.h.b16 %v1867
      %v3028 = vunpack.c.l.b16 %v1868
      %v3029 = vunpack.c.l.b16 %v1869
      %v3030 = vunpack.c.h.b16 %v1869
      %v3031 = vunpack.c.l.b16 %v1870
      %v3032 = vunpack.c.l.b16 %v1871
      %v3033 = vunpack.c.h.b16 %v1871
      %v3034 = vunpack.c.l.b16 %v1872
      %v3035 = vunpack.c.l.b16 %v1873
      %v3036 = vunpack.c.h.b16 %v1873
      %v3037 = vunpack.c.l.b16 %v1874
      %v3038 = vunpack.c.l.b16 %v1875
      %v3039 = vunpack.c.h.b16 %v1875
      %v3040 = vunpack.c.l.b16 %v1876
      %v3041 = vunpack.c.l.b16 %v1877
      %v3042 = vunpack.c.h.b16 %v1877
      %v3043 = vunpack.c.l.b16 %v1878
      %v3044 = vunpack.c.l.b16 %v1879
      %v3045 = vunpack.c.h.b16 %v1879
      %v3046 = vunpack.c.l.b16 %v1880
      %v3047 = vunpack.c.l.b16 %v1881
      %v3048 = vunpack.c.h.b16 %v1881
      %v3049 = vunpack.c.l.b16 %v1882
      %v3050 = vunpack.c.l.b16 %v1883
      %v3051 = vunpack.c.h.b16 %v1883
      %v3052 = vunpack.c.l.b16 %v1884
      %v3053 = vunpack.c.l.b16 %v1885
      %v3054 = vunpack.c.h.b16 %v1885
      %v3055 = vunpack.c.l.b16 %v1886
      %v3056 = vunpack.c.l.b16 %v1887
      %v3057 = vunpack.c.h.b16 %v1887
      %v3058 = vunpack.c.l.b16 %v1888
      %v3059 = vunpack.c.l.b16 %v1889
      %v3060 = vunpack.c.h.b16 %v1889
      %v3061 = vunpack.c.l.b16 %v1890
      %v3062 = vunpack.c.l.b16 %v1891
      %v3063 = vunpack.c.h.b16 %v1891
      %v3064 = vunpack.c.l.b16 %v1892
      %v3065 = vunpack.c.l.b16 %v1893
      %v3066 = vunpack.c.h.b16 %v1893
      %v3067 = vunpack.c.l.b16 %v1894
      %v3068 = vunpack.c.l.b16 %v1895
      %v3069 = vunpack.c.h.b16 %v1895
      %v3070 = vunpack.c.l.b16 %v1896
      %v3071 = vunpack.c.l.b16 %v1897
      %v3072 = vunpack.c.h.b16 %v1897
      %v3073 = vunpack.c.l.b16 %v1898
      %v3074 = vunpack.c.l.b16 %v1899
      %v3075 = vunpack.c.h.b16 %v1899
      %v3076 = vunpack.c.l.b16 %v1900
      %v3077 = vunpack.c.l.b16 %v1901
      %v3078 = vunpack.c.h.b16 %v1901
      %v3079 = vunpack.c.l.b16 %v1902
      %v3080 = vunpack.c.l.b16 %v1903
      %v3081 = vunpack.c.h.b16 %v1903
      %v3082 = vunpack.c.l.b16 %v1904
      %v3083 = vunpack.c.l.b16 %v1905
      %v3084 = vunpack.c.h.b16 %v1905
      %v3085 = vunpack.c.l.b16 %v1906
      %v3086 = vunpack.c.l.b16 %v1907
      %v3087 = vunpack.c.h.b16 %v1907
      %v3088 = vunpack.c.l.b16 %v1908
      %v3089 = vunpack.c.l.b16 %v1909
      %v3090 = vunpack.c.h.b16 %v1909
      %v3091 = vunpack.c.l.b16 %v1910
      %v3092 = vpack.c.b16 %v2963, %v2960
      %v3093 = vpack.c.b16 %v2964, %v2961
      %v3094 = vpack.c.b16 %v2965, %v2962
      %v3095 = vpack.c.b16 %v2969, %v2966
      %v3096 = vpack.c.b16 %v2970, %v2967
      %v3097 = vpack.c.b16 %v2971, %v2968
      %v3098 = vpack.c.b16 %v2975, %v2972
      %v3099 = vpack.c.b16 %v2976, %v2973
      %v3100 = vpack.c.b16 %v2977, %v2974
      %v3101 = vpack.c.b16 %v2981, %v2978
      %v3102 = vpack.c.b16 %v2982, %v2979
      %v3103 = vpack.c.b16 %v2983, %v2980
      %v3104 = vpack.c.b16 %v2987, %v2984
      %v3105 = vpack.c.b16 %v2988, %v2985
      %v3106 = vpack.c.b16 %v2989, %v2986
      %v3107 = vpack.c.b16 %v2993, %v2990
      %v3108 = vpack.c.b16 %v2994, %v2991
      %v3109 = vpack.c.b16 %v2995, %v2992
      %v3110 = vpack.c.b16 %v2999, %v2996
      %v3111 = vpack.c.b16 %v3000, %v2997
      %v3112 = vpack.c.b16 %v3001, %v2998
      %v3113 = vpack.c.b16 %v3005, %v3002
      %v3114 = vpack.c.b16 %v3006, %v3003
      %v3115 = vpack.c.b16 %v3007, %v3004
      %v3116 = vpack.c.b16 %v3011, %v3008
      %v3117 = vpack.c.b16 %v3012, %v3009
      %v3118 = vpack.c.b16 %v3013, %v3010
      %v3119 = vpack.c.b16 %v3017, %v3014
      %v3120 = vpack.c.b16 %v3018, %v3015
      %v3121 = vpack.c.b16 %v3019, %v3016
      %v3122 = vpack.c.b16 %v3023, %v3020
      %v3123 = vpack.c.b16 %v3024, %v3021
      %v3124 = vpack.c.b16 %v3025, %v3022
      %v3125 = vpack.c.b16 %v3029, %v3026
      %v3126 = vpack.c.b16 %v3030, %v3027
      %v3127 = vpack.c.b16 %v3031, %v3028
      %v3128 = vpack.c.b16 %v3035, %v3032
      %v3129 = vpack.c.b16 %v3036, %v3033
      %v3130 = vpack.c.b16 %v3037, %v3034
      %v3131 = vpack.c.b16 %v3041, %v3038
      %v3132 = vpack.c.b16 %v3042, %v3039
      %v3133 = vpack.c.b16 %v3043, %v3040
      %v3134 = vpack.c.b16 %v3047, %v3044
      %v3135 = vpack.c.b16 %v3048, %v3045
      %v3136 = vpack.c.b16 %v3049, %v3046
      %v3137 = vpack.c.b16 %v3053, %v3050
      %v3138 = vpack.c.b16 %v3054, %v3051
      %v3139 = vpack.c.b16 %v3055, %v3052
      %v3140 = vpack.c.b16 %v3059, %v3056
      %v3141 = vpack.c.b16 %v3060, %v3057
      %v3142 = vpack.c.b16 %v3061, %v3058
      %v3143 = vpack.c.b16 %v3065, %v3062
      %v3144 = vpack.c.b16 %v3066, %v3063
      %v3145 = vpack.c.b16 %v3067, %v3064
      %v3146 = vpack.c.b16 %v3071, %v3068
      %v3147 = vpack.c.b16 %v3072, %v3069
      %v3148 = vpack.c.b16 %v3073, %v3070
      %v3149 = vpack.c.b16 %v3077, %v3074
      %v3150 = vpack.c.b16 %v3078, %v3075
      %v3151 = vpack.c.b16 %v3079, %v3076
      %v3152 = vpack.c.b16 %v3083, %v3080
      %v3153 = vpack.c.b16 %v3084, %v3081
      %v3154 = vpack.c.b16 %v3085, %v3082
      %v3155 = vpack.c.b16 %v3089, %v3086
      %v3156 = vpack.c.b16 %v3090, %v3087
      %v3157 = vpack.c.b16 %v3091, %v3088
      %v3224 = vsel %vm2505, %v1807, 0
      %v3226 = vsel %vm2505, %v1810, 0
      %v3228 = vsel %vm2505, %v1813, 0
      %v3230 = vsel %vm2505, %v1816, 0
      %v3232 = vsel %vm2505, %v1819, 0
      %v3234 = vsel %vm2505, %v1822, 0
      %3236 = vmatprep.subr.bf16.mxu0 %v3093
      %3237 = vmatpush1.bf16.msra.mxu0 %v3092
      %3238 = vmatprep.subr.bf16.mxu0 %v3096
      %3239 = vmatpush1.bf16.msra.mxu0 %v3095
      %3240 = vmatprep.subr.bf16.mxu0 %v3099
      %3241 = vmatpush1.bf16.msra.mxu0 %v3098
      %3242 = vmatprep.subr.bf16.mxu0 %v3102
      %3243 = vmatpush1.bf16.msra.mxu0 %v3101
      %3244 = vmatprep.subr.bf16.mxu0 %v3105
      %3245 = vmatpush1.bf16.msra.mxu0 %v3104
      %3246 = vmatprep.subr.bf16.mxu0 %v3108
      %3247 = vmatpush1.bf16.msra.mxu0 %v3107
      %3248 = vmatprep.subr.bf16.mxu0 %v3111
      %3249 = vmatpush1.bf16.msra.mxu0 %v3110
      %3250 = vmatprep.subr.bf16.mxu0 %v3114
      %3251 = vmatpush1.bf16.msra.mxu0 %v3113
      %3252 = vmatprep.subr.bf16.mxu0 %v3117
      %3253 = vmatpush1.bf16.msra.mxu0 %v3116
      %3254 = vmatprep.subr.bf16.mxu0 %v3120
      %3255 = vmatpush1.bf16.msra.mxu0 %v3119
      %3256 = vmatprep.subr.bf16.mxu0 %v3123
      %3257 = vmatpush1.bf16.msra.mxu0 %v3122
      %3258 = vmatprep.subr.bf16.mxu0 %v3126
      %3259 = vmatpush1.bf16.msra.mxu0 %v3125
      %3260 = vmatprep.subr.bf16.mxu0 %v3129
      %3261 = vmatpush1.bf16.msra.mxu0 %v3128
      %3262 = vmatprep.subr.bf16.mxu0 %v3132
      %3263 = vmatpush1.bf16.msra.mxu0 %v3131
      %3264 = vmatprep.subr.bf16.mxu0 %v3135
      %3265 = vmatpush1.bf16.msra.mxu0 %v3134
      %3266 = vmatprep.subr.bf16.mxu0 %v3138
      %3267 = vmatpush1.bf16.msra.mxu0 %v3137
      %3268 = vmatprep.mubr.bf16.mxu0 %v1806
      %3269 = vmatmul.mubr.bf16.gmra.mrb[0].mxu0 %v1805
      %v3270 = vpop.f32.mrb[0].mxu0
      %v3271 = vadd.f32 %v2652, %v3270
      %v3272 = vpop.f32.mrb[0].mxu0
      %v3273 = vadd.f32 %v2654, %v3272
      %v3274 = vpop.f32.mrb[0].mxu0
      %v3275 = vadd.f32 %v2656, %v3274
      %v3276 = vpop.f32.mrb[0].mxu0
      %v3277 = vadd.f32 %v2658, %v3276
      %3278 = vmatprep.mubr.bf16.mxu0 %v1809
      %3279 = vmatmul.mubr.bf16.gmra.mrb[0].mxu0 %v1808
      %v3280 = vpop.f32.mrb[0].mxu0
      %v3281 = vadd.f32 %v2662, %v3280
      %v3282 = vpop.f32.mrb[0].mxu0
      %v3283 = vadd.f32 %v2664, %v3282
      %v3284 = vpop.f32.mrb[0].mxu0
      %v3285 = vadd.f32 %v2666, %v3284
      %v3286 = vpop.f32.mrb[0].mxu0
      %v3287 = vadd.f32 %v2668, %v3286
      %3288 = vmatprep.mubr.bf16.mxu0 %v1812
      %3289 = vmatmul.mubr.bf16.gmra.mrb[0].mxu0 %v1811
      %v3290 = vpop.f32.mrb[0].mxu0
      %v3291 = vadd.f32 %v2672, %v3290
      %v3292 = vpop.f32.mrb[0].mxu0
      %v3293 = vadd.f32 %v2674, %v3292
      %v3294 = vpop.f32.mrb[0].mxu0
      %v3295 = vadd.f32 %v2676, %v3294
      %v3296 = vpop.f32.mrb[0].mxu0
      %v3297 = vadd.f32 %v2678, %v3296
      %3298 = vmatprep.mubr.bf16.mxu0 %v1815
      %3299 = vmatmul.mubr.bf16.gmra.mrb[0].mxu0 %v1814
      %v3300 = vpop.f32.mrb[0].mxu0
      %v3301 = vadd.f32 %v2682, %v3300
      %v3302 = vpop.f32.mrb[0].mxu0
      %v3303 = vadd.f32 %v2684, %v3302
      %v3304 = vpop.f32.mrb[0].mxu0
      %v3305 = vadd.f32 %v2686, %v3304
      %v3306 = vpop.f32.mrb[0].mxu0
      %v3307 = vadd.f32 %v2688, %v3306
      %3308 = vmatprep.mubr.bf16.mxu0 %v1818
      %3309 = vmatmul.mubr.bf16.gmra.mrb[0].mxu0 %v1817
      %v3310 = vpop.f32.mrb[0].mxu0
      %v3311 = vadd.f32 %v2692, %v3310
      %v3312 = vpop.f32.mrb[0].mxu0
      %v3313 = vadd.f32 %v2694, %v3312
      %v3314 = vpop.f32.mrb[0].mxu0
      %v3315 = vadd.f32 %v2696, %v3314
      %v3316 = vpop.f32.mrb[0].mxu0
      %v3317 = vadd.f32 %v2698, %v3316
      %3318 = vmatprep.mubr.bf16.mxu0 %v1821
      %3319 = vmatmul.mubr.bf16.gmra.mrb[0].mxu0 %v1820
      %v3320 = vpop.f32.mrb[0].mxu0
      %v3321 = vadd.f32 %v2702, %v3320
      %v3322 = vpop.f32.mrb[0].mxu0
      %v3323 = vadd.f32 %v2704, %v3322
      %v3324 = vpop.f32.mrb[0].mxu0
      %v3325 = vadd.f32 %v2706, %v3324
      %v3326 = vpop.f32.mrb[0].mxu0
      %v3327 = vadd.f32 %v2708, %v3326
      %3328 = vdwg.mxu0
      %3329 = vmatprep.subr.bf16.mxu0 %v3141
      %3330 = vmatpush1.bf16.msra.mxu0 %v3140
      %3331 = vmatprep.subr.bf16.mxu0 %v3144
      %3332 = vmatpush1.bf16.msra.mxu0 %v3143
      %3333 = vmatprep.subr.bf16.mxu0 %v3147
      %3334 = vmatpush1.bf16.msra.mxu0 %v3146
      %3335 = vmatprep.subr.bf16.mxu0 %v3150
      %3336 = vmatpush1.bf16.msra.mxu0 %v3149
      %3337 = vmatprep.subr.bf16.mxu0 %v3153
      %3338 = vmatpush1.bf16.msra.mxu0 %v3152
      %3339 = vmatprep.subr.bf16.mxu0 %v3156
      %3340 = vmatpush1.bf16.msra.mxu0 %v3155
      %3341 = vmatprep.subr.bf16.mxu0 0
      %3342 = vmatpush1.bf16.msra.mxu0 0
      %3343 = vmatprep.subr.bf16.mxu0 0
      %3344 = vmatpush1.bf16.msra.mxu0 0
      %3345 = vmatprep.subr.bf16.mxu0 0
      %3346 = vmatpush1.bf16.msra.mxu0 0
      %3347 = vmatprep.subr.bf16.mxu0 0
      %3348 = vmatpush1.bf16.msra.mxu0 0
      %3349 = vmatprep.subr.bf16.mxu0 0
      %3350 = vmatpush1.bf16.msra.mxu0 0
      %3351 = vmatprep.subr.bf16.mxu0 0
      %3352 = vmatpush1.bf16.msra.mxu0 0
      %3353 = vmatprep.subr.bf16.mxu0 0
      %3354 = vmatpush1.bf16.msra.mxu0 0
      %3355 = vmatprep.subr.bf16.mxu0 0
      %3356 = vmatpush1.bf16.msra.mxu0 0
      %3357 = vmatprep.subr.bf16.mxu0 0
      %3358 = vmatpush1.bf16.msra.mxu0 0
      %3359 = vmatprep.subr.bf16.mxu0 0
      %3360 = vmatpush1.bf16.msra.mxu0 0
      %3361 = vmatprep.mubr.bf16.mxu0 0
      %3362 = vmatmul.mubr.bf16.gmra.mrb[0].mxu0 %v3224
      %v3363 = vpop.f32.mrb[0].mxu0
      %v3364 = vadd.f32 %v3271, %v3363
      %v3365 = vpop.f32.mrb[0].mxu0
      %v3366 = vadd.f32 %v3273, %v3365
      %v3367 = vpop.f32.mrb[0].mxu0
      %v3368 = vadd.f32 %v3275, %v3367
      %v3369 = vpop.f32.mrb[0].mxu0
      %v3370 = vadd.f32 %v3277, %v3369
      %3371 = vmatprep.mubr.bf16.mxu0 0
      %3372 = vmatmul.mubr.bf16.gmra.mrb[0].mxu0 %v3226
      %v3373 = vpop.f32.mrb[0].mxu0
      %v3374 = vadd.f32 %v3281, %v3373
      %v3375 = vpop.f32.mrb[0].mxu0
      %v3376 = vadd.f32 %v3283, %v3375
      %v3377 = vpop.f32.mrb[0].mxu0
      %v3378 = vadd.f32 %v3285, %v3377
      %v3379 = vpop.f32.mrb[0].mxu0
      %v3380 = vadd.f32 %v3287, %v3379
      %3381 = vmatprep.mubr.bf16.mxu0 0
      %3382 = vmatmul.mubr.bf16.gmra.mrb[0].mxu0 %v3228
      %v3383 = vpop.f32.mrb[0].mxu0
      %v3384 = vadd.f32 %v3291, %v3383
      %v3385 = vpop.f32.mrb[0].mxu0
      %v3386 = vadd.f32 %v3293, %v3385
      %v3387 = vpop.f32.mrb[0].mxu0
      %v3388 = vadd.f32 %v3295, %v3387
      %v3389 = vpop.f32.mrb[0].mxu0
      %v3390 = vadd.f32 %v3297, %v3389
      %3391 = vmatprep.mubr.bf16.mxu0 0
      %3392 = vmatmul.mubr.bf16.gmra.mrb[0].mxu0 %v3230
      %v3393 = vpop.f32.mrb[0].mxu0
      %v3394 = vadd.f32 %v3301, %v3393
      %v3395 = vpop.f32.mrb[0].mxu0
      %v3396 = vadd.f32 %v3303, %v3395
      %v3397 = vpop.f32.mrb[0].mxu0
      %v3398 = vadd.f32 %v3305, %v3397
      %v3399 = vpop.f32.mrb[0].mxu0
      %v3400 = vadd.f32 %v3307, %v3399
      %3401 = vmatprep.mubr.bf16.mxu0 0
      %3402 = vmatmul.mubr.bf16.gmra.mrb[0].mxu0 %v3232
      %v3403 = vpop.f32.mrb[0].mxu0
      %v3404 = vadd.f32 %v3311, %v3403
      %v3405 = vpop.f32.mrb[0].mxu0
      %v3406 = vadd.f32 %v3313, %v3405
      %v3407 = vpop.f32.mrb[0].mxu0
      %v3408 = vadd.f32 %v3315, %v3407
      %v3409 = vpop.f32.mrb[0].mxu0
      %v3410 = vadd.f32 %v3317, %v3409
      %3411 = vmatprep.mubr.bf16.mxu0 0
      %3412 = vmatmul.mubr.bf16.gmra.mrb[0].mxu0 %v3234
      %v3413 = vpop.f32.mrb[0].mxu0
      %v3414 = vadd.f32 %v3321, %v3413
      %v3415 = vpop.f32.mrb[0].mxu0
      %v3416 = vadd.f32 %v3323, %v3415
      %v3417 = vpop.f32.mrb[0].mxu0
      %v3418 = vadd.f32 %v3325, %v3417
      %v3419 = vpop.f32.mrb[0].mxu0
      %v3420 = vadd.f32 %v3327, %v3419
      %3421 = vdwg.mxu0
      %3422 = vmatprep.subr.bf16.mxu0 0
      %3423 = vmatpush1.bf16.msra.mxu0 %v3094
      %3424 = vmatprep.subr.bf16.mxu0 0
      %3425 = vmatpush1.bf16.msra.mxu0 %v3097
      %3426 = vmatprep.subr.bf16.mxu0 0
      %3427 = vmatpush1.bf16.msra.mxu0 %v3100
      %3428 = vmatprep.subr.bf16.mxu0 0
      %3429 = vmatpush1.bf16.msra.mxu0 %v3103
      %3430 = vmatprep.subr.bf16.mxu0 0
      %3431 = vmatpush1.bf16.msra.mxu0 %v3106
      %3432 = vmatprep.subr.bf16.mxu0 0
      %3433 = vmatpush1.bf16.msra.mxu0 %v3109
      %3434 = vmatprep.subr.bf16.mxu0 0
      %3435 = vmatpush1.bf16.msra.mxu0 %v3112
      %3436 = vmatprep.subr.bf16.mxu0 0
      %3437 = vmatpush1.bf16.msra.mxu0 %v3115
      %3438 = vmatprep.subr.bf16.mxu0 0
      %3439 = vmatpush1.bf16.msra.mxu0 %v3118
      %3440 = vmatprep.subr.bf16.mxu0 0
      %3441 = vmatpush1.bf16.msra.mxu0 %v3121
      %3442 = vmatprep.subr.bf16.mxu0 0
      %3443 = vmatpush1.bf16.msra.mxu0 %v3124
      %3444 = vmatprep.subr.bf16.mxu0 0
      %3445 = vmatpush1.bf16.msra.mxu0 %v3127
      %3446 = vmatprep.subr.bf16.mxu0 0
      %3447 = vmatpush1.bf16.msra.mxu0 %v3130
      %3448 = vmatprep.subr.bf16.mxu0 0
      %3449 = vmatpush1.bf16.msra.mxu0 %v3133
      %3450 = vmatprep.subr.bf16.mxu0 0
      %3451 = vmatpush1.bf16.msra.mxu0 %v3136
      %3452 = vmatprep.subr.bf16.mxu0 0
      %3453 = vmatpush1.bf16.msra.mxu0 %v3139
      %3454 = vmatprep.mubr.bf16.mxu0 %v1806
      %3455 = vmatmul.mubr.bf16.gmra.mrb[0].mxu0 %v1805
      %v3456 = vpop.f32.mrb[0].mxu0
      %v3457 = vadd.f32 %v2826, %v3456
      %v3458 = vpop.f32.mrb[0].mxu0
      %v3459 = vpop.f32.mrb[0].mxu0
      %v3460 = vadd.f32 %v2829, %v3459
      %v3461 = vpop.f32.mrb[0].mxu0
      %3462 = vmatprep.mubr.bf16.mxu0 %v1809
      %3463 = vmatmul.mubr.bf16.gmra.mrb[0].mxu0 %v1808
      %v3464 = vpop.f32.mrb[0].mxu0
      %v3465 = vadd.f32 %v2834, %v3464
      %v3466 = vpop.f32.mrb[0].mxu0
      %v3467 = vpop.f32.mrb[0].mxu0
      %v3468 = vadd.f32 %v2837, %v3467
      %v3469 = vpop.f32.mrb[0].mxu0
      %3470 = vmatprep.mubr.bf16.mxu0 %v1812
      %3471 = vmatmul.mubr.bf16.gmra.mrb[0].mxu0 %v1811
      %v3472 = vpop.f32.mrb[0].mxu0
      %v3473 = vadd.f32 %v2842, %v3472
      %v3474 = vpop.f32.mrb[0].mxu0
      %v3475 = vpop.f32.mrb[0].mxu0
      %v3476 = vadd.f32 %v2845, %v3475
      %v3477 = vpop.f32.mrb[0].mxu0
      %3478 = vmatprep.mubr.bf16.mxu0 %v1815
      %3479 = vmatmul.mubr.bf16.gmra.mrb[0].mxu0 %v1814
      %v3480 = vpop.f32.mrb[0].mxu0
      %v3481 = vadd.f32 %v2850, %v3480
      %v3482 = vpop.f32.mrb[0].mxu0
      %v3483 = vpop.f32.mrb[0].mxu0
      %v3484 = vadd.f32 %v2853, %v3483
      %v3485 = vpop.f32.mrb[0].mxu0
      %3486 = vmatprep.mubr.bf16.mxu0 %v1818
      %3487 = vmatmul.mubr.bf16.gmra.mrb[0].mxu0 %v1817
      %v3488 = vpop.f32.mrb[0].mxu0
      %v3489 = vadd.f32 %v2858, %v3488
      %v3490 = vpop.f32.mrb[0].mxu0
      %v3491 = vpop.f32.mrb[0].mxu0
      %v3492 = vadd.f32 %v2861, %v3491
      %v3493 = vpop.f32.mrb[0].mxu0
      %3494 = vmatprep.mubr.bf16.mxu0 %v1821
      %3495 = vmatmul.mubr.bf16.gmra.mrb[0].mxu0 %v1820
      %v3496 = vpop.f32.mrb[0].mxu0
      %v3497 = vadd.f32 %v2866, %v3496
      %v3498 = vpop.f32.mrb[0].mxu0
      %v3499 = vpop.f32.mrb[0].mxu0
      %v3500 = vadd.f32 %v2869, %v3499
      %v3501 = vpop.f32.mrb[0].mxu0
      %3502 = vdwg.mxu0
      %3503 = vmatprep.subr.bf16.mxu0 0
      %3504 = vmatpush1.bf16.msra.mxu0 %v3142
      %3505 = vmatprep.subr.bf16.mxu0 0
      %3506 = vmatpush1.bf16.msra.mxu0 %v3145
      %3507 = vmatprep.subr.bf16.mxu0 0
      %3508 = vmatpush1.bf16.msra.mxu0 %v3148
      %3509 = vmatprep.subr.bf16.mxu0 0
      %3510 = vmatpush1.bf16.msra.mxu0 %v3151
      %3511 = vmatprep.subr.bf16.mxu0 0
      %3512 = vmatpush1.bf16.msra.mxu0 %v3154
      %3513 = vmatprep.subr.bf16.mxu0 0
      %3514 = vmatpush1.bf16.msra.mxu0 %v3157
      %3515 = vmatprep.subr.bf16.mxu0 0
      %3516 = vmatpush1.bf16.msra.mxu0 0
      %3517 = vmatprep.subr.bf16.mxu0 0
      %3518 = vmatpush1.bf16.msra.mxu0 0
      %3519 = vmatprep.subr.bf16.mxu0 0
      %3520 = vmatpush1.bf16.msra.mxu0 0
      %3521 = vmatprep.subr.bf16.mxu0 0
      %3522 = vmatpush1.bf16.msra.mxu0 0
      %3523 = vmatprep.subr.bf16.mxu0 0
      %3524 = vmatpush1.bf16.msra.mxu0 0
      %3525 = vmatprep.subr.bf16.mxu0 0
      %3526 = vmatpush1.bf16.msra.mxu0 0
      %3527 = vmatprep.subr.bf16.mxu0 0
      %3528 = vmatpush1.bf16.msra.mxu0 0
      %3529 = vmatprep.subr.bf16.mxu0 0
      %3530 = vmatpush1.bf16.msra.mxu0 0
      %3531 = vmatprep.subr.bf16.mxu0 0
      %3532 = vmatpush1.bf16.msra.mxu0 0
      %3533 = vmatprep.subr.bf16.mxu0 0
      %3534 = vmatpush1.bf16.msra.mxu0 0
      %3535 = vmatprep.mubr.bf16.mxu0 0
      %3536 = vmatmul.mubr.bf16.gmra.mrb[0].mxu0 %v3224
      %v3537 = vpop.f32.mrb[0].mxu0
      %v3538 = vadd.f32 %v3457, %v3537
      %v3539 = vpop.f32.mrb[0].mxu0
      %v3540 = vpop.f32.mrb[0].mxu0
      %v3541 = vadd.f32 %v3460, %v3540
      %v3542 = vpop.f32.mrb[0].mxu0
      %3543 = vmatprep.mubr.bf16.mxu0 0
      %3544 = vmatmul.mubr.bf16.gmra.mrb[0].mxu0 %v3226
      %v3545 = vpop.f32.mrb[0].mxu0
      %v3546 = vadd.f32 %v3465, %v3545
      %v3547 = vpop.f32.mrb[0].mxu0
      %v3548 = vpop.f32.mrb[0].mxu0
      %v3549 = vadd.f32 %v3468, %v3548
      %v3550 = vpop.f32.mrb[0].mxu0
      %3551 = vmatprep.mubr.bf16.mxu0 0
      %3552 = vmatmul.mubr.bf16.gmra.mrb[0].mxu0 %v3228
      %v3553 = vpop.f32.mrb[0].mxu0
      %v3554 = vadd.f32 %v3473, %v3553
      %v3555 = vpop.f32.mrb[0].mxu0
      %v3556 = vpop.f32.mrb[0].mxu0
      %v3557 = vadd.f32 %v3476, %v3556
      %v3558 = vpop.f32.mrb[0].mxu0
      %3559 = vmatprep.mubr.bf16.mxu0 0
      %3560 = vmatmul.mubr.bf16.gmra.mrb[0].mxu0 %v3230
      %v3561 = vpop.f32.mrb[0].mxu0
      %v3562 = vadd.f32 %v3481, %v3561
      %v3563 = vpop.f32.mrb[0].mxu0
      %v3564 = vpop.f32.mrb[0].mxu0
      %v3565 = vadd.f32 %v3484, %v3564
      %v3566 = vpop.f32.mrb[0].mxu0
      %3567 = vmatprep.mubr.bf16.mxu0 0
      %3568 = vmatmul.mubr.bf16.gmra.mrb[0].mxu0 %v3232
      %v3569 = vpop.f32.mrb[0].mxu0
      %v3570 = vadd.f32 %v3489, %v3569
      %v3571 = vpop.f32.mrb[0].mxu0
      %v3572 = vpop.f32.mrb[0].mxu0
      %v3573 = vadd.f32 %v3492, %v3572
      %v3574 = vpop.f32.mrb[0].mxu0
      %3575 = vmatprep.mubr.bf16.mxu0 0
      %3576 = vmatmul.mubr.bf16.gmra.mrb[0].mxu0 %v3234
      %v3577 = vpop.f32.mrb[0].mxu0
      %v3578 = vadd.f32 %v3497, %v3577
      %v3579 = vpop.f32.mrb[0].mxu0
      %v3580 = vpop.f32.mrb[0].mxu0
      %v3581 = vadd.f32 %v3500, %v3580
      %v3582 = vpop.f32.mrb[0].mxu0
      %3583 = vdwg.mxu0
      %s3584 = scalar_lea.vmem %s5, 1056
      %v3585 = vld [vmem:[%s3584] sm:$0xff]
      %v3586 = vld [vmem:[%s3584 + $0x8] sm:$0xf]
      %v3587 = vld [vmem:[%s3584 + $0xc] sm:$0xff]
      %v3588 = vld [vmem:[%s3584 + $0x14] sm:$0xf]
      %v3589 = vld [vmem:[%s3584 + $0x18] sm:$0xff]
      %v3590 = vld [vmem:[%s3584 + $0x20] sm:$0xf]
      %v3591 = vld [vmem:[%s3584 + $0x24] sm:$0xff]
      %v3592 = vld [vmem:[%s3584 + $0x2c] sm:$0xf]
      %v3593 = vld [vmem:[%s3584 + $0x30] sm:$0xff]
      %v3594 = vld [vmem:[%s3584 + $0x38] sm:$0xf]
      %v3595 = vld [vmem:[%s3584 + $0x3c] sm:$0xff]
      %v3596 = vld [vmem:[%s3584 + $0x44] sm:$0xf]
      %v3597 = vld [vmem:[%s3584 + $0x48] sm:$0xff]
      %v3598 = vld [vmem:[%s3584 + $0x50] sm:$0xf]
      %v3599 = vld [vmem:[%s3584 + $0x54] sm:$0xff]
      %v3600 = vld [vmem:[%s3584 + $0x5c] sm:$0xf]
      %v3601 = vld [vmem:[%s3584 + $0x60] sm:$0xff]
      %v3602 = vld [vmem:[%s3584 + $0x68] sm:$0xf]
      %v3603 = vld [vmem:[%s3584 + $0x6c] sm:$0xff]
      %v3604 = vld [vmem:[%s3584 + $0x74] sm:$0xf]
      %v3605 = vld [vmem:[%s3584 + $0x78] sm:$0xff]
      %v3606 = vld [vmem:[%s3584 + $0x80] sm:$0xf]
      %v3607 = vld [vmem:[%s3584 + $0x84] sm:$0xff]
      %v3608 = vld [vmem:[%s3584 + $0x8c] sm:$0xf]
      %v3609 = vld [vmem:[%s3584 + $0x90] sm:$0xff]
      %v3610 = vld [vmem:[%s3584 + $0x98] sm:$0xf]
      %v3611 = vld [vmem:[%s3584 + $0x9c] sm:$0xff]
      %v3612 = vld [vmem:[%s3584 + $0xa4] sm:$0xf]
      %v3613 = vld [vmem:[%s3584 + $0xa8] sm:$0xff]
      %v3614 = vld [vmem:[%s3584 + $0xb0] sm:$0xf]
      %v3615 = vld [vmem:[%s3584 + $0xb4] sm:$0xff]
      %v3616 = vld [vmem:[%s3584 + $0xbc] sm:$0xf]
      %v3617 = vld [vmem:[%s3584 + $0xc0] sm:$0xff]
      %v3618 = vld [vmem:[%s3584 + $0xc8] sm:$0xf]
      %v3619 = vld [vmem:[%s3584 + $0xcc] sm:$0xff]
      %v3620 = vld [vmem:[%s3584 + $0xd4] sm:$0xf]
      %v3621 = vld [vmem:[%s3584 + $0xd8] sm:$0xff]
      %v3622 = vld [vmem:[%s3584 + $0xe0] sm:$0xf]
      %v3623 = vld [vmem:[%s3584 + $0xe4] sm:$0xff]
      %v3624 = vld [vmem:[%s3584 + $0xec] sm:$0xf]
      %v3625 = vld [vmem:[%s3584 + $0xf0] sm:$0xff]
      %v3626 = vld [vmem:[%s3584 + $0xf8] sm:$0xf]
      %v3627 = vld [vmem:[%s3584 + $0xfc] sm:$0xff]
      %v3628 = vld [vmem:[%s3584 + $0x104] sm:$0xf]
      %v3629 = vld [vmem:[%s3584 + $0x108] sm:$0xff]
      %v3630 = vld [vmem:[%s3584 + $0x110] sm:$0xf]
      %v3631 = vld [vmem:[%s3584 + $0x114] sm:$0xff]
      %v3632 = vld [vmem:[%s3584 + $0x11c] sm:$0xf]
      %v3633 = vld [vmem:[%s3584 + $0x120] sm:$0xff]
      %v3634 = vld [vmem:[%s3584 + $0x128] sm:$0xf]
      %v3635 = vld [vmem:[%s3584 + $0x12c] sm:$0xff]
      %v3636 = vld [vmem:[%s3584 + $0x134] sm:$0xf]
      %v3637 = vld [vmem:[%s3584 + $0x138] sm:$0xff]
      %v3638 = vld [vmem:[%s3584 + $0x140] sm:$0xf]
      %v3639 = vld [vmem:[%s3584 + $0x144] sm:$0xff]
      %v3640 = vld [vmem:[%s3584 + $0x14c] sm:$0xf]
      %v3641 = vld [vmem:[%s3584 + $0x150] sm:$0xff]
      %v3642 = vld [vmem:[%s3584 + $0x158] sm:$0xf]
      %v3643 = vld [vmem:[%s3584 + $0x15c] sm:$0xff]
      %v3644 = vld [vmem:[%s3584 + $0x164] sm:$0xf]
      %v3645 = vld [vmem:[%s3584 + $0x168] sm:$0xff]
      %v3646 = vld [vmem:[%s3584 + $0x170] sm:$0xf]
      %v3647 = vld [vmem:[%s3584 + $0x174] sm:$0xff]
      %v3648 = vld [vmem:[%s3584 + $0x17c] sm:$0xf]
      %v3649 = vld [vmem:[%s3584 + $0x180] sm:$0xff]
      %v3650 = vld [vmem:[%s3584 + $0x188] sm:$0xf]
      %v3651 = vld [vmem:[%s3584 + $0x18c] sm:$0xff]
      %v3652 = vld [vmem:[%s3584 + $0x194] sm:$0xf]
      %v3653 = vld [vmem:[%s3584 + $0x198] sm:$0xff]
      %v3654 = vld [vmem:[%s3584 + $0x1a0] sm:$0xf]
      %v3655 = vld [vmem:[%s3584 + $0x1a4] sm:$0xff]
      %v3656 = vld [vmem:[%s3584 + $0x1ac] sm:$0xf]
      %v3657 = vld [vmem:[%s3584 + $0x1b0] sm:$0xff]
      %v3658 = vld [vmem:[%s3584 + $0x1b8] sm:$0xf]
      %v3659 = vld [vmem:[%s3584 + $0x1bc] sm:$0xff]
      %v3660 = vld [vmem:[%s3584 + $0x1c4] sm:$0xf]
      %v3661 = vld [vmem:[%s3584 + $0x1c8] sm:$0xff]
      %v3662 = vld [vmem:[%s3584 + $0x1d0] sm:$0xf]
      %v3663 = vld [vmem:[%s3584 + $0x1d4] sm:$0xff]
      %v3664 = vld [vmem:[%s3584 + $0x1dc] sm:$0xf]
      %v3665 = vld [vmem:[%s3584 + $0x1e0] sm:$0xff]
      %v3666 = vld [vmem:[%s3584 + $0x1e8] sm:$0xf]
      %v3667 = vld [vmem:[%s3584 + $0x1ec] sm:$0xff]
      %v3668 = vld [vmem:[%s3584 + $0x1f4] sm:$0xf]
      %v3669 = vld [vmem:[%s3584 + $0x1f8] sm:$0xff]
      %v3670 = vld [vmem:[%s3584 + $0x200] sm:$0xf]
      %v3671 = vld [vmem:[%s3584 + $0x204] sm:$0xff]
      %v3672 = vld [vmem:[%s3584 + $0x20c] sm:$0xf]
      %vm3691 = vcmask 1046528
      %v3692 = vrot.slane %v1805, 1
      %v3693 = vrot.slane %v1808, 1
      %v3694 = vsel %vm3691, %v3692, %v3693
      %v3695 = vrot.slane %v1806, 1
      %v3696 = vrot.slane %v1809, 1
      %v3697 = vsel %vm3691, %v3695, %v3696
      %v3698 = vrot.slane %v1807, 1
      %v3699 = vrot.slane %v1810, 1
      %v3700 = vsel %vm3691, %v3698, %v3699
      %v3701 = vrot.slane %v1811, 1
      %v3702 = vsel %vm3691, %v3693, %v3701
      %v3703 = vrot.slane %v1812, 1
      %v3704 = vsel %vm3691, %v3696, %v3703
      %v3705 = vrot.slane %v1813, 1
      %v3706 = vsel %vm3691, %v3699, %v3705
      %v3707 = vrot.slane %v1814, 1
      %v3708 = vsel %vm3691, %v3701, %v3707
      %v3709 = vrot.slane %v1815, 1
      %v3710 = vsel %vm3691, %v3703, %v3709
      %v3711 = vrot.slane %v1816, 1
      %v3712 = vsel %vm3691, %v3705, %v3711
      %v3713 = vrot.slane %v1817, 1
      %v3714 = vsel %vm3691, %v3707, %v3713
      %v3715 = vrot.slane %v1818, 1
      %v3716 = vsel %vm3691, %v3709, %v3715
      %v3717 = vrot.slane %v1819, 1
      %v3718 = vsel %vm3691, %v3711, %v3717
      %v3719 = vrot.slane %v1820, 1
      %v3720 = vsel %vm3691, %v3713, %v3719
      %v3721 = vrot.slane %v1821, 1
      %v3722 = vsel %vm3691, %v3715, %v3721
      %v3723 = vrot.slane %v1822, 1
      %v3724 = vsel %vm3691, %v3717, %v3723
      %v3825 = vunpack.c.l.b16 %v3585
      %v3826 = vunpack.c.h.b16 %v3585
      %v3827 = vunpack.c.l.b16 %v3586
      %v3828 = vunpack.c.l.b16 %v3587
      %v3829 = vunpack.c.h.b16 %v3587
      %v3830 = vunpack.c.l.b16 %v3588
      %v3831 = vunpack.c.l.b16 %v3589
      %v3832 = vunpack.c.h.b16 %v3589
      %v3833 = vunpack.c.l.b16 %v3590
      %v3834 = vunpack.c.l.b16 %v3591
      %v3835 = vunpack.c.h.b16 %v3591
      %v3836 = vunpack.c.l.b16 %v3592
      %v3837 = vunpack.c.l.b16 %v3593
      %v3838 = vunpack.c.h.b16 %v3593
      %v3839 = vunpack.c.l.b16 %v3594
      %v3840 = vunpack.c.l.b16 %v3595
      %v3841 = vunpack.c.h.b16 %v3595
      %v3842 = vunpack.c.l.b16 %v3596
      %v3843 = vunpack.c.l.b16 %v3597
      %v3844 = vunpack.c.h.b16 %v3597
      %v3845 = vunpack.c.l.b16 %v3598
      %v3846 = vunpack.c.l.b16 %v3599
      %v3847 = vunpack.c.h.b16 %v3599
      %v3848 = vunpack.c.l.b16 %v3600
      %v3849 = vunpack.c.l.b16 %v3601
      %v3850 = vunpack.c.h.b16 %v3601
      %v3851 = vunpack.c.l.b16 %v3602
      %v3852 = vunpack.c.l.b16 %v3603
      %v3853 = vunpack.c.h.b16 %v3603
      %v3854 = vunpack.c.l.b16 %v3604
      %v3855 = vunpack.c.l.b16 %v3605
      %v3856 = vunpack.c.h.b16 %v3605
      %v3857 = vunpack.c.l.b16 %v3606
      %v3858 = vunpack.c.l.b16 %v3607
      %v3859 = vunpack.c.h.b16 %v3607
      %v3860 = vunpack.c.l.b16 %v3608
      %v3861 = vunpack.c.l.b16 %v3609
      %v3862 = vunpack.c.h.b16 %v3609
      %v3863 = vunpack.c.l.b16 %v3610
      %v3864 = vunpack.c.l.b16 %v3611
      %v3865 = vunpack.c.h.b16 %v3611
      %v3866 = vunpack.c.l.b16 %v3612
      %v3867 = vunpack.c.l.b16 %v3613
      %v3868 = vunpack.c.h.b16 %v3613
      %v3869 = vunpack.c.l.b16 %v3614
      %v3870 = vunpack.c.l.b16 %v3615
      %v3871 = vunpack.c.h.b16 %v3615
      %v3872 = vunpack.c.l.b16 %v3616
      %v3873 = vunpack.c.l.b16 %v3617
      %v3874 = vunpack.c.h.b16 %v3617
      %v3875 = vunpack.c.l.b16 %v3618
      %v3876 = vunpack.c.l.b16 %v3619
      %v3877 = vunpack.c.h.b16 %v3619
      %v3878 = vunpack.c.l.b16 %v3620
      %v3879 = vunpack.c.l.b16 %v3621
      %v3880 = vunpack.c.h.b16 %v3621
      %v3881 = vunpack.c.l.b16 %v3622
      %v3882 = vunpack.c.l.b16 %v3623
      %v3883 = vunpack.c.h.b16 %v3623
      %v3884 = vunpack.c.l.b16 %v3624
      %v3885 = vunpack.c.l.b16 %v3625
      %v3886 = vunpack.c.h.b16 %v3625
      %v3887 = vunpack.c.l.b16 %v3626
      %v3888 = vunpack.c.l.b16 %v3627
      %v3889 = vunpack.c.h.b16 %v3627
      %v3890 = vunpack.c.l.b16 %v3628
      %v3891 = vunpack.c.l.b16 %v3629
      %v3892 = vunpack.c.h.b16 %v3629
      %v3893 = vunpack.c.l.b16 %v3630
      %v3894 = vunpack.c.l.b16 %v3631
      %v3895 = vunpack.c.h.b16 %v3631
      %v3896 = vunpack.c.l.b16 %v3632
      %v3897 = vunpack.c.l.b16 %v3633
      %v3898 = vunpack.c.h.b16 %v3633
      %v3899 = vunpack.c.l.b16 %v3634
      %v3900 = vunpack.c.l.b16 %v3635
      %v3901 = vunpack.c.h.b16 %v3635
      %v3902 = vunpack.c.l.b16 %v3636
      %v3903 = vunpack.c.l.b16 %v3637
      %v3904 = vunpack.c.h.b16 %v3637
      %v3905 = vunpack.c.l.b16 %v3638
      %v3906 = vunpack.c.l.b16 %v3639
      %v3907 = vunpack.c.h.b16 %v3639
      %v3908 = vunpack.c.l.b16 %v3640
      %v3909 = vunpack.c.l.b16 %v3641
      %v3910 = vunpack.c.h.b16 %v3641
      %v3911 = vunpack.c.l.b16 %v3642
      %v3912 = vunpack.c.l.b16 %v3643
      %v3913 = vunpack.c.h.b16 %v3643
      %v3914 = vunpack.c.l.b16 %v3644
      %v3915 = vunpack.c.l.b16 %v3645
      %v3916 = vunpack.c.h.b16 %v3645
      %v3917 = vunpack.c.l.b16 %v3646
      %v3918 = vunpack.c.l.b16 %v3647
      %v3919 = vunpack.c.h.b16 %v3647
      %v3920 = vunpack.c.l.b16 %v3648
      %v3921 = vunpack.c.l.b16 %v3649
      %v3922 = vunpack.c.h.b16 %v3649
      %v3923 = vunpack.c.l.b16 %v3650
      %v3924 = vunpack.c.l.b16 %v3651
      %v3925 = vunpack.c.h.b16 %v3651
      %v3926 = vunpack.c.l.b16 %v3652
      %v3927 = vunpack.c.l.b16 %v3653
      %v3928 = vunpack.c.h.b16 %v3653
      %v3929 = vunpack.c.l.b16 %v3654
      %v3930 = vunpack.c.l.b16 %v3655
      %v3931 = vunpack.c.h.b16 %v3655
      %v3932 = vunpack.c.l.b16 %v3656
      %v3933 = vunpack.c.l.b16 %v3657
      %v3934 = vunpack.c.h.b16 %v3657
      %v3935 = vunpack.c.l.b16 %v3658
      %v3936 = vunpack.c.l.b16 %v3659
      %v3937 = vunpack.c.h.b16 %v3659
      %v3938 = vunpack.c.l.b16 %v3660
      %v3939 = vunpack.c.l.b16 %v3661
      %v3940 = vunpack.c.h.b16 %v3661
      %v3941 = vunpack.c.l.b16 %v3662
      %v3942 = vunpack.c.l.b16 %v3663
      %v3943 = vunpack.c.h.b16 %v3663
      %v3944 = vunpack.c.l.b16 %v3664
      %v3945 = vunpack.c.l.b16 %v3665
      %v3946 = vunpack.c.h.b16 %v3665
      %v3947 = vunpack.c.l.b16 %v3666
      %v3948 = vunpack.c.l.b16 %v3667
      %v3949 = vunpack.c.h.b16 %v3667
      %v3950 = vunpack.c.l.b16 %v3668
      %v3951 = vunpack.c.l.b16 %v3669
      %v3952 = vunpack.c.h.b16 %v3669
      %v3953 = vunpack.c.l.b16 %v3670
      %v3954 = vunpack.c.l.b16 %v3671
      %v3955 = vunpack.c.h.b16 %v3671
      %v3956 = vunpack.c.l.b16 %v3672
      %v3957 = vpack.c.b16 %v3828, %v3825
      %v3958 = vpack.c.b16 %v3829, %v3826
      %v3959 = vpack.c.b16 %v3830, %v3827
      %v3960 = vpack.c.b16 %v3834, %v3831
      %v3961 = vpack.c.b16 %v3835, %v3832
      %v3962 = vpack.c.b16 %v3836, %v3833
      %v3963 = vpack.c.b16 %v3840, %v3837
      %v3964 = vpack.c.b16 %v3841, %v3838
      %v3965 = vpack.c.b16 %v3842, %v3839
      %v3966 = vpack.c.b16 %v3846, %v3843
      %v3967 = vpack.c.b16 %v3847, %v3844
      %v3968 = vpack.c.b16 %v3848, %v3845
      %v3969 = vpack.c.b16 %v3852, %v3849
      %v3970 = vpack.c.b16 %v3853, %v3850
      %v3971 = vpack.c.b16 %v3854, %v3851
      %v3972 = vpack.c.b16 %v3858, %v3855
      %v3973 = vpack.c.b16 %v3859, %v3856
      %v3974 = vpack.c.b16 %v3860, %v3857
      %v3975 = vpack.c.b16 %v3864, %v3861
      %v3976 = vpack.c.b16 %v3865, %v3862
      %v3977 = vpack.c.b16 %v3866, %v3863
      %v3978 = vpack.c.b16 %v3870, %v3867
      %v3979 = vpack.c.b16 %v3871, %v3868
      %v3980 = vpack.c.b16 %v3872, %v3869
      %v3981 = vpack.c.b16 %v3876, %v3873
      %v3982 = vpack.c.b16 %v3877, %v3874
      %v3983 = vpack.c.b16 %v3878, %v3875
      %v3984 = vpack.c.b16 %v3882, %v3879
      %v3985 = vpack.c.b16 %v3883, %v3880
      %v3986 = vpack.c.b16 %v3884, %v3881
      %v3987 = vpack.c.b16 %v3888, %v3885
      %v3988 = vpack.c.b16 %v3889, %v3886
      %v3989 = vpack.c.b16 %v3890, %v3887
      %v3990 = vpack.c.b16 %v3894, %v3891
      %v3991 = vpack.c.b16 %v3895, %v3892
      %v3992 = vpack.c.b16 %v3896, %v3893
      %v3993 = vpack.c.b16 %v3900, %v3897
      %v3994 = vpack.c.b16 %v3901, %v3898
      %v3995 = vpack.c.b16 %v3902, %v3899
      %v3996 = vpack.c.b16 %v3906, %v3903
      %v3997 = vpack.c.b16 %v3907, %v3904
      %v3998 = vpack.c.b16 %v3908, %v3905
      %v3999 = vpack.c.b16 %v3912, %v3909
      %v4000 = vpack.c.b16 %v3913, %v3910
      %v4001 = vpack.c.b16 %v3914, %v3911
      %v4002 = vpack.c.b16 %v3918, %v3915
      %v4003 = vpack.c.b16 %v3919, %v3916
      %v4004 = vpack.c.b16 %v3920, %v3917
      %v4005 = vpack.c.b16 %v3924, %v3921
      %v4006 = vpack.c.b16 %v3925, %v3922
      %v4007 = vpack.c.b16 %v3926, %v3923
      %v4008 = vpack.c.b16 %v3930, %v3927
      %v4009 = vpack.c.b16 %v3931, %v3928
      %v4010 = vpack.c.b16 %v3932, %v3929
      %v4011 = vpack.c.b16 %v3936, %v3933
      %v4012 = vpack.c.b16 %v3937, %v3934
      %v4013 = vpack.c.b16 %v3938, %v3935
      %v4014 = vpack.c.b16 %v3942, %v3939
      %v4015 = vpack.c.b16 %v3943, %v3940
      %v4016 = vpack.c.b16 %v3944, %v3941
      %v4017 = vpack.c.b16 %v3948, %v3945
      %v4018 = vpack.c.b16 %v3949, %v3946
      %v4019 = vpack.c.b16 %v3950, %v3947
      %v4020 = vpack.c.b16 %v3954, %v3951
      %v4021 = vpack.c.b16 %v3955, %v3952
      %v4022 = vpack.c.b16 %v3956, %v3953
      %v4090 = vsel %vm2505, %v3700, 0
      %v4093 = vsel %vm2505, %v3706, 0
      %v4096 = vsel %vm2505, %v3712, 0
      %v4099 = vsel %vm2505, %v3718, 0
      %v4102 = vsel %vm2505, %v3724, 0
      %v4105 = vsel %vm2505, %v3723, 0
      %4107 = vmatprep.subr.bf16.mxu0 %v3958
      %4108 = vmatpush1.bf16.msra.mxu0 %v3957
      %4109 = vmatprep.subr.bf16.mxu0 %v3961
      %4110 = vmatpush1.bf16.msra.mxu0 %v3960
      %4111 = vmatprep.subr.bf16.mxu0 %v3964
      %4112 = vmatpush1.bf16.msra.mxu0 %v3963
      %4113 = vmatprep.subr.bf16.mxu0 %v3967
      %4114 = vmatpush1.bf16.msra.mxu0 %v3966
      %4115 = vmatprep.subr.bf16.mxu0 %v3970
      %4116 = vmatpush1.bf16.msra.mxu0 %v3969
      %4117 = vmatprep.subr.bf16.mxu0 %v3973
      %4118 = vmatpush1.bf16.msra.mxu0 %v3972
      %4119 = vmatprep.subr.bf16.mxu0 %v3976
      %4120 = vmatpush1.bf16.msra.mxu0 %v3975
      %4121 = vmatprep.subr.bf16.mxu0 %v3979
      %4122 = vmatpush1.bf16.msra.mxu0 %v3978
      %4123 = vmatprep.subr.bf16.mxu0 %v3982
      %4124 = vmatpush1.bf16.msra.mxu0 %v3981
      %4125 = vmatprep.subr.bf16.mxu0 %v3985
      %4126 = vmatpush1.bf16.msra.mxu0 %v3984
      %4127 = vmatprep.subr.bf16.mxu0 %v3988
      %4128 = vmatpush1.bf16.msra.mxu0 %v3987
      %4129 = vmatprep.subr.bf16.mxu0 %v3991
      %4130 = vmatpush1.bf16.msra.mxu0 %v3990
      %4131 = vmatprep.subr.bf16.mxu0 %v3994
      %4132 = vmatpush1.bf16.msra.mxu0 %v3993
      %4133 = vmatprep.subr.bf16.mxu0 %v3997
      %4134 = vmatpush1.bf16.msra.mxu0 %v3996
      %4135 = vmatprep.subr.bf16.mxu0 %v4000
      %4136 = vmatpush1.bf16.msra.mxu0 %v3999
      %4137 = vmatprep.subr.bf16.mxu0 %v4003
      %4138 = vmatpush1.bf16.msra.mxu0 %v4002
      %4139 = vmatprep.mubr.bf16.mxu0 %v3697
      %4140 = vmatmul.mubr.bf16.gmra.mrb[0].mxu0 %v3694
      %v4141 = vpop.f32.mrb[0].mxu0
      %v4142 = vadd.f32 0.0, %v4141
      %v4143 = vpop.f32.mrb[0].mxu0
      %v4144 = vadd.f32 0.0, %v4143
      %v4145 = vpop.f32.mrb[0].mxu0
      %v4146 = vadd.f32 0.0, %v4145
      %v4147 = vpop.f32.mrb[0].mxu0
      %v4148 = vadd.f32 0.0, %v4147
      %4149 = vmatprep.mubr.bf16.mxu0 %v3704
      %4150 = vmatmul.mubr.bf16.gmra.mrb[0].mxu0 %v3702
      %v4151 = vpop.f32.mrb[0].mxu0
      %v4152 = vadd.f32 0.0, %v4151
      %v4153 = vpop.f32.mrb[0].mxu0
      %v4154 = vadd.f32 0.0, %v4153
      %v4155 = vpop.f32.mrb[0].mxu0
      %v4156 = vadd.f32 0.0, %v4155
      %v4157 = vpop.f32.mrb[0].mxu0
      %v4158 = vadd.f32 0.0, %v4157
      %4159 = vmatprep.mubr.bf16.mxu0 %v3710
      %4160 = vmatmul.mubr.bf16.gmra.mrb[0].mxu0 %v3708
      %v4161 = vpop.f32.mrb[0].mxu0
      %v4162 = vadd.f32 0.0, %v4161
      %v4163 = vpop.f32.mrb[0].mxu0
      %v4164 = vadd.f32 0.0, %v4163
      %v4165 = vpop.f32.mrb[0].mxu0
      %v4166 = vadd.f32 0.0, %v4165
      %v4167 = vpop.f32.mrb[0].mxu0
      %v4168 = vadd.f32 0.0, %v4167
      %4169 = vmatprep.mubr.bf16.mxu0 %v3716
      %4170 = vmatmul.mubr.bf16.gmra.mrb[0].mxu0 %v3714
      %v4171 = vpop.f32.mrb[0].mxu0
      %v4172 = vadd.f32 0.0, %v4171
      %v4173 = vpop.f32.mrb[0].mxu0
      %v4174 = vadd.f32 0.0, %v4173
      %v4175 = vpop.f32.mrb[0].mxu0
      %v4176 = vadd.f32 0.0, %v4175
      %v4177 = vpop.f32.mrb[0].mxu0
      %v4178 = vadd.f32 0.0, %v4177
      %4179 = vmatprep.mubr.bf16.mxu0 %v3722
      %4180 = vmatmul.mubr.bf16.gmra.mrb[0].mxu0 %v3720
      %v4181 = vpop.f32.mrb[0].mxu0
      %v4182 = vadd.f32 0.0, %v4181
      %v4183 = vpop.f32.mrb[0].mxu0
      %v4184 = vadd.f32 0.0, %v4183
      %v4185 = vpop.f32.mrb[0].mxu0
      %v4186 = vadd.f32 0.0, %v4185
      %v4187 = vpop.f32.mrb[0].mxu0
      %v4188 = vadd.f32 0.0, %v4187
      %4189 = vmatprep.mubr.bf16.mxu0 %v3721
      %4190 = vmatmul.mubr.bf16.gmra.mrb[0].mxu0 %v3719
      %v4191 = vpop.f32.mrb[0].mxu0
      %v4192 = vadd.f32 0.0, %v4191
      %v4193 = vpop.f32.mrb[0].mxu0
      %v4194 = vadd.f32 0.0, %v4193
      %v4195 = vpop.f32.mrb[0].mxu0
      %v4196 = vadd.f32 0.0, %v4195
      %v4197 = vpop.f32.mrb[0].mxu0
      %v4198 = vadd.f32 0.0, %v4197
      %4199 = vdwg.mxu0
      %4200 = vmatprep.subr.bf16.mxu0 %v4006
      %4201 = vmatpush1.bf16.msra.mxu0 %v4005
      %4202 = vmatprep.subr.bf16.mxu0 %v4009
      %4203 = vmatpush1.bf16.msra.mxu0 %v4008
      %4204 = vmatprep.subr.bf16.mxu0 %v4012
      %4205 = vmatpush1.bf16.msra.mxu0 %v4011
      %4206 = vmatprep.subr.bf16.mxu0 %v4015
      %4207 = vmatpush1.bf16.msra.mxu0 %v4014
      %4208 = vmatprep.subr.bf16.mxu0 %v4018
      %4209 = vmatpush1.bf16.msra.mxu0 %v4017
      %4210 = vmatprep.subr.bf16.mxu0 %v4021
      %4211 = vmatpush1.bf16.msra.mxu0 %v4020
      %4212 = vmatprep.subr.bf16.mxu0 0
      %4213 = vmatpush1.bf16.msra.mxu0 0
      %4214 = vmatprep.subr.bf16.mxu0 0
      %4215 = vmatpush1.bf16.msra.mxu0 0
      %4216 = vmatprep.subr.bf16.mxu0 0
      %4217 = vmatpush1.bf16.msra.mxu0 0
      %4218 = vmatprep.subr.bf16.mxu0 0
      %4219 = vmatpush1.bf16.msra.mxu0 0
      %4220 = vmatprep.subr.bf16.mxu0 0
      %4221 = vmatpush1.bf16.msra.mxu0 0
      %4222 = vmatprep.subr.bf16.mxu0 0
      %4223 = vmatpush1.bf16.msra.mxu0 0
      %4224 = vmatprep.subr.bf16.mxu0 0
      %4225 = vmatpush1.bf16.msra.mxu0 0
      %4226 = vmatprep.subr.bf16.mxu0 0
      %4227 = vmatpush1.bf16.msra.mxu0 0
      %4228 = vmatprep.subr.bf16.mxu0 0
      %4229 = vmatpush1.bf16.msra.mxu0 0
      %4230 = vmatprep.subr.bf16.mxu0 0
      %4231 = vmatpush1.bf16.msra.mxu0 0
      %4232 = vmatprep.mubr.bf16.mxu0 0
      %4233 = vmatmul.mubr.bf16.gmra.mrb[0].mxu0 %v4090
      %v4234 = vpop.f32.mrb[0].mxu0
      %v4235 = vadd.f32 %v4142, %v4234
      %v4236 = vpop.f32.mrb[0].mxu0
      %v4237 = vadd.f32 %v4144, %v4236
      %v4238 = vpop.f32.mrb[0].mxu0
      %v4239 = vadd.f32 %v4146, %v4238
      %v4240 = vpop.f32.mrb[0].mxu0
      %v4241 = vadd.f32 %v4148, %v4240
      %4242 = vmatprep.mubr.bf16.mxu0 0
      %4243 = vmatmul.mubr.bf16.gmra.mrb[0].mxu0 %v4093
      %v4244 = vpop.f32.mrb[0].mxu0
      %v4245 = vadd.f32 %v4152, %v4244
      %v4246 = vpop.f32.mrb[0].mxu0
      %v4247 = vadd.f32 %v4154, %v4246
      %v4248 = vpop.f32.mrb[0].mxu0
      %v4249 = vadd.f32 %v4156, %v4248
      %v4250 = vpop.f32.mrb[0].mxu0
      %v4251 = vadd.f32 %v4158, %v4250
      %4252 = vmatprep.mubr.bf16.mxu0 0
      %4253 = vmatmul.mubr.bf16.gmra.mrb[0].mxu0 %v4096
      %v4254 = vpop.f32.mrb[0].mxu0
      %v4255 = vadd.f32 %v4162, %v4254
      %v4256 = vpop.f32.mrb[0].mxu0
      %v4257 = vadd.f32 %v4164, %v4256
      %v4258 = vpop.f32.mrb[0].mxu0
      %v4259 = vadd.f32 %v4166, %v4258
      %v4260 = vpop.f32.mrb[0].mxu0
      %v4261 = vadd.f32 %v4168, %v4260
      %4262 = vmatprep.mubr.bf16.mxu0 0
      %4263 = vmatmul.mubr.bf16.gmra.mrb[0].mxu0 %v4099
      %v4264 = vpop.f32.mrb[0].mxu0
      %v4265 = vadd.f32 %v4172, %v4264
      %v4266 = vpop.f32.mrb[0].mxu0
      %v4267 = vadd.f32 %v4174, %v4266
      %v4268 = vpop.f32.mrb[0].mxu0
      %v4269 = vadd.f32 %v4176, %v4268
      %v4270 = vpop.f32.mrb[0].mxu0
      %v4271 = vadd.f32 %v4178, %v4270
      %4272 = vmatprep.mubr.bf16.mxu0 0
      %4273 = vmatmul.mubr.bf16.gmra.mrb[0].mxu0 %v4102
      %v4274 = vpop.f32.mrb[0].mxu0
      %v4275 = vadd.f32 %v4182, %v4274
      %v4276 = vpop.f32.mrb[0].mxu0
      %v4277 = vadd.f32 %v4184, %v4276
      %v4278 = vpop.f32.mrb[0].mxu0
      %v4279 = vadd.f32 %v4186, %v4278
      %v4280 = vpop.f32.mrb[0].mxu0
      %v4281 = vadd.f32 %v4188, %v4280
      %4282 = vmatprep.mubr.bf16.mxu0 0
      %4283 = vmatmul.mubr.bf16.gmra.mrb[0].mxu0 %v4105
      %v4284 = vpop.f32.mrb[0].mxu0
      %v4285 = vadd.f32 %v4192, %v4284
      %v4286 = vpop.f32.mrb[0].mxu0
      %v4287 = vadd.f32 %v4194, %v4286
      %v4288 = vpop.f32.mrb[0].mxu0
      %v4289 = vadd.f32 %v4196, %v4288
      %v4290 = vpop.f32.mrb[0].mxu0
      %v4291 = vadd.f32 %v4198, %v4290
      %4292 = vdwg.mxu0
      %4293 = vmatprep.subr.bf16.mxu0 0
      %4294 = vmatpush1.bf16.msra.mxu0 %v3959
      %4295 = vmatprep.subr.bf16.mxu0 0
      %4296 = vmatpush1.bf16.msra.mxu0 %v3962
      %4297 = vmatprep.subr.bf16.mxu0 0
      %4298 = vmatpush1.bf16.msra.mxu0 %v3965
      %4299 = vmatprep.subr.bf16.mxu0 0
      %4300 = vmatpush1.bf16.msra.mxu0 %v3968
      %4301 = vmatprep.subr.bf16.mxu0 0
      %4302 = vmatpush1.bf16.msra.mxu0 %v3971
      %4303 = vmatprep.subr.bf16.mxu0 0
      %4304 = vmatpush1.bf16.msra.mxu0 %v3974
      %4305 = vmatprep.subr.bf16.mxu0 0
      %4306 = vmatpush1.bf16.msra.mxu0 %v3977
      %4307 = vmatprep.subr.bf16.mxu0 0
      %4308 = vmatpush1.bf16.msra.mxu0 %v3980
      %4309 = vmatprep.subr.bf16.mxu0 0
      %4310 = vmatpush1.bf16.msra.mxu0 %v3983
      %4311 = vmatprep.subr.bf16.mxu0 0
      %4312 = vmatpush1.bf16.msra.mxu0 %v3986
      %4313 = vmatprep.subr.bf16.mxu0 0
      %4314 = vmatpush1.bf16.msra.mxu0 %v3989
      %4315 = vmatprep.subr.bf16.mxu0 0
      %4316 = vmatpush1.bf16.msra.mxu0 %v3992
      %4317 = vmatprep.subr.bf16.mxu0 0
      %4318 = vmatpush1.bf16.msra.mxu0 %v3995
      %4319 = vmatprep.subr.bf16.mxu0 0
      %4320 = vmatpush1.bf16.msra.mxu0 %v3998
      %4321 = vmatprep.subr.bf16.mxu0 0
      %4322 = vmatpush1.bf16.msra.mxu0 %v4001
      %4323 = vmatprep.subr.bf16.mxu0 0
      %4324 = vmatpush1.bf16.msra.mxu0 %v4004
      %4325 = vmatprep.mubr.bf16.mxu0 %v3697
      %4326 = vmatmul.mubr.bf16.gmra.mrb[0].mxu0 %v3694
      %v4327 = vpop.f32.mrb[0].mxu0
      %v4328 = vadd.f32 0.0, %v4327
      %v4329 = vpop.f32.mrb[0].mxu0
      %v4330 = vpop.f32.mrb[0].mxu0
      %v4331 = vadd.f32 0.0, %v4330
      %v4332 = vpop.f32.mrb[0].mxu0
      %4333 = vmatprep.mubr.bf16.mxu0 %v3704
      %4334 = vmatmul.mubr.bf16.gmra.mrb[0].mxu0 %v3702
      %v4335 = vpop.f32.mrb[0].mxu0
      %v4336 = vadd.f32 0.0, %v4335
      %v4337 = vpop.f32.mrb[0].mxu0
      %v4338 = vpop.f32.mrb[0].mxu0
      %v4339 = vadd.f32 0.0, %v4338
      %v4340 = vpop.f32.mrb[0].mxu0
      %4341 = vmatprep.mubr.bf16.mxu0 %v3710
      %4342 = vmatmul.mubr.bf16.gmra.mrb[0].mxu0 %v3708
      %v4343 = vpop.f32.mrb[0].mxu0
      %v4344 = vadd.f32 0.0, %v4343
      %v4345 = vpop.f32.mrb[0].mxu0
      %v4346 = vpop.f32.mrb[0].mxu0
      %v4347 = vadd.f32 0.0, %v4346
      %v4348 = vpop.f32.mrb[0].mxu0
      %4349 = vmatprep.mubr.bf16.mxu0 %v3716
      %4350 = vmatmul.mubr.bf16.gmra.mrb[0].mxu0 %v3714
      %v4351 = vpop.f32.mrb[0].mxu0
      %v4352 = vadd.f32 0.0, %v4351
      %v4353 = vpop.f32.mrb[0].mxu0
      %v4354 = vpop.f32.mrb[0].mxu0
      %v4355 = vadd.f32 0.0, %v4354
      %v4356 = vpop.f32.mrb[0].mxu0
      %4357 = vmatprep.mubr.bf16.mxu0 %v3722
      %4358 = vmatmul.mubr.bf16.gmra.mrb[0].mxu0 %v3720
      %v4359 = vpop.f32.mrb[0].mxu0
      %v4360 = vadd.f32 0.0, %v4359
      %v4361 = vpop.f32.mrb[0].mxu0
      %v4362 = vpop.f32.mrb[0].mxu0
      %v4363 = vadd.f32 0.0, %v4362
      %v4364 = vpop.f32.mrb[0].mxu0
      %4365 = vmatprep.mubr.bf16.mxu0 %v3721
      %4366 = vmatmul.mubr.bf16.gmra.mrb[0].mxu0 %v3719
      %v4367 = vpop.f32.mrb[0].mxu0
      %v4368 = vadd.f32 0.0, %v4367
      %v4369 = vpop.f32.mrb[0].mxu0
      %v4370 = vpop.f32.mrb[0].mxu0
      %v4371 = vadd.f32 0.0, %v4370
      %v4372 = vpop.f32.mrb[0].mxu0
      %4373 = vdwg.mxu0
      %4374 = vmatprep.subr.bf16.mxu0 0
      %4375 = vmatpush1.bf16.msra.mxu0 %v4007
      %4376 = vmatprep.subr.bf16.mxu0 0
      %4377 = vmatpush1.bf16.msra.mxu0 %v4010
      %4378 = vmatprep.subr.bf16.mxu0 0
      %4379 = vmatpush1.bf16.msra.mxu0 %v4013
      %4380 = vmatprep.subr.bf16.mxu0 0
      %4381 = vmatpush1.bf16.msra.mxu0 %v4016
      %4382 = vmatprep.subr.bf16.mxu0 0
      %4383 = vmatpush1.bf16.msra.mxu0 %v4019
      %4384 = vmatprep.subr.bf16.mxu0 0
      %4385 = vmatpush1.bf16.msra.mxu0 %v4022
      %4386 = vmatprep.subr.bf16.mxu0 0
      %4387 = vmatpush1.bf16.msra.mxu0 0
      %4388 = vmatprep.subr.bf16.mxu0 0
      %4389 = vmatpush1.bf16.msra.mxu0 0
      %4390 = vmatprep.subr.bf16.mxu0 0
      %4391 = vmatpush1.bf16.msra.mxu0 0
      %4392 = vmatprep.subr.bf16.mxu0 0
      %4393 = vmatpush1.bf16.msra.mxu0 0
      %4394 = vmatprep.subr.bf16.mxu0 0
      %4395 = vmatpush1.bf16.msra.mxu0 0
      %4396 = vmatprep.subr.bf16.mxu0 0
      %4397 = vmatpush1.bf16.msra.mxu0 0
      %4398 = vmatprep.subr.bf16.mxu0 0
      %4399 = vmatpush1.bf16.msra.mxu0 0
      %4400 = vmatprep.subr.bf16.mxu0 0
      %4401 = vmatpush1.bf16.msra.mxu0 0
      %4402 = vmatprep.subr.bf16.mxu0 0
      %4403 = vmatpush1.bf16.msra.mxu0 0
      %4404 = vmatprep.subr.bf16.mxu0 0
      %4405 = vmatpush1.bf16.msra.mxu0 0
      %4406 = vmatprep.mubr.bf16.mxu0 0
      %4407 = vmatmul.mubr.bf16.gmra.mrb[0].mxu0 %v4090
      %v4408 = vpop.f32.mrb[0].mxu0
      %v4409 = vadd.f32 %v4328, %v4408
      %v4410 = vpop.f32.mrb[0].mxu0
      %v4411 = vpop.f32.mrb[0].mxu0
      %v4412 = vadd.f32 %v4331, %v4411
      %v4413 = vpop.f32.mrb[0].mxu0
      %4414 = vmatprep.mubr.bf16.mxu0 0
      %4415 = vmatmul.mubr.bf16.gmra.mrb[0].mxu0 %v4093
      %v4416 = vpop.f32.mrb[0].mxu0
      %v4417 = vadd.f32 %v4336, %v4416
      %v4418 = vpop.f32.mrb[0].mxu0
      %v4419 = vpop.f32.mrb[0].mxu0
      %v4420 = vadd.f32 %v4339, %v4419
      %v4421 = vpop.f32.mrb[0].mxu0
      %4422 = vmatprep.mubr.bf16.mxu0 0
      %4423 = vmatmul.mubr.bf16.gmra.mrb[0].mxu0 %v4096
      %v4424 = vpop.f32.mrb[0].mxu0
      %v4425 = vadd.f32 %v4344, %v4424
      %v4426 = vpop.f32.mrb[0].mxu0
      %v4427 = vpop.f32.mrb[0].mxu0
      %v4428 = vadd.f32 %v4347, %v4427
      %v4429 = vpop.f32.mrb[0].mxu0
      %4430 = vmatprep.mubr.bf16.mxu0 0
      %4431 = vmatmul.mubr.bf16.gmra.mrb[0].mxu0 %v4099
      %v4432 = vpop.f32.mrb[0].mxu0
      %v4433 = vadd.f32 %v4352, %v4432
      %v4434 = vpop.f32.mrb[0].mxu0
      %v4435 = vpop.f32.mrb[0].mxu0
      %v4436 = vadd.f32 %v4355, %v4435
      %v4437 = vpop.f32.mrb[0].mxu0
      %4438 = vmatprep.mubr.bf16.mxu0 0
      %4439 = vmatmul.mubr.bf16.gmra.mrb[0].mxu0 %v4102
      %v4440 = vpop.f32.mrb[0].mxu0
      %v4441 = vadd.f32 %v4360, %v4440
      %v4442 = vpop.f32.mrb[0].mxu0
      %v4443 = vpop.f32.mrb[0].mxu0
      %v4444 = vadd.f32 %v4363, %v4443
      %v4445 = vpop.f32.mrb[0].mxu0
      %4446 = vmatprep.mubr.bf16.mxu0 0
      %4447 = vmatmul.mubr.bf16.gmra.mrb[0].mxu0 %v4105
      %v4448 = vpop.f32.mrb[0].mxu0
      %v4449 = vadd.f32 %v4368, %v4448
      %v4450 = vpop.f32.mrb[0].mxu0
      %v4451 = vpop.f32.mrb[0].mxu0
      %v4452 = vadd.f32 %v4371, %v4451
      %v4453 = vpop.f32.mrb[0].mxu0
      %4454 = vdwg.mxu0
      %v4455 = vadd.f32 %v3364, %v4235
      %v4456 = vadd.f32 %v3366, %v4237
      %v4457 = vadd.f32 %v3538, %v4409
      %v4458 = vadd.f32 %v3368, %v4239
      %v4459 = vadd.f32 %v3370, %v4241
      %v4460 = vadd.f32 %v3541, %v4412
      %v4461 = vadd.f32 %v3374, %v4245
      %v4462 = vadd.f32 %v3376, %v4247
      %v4463 = vadd.f32 %v3546, %v4417
      %v4464 = vadd.f32 %v3378, %v4249
      %v4465 = vadd.f32 %v3380, %v4251
      %v4466 = vadd.f32 %v3549, %v4420
      %v4467 = vadd.f32 %v3384, %v4255
      %v4468 = vadd.f32 %v3386, %v4257
      %v4469 = vadd.f32 %v3554, %v4425
      %v4470 = vadd.f32 %v3388, %v4259
      %v4471 = vadd.f32 %v3390, %v4261
      %v4472 = vadd.f32 %v3557, %v4428
      %v4473 = vadd.f32 %v3394, %v4265
      %v4474 = vadd.f32 %v3396, %v4267
      %v4475 = vadd.f32 %v3562, %v4433
      %v4476 = vadd.f32 %v3398, %v4269
      %v4477 = vadd.f32 %v3400, %v4271
      %v4478 = vadd.f32 %v3565, %v4436
      %v4479 = vadd.f32 %v3404, %v4275
      %v4480 = vadd.f32 %v3406, %v4277
      %v4481 = vadd.f32 %v3570, %v4441
      %v4482 = vadd.f32 %v3408, %v4279
      %v4483 = vadd.f32 %v3410, %v4281
      %v4484 = vadd.f32 %v3573, %v4444
      %v4485 = vadd.f32 %v3414, %v4285
      %v4486 = vadd.f32 %v3416, %v4287
      %v4487 = vadd.f32 %v3578, %v4449
      %v4488 = vadd.f32 %v3418, %v4289
      %v4489 = vadd.f32 %v3420, %v4291
      %v4490 = vadd.f32 %v3581, %v4452
      %v4491 = vld [vmem:[%s6] sm:$0x7]
      %v4493 = vlaneseq
      %v4494 = vshrl.u32 %v4493, 7
      %v4495 = vsub.s32 0, %v4494
      %v4496 = vrot.slane %v4491, %v4495
      %v4497 = vlaneseq
      %v4498 = vshrl.u32 %v4497, 7
      %v4499 = vsub.s32 1, %v4498
      %v4500 = vrot.slane %v4491, %v4499
      %v4501 = vlaneseq
      %v4502 = vshrl.u32 %v4501, 7
      %v4503 = vsub.s32 2, %v4502
      %v4504 = vrot.slane %v4491, %v4503
      %v4508 = vadd.f32 %v4455, %v4496
      %v4509 = vadd.f32 %v4456, %v4500
      %v4510 = vadd.f32 %v4457, %v4504
      %v4511 = vadd.f32 %v4458, %v4496
      %v4512 = vadd.f32 %v4459, %v4500
      %v4513 = vadd.f32 %v4460, %v4504
      %v4514 = vadd.f32 %v4461, %v4496
      %v4515 = vadd.f32 %v4462, %v4500
      %v4516 = vadd.f32 %v4463, %v4504
      %v4517 = vadd.f32 %v4464, %v4496
      %v4518 = vadd.f32 %v4465, %v4500
      %v4519 = vadd.f32 %v4466, %v4504
      %v4520 = vadd.f32 %v4467, %v4496
      %v4521 = vadd.f32 %v4468, %v4500
      %v4522 = vadd.f32 %v4469, %v4504
      %v4523 = vadd.f32 %v4470, %v4496
      %v4524 = vadd.f32 %v4471, %v4500
      %v4525 = vadd.f32 %v4472, %v4504
      %v4526 = vadd.f32 %v4473, %v4496
      %v4527 = vadd.f32 %v4474, %v4500
      %v4528 = vadd.f32 %v4475, %v4504
      %v4529 = vadd.f32 %v4476, %v4496
      %v4530 = vadd.f32 %v4477, %v4500
      %v4531 = vadd.f32 %v4478, %v4504
      %v4532 = vadd.f32 %v4479, %v4496
      %v4533 = vadd.f32 %v4480, %v4500
      %v4534 = vadd.f32 %v4481, %v4504
      %v4535 = vadd.f32 %v4482, %v4496
      %v4536 = vadd.f32 %v4483, %v4500
      %v4537 = vadd.f32 %v4484, %v4504
      %v4538 = vadd.f32 %v4485, %v4496
      %v4539 = vadd.f32 %v4486, %v4500
      %v4540 = vadd.f32 %v4487, %v4504
      %v4541 = vadd.f32 %v4488, %v4496
      %v4542 = vadd.f32 %v4489, %v4500
      %v4543 = vadd.f32 %v4490, %v4504
      %v4544 = vmax.f32 %v4508, 0.0
      %v4545 = vmax.f32 %v4509, 0.0
      %v4546 = vmax.f32 %v4510, 0.0
      %v4547 = vmax.f32 %v4511, 0.0
      %v4548 = vmax.f32 %v4512, 0.0
      %v4549 = vmax.f32 %v4513, 0.0
      %v4550 = vmax.f32 %v4514, 0.0
      %v4551 = vmax.f32 %v4515, 0.0
      %v4552 = vmax.f32 %v4516, 0.0
      %v4553 = vmax.f32 %v4517, 0.0
      %v4554 = vmax.f32 %v4518, 0.0
      %v4555 = vmax.f32 %v4519, 0.0
      %v4556 = vmax.f32 %v4520, 0.0
      %v4557 = vmax.f32 %v4521, 0.0
      %v4558 = vmax.f32 %v4522, 0.0
      %v4559 = vmax.f32 %v4523, 0.0
      %v4560 = vmax.f32 %v4524, 0.0
      %v4561 = vmax.f32 %v4525, 0.0
      %v4562 = vmax.f32 %v4526, 0.0
      %v4563 = vmax.f32 %v4527, 0.0
      %v4564 = vmax.f32 %v4528, 0.0
      %v4565 = vmax.f32 %v4529, 0.0
      %v4566 = vmax.f32 %v4530, 0.0
      %v4567 = vmax.f32 %v4531, 0.0
      %v4568 = vmax.f32 %v4532, 0.0
      %v4569 = vmax.f32 %v4533, 0.0
      %v4570 = vmax.f32 %v4534, 0.0
      %v4571 = vmax.f32 %v4535, 0.0
      %v4572 = vmax.f32 %v4536, 0.0
      %v4573 = vmax.f32 %v4537, 0.0
      %v4574 = vmax.f32 %v4538, 0.0
      %v4575 = vmax.f32 %v4539, 0.0
      %v4576 = vmax.f32 %v4540, 0.0
      %v4577 = vmax.f32 %v4541, 0.0
      %v4578 = vmax.f32 %v4542, 0.0
      %v4579 = vmax.f32 %v4543, 0.0
      %v4580 = vpack.c.bf16 %v4547, %v4544
      %v4581 = vpack.c.bf16 %v4548, %v4545
      %v4582 = vpack.c.bf16 %v4549, %v4546
      %v4583 = vpack.c.bf16 %v4553, %v4550
      %v4584 = vpack.c.bf16 %v4554, %v4551
      %v4585 = vpack.c.bf16 %v4555, %v4552
      %v4586 = vpack.c.bf16 %v4559, %v4556
      %v4587 = vpack.c.bf16 %v4560, %v4557
      %v4588 = vpack.c.bf16 %v4561, %v4558
      %v4589 = vpack.c.bf16 %v4565, %v4562
      %v4590 = vpack.c.bf16 %v4566, %v4563
      %v4591 = vpack.c.bf16 %v4567, %v4564
      %v4592 = vpack.c.bf16 %v4571, %v4568
      %v4593 = vpack.c.bf16 %v4572, %v4569
      %v4594 = vpack.c.bf16 %v4573, %v4570
      %v4595 = vpack.c.bf16 %v4577, %v4574
      %v4596 = vpack.c.bf16 %v4578, %v4575
      %v4597 = vpack.c.bf16 %v4579, %v4576
      %v4598 = vld [vmem:[%s7] sm:$0xff]
      %v4599 = vld [vmem:[%s7 + $0x8] sm:$0xff]
      %v4600 = vld [vmem:[%s7 + $0x10] sm:$0xff]
      %v4601 = vld [vmem:[%s7 + $0x18] sm:$0xff]
      %v4602 = vld [vmem:[%s7 + $0x20] sm:$0xff]
      %v4603 = vld [vmem:[%s7 + $0x28] sm:$0xff]
      %v4604 = vld [vmem:[%s7 + $0x30] sm:$0xff]
      %v4605 = vld [vmem:[%s7 + $0x38] sm:$0xff]
      %v4606 = vld [vmem:[%s7 + $0x40] sm:$0xff]
      %v4607 = vld [vmem:[%s7 + $0x48] sm:$0xff]
      %v4608 = vld [vmem:[%s7 + $0x50] sm:$0xff]
      %v4609 = vld [vmem:[%s7 + $0x58] sm:$0xff]
      %v4610 = vld [vmem:[%s7 + $0x60] sm:$0xff]
      %v4611 = vld [vmem:[%s7 + $0x68] sm:$0xff]
      %v4612 = vld [vmem:[%s7 + $0x70] sm:$0xff]
      %v4613 = vld [vmem:[%s7 + $0x78] sm:$0xff]
      %v4614 = vld [vmem:[%s7 + $0x80] sm:$0xff]
      %v4615 = vld [vmem:[%s7 + $0x88] sm:$0xff]
      %v4616 = vld [vmem:[%s7 + $0x90] sm:$0xff]
      %v4617 = vld [vmem:[%s7 + $0x98] sm:$0xff]
      %v4618 = vld [vmem:[%s7 + $0xa0] sm:$0xff]
      %v4619 = vld [vmem:[%s7 + $0xa8] sm:$0xff]
      %v4620 = vld [vmem:[%s7 + $0xb0] sm:$0xff]
      %v4621 = vld [vmem:[%s7 + $0xb8] sm:$0xff]
      %v4622 = vld [vmem:[%s7 + $0xc0] sm:$0xff]
      %v4623 = vld [vmem:[%s7 + $0xc8] sm:$0xff]
      %v4624 = vld [vmem:[%s7 + $0xd0] sm:$0xff]
      %v4625 = vld [vmem:[%s7 + $0xd8] sm:$0xff]
      %v4626 = vld [vmem:[%s7 + $0xe0] sm:$0xff]
      %v4627 = vld [vmem:[%s7 + $0xe8] sm:$0xff]
      %v4628 = vld [vmem:[%s7 + $0xf0] sm:$0xff]
      %v4629 = vld [vmem:[%s7 + $0xf8] sm:$0xff]
      %v4630 = vld [vmem:[%s7 + $0x100] sm:$0xff]
      %v4631 = vld [vmem:[%s7 + $0x108] sm:$0xff]
      %v4632 = vld [vmem:[%s7 + $0x110] sm:$0xff]
      %v4633 = vld [vmem:[%s7 + $0x118] sm:$0xff]
      %s4634 = scalar_lea.vmem %s7, 288
      %v4635 = vld [vmem:[%s4634] sm:$0xff]
      %v4636 = vld [vmem:[%s4634 + $0x8] sm:$0xff]
      %v4637 = vld [vmem:[%s4634 + $0x10] sm:$0xff]
      %v4638 = vld [vmem:[%s4634 + $0x18] sm:$0xff]
      %v4639 = vld [vmem:[%s4634 + $0x20] sm:$0xff]
      %v4640 = vld [vmem:[%s4634 + $0x28] sm:$0xff]
      %v4641 = vld [vmem:[%s4634 + $0x30] sm:$0xff]
      %v4642 = vld [vmem:[%s4634 + $0x38] sm:$0xff]
      %v4643 = vld [vmem:[%s4634 + $0x40] sm:$0xff]
      %v4644 = vld [vmem:[%s4634 + $0x48] sm:$0xff]
      %v4645 = vld [vmem:[%s4634 + $0x50] sm:$0xff]
      %v4646 = vld [vmem:[%s4634 + $0x58] sm:$0xff]
      %v4647 = vld [vmem:[%s4634 + $0x60] sm:$0xff]
      %v4648 = vld [vmem:[%s4634 + $0x68] sm:$0xff]
      %v4649 = vld [vmem:[%s4634 + $0x70] sm:$0xff]
      %v4650 = vld [vmem:[%s4634 + $0x78] sm:$0xff]
      %v4651 = vld [vmem:[%s4634 + $0x80] sm:$0xff]
      %v4652 = vld [vmem:[%s4634 + $0x88] sm:$0xff]
      %v4653 = vld [vmem:[%s4634 + $0x90] sm:$0xff]
      %v4654 = vld [vmem:[%s4634 + $0x98] sm:$0xff]
      %v4655 = vld [vmem:[%s4634 + $0xa0] sm:$0xff]
      %v4656 = vld [vmem:[%s4634 + $0xa8] sm:$0xff]
      %v4657 = vld [vmem:[%s4634 + $0xb0] sm:$0xff]
      %v4658 = vld [vmem:[%s4634 + $0xb8] sm:$0xff]
      %v4659 = vld [vmem:[%s4634 + $0xc0] sm:$0xff]
      %v4660 = vld [vmem:[%s4634 + $0xc8] sm:$0xff]
      %v4661 = vld [vmem:[%s4634 + $0xd0] sm:$0xff]
      %v4662 = vld [vmem:[%s4634 + $0xd8] sm:$0xff]
      %v4663 = vld [vmem:[%s4634 + $0xe0] sm:$0xff]
      %v4664 = vld [vmem:[%s4634 + $0xe8] sm:$0xff]
      %v4665 = vld [vmem:[%s4634 + $0xf0] sm:$0xff]
      %v4666 = vld [vmem:[%s4634 + $0xf8] sm:$0xff]
      %v4667 = vld [vmem:[%s4634 + $0x100] sm:$0xff]
      %v4668 = vld [vmem:[%s4634 + $0x108] sm:$0xff]
      %v4669 = vld [vmem:[%s4634 + $0x110] sm:$0xff]
      %v4670 = vld [vmem:[%s4634 + $0x118] sm:$0xff]
      %v4672 = vshrl.u32 %v4580, 16
      %v4674 = vshll.u32 %v4580, 16
      %v4676 = vrot.slane %v4674, 1
      %v4677 = vor.u32 %v4672, %v4676
      %v4679 = vshll.u32 %v4583, 16
      %v4681 = vrot.slane %v4679, 1
      %v4682 = vsel %vm1365, %v4677, %v4681
      %v4684 = vshrl.u32 %v4581, 16
      %v4686 = vshll.u32 %v4581, 16
      %v4688 = vrot.slane %v4686, 1
      %v4689 = vor.u32 %v4684, %v4688
      %v4691 = vshll.u32 %v4584, 16
      %v4693 = vrot.slane %v4691, 1
      %v4694 = vsel %vm1365, %v4689, %v4693
      %v4696 = vshrl.u32 %v4582, 16
      %v4698 = vshll.u32 %v4582, 16
      %v4700 = vrot.slane %v4698, 1
      %v4701 = vor.u32 %v4696, %v4700
      %v4703 = vshll.u32 %v4585, 16
      %v4705 = vrot.slane %v4703, 1
      %v4706 = vsel %vm1365, %v4701, %v4705
      %v4707 = vshrl.u32 %v4583, 16
      %v4709 = vor.u32 %v4707, %v4681
      %v4711 = vshll.u32 %v4586, 16
      %v4713 = vrot.slane %v4711, 1
      %v4714 = vsel %vm1365, %v4709, %v4713
      %v4715 = vshrl.u32 %v4584, 16
      %v4717 = vor.u32 %v4715, %v4693
      %v4719 = vshll.u32 %v4587, 16
      %v4721 = vrot.slane %v4719, 1
      %v4722 = vsel %vm1365, %v4717, %v4721
      %v4723 = vshrl.u32 %v4585, 16
      %v4725 = vor.u32 %v4723, %v4705
      %v4727 = vshll.u32 %v4588, 16
      %v4729 = vrot.slane %v4727, 1
      %v4730 = vsel %vm1365, %v4725, %v4729
      %v4731 = vshrl.u32 %v4586, 16
      %v4733 = vor.u32 %v4731, %v4713
      %v4735 = vshll.u32 %v4589, 16
      %v4737 = vrot.slane %v4735, 1
      %v4738 = vsel %vm1365, %v4733, %v4737
      %v4739 = vshrl.u32 %v4587, 16
      %v4741 = vor.u32 %v4739, %v4721
      %v4743 = vshll.u32 %v4590, 16
      %v4745 = vrot.slane %v4743, 1
      %v4746 = vsel %vm1365, %v4741, %v4745
      %v4747 = vshrl.u32 %v4588, 16
      %v4749 = vor.u32 %v4747, %v4729
      %v4751 = vshll.u32 %v4591, 16
      %v4753 = vrot.slane %v4751, 1
      %v4754 = vsel %vm1365, %v4749, %v4753
      %v4755 = vshrl.u32 %v4589, 16
      %v4757 = vor.u32 %v4755, %v4737
      %v4759 = vshll.u32 %v4592, 16
      %v4761 = vrot.slane %v4759, 1
      %v4762 = vsel %vm1365, %v4757, %v4761
      %v4763 = vshrl.u32 %v4590, 16
      %v4765 = vor.u32 %v4763, %v4745
      %v4767 = vshll.u32 %v4593, 16
      %v4769 = vrot.slane %v4767, 1
      %v4770 = vsel %vm1365, %v4765, %v4769
      %v4771 = vshrl.u32 %v4591, 16
      %v4773 = vor.u32 %v4771, %v4753
      %v4775 = vshll.u32 %v4594, 16
      %v4777 = vrot.slane %v4775, 1
      %v4778 = vsel %vm1365, %v4773, %v4777
      %v4779 = vshrl.u32 %v4592, 16
      %v4781 = vor.u32 %v4779, %v4761
      %v4783 = vshll.u32 %v4595, 16
      %v4785 = vrot.slane %v4783, 1
      %v4786 = vsel %vm1365, %v4781, %v4785
      %v4787 = vshrl.u32 %v4593, 16
      %v4789 = vor.u32 %v4787, %v4769
      %v4791 = vshll.u32 %v4596, 16
      %v4793 = vrot.slane %v4791, 1
      %v4794 = vsel %vm1365, %v4789, %v4793
      %v4795 = vshrl.u32 %v4594, 16
      %v4797 = vor.u32 %v4795, %v4777
      %v4799 = vshll.u32 %v4597, 16
      %v4801 = vrot.slane %v4799, 1
      %v4802 = vsel %vm1365, %v4797, %v4801
      %v4803 = vshrl.u32 %v4595, 16
      %v4805 = vor.u32 %v4803, %v4785
      %v4806 = vshrl.u32 %v4596, 16
      %v4808 = vor.u32 %v4806, %v4793
      %v4809 = vshrl.u32 %v4597, 16
      %v4811 = vor.u32 %v4809, %v4801
      %v4860 = vunpack.c.l.b16 %v4635
      %v4861 = vunpack.c.h.b16 %v4635
      %v4862 = vunpack.c.l.b16 %v4636
      %v4863 = vunpack.c.h.b16 %v4636
      %v4864 = vunpack.c.l.b16 %v4637
      %v4865 = vunpack.c.h.b16 %v4637
      %v4866 = vunpack.c.l.b16 %v4638
      %v4867 = vunpack.c.h.b16 %v4638
      %v4868 = vunpack.c.l.b16 %v4639
      %v4869 = vunpack.c.h.b16 %v4639
      %v4870 = vunpack.c.l.b16 %v4640
      %v4871 = vunpack.c.h.b16 %v4640
      %v4872 = vunpack.c.l.b16 %v4641
      %v4873 = vunpack.c.h.b16 %v4641
      %v4874 = vunpack.c.l.b16 %v4642
      %v4875 = vunpack.c.h.b16 %v4642
      %v4876 = vunpack.c.l.b16 %v4643
      %v4877 = vunpack.c.h.b16 %v4643
      %v4878 = vunpack.c.l.b16 %v4644
      %v4879 = vunpack.c.h.b16 %v4644
      %v4880 = vunpack.c.l.b16 %v4645
      %v4881 = vunpack.c.h.b16 %v4645
      %v4882 = vunpack.c.l.b16 %v4646
      %v4883 = vunpack.c.h.b16 %v4646
      %v4884 = vunpack.c.l.b16 %v4647
      %v4885 = vunpack.c.h.b16 %v4647
      %v4886 = vunpack.c.l.b16 %v4648
      %v4887 = vunpack.c.h.b16 %v4648
      %v4888 = vunpack.c.l.b16 %v4649
      %v4889 = vunpack.c.h.b16 %v4649
      %v4890 = vunpack.c.l.b16 %v4650
      %v4891 = vunpack.c.h.b16 %v4650
      %v4892 = vunpack.c.l.b16 %v4651
      %v4893 = vunpack.c.h.b16 %v4651
      %v4894 = vunpack.c.l.b16 %v4652
      %v4895 = vunpack.c.h.b16 %v4652
      %v4896 = vunpack.c.l.b16 %v4653
      %v4897 = vunpack.c.h.b16 %v4653
      %v4898 = vunpack.c.l.b16 %v4654
      %v4899 = vunpack.c.h.b16 %v4654
      %v4900 = vunpack.c.l.b16 %v4655
      %v4901 = vunpack.c.h.b16 %v4655
      %v4902 = vunpack.c.l.b16 %v4656
      %v4903 = vunpack.c.h.b16 %v4656
      %v4904 = vunpack.c.l.b16 %v4657
      %v4905 = vunpack.c.h.b16 %v4657
      %v4906 = vunpack.c.l.b16 %v4658
      %v4907 = vunpack.c.h.b16 %v4658
      %v4908 = vunpack.c.l.b16 %v4659
      %v4909 = vunpack.c.h.b16 %v4659
      %v4910 = vunpack.c.l.b16 %v4660
      %v4911 = vunpack.c.h.b16 %v4660
      %v4912 = vunpack.c.l.b16 %v4661
      %v4913 = vunpack.c.h.b16 %v4661
      %v4914 = vunpack.c.l.b16 %v4662
      %v4915 = vunpack.c.h.b16 %v4662
      %v4916 = vunpack.c.l.b16 %v4663
      %v4917 = vunpack.c.h.b16 %v4663
      %v4918 = vunpack.c.l.b16 %v4664
      %v4919 = vunpack.c.h.b16 %v4664
      %v4920 = vunpack.c.l.b16 %v4665
      %v4921 = vunpack.c.h.b16 %v4665
      %v4922 = vunpack.c.l.b16 %v4666
      %v4923 = vunpack.c.h.b16 %v4666
      %v4924 = vunpack.c.l.b16 %v4667
      %v4925 = vunpack.c.h.b16 %v4667
      %v4926 = vunpack.c.l.b16 %v4668
      %v4927 = vunpack.c.h.b16 %v4668
      %v4928 = vunpack.c.l.b16 %v4669
      %v4929 = vunpack.c.h.b16 %v4669
      %v4930 = vunpack.c.l.b16 %v4670
      %v4931 = vunpack.c.h.b16 %v4670
      %v4932 = vpack.c.b16 %v4862, %v4860
      %v4933 = vpack.c.b16 %v4863, %v4861
      %v4934 = vpack.c.b16 %v4866, %v4864
      %v4935 = vpack.c.b16 %v4867, %v4865
      %v4936 = vpack.c.b16 %v4870, %v4868
      %v4937 = vpack.c.b16 %v4871, %v4869
      %v4938 = vpack.c.b16 %v4874, %v4872
      %v4939 = vpack.c.b16 %v4875, %v4873
      %v4940 = vpack.c.b16 %v4878, %v4876
      %v4941 = vpack.c.b16 %v4879, %v4877
      %v4942 = vpack.c.b16 %v4882, %v4880
      %v4943 = vpack.c.b16 %v4883, %v4881
      %v4944 = vpack.c.b16 %v4886, %v4884
      %v4945 = vpack.c.b16 %v4887, %v4885
      %v4946 = vpack.c.b16 %v4890, %v4888
      %v4947 = vpack.c.b16 %v4891, %v4889
      %v4948 = vpack.c.b16 %v4894, %v4892
      %v4949 = vpack.c.b16 %v4895, %v4893
      %v4950 = vpack.c.b16 %v4898, %v4896
      %v4951 = vpack.c.b16 %v4899, %v4897
      %v4952 = vpack.c.b16 %v4902, %v4900
      %v4953 = vpack.c.b16 %v4903, %v4901
      %v4954 = vpack.c.b16 %v4906, %v4904
      %v4955 = vpack.c.b16 %v4907, %v4905
      %v4956 = vpack.c.b16 %v4910, %v4908
      %v4957 = vpack.c.b16 %v4911, %v4909
      %v4958 = vpack.c.b16 %v4914, %v4912
      %v4959 = vpack.c.b16 %v4915, %v4913
      %v4960 = vpack.c.b16 %v4918, %v4916
      %v4961 = vpack.c.b16 %v4919, %v4917
      %v4962 = vpack.c.b16 %v4922, %v4920
      %v4963 = vpack.c.b16 %v4923, %v4921
      %v4964 = vpack.c.b16 %v4926, %v4924
      %v4965 = vpack.c.b16 %v4927, %v4925
      %v4966 = vpack.c.b16 %v4930, %v4928
      %v4967 = vpack.c.b16 %v4931, %v4929
      %vm5004 = vcmask 261120
      %v5006 = vsel %vm5004, %v4706, 0
      %v5009 = vsel %vm5004, %v4730, 0
      %v5012 = vsel %vm5004, %v4754, 0
      %v5015 = vsel %vm5004, %v4778, 0
      %v5018 = vsel %vm5004, %v4802, 0
      %v5021 = vsel %vm5004, %v4811, 0
      %5023 = vmatprep.subr.bf16.mxu0 %v4933
      %5024 = vmatpush1.bf16.msra.mxu0 %v4932
      %5025 = vmatprep.subr.bf16.mxu0 %v4935
      %5026 = vmatpush1.bf16.msra.mxu0 %v4934
      %5027 = vmatprep.subr.bf16.mxu0 %v4937
      %5028 = vmatpush1.bf16.msra.mxu0 %v4936
      %5029 = vmatprep.subr.bf16.mxu0 %v4939
      %5030 = vmatpush1.bf16.msra.mxu0 %v4938
      %5031 = vmatprep.subr.bf16.mxu0 %v4941
      %5032 = vmatpush1.bf16.msra.mxu0 %v4940
      %5033 = vmatprep.subr.bf16.mxu0 %v4943
      %5034 = vmatpush1.bf16.msra.mxu0 %v4942
      %5035 = vmatprep.subr.bf16.mxu0 %v4945
      %5036 = vmatpush1.bf16.msra.mxu0 %v4944
      %5037 = vmatprep.subr.bf16.mxu0 %v4947
      %5038 = vmatpush1.bf16.msra.mxu0 %v4946
      %5039 = vmatprep.subr.bf16.mxu0 %v4949
      %5040 = vmatpush1.bf16.msra.mxu0 %v4948
      %5041 = vmatprep.subr.bf16.mxu0 %v4951
      %5042 = vmatpush1.bf16.msra.mxu0 %v4950
      %5043 = vmatprep.subr.bf16.mxu0 %v4953
      %5044 = vmatpush1.bf16.msra.mxu0 %v4952
      %5045 = vmatprep.subr.bf16.mxu0 %v4955
      %5046 = vmatpush1.bf16.msra.mxu0 %v4954
      %5047 = vmatprep.subr.bf16.mxu0 %v4957
      %5048 = vmatpush1.bf16.msra.mxu0 %v4956
      %5049 = vmatprep.subr.bf16.mxu0 %v4959
      %5050 = vmatpush1.bf16.msra.mxu0 %v4958
      %5051 = vmatprep.subr.bf16.mxu0 %v4961
      %5052 = vmatpush1.bf16.msra.mxu0 %v4960
      %5053 = vmatprep.subr.bf16.mxu0 %v4963
      %5054 = vmatpush1.bf16.msra.mxu0 %v4962
      %5055 = vmatprep.mubr.bf16.mxu0 %v4694
      %5056 = vmatmul.mubr.bf16.gmra.mrb[0].mxu0 %v4682
      %v5057 = vpop.f32.mrb[0].mxu0
      %v5058 = vadd.f32 0.0, %v5057
      %v5059 = vpop.f32.mrb[0].mxu0
      %v5060 = vadd.f32 0.0, %v5059
      %v5061 = vpop.f32.mrb[0].mxu0
      %v5062 = vadd.f32 0.0, %v5061
      %v5063 = vpop.f32.mrb[0].mxu0
      %v5064 = vadd.f32 0.0, %v5063
      %5065 = vmatprep.mubr.bf16.mxu0 %v4722
      %5066 = vmatmul.mubr.bf16.gmra.mrb[0].mxu0 %v4714
      %v5067 = vpop.f32.mrb[0].mxu0
      %v5068 = vadd.f32 0.0, %v5067
      %v5069 = vpop.f32.mrb[0].mxu0
      %v5070 = vadd.f32 0.0, %v5069
      %v5071 = vpop.f32.mrb[0].mxu0
      %v5072 = vadd.f32 0.0, %v5071
      %v5073 = vpop.f32.mrb[0].mxu0
      %v5074 = vadd.f32 0.0, %v5073
      %5075 = vmatprep.mubr.bf16.mxu0 %v4746
      %5076 = vmatmul.mubr.bf16.gmra.mrb[0].mxu0 %v4738
      %v5077 = vpop.f32.mrb[0].mxu0
      %v5078 = vadd.f32 0.0, %v5077
      %v5079 = vpop.f32.mrb[0].mxu0
      %v5080 = vadd.f32 0.0, %v5079
      %v5081 = vpop.f32.mrb[0].mxu0
      %v5082 = vadd.f32 0.0, %v5081
      %v5083 = vpop.f32.mrb[0].mxu0
      %v5084 = vadd.f32 0.0, %v5083
      %5085 = vmatprep.mubr.bf16.mxu0 %v4770
      %5086 = vmatmul.mubr.bf16.gmra.mrb[0].mxu0 %v4762
      %v5087 = vpop.f32.mrb[0].mxu0
      %v5088 = vadd.f32 0.0, %v5087
      %v5089 = vpop.f32.mrb[0].mxu0
      %v5090 = vadd.f32 0.0, %v5089
      %v5091 = vpop.f32.mrb[0].mxu0
      %v5092 = vadd.f32 0.0, %v5091
      %v5093 = vpop.f32.mrb[0].mxu0
      %v5094 = vadd.f32 0.0, %v5093
      %5095 = vmatprep.mubr.bf16.mxu0 %v4794
      %5096 = vmatmul.mubr.bf16.gmra.mrb[0].mxu0 %v4786
      %v5097 = vpop.f32.mrb[0].mxu0
      %v5098 = vadd.f32 0.0, %v5097
      %v5099 = vpop.f32.mrb[0].mxu0
      %v5100 = vadd.f32 0.0, %v5099
      %v5101 = vpop.f32.mrb[0].mxu0
      %v5102 = vadd.f32 0.0, %v5101
      %v5103 = vpop.f32.mrb[0].mxu0
      %v5104 = vadd.f32 0.0, %v5103
      %5105 = vmatprep.mubr.bf16.mxu0 %v4808
      %5106 = vmatmul.mubr.bf16.gmra.mrb[0].mxu0 %v4805
      %v5107 = vpop.f32.mrb[0].mxu0
      %v5108 = vadd.f32 0.0, %v5107
      %v5109 = vpop.f32.mrb[0].mxu0
      %v5110 = vadd.f32 0.0, %v5109
      %v5111 = vpop.f32.mrb[0].mxu0
      %v5112 = vadd.f32 0.0, %v5111
      %v5113 = vpop.f32.mrb[0].mxu0
      %v5114 = vadd.f32 0.0, %v5113
      %5115 = vdwg.mxu0
      %5116 = vmatprep.subr.bf16.mxu0 %v4965
      %5117 = vmatpush1.bf16.msra.mxu0 %v4964
      %5118 = vmatprep.subr.bf16.mxu0 %v4967
      %5119 = vmatpush1.bf16.msra.mxu0 %v4966
      %5120 = vmatprep.subr.bf16.mxu0 0
      %5121 = vmatpush1.bf16.msra.mxu0 0
      %5122 = vmatprep.subr.bf16.mxu0 0
      %5123 = vmatpush1.bf16.msra.mxu0 0
      %5124 = vmatprep.subr.bf16.mxu0 0
      %5125 = vmatpush1.bf16.msra.mxu0 0
      %5126 = vmatprep.subr.bf16.mxu0 0
      %5127 = vmatpush1.bf16.msra.mxu0 0
      %5128 = vmatprep.subr.bf16.mxu0 0
      %5129 = vmatpush1.bf16.msra.mxu0 0
      %5130 = vmatprep.subr.bf16.mxu0 0
      %5131 = vmatpush1.bf16.msra.mxu0 0
      %5132 = vmatprep.subr.bf16.mxu0 0
      %5133 = vmatpush1.bf16.msra.mxu0 0
      %5134 = vmatprep.subr.bf16.mxu0 0
      %5135 = vmatpush1.bf16.msra.mxu0 0
      %5136 = vmatprep.subr.bf16.mxu0 0
      %5137 = vmatpush1.bf16.msra.mxu0 0
      %5138 = vmatprep.subr.bf16.mxu0 0
      %5139 = vmatpush1.bf16.msra.mxu0 0
      %5140 = vmatprep.subr.bf16.mxu0 0
      %5141 = vmatpush1.bf16.msra.mxu0 0
      %5142 = vmatprep.subr.bf16.mxu0 0
      %5143 = vmatpush1.bf16.msra.mxu0 0
      %5144 = vmatprep.subr.bf16.mxu0 0
      %5145 = vmatpush1.bf16.msra.mxu0 0
      %5146 = vmatprep.subr.bf16.mxu0 0
      %5147 = vmatpush1.bf16.msra.mxu0 0
      %5148 = vmatprep.mubr.bf16.mxu0 0
      %5149 = vmatmul.mubr.bf16.gmra.mrb[0].mxu0 %v5006
      %v5150 = vpop.f32.mrb[0].mxu0
      %v5151 = vadd.f32 %v5058, %v5150
      %v5152 = vpop.f32.mrb[0].mxu0
      %v5153 = vadd.f32 %v5060, %v5152
      %v5154 = vpop.f32.mrb[0].mxu0
      %v5155 = vadd.f32 %v5062, %v5154
      %v5156 = vpop.f32.mrb[0].mxu0
      %v5157 = vadd.f32 %v5064, %v5156
      %5158 = vmatprep.mubr.bf16.mxu0 0
      %5159 = vmatmul.mubr.bf16.gmra.mrb[0].mxu0 %v5009
      %v5160 = vpop.f32.mrb[0].mxu0
      %v5161 = vadd.f32 %v5068, %v5160
      %v5162 = vpop.f32.mrb[0].mxu0
      %v5163 = vadd.f32 %v5070, %v5162
      %v5164 = vpop.f32.mrb[0].mxu0
      %v5165 = vadd.f32 %v5072, %v5164
      %v5166 = vpop.f32.mrb[0].mxu0
      %v5167 = vadd.f32 %v5074, %v5166
      %5168 = vmatprep.mubr.bf16.mxu0 0
      %5169 = vmatmul.mubr.bf16.gmra.mrb[0].mxu0 %v5012
      %v5170 = vpop.f32.mrb[0].mxu0
      %v5171 = vadd.f32 %v5078, %v5170
      %v5172 = vpop.f32.mrb[0].mxu0
      %v5173 = vadd.f32 %v5080, %v5172
      %v5174 = vpop.f32.mrb[0].mxu0
      %v5175 = vadd.f32 %v5082, %v5174
      %v5176 = vpop.f32.mrb[0].mxu0
      %v5177 = vadd.f32 %v5084, %v5176
      %5178 = vmatprep.mubr.bf16.mxu0 0
      %5179 = vmatmul.mubr.bf16.gmra.mrb[0].mxu0 %v5015
      %v5180 = vpop.f32.mrb[0].mxu0
      %v5181 = vadd.f32 %v5088, %v5180
      %v5182 = vpop.f32.mrb[0].mxu0
      %v5183 = vadd.f32 %v5090, %v5182
      %v5184 = vpop.f32.mrb[0].mxu0
      %v5185 = vadd.f32 %v5092, %v5184
      %v5186 = vpop.f32.mrb[0].mxu0
      %v5187 = vadd.f32 %v5094, %v5186
      %5188 = vmatprep.mubr.bf16.mxu0 0
      %5189 = vmatmul.mubr.bf16.gmra.mrb[0].mxu0 %v5018
      %v5190 = vpop.f32.mrb[0].mxu0
      %v5191 = vadd.f32 %v5098, %v5190
      %v5192 = vpop.f32.mrb[0].mxu0
      %v5193 = vadd.f32 %v5100, %v5192
      %v5194 = vpop.f32.mrb[0].mxu0
      %v5195 = vadd.f32 %v5102, %v5194
      %v5196 = vpop.f32.mrb[0].mxu0
      %v5197 = vadd.f32 %v5104, %v5196
      %5198 = vmatprep.mubr.bf16.mxu0 0
      %5199 = vmatmul.mubr.bf16.gmra.mrb[0].mxu0 %v5021
      %v5200 = vpop.f32.mrb[0].mxu0
      %v5201 = vadd.f32 %v5108, %v5200
      %v5202 = vpop.f32.mrb[0].mxu0
      %v5203 = vadd.f32 %v5110, %v5202
      %v5204 = vpop.f32.mrb[0].mxu0
      %v5205 = vadd.f32 %v5112, %v5204
      %v5206 = vpop.f32.mrb[0].mxu0
      %v5207 = vadd.f32 %v5114, %v5206
      %5208 = vdwg.mxu0
      %v5245 = vunpack.c.l.b16 %v4598
      %v5246 = vunpack.c.h.b16 %v4598
      %v5247 = vunpack.c.l.b16 %v4599
      %v5248 = vunpack.c.h.b16 %v4599
      %v5249 = vunpack.c.l.b16 %v4600
      %v5250 = vunpack.c.h.b16 %v4600
      %v5251 = vunpack.c.l.b16 %v4601
      %v5252 = vunpack.c.h.b16 %v4601
      %v5253 = vunpack.c.l.b16 %v4602
      %v5254 = vunpack.c.h.b16 %v4602
      %v5255 = vunpack.c.l.b16 %v4603
      %v5256 = vunpack.c.h.b16 %v4603
      %v5257 = vunpack.c.l.b16 %v4604
      %v5258 = vunpack.c.h.b16 %v4604
      %v5259 = vunpack.c.l.b16 %v4605
      %v5260 = vunpack.c.h.b16 %v4605
      %v5261 = vunpack.c.l.b16 %v4606
      %v5262 = vunpack.c.h.b16 %v4606
      %v5263 = vunpack.c.l.b16 %v4607
      %v5264 = vunpack.c.h.b16 %v4607
      %v5265 = vunpack.c.l.b16 %v4608
      %v5266 = vunpack.c.h.b16 %v4608
      %v5267 = vunpack.c.l.b16 %v4609
      %v5268 = vunpack.c.h.b16 %v4609
      %v5269 = vunpack.c.l.b16 %v4610
      %v5270 = vunpack.c.h.b16 %v4610
      %v5271 = vunpack.c.l.b16 %v4611
      %v5272 = vunpack.c.h.b16 %v4611
      %v5273 = vunpack.c.l.b16 %v4612
      %v5274 = vunpack.c.h.b16 %v4612
      %v5275 = vunpack.c.l.b16 %v4613
      %v5276 = vunpack.c.h.b16 %v4613
      %v5277 = vunpack.c.l.b16 %v4614
      %v5278 = vunpack.c.h.b16 %v4614
      %v5279 = vunpack.c.l.b16 %v4615
      %v5280 = vunpack.c.h.b16 %v4615
      %v5281 = vunpack.c.l.b16 %v4616
      %v5282 = vunpack.c.h.b16 %v4616
      %v5283 = vunpack.c.l.b16 %v4617
      %v5284 = vunpack.c.h.b16 %v4617
      %v5285 = vunpack.c.l.b16 %v4618
      %v5286 = vunpack.c.h.b16 %v4618
      %v5287 = vunpack.c.l.b16 %v4619
      %v5288 = vunpack.c.h.b16 %v4619
      %v5289 = vunpack.c.l.b16 %v4620
      %v5290 = vunpack.c.h.b16 %v4620
      %v5291 = vunpack.c.l.b16 %v4621
      %v5292 = vunpack.c.h.b16 %v4621
      %v5293 = vunpack.c.l.b16 %v4622
      %v5294 = vunpack.c.h.b16 %v4622
      %v5295 = vunpack.c.l.b16 %v4623
      %v5296 = vunpack.c.h.b16 %v4623
      %v5297 = vunpack.c.l.b16 %v4624
      %v5298 = vunpack.c.h.b16 %v4624
      %v5299 = vunpack.c.l.b16 %v4625
      %v5300 = vunpack.c.h.b16 %v4625
      %v5301 = vunpack.c.l.b16 %v4626
      %v5302 = vunpack.c.h.b16 %v4626
      %v5303 = vunpack.c.l.b16 %v4627
      %v5304 = vunpack.c.h.b16 %v4627
      %v5305 = vunpack.c.l.b16 %v4628
      %v5306 = vunpack.c.h.b16 %v4628
      %v5307 = vunpack.c.l.b16 %v4629
      %v5308 = vunpack.c.h.b16 %v4629
      %v5309 = vunpack.c.l.b16 %v4630
      %v5310 = vunpack.c.h.b16 %v4630
      %v5311 = vunpack.c.l.b16 %v4631
      %v5312 = vunpack.c.h.b16 %v4631
      %v5313 = vunpack.c.l.b16 %v4632
      %v5314 = vunpack.c.h.b16 %v4632
      %v5315 = vunpack.c.l.b16 %v4633
      %v5316 = vunpack.c.h.b16 %v4633
      %v5317 = vpack.c.b16 %v5247, %v5245
      %v5318 = vpack.c.b16 %v5248, %v5246
      %v5319 = vpack.c.b16 %v5251, %v5249
      %v5320 = vpack.c.b16 %v5252, %v5250
      %v5321 = vpack.c.b16 %v5255, %v5253
      %v5322 = vpack.c.b16 %v5256, %v5254
      %v5323 = vpack.c.b16 %v5259, %v5257
      %v5324 = vpack.c.b16 %v5260, %v5258
      %v5325 = vpack.c.b16 %v5263, %v5261
      %v5326 = vpack.c.b16 %v5264, %v5262
      %v5327 = vpack.c.b16 %v5267, %v5265
      %v5328 = vpack.c.b16 %v5268, %v5266
      %v5329 = vpack.c.b16 %v5271, %v5269
      %v5330 = vpack.c.b16 %v5272, %v5270
      %v5331 = vpack.c.b16 %v5275, %v5273
      %v5332 = vpack.c.b16 %v5276, %v5274
      %v5333 = vpack.c.b16 %v5279, %v5277
      %v5334 = vpack.c.b16 %v5280, %v5278
      %v5335 = vpack.c.b16 %v5283, %v5281
      %v5336 = vpack.c.b16 %v5284, %v5282
      %v5337 = vpack.c.b16 %v5287, %v5285
      %v5338 = vpack.c.b16 %v5288, %v5286
      %v5339 = vpack.c.b16 %v5291, %v5289
      %v5340 = vpack.c.b16 %v5292, %v5290
      %v5341 = vpack.c.b16 %v5295, %v5293
      %v5342 = vpack.c.b16 %v5296, %v5294
      %v5343 = vpack.c.b16 %v5299, %v5297
      %v5344 = vpack.c.b16 %v5300, %v5298
      %v5345 = vpack.c.b16 %v5303, %v5301
      %v5346 = vpack.c.b16 %v5304, %v5302
      %v5347 = vpack.c.b16 %v5307, %v5305
      %v5348 = vpack.c.b16 %v5308, %v5306
      %v5349 = vpack.c.b16 %v5311, %v5309
      %v5350 = vpack.c.b16 %v5312, %v5310
      %v5351 = vpack.c.b16 %v5315, %v5313
      %v5352 = vpack.c.b16 %v5316, %v5314
      %v5389 = vsel %vm5004, %v4582, 0
      %v5391 = vsel %vm5004, %v4585, 0
      %v5393 = vsel %vm5004, %v4588, 0
      %v5395 = vsel %vm5004, %v4591, 0
      %v5397 = vsel %vm5004, %v4594, 0
      %v5399 = vsel %vm5004, %v4597, 0
      %5401 = vmatprep.subr.bf16.mxu0 %v5318
      %5402 = vmatpush1.bf16.msra.mxu0 %v5317
      %5403 = vmatprep.subr.bf16.mxu0 %v5320
      %5404 = vmatpush1.bf16.msra.mxu0 %v5319
      %5405 = vmatprep.subr.bf16.mxu0 %v5322
      %5406 = vmatpush1.bf16.msra.mxu0 %v5321
      %5407 = vmatprep.subr.bf16.mxu0 %v5324
      %5408 = vmatpush1.bf16.msra.mxu0 %v5323
      %5409 = vmatprep.subr.bf16.mxu0 %v5326
      %5410 = vmatpush1.bf16.msra.mxu0 %v5325
      %5411 = vmatprep.subr.bf16.mxu0 %v5328
      %5412 = vmatpush1.bf16.msra.mxu0 %v5327
      %5413 = vmatprep.subr.bf16.mxu0 %v5330
      %5414 = vmatpush1.bf16.msra.mxu0 %v5329
      %5415 = vmatprep.subr.bf16.mxu0 %v5332
      %5416 = vmatpush1.bf16.msra.mxu0 %v5331
      %5417 = vmatprep.subr.bf16.mxu0 %v5334
      %5418 = vmatpush1.bf16.msra.mxu0 %v5333
      %5419 = vmatprep.subr.bf16.mxu0 %v5336
      %5420 = vmatpush1.bf16.msra.mxu0 %v5335
      %5421 = vmatprep.subr.bf16.mxu0 %v5338
      %5422 = vmatpush1.bf16.msra.mxu0 %v5337
      %5423 = vmatprep.subr.bf16.mxu0 %v5340
      %5424 = vmatpush1.bf16.msra.mxu0 %v5339
      %5425 = vmatprep.subr.bf16.mxu0 %v5342
      %5426 = vmatpush1.bf16.msra.mxu0 %v5341
      %5427 = vmatprep.subr.bf16.mxu0 %v5344
      %5428 = vmatpush1.bf16.msra.mxu0 %v5343
      %5429 = vmatprep.subr.bf16.mxu0 %v5346
      %5430 = vmatpush1.bf16.msra.mxu0 %v5345
      %5431 = vmatprep.subr.bf16.mxu0 %v5348
      %5432 = vmatpush1.bf16.msra.mxu0 %v5347
      %5433 = vmatprep.mubr.bf16.mxu0 %v4581
      %5434 = vmatmul.mubr.bf16.gmra.mrb[0].mxu0 %v4580
      %v5435 = vpop.f32.mrb[0].mxu0
      %v5436 = vadd.f32 %v5151, %v5435
      %v5437 = vpop.f32.mrb[0].mxu0
      %v5438 = vadd.f32 %v5153, %v5437
      %v5439 = vpop.f32.mrb[0].mxu0
      %v5440 = vadd.f32 %v5155, %v5439
      %v5441 = vpop.f32.mrb[0].mxu0
      %v5442 = vadd.f32 %v5157, %v5441
      %5443 = vmatprep.mubr.bf16.mxu0 %v4584
      %5444 = vmatmul.mubr.bf16.gmra.mrb[0].mxu0 %v4583
      %v5445 = vpop.f32.mrb[0].mxu0
      %v5446 = vadd.f32 %v5161, %v5445
      %v5447 = vpop.f32.mrb[0].mxu0
      %v5448 = vadd.f32 %v5163, %v5447
      %v5449 = vpop.f32.mrb[0].mxu0
      %v5450 = vadd.f32 %v5165, %v5449
      %v5451 = vpop.f32.mrb[0].mxu0
      %v5452 = vadd.f32 %v5167, %v5451
      %5453 = vmatprep.mubr.bf16.mxu0 %v4587
      %5454 = vmatmul.mubr.bf16.gmra.mrb[0].mxu0 %v4586
      %v5455 = vpop.f32.mrb[0].mxu0
      %v5456 = vadd.f32 %v5171, %v5455
      %v5457 = vpop.f32.mrb[0].mxu0
      %v5458 = vadd.f32 %v5173, %v5457
      %v5459 = vpop.f32.mrb[0].mxu0
      %v5460 = vadd.f32 %v5175, %v5459
      %v5461 = vpop.f32.mrb[0].mxu0
      %v5462 = vadd.f32 %v5177, %v5461
      %5463 = vmatprep.mubr.bf16.mxu0 %v4590
      %5464 = vmatmul.mubr.bf16.gmra.mrb[0].mxu0 %v4589
      %v5465 = vpop.f32.mrb[0].mxu0
      %v5466 = vadd.f32 %v5181, %v5465
      %v5467 = vpop.f32.mrb[0].mxu0
      %v5468 = vadd.f32 %v5183, %v5467
      %v5469 = vpop.f32.mrb[0].mxu0
      %v5470 = vadd.f32 %v5185, %v5469
      %v5471 = vpop.f32.mrb[0].mxu0
      %v5472 = vadd.f32 %v5187, %v5471
      %5473 = vmatprep.mubr.bf16.mxu0 %v4593
      %5474 = vmatmul.mubr.bf16.gmra.mrb[0].mxu0 %v4592
      %v5475 = vpop.f32.mrb[0].mxu0
      %v5476 = vadd.f32 %v5191, %v5475
      %v5477 = vpop.f32.mrb[0].mxu0
      %v5478 = vadd.f32 %v5193, %v5477
      %v5479 = vpop.f32.mrb[0].mxu0
      %v5480 = vadd.f32 %v5195, %v5479
      %v5481 = vpop.f32.mrb[0].mxu0
      %v5482 = vadd.f32 %v5197, %v5481
      %5483 = vmatprep.mubr.bf16.mxu0 %v4596
      %5484 = vmatmul.mubr.bf16.gmra.mrb[0].mxu0 %v4595
      %v5485 = vpop.f32.mrb[0].mxu0
      %v5486 = vadd.f32 %v5201, %v5485
      %v5487 = vpop.f32.mrb[0].mxu0
      %v5488 = vadd.f32 %v5203, %v5487
      %v5489 = vpop.f32.mrb[0].mxu0
      %v5490 = vadd.f32 %v5205, %v5489
      %v5491 = vpop.f32.mrb[0].mxu0
      %v5492 = vadd.f32 %v5207, %v5491
      %5493 = vdwg.mxu0
      %5494 = vmatprep.subr.bf16.mxu0 %v5350
      %5495 = vmatpush1.bf16.msra.mxu0 %v5349
      %5496 = vmatprep.subr.bf16.mxu0 %v5352
      %5497 = vmatpush1.bf16.msra.mxu0 %v5351
      %5498 = vmatprep.subr.bf16.mxu0 0
      %5499 = vmatpush1.bf16.msra.mxu0 0
      %5500 = vmatprep.subr.bf16.mxu0 0
      %5501 = vmatpush1.bf16.msra.mxu0 0
      %5502 = vmatprep.subr.bf16.mxu0 0
      %5503 = vmatpush1.bf16.msra.mxu0 0
      %5504 = vmatprep.subr.bf16.mxu0 0
      %5505 = vmatpush1.bf16.msra.mxu0 0
      %5506 = vmatprep.subr.bf16.mxu0 0
      %5507 = vmatpush1.bf16.msra.mxu0 0
      %5508 = vmatprep.subr.bf16.mxu0 0
      %5509 = vmatpush1.bf16.msra.mxu0 0
      %5510 = vmatprep.subr.bf16.mxu0 0
      %5511 = vmatpush1.bf16.msra.mxu0 0
      %5512 = vmatprep.subr.bf16.mxu0 0
      %5513 = vmatpush1.bf16.msra.mxu0 0
      %5514 = vmatprep.subr.bf16.mxu0 0
      %5515 = vmatpush1.bf16.msra.mxu0 0
      %5516 = vmatprep.subr.bf16.mxu0 0
      %5517 = vmatpush1.bf16.msra.mxu0 0
      %5518 = vmatprep.subr.bf16.mxu0 0
      %5519 = vmatpush1.bf16.msra.mxu0 0
      %5520 = vmatprep.subr.bf16.mxu0 0
      %5521 = vmatpush1.bf16.msra.mxu0 0
      %5522 = vmatprep.subr.bf16.mxu0 0
      %5523 = vmatpush1.bf16.msra.mxu0 0
      %5524 = vmatprep.subr.bf16.mxu0 0
      %5525 = vmatpush1.bf16.msra.mxu0 0
      %5526 = vmatprep.mubr.bf16.mxu0 0
      %5527 = vmatmul.mubr.bf16.gmra.mrb[0].mxu0 %v5389
      %v5528 = vpop.f32.mrb[0].mxu0
      %v5529 = vadd.f32 %v5436, %v5528
      %v5530 = vpop.f32.mrb[0].mxu0
      %v5531 = vadd.f32 %v5438, %v5530
      %v5532 = vpop.f32.mrb[0].mxu0
      %v5533 = vadd.f32 %v5440, %v5532
      %v5534 = vpop.f32.mrb[0].mxu0
      %v5535 = vadd.f32 %v5442, %v5534
      %5536 = vmatprep.mubr.bf16.mxu0 0
      %5537 = vmatmul.mubr.bf16.gmra.mrb[0].mxu0 %v5391
      %v5538 = vpop.f32.mrb[0].mxu0
      %v5539 = vadd.f32 %v5446, %v5538
      %v5540 = vpop.f32.mrb[0].mxu0
      %v5541 = vadd.f32 %v5448, %v5540
      %v5542 = vpop.f32.mrb[0].mxu0
      %v5543 = vadd.f32 %v5450, %v5542
      %v5544 = vpop.f32.mrb[0].mxu0
      %v5545 = vadd.f32 %v5452, %v5544
      %5546 = vmatprep.mubr.bf16.mxu0 0
      %5547 = vmatmul.mubr.bf16.gmra.mrb[0].mxu0 %v5393
      %v5548 = vpop.f32.mrb[0].mxu0
      %v5549 = vadd.f32 %v5456, %v5548
      %v5550 = vpop.f32.mrb[0].mxu0
      %v5551 = vadd.f32 %v5458, %v5550
      %v5552 = vpop.f32.mrb[0].mxu0
      %v5553 = vadd.f32 %v5460, %v5552
      %v5554 = vpop.f32.mrb[0].mxu0
      %v5555 = vadd.f32 %v5462, %v5554
      %5556 = vmatprep.mubr.bf16.mxu0 0
      %5557 = vmatmul.mubr.bf16.gmra.mrb[0].mxu0 %v5395
      %v5558 = vpop.f32.mrb[0].mxu0
      %v5559 = vadd.f32 %v5466, %v5558
      %v5560 = vpop.f32.mrb[0].mxu0
      %v5561 = vadd.f32 %v5468, %v5560
      %v5562 = vpop.f32.mrb[0].mxu0
      %v5563 = vadd.f32 %v5470, %v5562
      %v5564 = vpop.f32.mrb[0].mxu0
      %v5565 = vadd.f32 %v5472, %v5564
      %5566 = vmatprep.mubr.bf16.mxu0 0
      %5567 = vmatmul.mubr.bf16.gmra.mrb[0].mxu0 %v5397
      %v5568 = vpop.f32.mrb[0].mxu0
      %v5569 = vadd.f32 %v5476, %v5568
      %v5570 = vpop.f32.mrb[0].mxu0
      %v5571 = vadd.f32 %v5478, %v5570
      %v5572 = vpop.f32.mrb[0].mxu0
      %v5573 = vadd.f32 %v5480, %v5572
      %v5574 = vpop.f32.mrb[0].mxu0
      %v5575 = vadd.f32 %v5482, %v5574
      %5576 = vmatprep.mubr.bf16.mxu0 0
      %5577 = vmatmul.mubr.bf16.gmra.mrb[0].mxu0 %v5399
      %v5578 = vpop.f32.mrb[0].mxu0
      %v5579 = vadd.f32 %v5486, %v5578
      %v5580 = vpop.f32.mrb[0].mxu0
      %v5581 = vadd.f32 %v5488, %v5580
      %v5582 = vpop.f32.mrb[0].mxu0
      %v5583 = vadd.f32 %v5490, %v5582
      %v5584 = vpop.f32.mrb[0].mxu0
      %v5585 = vadd.f32 %v5492, %v5584
      %5586 = vdwg.mxu0
      %s5587 = scalar_lea.vmem %s7, 576
      %v5588 = vld [vmem:[%s5587] sm:$0xff]
      %v5589 = vld [vmem:[%s5587 + $0x8] sm:$0xff]
      %v5590 = vld [vmem:[%s5587 + $0x10] sm:$0xff]
      %v5591 = vld [vmem:[%s5587 + $0x18] sm:$0xff]
      %v5592 = vld [vmem:[%s5587 + $0x20] sm:$0xff]
      %v5593 = vld [vmem:[%s5587 + $0x28] sm:$0xff]
      %v5594 = vld [vmem:[%s5587 + $0x30] sm:$0xff]
      %v5595 = vld [vmem:[%s5587 + $0x38] sm:$0xff]
      %v5596 = vld [vmem:[%s5587 + $0x40] sm:$0xff]
      %v5597 = vld [vmem:[%s5587 + $0x48] sm:$0xff]
      %v5598 = vld [vmem:[%s5587 + $0x50] sm:$0xff]
      %v5599 = vld [vmem:[%s5587 + $0x58] sm:$0xff]
      %v5600 = vld [vmem:[%s5587 + $0x60] sm:$0xff]
      %v5601 = vld [vmem:[%s5587 + $0x68] sm:$0xff]
      %v5602 = vld [vmem:[%s5587 + $0x70] sm:$0xff]
      %v5603 = vld [vmem:[%s5587 + $0x78] sm:$0xff]
      %v5604 = vld [vmem:[%s5587 + $0x80] sm:$0xff]
      %v5605 = vld [vmem:[%s5587 + $0x88] sm:$0xff]
      %v5606 = vld [vmem:[%s5587 + $0x90] sm:$0xff]
      %v5607 = vld [vmem:[%s5587 + $0x98] sm:$0xff]
      %v5608 = vld [vmem:[%s5587 + $0xa0] sm:$0xff]
      %v5609 = vld [vmem:[%s5587 + $0xa8] sm:$0xff]
      %v5610 = vld [vmem:[%s5587 + $0xb0] sm:$0xff]
      %v5611 = vld [vmem:[%s5587 + $0xb8] sm:$0xff]
      %v5612 = vld [vmem:[%s5587 + $0xc0] sm:$0xff]
      %v5613 = vld [vmem:[%s5587 + $0xc8] sm:$0xff]
      %v5614 = vld [vmem:[%s5587 + $0xd0] sm:$0xff]
      %v5615 = vld [vmem:[%s5587 + $0xd8] sm:$0xff]
      %v5616 = vld [vmem:[%s5587 + $0xe0] sm:$0xff]
      %v5617 = vld [vmem:[%s5587 + $0xe8] sm:$0xff]
      %v5618 = vld [vmem:[%s5587 + $0xf0] sm:$0xff]
      %v5619 = vld [vmem:[%s5587 + $0xf8] sm:$0xff]
      %v5620 = vld [vmem:[%s5587 + $0x100] sm:$0xff]
      %v5621 = vld [vmem:[%s5587 + $0x108] sm:$0xff]
      %v5622 = vld [vmem:[%s5587 + $0x110] sm:$0xff]
      %v5623 = vld [vmem:[%s5587 + $0x118] sm:$0xff]
      %v5642 = vrot.slane %v4580, 1
      %v5643 = vrot.slane %v4583, 1
      %v5644 = vsel %vm3691, %v5642, %v5643
      %v5645 = vrot.slane %v4581, 1
      %v5646 = vrot.slane %v4584, 1
      %v5647 = vsel %vm3691, %v5645, %v5646
      %v5648 = vrot.slane %v4582, 1
      %v5649 = vrot.slane %v4585, 1
      %v5650 = vsel %vm3691, %v5648, %v5649
      %v5651 = vrot.slane %v4586, 1
      %v5652 = vsel %vm3691, %v5643, %v5651
      %v5653 = vrot.slane %v4587, 1
      %v5654 = vsel %vm3691, %v5646, %v5653
      %v5655 = vrot.slane %v4588, 1
      %v5656 = vsel %vm3691, %v5649, %v5655
      %v5657 = vrot.slane %v4589, 1
      %v5658 = vsel %vm3691, %v5651, %v5657
      %v5659 = vrot.slane %v4590, 1
      %v5660 = vsel %vm3691, %v5653, %v5659
      %v5661 = vrot.slane %v4591, 1
      %v5662 = vsel %vm3691, %v5655, %v5661
      %v5663 = vrot.slane %v4592, 1
      %v5664 = vsel %vm3691, %v5657, %v5663
      %v5665 = vrot.slane %v4593, 1
      %v5666 = vsel %vm3691, %v5659, %v5665
      %v5667 = vrot.slane %v4594, 1
      %v5668 = vsel %vm3691, %v5661, %v5667
      %v5669 = vrot.slane %v4595, 1
      %v5670 = vsel %vm3691, %v5663, %v5669
      %v5671 = vrot.slane %v4596, 1
      %v5672 = vsel %vm3691, %v5665, %v5671
      %v5673 = vrot.slane %v4597, 1
      %v5674 = vsel %vm3691, %v5667, %v5673
      %v5723 = vunpack.c.l.b16 %v5588
      %v5724 = vunpack.c.h.b16 %v5588
      %v5725 = vunpack.c.l.b16 %v5589
      %v5726 = vunpack.c.h.b16 %v5589
      %v5727 = vunpack.c.l.b16 %v5590
      %v5728 = vunpack.c.h.b16 %v5590
      %v5729 = vunpack.c.l.b16 %v5591
      %v5730 = vunpack.c.h.b16 %v5591
      %v5731 = vunpack.c.l.b16 %v5592
      %v5732 = vunpack.c.h.b16 %v5592
      %v5733 = vunpack.c.l.b16 %v5593
      %v5734 = vunpack.c.h.b16 %v5593
      %v5735 = vunpack.c.l.b16 %v5594
      %v5736 = vunpack.c.h.b16 %v5594
      %v5737 = vunpack.c.l.b16 %v5595
      %v5738 = vunpack.c.h.b16 %v5595
      %v5739 = vunpack.c.l.b16 %v5596
      %v5740 = vunpack.c.h.b16 %v5596
      %v5741 = vunpack.c.l.b16 %v5597
      %v5742 = vunpack.c.h.b16 %v5597
      %v5743 = vunpack.c.l.b16 %v5598
      %v5744 = vunpack.c.h.b16 %v5598
      %v5745 = vunpack.c.l.b16 %v5599
      %v5746 = vunpack.c.h.b16 %v5599
      %v5747 = vunpack.c.l.b16 %v5600
      %v5748 = vunpack.c.h.b16 %v5600
      %v5749 = vunpack.c.l.b16 %v5601
      %v5750 = vunpack.c.h.b16 %v5601
      %v5751 = vunpack.c.l.b16 %v5602
      %v5752 = vunpack.c.h.b16 %v5602
      %v5753 = vunpack.c.l.b16 %v5603
      %v5754 = vunpack.c.h.b16 %v5603
      %v5755 = vunpack.c.l.b16 %v5604
      %v5756 = vunpack.c.h.b16 %v5604
      %v5757 = vunpack.c.l.b16 %v5605
      %v5758 = vunpack.c.h.b16 %v5605
      %v5759 = vunpack.c.l.b16 %v5606
      %v5760 = vunpack.c.h.b16 %v5606
      %v5761 = vunpack.c.l.b16 %v5607
      %v5762 = vunpack.c.h.b16 %v5607
      %v5763 = vunpack.c.l.b16 %v5608
      %v5764 = vunpack.c.h.b16 %v5608
      %v5765 = vunpack.c.l.b16 %v5609
      %v5766 = vunpack.c.h.b16 %v5609
      %v5767 = vunpack.c.l.b16 %v5610
      %v5768 = vunpack.c.h.b16 %v5610
      %v5769 = vunpack.c.l.b16 %v5611
      %v5770 = vunpack.c.h.b16 %v5611
      %v5771 = vunpack.c.l.b16 %v5612
      %v5772 = vunpack.c.h.b16 %v5612
      %v5773 = vunpack.c.l.b16 %v5613
      %v5774 = vunpack.c.h.b16 %v5613
      %v5775 = vunpack.c.l.b16 %v5614
      %v5776 = vunpack.c.h.b16 %v5614
      %v5777 = vunpack.c.l.b16 %v5615
      %v5778 = vunpack.c.h.b16 %v5615
      %v5779 = vunpack.c.l.b16 %v5616
      %v5780 = vunpack.c.h.b16 %v5616
      %v5781 = vunpack.c.l.b16 %v5617
      %v5782 = vunpack.c.h.b16 %v5617
      %v5783 = vunpack.c.l.b16 %v5618
      %v5784 = vunpack.c.h.b16 %v5618
      %v5785 = vunpack.c.l.b16 %v5619
      %v5786 = vunpack.c.h.b16 %v5619
      %v5787 = vunpack.c.l.b16 %v5620
      %v5788 = vunpack.c.h.b16 %v5620
      %v5789 = vunpack.c.l.b16 %v5621
      %v5790 = vunpack.c.h.b16 %v5621
      %v5791 = vunpack.c.l.b16 %v5622
      %v5792 = vunpack.c.h.b16 %v5622
      %v5793 = vunpack.c.l.b16 %v5623
      %v5794 = vunpack.c.h.b16 %v5623
      %v5795 = vpack.c.b16 %v5725, %v5723
      %v5796 = vpack.c.b16 %v5726, %v5724
      %v5797 = vpack.c.b16 %v5729, %v5727
      %v5798 = vpack.c.b16 %v5730, %v5728
      %v5799 = vpack.c.b16 %v5733, %v5731
      %v5800 = vpack.c.b16 %v5734, %v5732
      %v5801 = vpack.c.b16 %v5737, %v5735
      %v5802 = vpack.c.b16 %v5738, %v5736
      %v5803 = vpack.c.b16 %v5741, %v5739
      %v5804 = vpack.c.b16 %v5742, %v5740
      %v5805 = vpack.c.b16 %v5745, %v5743
      %v5806 = vpack.c.b16 %v5746, %v5744
      %v5807 = vpack.c.b16 %v5749, %v5747
      %v5808 = vpack.c.b16 %v5750, %v5748
      %v5809 = vpack.c.b16 %v5753, %v5751
      %v5810 = vpack.c.b16 %v5754, %v5752
      %v5811 = vpack.c.b16 %v5757, %v5755
      %v5812 = vpack.c.b16 %v5758, %v5756
      %v5813 = vpack.c.b16 %v5761, %v5759
      %v5814 = vpack.c.b16 %v5762, %v5760
      %v5815 = vpack.c.b16 %v5765, %v5763
      %v5816 = vpack.c.b16 %v5766, %v5764
      %v5817 = vpack.c.b16 %v5769, %v5767
      %v5818 = vpack.c.b16 %v5770, %v5768
      %v5819 = vpack.c.b16 %v5773, %v5771
      %v5820 = vpack.c.b16 %v5774, %v5772
      %v5821 = vpack.c.b16 %v5777, %v5775
      %v5822 = vpack.c.b16 %v5778, %v5776
      %v5823 = vpack.c.b16 %v5781, %v5779
      %v5824 = vpack.c.b16 %v5782, %v5780
      %v5825 = vpack.c.b16 %v5785, %v5783
      %v5826 = vpack.c.b16 %v5786, %v5784
      %v5827 = vpack.c.b16 %v5789, %v5787
      %v5828 = vpack.c.b16 %v5790, %v5788
      %v5829 = vpack.c.b16 %v5793, %v5791
      %v5830 = vpack.c.b16 %v5794, %v5792
      %v5868 = vsel %vm5004, %v5650, 0
      %v5871 = vsel %vm5004, %v5656, 0
      %v5874 = vsel %vm5004, %v5662, 0
      %v5877 = vsel %vm5004, %v5668, 0
      %v5880 = vsel %vm5004, %v5674, 0
      %v5883 = vsel %vm5004, %v5673, 0
      %5885 = vmatprep.subr.bf16.mxu0 %v5796
      %5886 = vmatpush1.bf16.msra.mxu0 %v5795
      %5887 = vmatprep.subr.bf16.mxu0 %v5798
      %5888 = vmatpush1.bf16.msra.mxu0 %v5797
      %5889 = vmatprep.subr.bf16.mxu0 %v5800
      %5890 = vmatpush1.bf16.msra.mxu0 %v5799
      %5891 = vmatprep.subr.bf16.mxu0 %v5802
      %5892 = vmatpush1.bf16.msra.mxu0 %v5801
      %5893 = vmatprep.subr.bf16.mxu0 %v5804
      %5894 = vmatpush1.bf16.msra.mxu0 %v5803
      %5895 = vmatprep.subr.bf16.mxu0 %v5806
      %5896 = vmatpush1.bf16.msra.mxu0 %v5805
      %5897 = vmatprep.subr.bf16.mxu0 %v5808
      %5898 = vmatpush1.bf16.msra.mxu0 %v5807
      %5899 = vmatprep.subr.bf16.mxu0 %v5810
      %5900 = vmatpush1.bf16.msra.mxu0 %v5809
      %5901 = vmatprep.subr.bf16.mxu0 %v5812
      %5902 = vmatpush1.bf16.msra.mxu0 %v5811
      %5903 = vmatprep.subr.bf16.mxu0 %v5814
      %5904 = vmatpush1.bf16.msra.mxu0 %v5813
      %5905 = vmatprep.subr.bf16.mxu0 %v5816
      %5906 = vmatpush1.bf16.msra.mxu0 %v5815
      %5907 = vmatprep.subr.bf16.mxu0 %v5818
      %5908 = vmatpush1.bf16.msra.mxu0 %v5817
      %5909 = vmatprep.subr.bf16.mxu0 %v5820
      %5910 = vmatpush1.bf16.msra.mxu0 %v5819
      %5911 = vmatprep.subr.bf16.mxu0 %v5822
      %5912 = vmatpush1.bf16.msra.mxu0 %v5821
      %5913 = vmatprep.subr.bf16.mxu0 %v5824
      %5914 = vmatpush1.bf16.msra.mxu0 %v5823
      %5915 = vmatprep.subr.bf16.mxu0 %v5826
      %5916 = vmatpush1.bf16.msra.mxu0 %v5825
      %5917 = vmatprep.mubr.bf16.mxu0 %v5647
      %5918 = vmatmul.mubr.bf16.gmra.mrb[0].mxu0 %v5644
      %v5919 = vpop.f32.mrb[0].mxu0
      %v5920 = vadd.f32 0.0, %v5919
      %v5921 = vpop.f32.mrb[0].mxu0
      %v5922 = vadd.f32 0.0, %v5921
      %v5923 = vpop.f32.mrb[0].mxu0
      %v5924 = vadd.f32 0.0, %v5923
      %v5925 = vpop.f32.mrb[0].mxu0
      %v5926 = vadd.f32 0.0, %v5925
      %5927 = vmatprep.mubr.bf16.mxu0 %v5654
      %5928 = vmatmul.mubr.bf16.gmra.mrb[0].mxu0 %v5652
      %v5929 = vpop.f32.mrb[0].mxu0
      %v5930 = vadd.f32 0.0, %v5929
      %v5931 = vpop.f32.mrb[0].mxu0
      %v5932 = vadd.f32 0.0, %v5931
      %v5933 = vpop.f32.mrb[0].mxu0
      %v5934 = vadd.f32 0.0, %v5933
      %v5935 = vpop.f32.mrb[0].mxu0
      %v5936 = vadd.f32 0.0, %v5935
      %5937 = vmatprep.mubr.bf16.mxu0 %v5660
      %5938 = vmatmul.mubr.bf16.gmra.mrb[0].mxu0 %v5658
      %v5939 = vpop.f32.mrb[0].mxu0
      %v5940 = vadd.f32 0.0, %v5939
      %v5941 = vpop.f32.mrb[0].mxu0
      %v5942 = vadd.f32 0.0, %v5941
      %v5943 = vpop.f32.mrb[0].mxu0
      %v5944 = vadd.f32 0.0, %v5943
      %v5945 = vpop.f32.mrb[0].mxu0
      %v5946 = vadd.f32 0.0, %v5945
      %5947 = vmatprep.mubr.bf16.mxu0 %v5666
      %5948 = vmatmul.mubr.bf16.gmra.mrb[0].mxu0 %v5664
      %v5949 = vpop.f32.mrb[0].mxu0
      %v5950 = vadd.f32 0.0, %v5949
      %v5951 = vpop.f32.mrb[0].mxu0
      %v5952 = vadd.f32 0.0, %v5951
      %v5953 = vpop.f32.mrb[0].mxu0
      %v5954 = vadd.f32 0.0, %v5953
      %v5955 = vpop.f32.mrb[0].mxu0
      %v5956 = vadd.f32 0.0, %v5955
      %5957 = vmatprep.mubr.bf16.mxu0 %v5672
      %5958 = vmatmul.mubr.bf16.gmra.mrb[0].mxu0 %v5670
      %v5959 = vpop.f32.mrb[0].mxu0
      %v5960 = vadd.f32 0.0, %v5959
      %v5961 = vpop.f32.mrb[0].mxu0
      %v5962 = vadd.f32 0.0, %v5961
      %v5963 = vpop.f32.mrb[0].mxu0
      %v5964 = vadd.f32 0.0, %v5963
      %v5965 = vpop.f32.mrb[0].mxu0
      %v5966 = vadd.f32 0.0, %v5965
      %5967 = vmatprep.mubr.bf16.mxu0 %v5671
      %5968 = vmatmul.mubr.bf16.gmra.mrb[0].mxu0 %v5669
      %v5969 = vpop.f32.mrb[0].mxu0
      %v5970 = vadd.f32 0.0, %v5969
      %v5971 = vpop.f32.mrb[0].mxu0
      %v5972 = vadd.f32 0.0, %v5971
      %v5973 = vpop.f32.mrb[0].mxu0
      %v5974 = vadd.f32 0.0, %v5973
      %v5975 = vpop.f32.mrb[0].mxu0
      %v5976 = vadd.f32 0.0, %v5975
      %5977 = vdwg.mxu0
      %5978 = vmatprep.subr.bf16.mxu0 %v5828
      %5979 = vmatpush1.bf16.msra.mxu0 %v5827
      %5980 = vmatprep.subr.bf16.mxu0 %v5830
      %5981 = vmatpush1.bf16.msra.mxu0 %v5829
      %5982 = vmatprep.subr.bf16.mxu0 0
      %5983 = vmatpush1.bf16.msra.mxu0 0
      %5984 = vmatprep.subr.bf16.mxu0 0
      %5985 = vmatpush1.bf16.msra.mxu0 0
      %5986 = vmatprep.subr.bf16.mxu0 0
      %5987 = vmatpush1.bf16.msra.mxu0 0
      %5988 = vmatprep.subr.bf16.mxu0 0
      %5989 = vmatpush1.bf16.msra.mxu0 0
      %5990 = vmatprep.subr.bf16.mxu0 0
      %5991 = vmatpush1.bf16.msra.mxu0 0
      %5992 = vmatprep.subr.bf16.mxu0 0
      %5993 = vmatpush1.bf16.msra.mxu0 0
      %5994 = vmatprep.subr.bf16.mxu0 0
      %5995 = vmatpush1.bf16.msra.mxu0 0
      %5996 = vmatprep.subr.bf16.mxu0 0
      %5997 = vmatpush1.bf16.msra.mxu0 0
      %5998 = vmatprep.subr.bf16.mxu0 0
      %5999 = vmatpush1.bf16.msra.mxu0 0
      %6000 = vmatprep.subr.bf16.mxu0 0
      %6001 = vmatpush1.bf16.msra.mxu0 0
      %6002 = vmatprep.subr.bf16.mxu0 0
      %6003 = vmatpush1.bf16.msra.mxu0 0
      %6004 = vmatprep.subr.bf16.mxu0 0
      %6005 = vmatpush1.bf16.msra.mxu0 0
      %6006 = vmatprep.subr.bf16.mxu0 0
      %6007 = vmatpush1.bf16.msra.mxu0 0
      %6008 = vmatprep.subr.bf16.mxu0 0
      %6009 = vmatpush1.bf16.msra.mxu0 0
      %6010 = vmatprep.mubr.bf16.mxu0 0
      %6011 = vmatmul.mubr.bf16.gmra.mrb[0].mxu0 %v5868
      %v6012 = vpop.f32.mrb[0].mxu0
      %v6013 = vadd.f32 %v5920, %v6012
      %v6014 = vpop.f32.mrb[0].mxu0
      %v6015 = vadd.f32 %v5922, %v6014
      %v6016 = vpop.f32.mrb[0].mxu0
      %v6017 = vadd.f32 %v5924, %v6016
      %v6018 = vpop.f32.mrb[0].mxu0
      %v6019 = vadd.f32 %v5926, %v6018
      %6020 = vmatprep.mubr.bf16.mxu0 0
      %6021 = vmatmul.mubr.bf16.gmra.mrb[0].mxu0 %v5871
      %v6022 = vpop.f32.mrb[0].mxu0
      %v6023 = vadd.f32 %v5930, %v6022
      %v6024 = vpop.f32.mrb[0].mxu0
      %v6025 = vadd.f32 %v5932, %v6024
      %v6026 = vpop.f32.mrb[0].mxu0
      %v6027 = vadd.f32 %v5934, %v6026
      %v6028 = vpop.f32.mrb[0].mxu0
      %v6029 = vadd.f32 %v5936, %v6028
      %6030 = vmatprep.mubr.bf16.mxu0 0
      %6031 = vmatmul.mubr.bf16.gmra.mrb[0].mxu0 %v5874
      %v6032 = vpop.f32.mrb[0].mxu0
      %v6033 = vadd.f32 %v5940, %v6032
      %v6034 = vpop.f32.mrb[0].mxu0
      %v6035 = vadd.f32 %v5942, %v6034
      %v6036 = vpop.f32.mrb[0].mxu0
      %v6037 = vadd.f32 %v5944, %v6036
      %v6038 = vpop.f32.mrb[0].mxu0
      %v6039 = vadd.f32 %v5946, %v6038
      %6040 = vmatprep.mubr.bf16.mxu0 0
      %6041 = vmatmul.mubr.bf16.gmra.mrb[0].mxu0 %v5877
      %v6042 = vpop.f32.mrb[0].mxu0
      %v6043 = vadd.f32 %v5950, %v6042
      %v6044 = vpop.f32.mrb[0].mxu0
      %v6045 = vadd.f32 %v5952, %v6044
      %v6046 = vpop.f32.mrb[0].mxu0
      %v6047 = vadd.f32 %v5954, %v6046
      %v6048 = vpop.f32.mrb[0].mxu0
      %v6049 = vadd.f32 %v5956, %v6048
      %6050 = vmatprep.mubr.bf16.mxu0 0
      %6051 = vmatmul.mubr.bf16.gmra.mrb[0].mxu0 %v5880
      %v6052 = vpop.f32.mrb[0].mxu0
      %v6053 = vadd.f32 %v5960, %v6052
      %v6054 = vpop.f32.mrb[0].mxu0
      %v6055 = vadd.f32 %v5962, %v6054
      %v6056 = vpop.f32.mrb[0].mxu0
      %v6057 = vadd.f32 %v5964, %v6056
      %v6058 = vpop.f32.mrb[0].mxu0
      %v6059 = vadd.f32 %v5966, %v6058
      %6060 = vmatprep.mubr.bf16.mxu0 0
      %6061 = vmatmul.mubr.bf16.gmra.mrb[0].mxu0 %v5883
      %v6062 = vpop.f32.mrb[0].mxu0
      %v6063 = vadd.f32 %v5970, %v6062
      %v6064 = vpop.f32.mrb[0].mxu0
      %v6065 = vadd.f32 %v5972, %v6064
      %v6066 = vpop.f32.mrb[0].mxu0
      %v6067 = vadd.f32 %v5974, %v6066
      %v6068 = vpop.f32.mrb[0].mxu0
      %v6069 = vadd.f32 %v5976, %v6068
      %6070 = vdwg.mxu0
      %v6071 = vadd.f32 %v5529, %v6013
      %v6072 = vadd.f32 %v5531, %v6015
      %v6073 = vadd.f32 %v5533, %v6017
      %v6074 = vadd.f32 %v5535, %v6019
      %v6075 = vadd.f32 %v5539, %v6023
      %v6076 = vadd.f32 %v5541, %v6025
      %v6077 = vadd.f32 %v5543, %v6027
      %v6078 = vadd.f32 %v5545, %v6029
      %v6079 = vadd.f32 %v5549, %v6033
      %v6080 = vadd.f32 %v5551, %v6035
      %v6081 = vadd.f32 %v5553, %v6037
      %v6082 = vadd.f32 %v5555, %v6039
      %v6083 = vadd.f32 %v5559, %v6043
      %v6084 = vadd.f32 %v5561, %v6045
      %v6085 = vadd.f32 %v5563, %v6047
      %v6086 = vadd.f32 %v5565, %v6049
      %v6087 = vadd.f32 %v5569, %v6053
      %v6088 = vadd.f32 %v5571, %v6055
      %v6089 = vadd.f32 %v5573, %v6057
      %v6090 = vadd.f32 %v5575, %v6059
      %v6091 = vadd.f32 %v5579, %v6063
      %v6092 = vadd.f32 %v5581, %v6065
      %v6093 = vadd.f32 %v5583, %v6067
      %v6094 = vadd.f32 %v5585, %v6069
      %v6095 = vld [vmem:[%s8] sm:$0x3]
      %v6097 = vlaneseq
      %v6098 = vshrl.u32 %v6097, 7
      %v6099 = vsub.s32 0, %v6098
      %v6100 = vrot.slane %v6095, %v6099
      %v6101 = vlaneseq
      %v6102 = vshrl.u32 %v6101, 7
      %v6103 = vsub.s32 1, %v6102
      %v6104 = vrot.slane %v6095, %v6103
      %v6107 = vadd.f32 %v6071, %v6100
      %v6108 = vadd.f32 %v6072, %v6104
      %v6109 = vadd.f32 %v6073, %v6100
      %v6110 = vadd.f32 %v6074, %v6104
      %v6111 = vadd.f32 %v6075, %v6100
      %v6112 = vadd.f32 %v6076, %v6104
      %v6113 = vadd.f32 %v6077, %v6100
      %v6114 = vadd.f32 %v6078, %v6104
      %v6115 = vadd.f32 %v6079, %v6100
      %v6116 = vadd.f32 %v6080, %v6104
      %v6117 = vadd.f32 %v6081, %v6100
      %v6118 = vadd.f32 %v6082, %v6104
      %v6119 = vadd.f32 %v6083, %v6100
      %v6120 = vadd.f32 %v6084, %v6104
      %v6121 = vadd.f32 %v6085, %v6100
      %v6122 = vadd.f32 %v6086, %v6104
      %v6123 = vadd.f32 %v6087, %v6100
      %v6124 = vadd.f32 %v6088, %v6104
      %v6125 = vadd.f32 %v6089, %v6100
      %v6126 = vadd.f32 %v6090, %v6104
      %v6127 = vadd.f32 %v6091, %v6100
      %v6128 = vadd.f32 %v6092, %v6104
      %v6129 = vadd.f32 %v6093, %v6100
      %v6130 = vadd.f32 %v6094, %v6104
      %v6131 = vmax.f32 %v6107, 0.0
      %v6132 = vmax.f32 %v6108, 0.0
      %v6133 = vmax.f32 %v6109, 0.0
      %v6134 = vmax.f32 %v6110, 0.0
      %v6135 = vmax.f32 %v6111, 0.0
      %v6136 = vmax.f32 %v6112, 0.0
      %v6137 = vmax.f32 %v6113, 0.0
      %v6138 = vmax.f32 %v6114, 0.0
      %v6139 = vmax.f32 %v6115, 0.0
      %v6140 = vmax.f32 %v6116, 0.0
      %v6141 = vmax.f32 %v6117, 0.0
      %v6142 = vmax.f32 %v6118, 0.0
      %v6143 = vmax.f32 %v6119, 0.0
      %v6144 = vmax.f32 %v6120, 0.0
      %v6145 = vmax.f32 %v6121, 0.0
      %v6146 = vmax.f32 %v6122, 0.0
      %v6147 = vmax.f32 %v6123, 0.0
      %v6148 = vmax.f32 %v6124, 0.0
      %v6149 = vmax.f32 %v6125, 0.0
      %v6150 = vmax.f32 %v6126, 0.0
      %v6151 = vmax.f32 %v6127, 0.0
      %v6152 = vmax.f32 %v6128, 0.0
      %v6153 = vmax.f32 %v6129, 0.0
      %v6154 = vmax.f32 %v6130, 0.0
      %v6155 = vpack.c.bf16 %v6133, %v6131
      %v6156 = vpack.c.bf16 %v6134, %v6132
      %v6157 = vpack.c.bf16 %v6137, %v6135
      %v6158 = vpack.c.bf16 %v6138, %v6136
      %v6159 = vpack.c.bf16 %v6141, %v6139
      %v6160 = vpack.c.bf16 %v6142, %v6140
      %v6161 = vpack.c.bf16 %v6145, %v6143
      %v6162 = vpack.c.bf16 %v6146, %v6144
      %v6163 = vpack.c.bf16 %v6149, %v6147
      %v6164 = vpack.c.bf16 %v6150, %v6148
      %v6165 = vpack.c.bf16 %v6153, %v6151
      %v6166 = vpack.c.bf16 %v6154, %v6152
      %v6167 = vld [vmem:[%s9] sm:$0xff]
      %v6168 = vld [vmem:[%s9 + $0x8] sm:$0xff]
      %v6169 = vld [vmem:[%s9 + $0x10] sm:$0xff]
      %v6170 = vld [vmem:[%s9 + $0x18] sm:$0xff]
      %v6171 = vld [vmem:[%s9 + $0x20] sm:$0xff]
      %v6172 = vld [vmem:[%s9 + $0x28] sm:$0xff]
      %v6173 = vld [vmem:[%s9 + $0x30] sm:$0xff]
      %v6174 = vld [vmem:[%s9 + $0x38] sm:$0xff]
      %v6175 = vld [vmem:[%s9 + $0x40] sm:$0xff]
      %v6176 = vld [vmem:[%s9 + $0x48] sm:$0xff]
      %v6177 = vld [vmem:[%s9 + $0x50] sm:$0xff]
      %v6178 = vld [vmem:[%s9 + $0x58] sm:$0xff]
      %v6179 = vld [vmem:[%s9 + $0x60] sm:$0xff]
      %v6180 = vld [vmem:[%s9 + $0x68] sm:$0xff]
      %v6181 = vld [vmem:[%s9 + $0x70] sm:$0xff]
      %v6182 = vld [vmem:[%s9 + $0x78] sm:$0xff]
      %v6183 = vld [vmem:[%s9 + $0x80] sm:$0xff]
      %v6184 = vld [vmem:[%s9 + $0x88] sm:$0xff]
      %v6185 = vld [vmem:[%s9 + $0x90] sm:$0xff]
      %v6186 = vld [vmem:[%s9 + $0x98] sm:$0xff]
      %v6187 = vld [vmem:[%s9 + $0xa0] sm:$0xff]
      %v6188 = vld [vmem:[%s9 + $0xa8] sm:$0xff]
      %v6189 = vld [vmem:[%s9 + $0xb0] sm:$0xff]
      %v6190 = vld [vmem:[%s9 + $0xb8] sm:$0xff]
      %v6191 = vld [vmem:[%s9 + $0xc0] sm:$0xff]
      %v6192 = vld [vmem:[%s9 + $0xc8] sm:$0xff]
      %v6193 = vld [vmem:[%s9 + $0xd0] sm:$0xff]
      %v6194 = vld [vmem:[%s9 + $0xd8] sm:$0xff]
      %s6195 = scalar_lea.vmem %s9, 224
      %v6196 = vld [vmem:[%s6195] sm:$0xff]
      %v6197 = vld [vmem:[%s6195 + $0x8] sm:$0xff]
      %v6198 = vld [vmem:[%s6195 + $0x10] sm:$0xff]
      %v6199 = vld [vmem:[%s6195 + $0x18] sm:$0xff]
      %v6200 = vld [vmem:[%s6195 + $0x20] sm:$0xff]
      %v6201 = vld [vmem:[%s6195 + $0x28] sm:$0xff]
      %v6202 = vld [vmem:[%s6195 + $0x30] sm:$0xff]
      %v6203 = vld [vmem:[%s6195 + $0x38] sm:$0xff]
      %v6204 = vld [vmem:[%s6195 + $0x40] sm:$0xff]
      %v6205 = vld [vmem:[%s6195 + $0x48] sm:$0xff]
      %v6206 = vld [vmem:[%s6195 + $0x50] sm:$0xff]
      %v6207 = vld [vmem:[%s6195 + $0x58] sm:$0xff]
      %v6208 = vld [vmem:[%s6195 + $0x60] sm:$0xff]
      %v6209 = vld [vmem:[%s6195 + $0x68] sm:$0xff]
      %v6210 = vld [vmem:[%s6195 + $0x70] sm:$0xff]
      %v6211 = vld [vmem:[%s6195 + $0x78] sm:$0xff]
      %v6212 = vld [vmem:[%s6195 + $0x80] sm:$0xff]
      %v6213 = vld [vmem:[%s6195 + $0x88] sm:$0xff]
      %v6214 = vld [vmem:[%s6195 + $0x90] sm:$0xff]
      %v6215 = vld [vmem:[%s6195 + $0x98] sm:$0xff]
      %v6216 = vld [vmem:[%s6195 + $0xa0] sm:$0xff]
      %v6217 = vld [vmem:[%s6195 + $0xa8] sm:$0xff]
      %v6218 = vld [vmem:[%s6195 + $0xb0] sm:$0xff]
      %v6219 = vld [vmem:[%s6195 + $0xb8] sm:$0xff]
      %v6220 = vld [vmem:[%s6195 + $0xc0] sm:$0xff]
      %v6221 = vld [vmem:[%s6195 + $0xc8] sm:$0xff]
      %v6222 = vld [vmem:[%s6195 + $0xd0] sm:$0xff]
      %v6223 = vld [vmem:[%s6195 + $0xd8] sm:$0xff]
      %v6225 = vshrl.u32 %v6155, 16
      %v6227 = vshll.u32 %v6155, 16
      %v6229 = vrot.slane %v6227, 1
      %v6230 = vor.u32 %v6225, %v6229
      %v6232 = vshll.u32 %v6157, 16
      %v6234 = vrot.slane %v6232, 1
      %v6235 = vsel %vm1365, %v6230, %v6234
      %v6237 = vshrl.u32 %v6156, 16
      %v6239 = vshll.u32 %v6156, 16
      %v6241 = vrot.slane %v6239, 1
      %v6242 = vor.u32 %v6237, %v6241
      %v6244 = vshll.u32 %v6158, 16
      %v6246 = vrot.slane %v6244, 1
      %v6247 = vsel %vm1365, %v6242, %v6246
      %v6248 = vshrl.u32 %v6157, 16
      %v6250 = vor.u32 %v6248, %v6234
      %v6252 = vshll.u32 %v6159, 16
      %v6254 = vrot.slane %v6252, 1
      %v6255 = vsel %vm1365, %v6250, %v6254
      %v6256 = vshrl.u32 %v6158, 16
      %v6258 = vor.u32 %v6256, %v6246
      %v6260 = vshll.u32 %v6160, 16
      %v6262 = vrot.slane %v6260, 1
      %v6263 = vsel %vm1365, %v6258, %v6262
      %v6264 = vshrl.u32 %v6159, 16
      %v6266 = vor.u32 %v6264, %v6254
      %v6268 = vshll.u32 %v6161, 16
      %v6270 = vrot.slane %v6268, 1
      %v6271 = vsel %vm1365, %v6266, %v6270
      %v6272 = vshrl.u32 %v6160, 16
      %v6274 = vor.u32 %v6272, %v6262
      %v6276 = vshll.u32 %v6162, 16
      %v6278 = vrot.slane %v6276, 1
      %v6279 = vsel %vm1365, %v6274, %v6278
      %v6280 = vshrl.u32 %v6161, 16
      %v6282 = vor.u32 %v6280, %v6270
      %v6284 = vshll.u32 %v6163, 16
      %v6286 = vrot.slane %v6284, 1
      %v6287 = vsel %vm1365, %v6282, %v6286
      %v6288 = vshrl.u32 %v6162, 16
      %v6290 = vor.u32 %v6288, %v6278
      %v6292 = vshll.u32 %v6164, 16
      %v6294 = vrot.slane %v6292, 1
      %v6295 = vsel %vm1365, %v6290, %v6294
      %v6296 = vshrl.u32 %v6163, 16
      %v6298 = vor.u32 %v6296, %v6286
      %v6300 = vshll.u32 %v6165, 16
      %v6302 = vrot.slane %v6300, 1
      %v6303 = vsel %vm1365, %v6298, %v6302
      %v6304 = vshrl.u32 %v6164, 16
      %v6306 = vor.u32 %v6304, %v6294
      %v6308 = vshll.u32 %v6166, 16
      %v6310 = vrot.slane %v6308, 1
      %v6311 = vsel %vm1365, %v6306, %v6310
      %v6312 = vshrl.u32 %v6165, 16
      %v6314 = vor.u32 %v6312, %v6302
      %v6315 = vshrl.u32 %v6166, 16
      %v6317 = vor.u32 %v6315, %v6310
      %v6352 = vunpack.c.l.b16 %v6196
      %v6353 = vunpack.c.h.b16 %v6196
      %v6354 = vunpack.c.l.b16 %v6197
      %v6355 = vunpack.c.h.b16 %v6197
      %v6356 = vunpack.c.l.b16 %v6198
      %v6357 = vunpack.c.h.b16 %v6198
      %v6358 = vunpack.c.l.b16 %v6199
      %v6359 = vunpack.c.h.b16 %v6199
      %v6360 = vunpack.c.l.b16 %v6200
      %v6361 = vunpack.c.h.b16 %v6200
      %v6362 = vunpack.c.l.b16 %v6201
      %v6363 = vunpack.c.h.b16 %v6201
      %v6364 = vunpack.c.l.b16 %v6202
      %v6365 = vunpack.c.h.b16 %v6202
      %v6366 = vunpack.c.l.b16 %v6203
      %v6367 = vunpack.c.h.b16 %v6203
      %v6368 = vunpack.c.l.b16 %v6204
      %v6369 = vunpack.c.h.b16 %v6204
      %v6370 = vunpack.c.l.b16 %v6205
      %v6371 = vunpack.c.h.b16 %v6205
      %v6372 = vunpack.c.l.b16 %v6206
      %v6373 = vunpack.c.h.b16 %v6206
      %v6374 = vunpack.c.l.b16 %v6207
      %v6375 = vunpack.c.h.b16 %v6207
      %v6376 = vunpack.c.l.b16 %v6208
      %v6377 = vunpack.c.h.b16 %v6208
      %v6378 = vunpack.c.l.b16 %v6209
      %v6379 = vunpack.c.h.b16 %v6209
      %v6380 = vunpack.c.l.b16 %v6210
      %v6381 = vunpack.c.h.b16 %v6210
      %v6382 = vunpack.c.l.b16 %v6211
      %v6383 = vunpack.c.h.b16 %v6211
      %v6384 = vunpack.c.l.b16 %v6212
      %v6385 = vunpack.c.h.b16 %v6212
      %v6386 = vunpack.c.l.b16 %v6213
      %v6387 = vunpack.c.h.b16 %v6213
      %v6388 = vunpack.c.l.b16 %v6214
      %v6389 = vunpack.c.h.b16 %v6214
      %v6390 = vunpack.c.l.b16 %v6215
      %v6391 = vunpack.c.h.b16 %v6215
      %v6392 = vunpack.c.l.b16 %v6216
      %v6393 = vunpack.c.h.b16 %v6216
      %v6394 = vunpack.c.l.b16 %v6217
      %v6395 = vunpack.c.h.b16 %v6217
      %v6396 = vunpack.c.l.b16 %v6218
      %v6397 = vunpack.c.h.b16 %v6218
      %v6398 = vunpack.c.l.b16 %v6219
      %v6399 = vunpack.c.h.b16 %v6219
      %v6400 = vunpack.c.l.b16 %v6220
      %v6401 = vunpack.c.h.b16 %v6220
      %v6402 = vunpack.c.l.b16 %v6221
      %v6403 = vunpack.c.h.b16 %v6221
      %v6404 = vunpack.c.l.b16 %v6222
      %v6405 = vunpack.c.h.b16 %v6222
      %v6406 = vunpack.c.l.b16 %v6223
      %v6407 = vunpack.c.h.b16 %v6223
      %v6408 = vpack.c.b16 %v6354, %v6352
      %v6409 = vpack.c.b16 %v6355, %v6353
      %v6410 = vpack.c.b16 %v6358, %v6356
      %v6411 = vpack.c.b16 %v6359, %v6357
      %v6412 = vpack.c.b16 %v6362, %v6360
      %v6413 = vpack.c.b16 %v6363, %v6361
      %v6414 = vpack.c.b16 %v6366, %v6364
      %v6415 = vpack.c.b16 %v6367, %v6365
      %v6416 = vpack.c.b16 %v6370, %v6368
      %v6417 = vpack.c.b16 %v6371, %v6369
      %v6418 = vpack.c.b16 %v6374, %v6372
      %v6419 = vpack.c.b16 %v6375, %v6373
      %v6420 = vpack.c.b16 %v6378, %v6376
      %v6421 = vpack.c.b16 %v6379, %v6377
      %v6422 = vpack.c.b16 %v6382, %v6380
      %v6423 = vpack.c.b16 %v6383, %v6381
      %v6424 = vpack.c.b16 %v6386, %v6384
      %v6425 = vpack.c.b16 %v6387, %v6385
      %v6426 = vpack.c.b16 %v6390, %v6388
      %v6427 = vpack.c.b16 %v6391, %v6389
      %v6428 = vpack.c.b16 %v6394, %v6392
      %v6429 = vpack.c.b16 %v6395, %v6393
      %v6430 = vpack.c.b16 %v6398, %v6396
      %v6431 = vpack.c.b16 %v6399, %v6397
      %v6432 = vpack.c.b16 %v6402, %v6400
      %v6433 = vpack.c.b16 %v6403, %v6401
      %v6434 = vpack.c.b16 %v6406, %v6404
      %v6435 = vpack.c.b16 %v6407, %v6405
      %v6465 = vsel %vm2505, %v6247, 0
      %v6468 = vsel %vm2505, %v6263, 0
      %v6471 = vsel %vm2505, %v6279, 0
      %v6474 = vsel %vm2505, %v6295, 0
      %v6477 = vsel %vm2505, %v6311, 0
      %v6480 = vsel %vm2505, %v6317, 0
      %6482 = vmatprep.subr.bf16.mxu0 %v6409
      %6483 = vmatpush1.bf16.msra.mxu0 %v6408
      %6484 = vmatprep.subr.bf16.mxu0 %v6411
      %6485 = vmatpush1.bf16.msra.mxu0 %v6410
      %6486 = vmatprep.subr.bf16.mxu0 %v6413
      %6487 = vmatpush1.bf16.msra.mxu0 %v6412
      %6488 = vmatprep.subr.bf16.mxu0 %v6415
      %6489 = vmatpush1.bf16.msra.mxu0 %v6414
      %6490 = vmatprep.subr.bf16.mxu0 %v6417
      %6491 = vmatpush1.bf16.msra.mxu0 %v6416
      %6492 = vmatprep.subr.bf16.mxu0 %v6419
      %6493 = vmatpush1.bf16.msra.mxu0 %v6418
      %6494 = vmatprep.subr.bf16.mxu0 %v6421
      %6495 = vmatpush1.bf16.msra.mxu0 %v6420
      %6496 = vmatprep.subr.bf16.mxu0 %v6423
      %6497 = vmatpush1.bf16.msra.mxu0 %v6422
      %6498 = vmatprep.subr.bf16.mxu0 %v6425
      %6499 = vmatpush1.bf16.msra.mxu0 %v6424
      %6500 = vmatprep.subr.bf16.mxu0 %v6427
      %6501 = vmatpush1.bf16.msra.mxu0 %v6426
      %6502 = vmatprep.subr.bf16.mxu0 %v6429
      %6503 = vmatpush1.bf16.msra.mxu0 %v6428
      %6504 = vmatprep.subr.bf16.mxu0 %v6431
      %6505 = vmatpush1.bf16.msra.mxu0 %v6430
      %6506 = vmatprep.subr.bf16.mxu0 %v6433
      %6507 = vmatpush1.bf16.msra.mxu0 %v6432
      %6508 = vmatprep.subr.bf16.mxu0 %v6435
      %6509 = vmatpush1.bf16.msra.mxu0 %v6434
      %6510 = vmatprep.subr.bf16.mxu0 0
      %6511 = vmatpush1.bf16.msra.mxu0 0
      %6512 = vmatprep.subr.bf16.mxu0 0
      %6513 = vmatpush1.bf16.msra.mxu0 0
      %6514 = vmatprep.mubr.bf16.mxu0 %v6465
      %6515 = vmatmul.mubr.bf16.gmra.mrb[0].mxu0 %v6235
      %v6516 = vpop.f32.mrb[0].mxu0
      %v6517 = vadd.f32 0.0, %v6516
      %v6518 = vpop.f32.mrb[0].mxu0
      %v6519 = vadd.f32 0.0, %v6518
      %v6520 = vpop.f32.mrb[0].mxu0
      %v6521 = vadd.f32 0.0, %v6520
      %v6522 = vpop.f32.mrb[0].mxu0
      %v6523 = vadd.f32 0.0, %v6522
      %6524 = vmatprep.mubr.bf16.mxu0 %v6468
      %6525 = vmatmul.mubr.bf16.gmra.mrb[0].mxu0 %v6255
      %v6526 = vpop.f32.mrb[0].mxu0
      %v6527 = vadd.f32 0.0, %v6526
      %v6528 = vpop.f32.mrb[0].mxu0
      %v6529 = vadd.f32 0.0, %v6528
      %v6530 = vpop.f32.mrb[0].mxu0
      %v6531 = vadd.f32 0.0, %v6530
      %v6532 = vpop.f32.mrb[0].mxu0
      %v6533 = vadd.f32 0.0, %v6532
      %6534 = vmatprep.mubr.bf16.mxu0 %v6471
      %6535 = vmatmul.mubr.bf16.gmra.mrb[0].mxu0 %v6271
      %v6536 = vpop.f32.mrb[0].mxu0
      %v6537 = vadd.f32 0.0, %v6536
      %v6538 = vpop.f32.mrb[0].mxu0
      %v6539 = vadd.f32 0.0, %v6538
      %v6540 = vpop.f32.mrb[0].mxu0
      %v6541 = vadd.f32 0.0, %v6540
      %v6542 = vpop.f32.mrb[0].mxu0
      %v6543 = vadd.f32 0.0, %v6542
      %6544 = vmatprep.mubr.bf16.mxu0 %v6474
      %6545 = vmatmul.mubr.bf16.gmra.mrb[0].mxu0 %v6287
      %v6546 = vpop.f32.mrb[0].mxu0
      %v6547 = vadd.f32 0.0, %v6546
      %v6548 = vpop.f32.mrb[0].mxu0
      %v6549 = vadd.f32 0.0, %v6548
      %v6550 = vpop.f32.mrb[0].mxu0
      %v6551 = vadd.f32 0.0, %v6550
      %v6552 = vpop.f32.mrb[0].mxu0
      %v6553 = vadd.f32 0.0, %v6552
      %6554 = vmatprep.mubr.bf16.mxu0 %v6477
      %6555 = vmatmul.mubr.bf16.gmra.mrb[0].mxu0 %v6303
      %v6556 = vpop.f32.mrb[0].mxu0
      %v6557 = vadd.f32 0.0, %v6556
      %v6558 = vpop.f32.mrb[0].mxu0
      %v6559 = vadd.f32 0.0, %v6558
      %v6560 = vpop.f32.mrb[0].mxu0
      %v6561 = vadd.f32 0.0, %v6560
      %v6562 = vpop.f32.mrb[0].mxu0
      %v6563 = vadd.f32 0.0, %v6562
      %6564 = vmatprep.mubr.bf16.mxu0 %v6480
      %6565 = vmatmul.mubr.bf16.gmra.mrb[0].mxu0 %v6314
      %v6566 = vpop.f32.mrb[0].mxu0
      %v6567 = vadd.f32 0.0, %v6566
      %v6568 = vpop.f32.mrb[0].mxu0
      %v6569 = vadd.f32 0.0, %v6568
      %v6570 = vpop.f32.mrb[0].mxu0
      %v6571 = vadd.f32 0.0, %v6570
      %v6572 = vpop.f32.mrb[0].mxu0
      %v6573 = vadd.f32 0.0, %v6572
      %6574 = vdwg.mxu0
      %v6603 = vunpack.c.l.b16 %v6167
      %v6604 = vunpack.c.h.b16 %v6167
      %v6605 = vunpack.c.l.b16 %v6168
      %v6606 = vunpack.c.h.b16 %v6168
      %v6607 = vunpack.c.l.b16 %v6169
      %v6608 = vunpack.c.h.b16 %v6169
      %v6609 = vunpack.c.l.b16 %v6170
      %v6610 = vunpack.c.h.b16 %v6170
      %v6611 = vunpack.c.l.b16 %v6171
      %v6612 = vunpack.c.h.b16 %v6171
      %v6613 = vunpack.c.l.b16 %v6172
      %v6614 = vunpack.c.h.b16 %v6172
      %v6615 = vunpack.c.l.b16 %v6173
      %v6616 = vunpack.c.h.b16 %v6173
      %v6617 = vunpack.c.l.b16 %v6174
      %v6618 = vunpack.c.h.b16 %v6174
      %v6619 = vunpack.c.l.b16 %v6175
      %v6620 = vunpack.c.h.b16 %v6175
      %v6621 = vunpack.c.l.b16 %v6176
      %v6622 = vunpack.c.h.b16 %v6176
      %v6623 = vunpack.c.l.b16 %v6177
      %v6624 = vunpack.c.h.b16 %v6177
      %v6625 = vunpack.c.l.b16 %v6178
      %v6626 = vunpack.c.h.b16 %v6178
      %v6627 = vunpack.c.l.b16 %v6179
      %v6628 = vunpack.c.h.b16 %v6179
      %v6629 = vunpack.c.l.b16 %v6180
      %v6630 = vunpack.c.h.b16 %v6180
      %v6631 = vunpack.c.l.b16 %v6181
      %v6632 = vunpack.c.h.b16 %v6181
      %v6633 = vunpack.c.l.b16 %v6182
      %v6634 = vunpack.c.h.b16 %v6182
      %v6635 = vunpack.c.l.b16 %v6183
      %v6636 = vunpack.c.h.b16 %v6183
      %v6637 = vunpack.c.l.b16 %v6184
      %v6638 = vunpack.c.h.b16 %v6184
      %v6639 = vunpack.c.l.b16 %v6185
      %v6640 = vunpack.c.h.b16 %v6185
      %v6641 = vunpack.c.l.b16 %v6186
      %v6642 = vunpack.c.h.b16 %v6186
      %v6643 = vunpack.c.l.b16 %v6187
      %v6644 = vunpack.c.h.b16 %v6187
      %v6645 = vunpack.c.l.b16 %v6188
      %v6646 = vunpack.c.h.b16 %v6188
      %v6647 = vunpack.c.l.b16 %v6189
      %v6648 = vunpack.c.h.b16 %v6189
      %v6649 = vunpack.c.l.b16 %v6190
      %v6650 = vunpack.c.h.b16 %v6190
      %v6651 = vunpack.c.l.b16 %v6191
      %v6652 = vunpack.c.h.b16 %v6191
      %v6653 = vunpack.c.l.b16 %v6192
      %v6654 = vunpack.c.h.b16 %v6192
      %v6655 = vunpack.c.l.b16 %v6193
      %v6656 = vunpack.c.h.b16 %v6193
      %v6657 = vunpack.c.l.b16 %v6194
      %v6658 = vunpack.c.h.b16 %v6194
      %v6659 = vpack.c.b16 %v6605, %v6603
      %v6660 = vpack.c.b16 %v6606, %v6604
      %v6661 = vpack.c.b16 %v6609, %v6607
      %v6662 = vpack.c.b16 %v6610, %v6608
      %v6663 = vpack.c.b16 %v6613, %v6611
      %v6664 = vpack.c.b16 %v6614, %v6612
      %v6665 = vpack.c.b16 %v6617, %v6615
      %v6666 = vpack.c.b16 %v6618, %v6616
      %v6667 = vpack.c.b16 %v6621, %v6619
      %v6668 = vpack.c.b16 %v6622, %v6620
      %v6669 = vpack.c.b16 %v6625, %v6623
      %v6670 = vpack.c.b16 %v6626, %v6624
      %v6671 = vpack.c.b16 %v6629, %v6627
      %v6672 = vpack.c.b16 %v6630, %v6628
      %v6673 = vpack.c.b16 %v6633, %v6631
      %v6674 = vpack.c.b16 %v6634, %v6632
      %v6675 = vpack.c.b16 %v6637, %v6635
      %v6676 = vpack.c.b16 %v6638, %v6636
      %v6677 = vpack.c.b16 %v6641, %v6639
      %v6678 = vpack.c.b16 %v6642, %v6640
      %v6679 = vpack.c.b16 %v6645, %v6643
      %v6680 = vpack.c.b16 %v6646, %v6644
      %v6681 = vpack.c.b16 %v6649, %v6647
      %v6682 = vpack.c.b16 %v6650, %v6648
      %v6683 = vpack.c.b16 %v6653, %v6651
      %v6684 = vpack.c.b16 %v6654, %v6652
      %v6685 = vpack.c.b16 %v6657, %v6655
      %v6686 = vpack.c.b16 %v6658, %v6656
      %v6715 = vsel %vm2505, %v6156, 0
      %v6717 = vsel %vm2505, %v6158, 0
      %v6719 = vsel %vm2505, %v6160, 0
      %v6721 = vsel %vm2505, %v6162, 0
      %v6723 = vsel %vm2505, %v6164, 0
      %v6725 = vsel %vm2505, %v6166, 0
      %6727 = vmatprep.subr.bf16.mxu0 %v6660
      %6728 = vmatpush1.bf16.msra.mxu0 %v6659
      %6729 = vmatprep.subr.bf16.mxu0 %v6662
      %6730 = vmatpush1.bf16.msra.mxu0 %v6661
      %6731 = vmatprep.subr.bf16.mxu0 %v6664
      %6732 = vmatpush1.bf16.msra.mxu0 %v6663
      %6733 = vmatprep.subr.bf16.mxu0 %v6666
      %6734 = vmatpush1.bf16.msra.mxu0 %v6665
      %6735 = vmatprep.subr.bf16.mxu0 %v6668
      %6736 = vmatpush1.bf16.msra.mxu0 %v6667
      %6737 = vmatprep.subr.bf16.mxu0 %v6670
      %6738 = vmatpush1.bf16.msra.mxu0 %v6669
      %6739 = vmatprep.subr.bf16.mxu0 %v6672
      %6740 = vmatpush1.bf16.msra.mxu0 %v6671
      %6741 = vmatprep.subr.bf16.mxu0 %v6674
      %6742 = vmatpush1.bf16.msra.mxu0 %v6673
      %6743 = vmatprep.subr.bf16.mxu0 %v6676
      %6744 = vmatpush1.bf16.msra.mxu0 %v6675
      %6745 = vmatprep.subr.bf16.mxu0 %v6678
      %6746 = vmatpush1.bf16.msra.mxu0 %v6677
      %6747 = vmatprep.subr.bf16.mxu0 %v6680
      %6748 = vmatpush1.bf16.msra.mxu0 %v6679
      %6749 = vmatprep.subr.bf16.mxu0 %v6682
      %6750 = vmatpush1.bf16.msra.mxu0 %v6681
      %6751 = vmatprep.subr.bf16.mxu0 %v6684
      %6752 = vmatpush1.bf16.msra.mxu0 %v6683
      %6753 = vmatprep.subr.bf16.mxu0 %v6686
      %6754 = vmatpush1.bf16.msra.mxu0 %v6685
      %6755 = vmatprep.subr.bf16.mxu0 0
      %6756 = vmatpush1.bf16.msra.mxu0 0
      %6757 = vmatprep.subr.bf16.mxu0 0
      %6758 = vmatpush1.bf16.msra.mxu0 0
      %6759 = vmatprep.mubr.bf16.mxu0 %v6715
      %6760 = vmatmul.mubr.bf16.gmra.mrb[0].mxu0 %v6155
      %v6761 = vpop.f32.mrb[0].mxu0
      %v6762 = vadd.f32 %v6517, %v6761
      %v6763 = vpop.f32.mrb[0].mxu0
      %v6764 = vadd.f32 %v6519, %v6763
      %v6765 = vpop.f32.mrb[0].mxu0
      %v6766 = vadd.f32 %v6521, %v6765
      %v6767 = vpop.f32.mrb[0].mxu0
      %v6768 = vadd.f32 %v6523, %v6767
      %6769 = vmatprep.mubr.bf16.mxu0 %v6717
      %6770 = vmatmul.mubr.bf16.gmra.mrb[0].mxu0 %v6157
      %v6771 = vpop.f32.mrb[0].mxu0
      %v6772 = vadd.f32 %v6527, %v6771
      %v6773 = vpop.f32.mrb[0].mxu0
      %v6774 = vadd.f32 %v6529, %v6773
      %v6775 = vpop.f32.mrb[0].mxu0
      %v6776 = vadd.f32 %v6531, %v6775
      %v6777 = vpop.f32.mrb[0].mxu0
      %v6778 = vadd.f32 %v6533, %v6777
      %6779 = vmatprep.mubr.bf16.mxu0 %v6719
      %6780 = vmatmul.mubr.bf16.gmra.mrb[0].mxu0 %v6159
      %v6781 = vpop.f32.mrb[0].mxu0
      %v6782 = vadd.f32 %v6537, %v6781
      %v6783 = vpop.f32.mrb[0].mxu0
      %v6784 = vadd.f32 %v6539, %v6783
      %v6785 = vpop.f32.mrb[0].mxu0
      %v6786 = vadd.f32 %v6541, %v6785
      %v6787 = vpop.f32.mrb[0].mxu0
      %v6788 = vadd.f32 %v6543, %v6787
      %6789 = vmatprep.mubr.bf16.mxu0 %v6721
      %6790 = vmatmul.mubr.bf16.gmra.mrb[0].mxu0 %v6161
      %v6791 = vpop.f32.mrb[0].mxu0
      %v6792 = vadd.f32 %v6547, %v6791
      %v6793 = vpop.f32.mrb[0].mxu0
      %v6794 = vadd.f32 %v6549, %v6793
      %v6795 = vpop.f32.mrb[0].mxu0
      %v6796 = vadd.f32 %v6551, %v6795
      %v6797 = vpop.f32.mrb[0].mxu0
      %v6798 = vadd.f32 %v6553, %v6797
      %6799 = vmatprep.mubr.bf16.mxu0 %v6723
      %6800 = vmatmul.mubr.bf16.gmra.mrb[0].mxu0 %v6163
      %v6801 = vpop.f32.mrb[0].mxu0
      %v6802 = vadd.f32 %v6557, %v6801
      %v6803 = vpop.f32.mrb[0].mxu0
      %v6804 = vadd.f32 %v6559, %v6803
      %v6805 = vpop.f32.mrb[0].mxu0
      %v6806 = vadd.f32 %v6561, %v6805
      %v6807 = vpop.f32.mrb[0].mxu0
      %v6808 = vadd.f32 %v6563, %v6807
      %6809 = vmatprep.mubr.bf16.mxu0 %v6725
      %6810 = vmatmul.mubr.bf16.gmra.mrb[0].mxu0 %v6165
      %v6811 = vpop.f32.mrb[0].mxu0
      %v6812 = vadd.f32 %v6567, %v6811
      %v6813 = vpop.f32.mrb[0].mxu0
      %v6814 = vadd.f32 %v6569, %v6813
      %v6815 = vpop.f32.mrb[0].mxu0
      %v6816 = vadd.f32 %v6571, %v6815
      %v6817 = vpop.f32.mrb[0].mxu0
      %v6818 = vadd.f32 %v6573, %v6817
      %6819 = vdwg.mxu0
      %s6820 = scalar_lea.vmem %s9, 448
      %v6821 = vld [vmem:[%s6820] sm:$0xff]
      %v6822 = vld [vmem:[%s6820 + $0x8] sm:$0xff]
      %v6823 = vld [vmem:[%s6820 + $0x10] sm:$0xff]
      %v6824 = vld [vmem:[%s6820 + $0x18] sm:$0xff]
      %v6825 = vld [vmem:[%s6820 + $0x20] sm:$0xff]
      %v6826 = vld [vmem:[%s6820 + $0x28] sm:$0xff]
      %v6827 = vld [vmem:[%s6820 + $0x30] sm:$0xff]
      %v6828 = vld [vmem:[%s6820 + $0x38] sm:$0xff]
      %v6829 = vld [vmem:[%s6820 + $0x40] sm:$0xff]
      %v6830 = vld [vmem:[%s6820 + $0x48] sm:$0xff]
      %v6831 = vld [vmem:[%s6820 + $0x50] sm:$0xff]
      %v6832 = vld [vmem:[%s6820 + $0x58] sm:$0xff]
      %v6833 = vld [vmem:[%s6820 + $0x60] sm:$0xff]
      %v6834 = vld [vmem:[%s6820 + $0x68] sm:$0xff]
      %v6835 = vld [vmem:[%s6820 + $0x70] sm:$0xff]
      %v6836 = vld [vmem:[%s6820 + $0x78] sm:$0xff]
      %v6837 = vld [vmem:[%s6820 + $0x80] sm:$0xff]
      %v6838 = vld [vmem:[%s6820 + $0x88] sm:$0xff]
      %v6839 = vld [vmem:[%s6820 + $0x90] sm:$0xff]
      %v6840 = vld [vmem:[%s6820 + $0x98] sm:$0xff]
      %v6841 = vld [vmem:[%s6820 + $0xa0] sm:$0xff]
      %v6842 = vld [vmem:[%s6820 + $0xa8] sm:$0xff]
      %v6843 = vld [vmem:[%s6820 + $0xb0] sm:$0xff]
      %v6844 = vld [vmem:[%s6820 + $0xb8] sm:$0xff]
      %v6845 = vld [vmem:[%s6820 + $0xc0] sm:$0xff]
      %v6846 = vld [vmem:[%s6820 + $0xc8] sm:$0xff]
      %v6847 = vld [vmem:[%s6820 + $0xd0] sm:$0xff]
      %v6848 = vld [vmem:[%s6820 + $0xd8] sm:$0xff]
      %v6861 = vrot.slane %v6155, 1
      %v6862 = vrot.slane %v6157, 1
      %v6863 = vsel %vm3691, %v6861, %v6862
      %v6864 = vrot.slane %v6156, 1
      %v6865 = vrot.slane %v6158, 1
      %v6866 = vsel %vm3691, %v6864, %v6865
      %v6867 = vrot.slane %v6159, 1
      %v6868 = vsel %vm3691, %v6862, %v6867
      %v6869 = vrot.slane %v6160, 1
      %v6870 = vsel %vm3691, %v6865, %v6869
      %v6871 = vrot.slane %v6161, 1
      %v6872 = vsel %vm3691, %v6867, %v6871
      %v6873 = vrot.slane %v6162, 1
      %v6874 = vsel %vm3691, %v6869, %v6873
      %v6875 = vrot.slane %v6163, 1
      %v6876 = vsel %vm3691, %v6871, %v6875
      %v6877 = vrot.slane %v6164, 1
      %v6878 = vsel %vm3691, %v6873, %v6877
      %v6879 = vrot.slane %v6165, 1
      %v6880 = vsel %vm3691, %v6875, %v6879
      %v6881 = vrot.slane %v6166, 1
      %v6882 = vsel %vm3691, %v6877, %v6881
      %v6917 = vunpack.c.l.b16 %v6821
      %v6918 = vunpack.c.h.b16 %v6821
      %v6919 = vunpack.c.l.b16 %v6822
      %v6920 = vunpack.c.h.b16 %v6822
      %v6921 = vunpack.c.l.b16 %v6823
      %v6922 = vunpack.c.h.b16 %v6823
      %v6923 = vunpack.c.l.b16 %v6824
      %v6924 = vunpack.c.h.b16 %v6824
      %v6925 = vunpack.c.l.b16 %v6825
      %v6926 = vunpack.c.h.b16 %v6825
      %v6927 = vunpack.c.l.b16 %v6826
      %v6928 = vunpack.c.h.b16 %v6826
      %v6929 = vunpack.c.l.b16 %v6827
      %v6930 = vunpack.c.h.b16 %v6827
      %v6931 = vunpack.c.l.b16 %v6828
      %v6932 = vunpack.c.h.b16 %v6828
      %v6933 = vunpack.c.l.b16 %v6829
      %v6934 = vunpack.c.h.b16 %v6829
      %v6935 = vunpack.c.l.b16 %v6830
      %v6936 = vunpack.c.h.b16 %v6830
      %v6937 = vunpack.c.l.b16 %v6831
      %v6938 = vunpack.c.h.b16 %v6831
      %v6939 = vunpack.c.l.b16 %v6832
      %v6940 = vunpack.c.h.b16 %v6832
      %v6941 = vunpack.c.l.b16 %v6833
      %v6942 = vunpack.c.h.b16 %v6833
      %v6943 = vunpack.c.l.b16 %v6834
      %v6944 = vunpack.c.h.b16 %v6834
      %v6945 = vunpack.c.l.b16 %v6835
      %v6946 = vunpack.c.h.b16 %v6835
      %v6947 = vunpack.c.l.b16 %v6836
      %v6948 = vunpack.c.h.b16 %v6836
      %v6949 = vunpack.c.l.b16 %v6837
      %v6950 = vunpack.c.h.b16 %v6837
      %v6951 = vunpack.c.l.b16 %v6838
      %v6952 = vunpack.c.h.b16 %v6838
      %v6953 = vunpack.c.l.b16 %v6839
      %v6954 = vunpack.c.h.b16 %v6839
      %v6955 = vunpack.c.l.b16 %v6840
      %v6956 = vunpack.c.h.b16 %v6840
      %v6957 = vunpack.c.l.b16 %v6841
      %v6958 = vunpack.c.h.b16 %v6841
      %v6959 = vunpack.c.l.b16 %v6842
      %v6960 = vunpack.c.h.b16 %v6842
      %v6961 = vunpack.c.l.b16 %v6843
      %v6962 = vunpack.c.h.b16 %v6843
      %v6963 = vunpack.c.l.b16 %v6844
      %v6964 = vunpack.c.h.b16 %v6844
      %v6965 = vunpack.c.l.b16 %v6845
      %v6966 = vunpack.c.h.b16 %v6845
      %v6967 = vunpack.c.l.b16 %v6846
      %v6968 = vunpack.c.h.b16 %v6846
      %v6969 = vunpack.c.l.b16 %v6847
      %v6970 = vunpack.c.h.b16 %v6847
      %v6971 = vunpack.c.l.b16 %v6848
      %v6972 = vunpack.c.h.b16 %v6848
      %v6973 = vpack.c.b16 %v6919, %v6917
      %v6974 = vpack.c.b16 %v6920, %v6918
      %v6975 = vpack.c.b16 %v6923, %v6921
      %v6976 = vpack.c.b16 %v6924, %v6922
      %v6977 = vpack.c.b16 %v6927, %v6925
      %v6978 = vpack.c.b16 %v6928, %v6926
      %v6979 = vpack.c.b16 %v6931, %v6929
      %v6980 = vpack.c.b16 %v6932, %v6930
      %v6981 = vpack.c.b16 %v6935, %v6933
      %v6982 = vpack.c.b16 %v6936, %v6934
      %v6983 = vpack.c.b16 %v6939, %v6937
      %v6984 = vpack.c.b16 %v6940, %v6938
      %v6985 = vpack.c.b16 %v6943, %v6941
      %v6986 = vpack.c.b16 %v6944, %v6942
      %v6987 = vpack.c.b16 %v6947, %v6945
      %v6988 = vpack.c.b16 %v6948, %v6946
      %v6989 = vpack.c.b16 %v6951, %v6949
      %v6990 = vpack.c.b16 %v6952, %v6950
      %v6991 = vpack.c.b16 %v6955, %v6953
      %v6992 = vpack.c.b16 %v6956, %v6954
      %v6993 = vpack.c.b16 %v6959, %v6957
      %v6994 = vpack.c.b16 %v6960, %v6958
      %v6995 = vpack.c.b16 %v6963, %v6961
      %v6996 = vpack.c.b16 %v6964, %v6962
      %v6997 = vpack.c.b16 %v6967, %v6965
      %v6998 = vpack.c.b16 %v6968, %v6966
      %v6999 = vpack.c.b16 %v6971, %v6969
      %v7000 = vpack.c.b16 %v6972, %v6970
      %v7030 = vsel %vm2505, %v6866, 0
      %v7033 = vsel %vm2505, %v6870, 0
      %v7036 = vsel %vm2505, %v6874, 0
      %v7039 = vsel %vm2505, %v6878, 0
      %v7042 = vsel %vm2505, %v6882, 0
      %v7045 = vsel %vm2505, %v6881, 0
      %7047 = vmatprep.subr.bf16.mxu0 %v6974
      %7048 = vmatpush1.bf16.msra.mxu0 %v6973
      %7049 = vmatprep.subr.bf16.mxu0 %v6976
      %7050 = vmatpush1.bf16.msra.mxu0 %v6975
      %7051 = vmatprep.subr.bf16.mxu0 %v6978
      %7052 = vmatpush1.bf16.msra.mxu0 %v6977
      %7053 = vmatprep.subr.bf16.mxu0 %v6980
      %7054 = vmatpush1.bf16.msra.mxu0 %v6979
      %7055 = vmatprep.subr.bf16.mxu0 %v6982
      %7056 = vmatpush1.bf16.msra.mxu0 %v6981
      %7057 = vmatprep.subr.bf16.mxu0 %v6984
      %7058 = vmatpush1.bf16.msra.mxu0 %v6983
      %7059 = vmatprep.subr.bf16.mxu0 %v6986
      %7060 = vmatpush1.bf16.msra.mxu0 %v6985
      %7061 = vmatprep.subr.bf16.mxu0 %v6988
      %7062 = vmatpush1.bf16.msra.mxu0 %v6987
      %7063 = vmatprep.subr.bf16.mxu0 %v6990
      %7064 = vmatpush1.bf16.msra.mxu0 %v6989
      %7065 = vmatprep.subr.bf16.mxu0 %v6992
      %7066 = vmatpush1.bf16.msra.mxu0 %v6991
      %7067 = vmatprep.subr.bf16.mxu0 %v6994
      %7068 = vmatpush1.bf16.msra.mxu0 %v6993
      %7069 = vmatprep.subr.bf16.mxu0 %v6996
      %7070 = vmatpush1.bf16.msra.mxu0 %v6995
      %7071 = vmatprep.subr.bf16.mxu0 %v6998
      %7072 = vmatpush1.bf16.msra.mxu0 %v6997
      %7073 = vmatprep.subr.bf16.mxu0 %v7000
      %7074 = vmatpush1.bf16.msra.mxu0 %v6999
      %7075 = vmatprep.subr.bf16.mxu0 0
      %7076 = vmatpush1.bf16.msra.mxu0 0
      %7077 = vmatprep.subr.bf16.mxu0 0
      %7078 = vmatpush1.bf16.msra.mxu0 0
      %7079 = vmatprep.mubr.bf16.mxu0 %v7030
      %7080 = vmatmul.mubr.bf16.gmra.mrb[0].mxu0 %v6863
      %v7081 = vpop.f32.mrb[0].mxu0
      %v7082 = vadd.f32 0.0, %v7081
      %v7083 = vpop.f32.mrb[0].mxu0
      %v7084 = vadd.f32 0.0, %v7083
      %v7085 = vpop.f32.mrb[0].mxu0
      %v7086 = vadd.f32 0.0, %v7085
      %v7087 = vpop.f32.mrb[0].mxu0
      %v7088 = vadd.f32 0.0, %v7087
      %7089 = vmatprep.mubr.bf16.mxu0 %v7033
      %7090 = vmatmul.mubr.bf16.gmra.mrb[0].mxu0 %v6868
      %v7091 = vpop.f32.mrb[0].mxu0
      %v7092 = vadd.f32 0.0, %v7091
      %v7093 = vpop.f32.mrb[0].mxu0
      %v7094 = vadd.f32 0.0, %v7093
      %v7095 = vpop.f32.mrb[0].mxu0
      %v7096 = vadd.f32 0.0, %v7095
      %v7097 = vpop.f32.mrb[0].mxu0
      %v7098 = vadd.f32 0.0, %v7097
      %7099 = vmatprep.mubr.bf16.mxu0 %v7036
      %7100 = vmatmul.mubr.bf16.gmra.mrb[0].mxu0 %v6872
      %v7101 = vpop.f32.mrb[0].mxu0
      %v7102 = vadd.f32 0.0, %v7101
      %v7103 = vpop.f32.mrb[0].mxu0
      %v7104 = vadd.f32 0.0, %v7103
      %v7105 = vpop.f32.mrb[0].mxu0
      %v7106 = vadd.f32 0.0, %v7105
      %v7107 = vpop.f32.mrb[0].mxu0
      %v7108 = vadd.f32 0.0, %v7107
      %7109 = vmatprep.mubr.bf16.mxu0 %v7039
      %7110 = vmatmul.mubr.bf16.gmra.mrb[0].mxu0 %v6876
      %v7111 = vpop.f32.mrb[0].mxu0
      %v7112 = vadd.f32 0.0, %v7111
      %v7113 = vpop.f32.mrb[0].mxu0
      %v7114 = vadd.f32 0.0, %v7113
      %v7115 = vpop.f32.mrb[0].mxu0
      %v7116 = vadd.f32 0.0, %v7115
      %v7117 = vpop.f32.mrb[0].mxu0
      %v7118 = vadd.f32 0.0, %v7117
      %7119 = vmatprep.mubr.bf16.mxu0 %v7042
      %7120 = vmatmul.mubr.bf16.gmra.mrb[0].mxu0 %v6880
      %v7121 = vpop.f32.mrb[0].mxu0
      %v7122 = vadd.f32 0.0, %v7121
      %v7123 = vpop.f32.mrb[0].mxu0
      %v7124 = vadd.f32 0.0, %v7123
      %v7125 = vpop.f32.mrb[0].mxu0
      %v7126 = vadd.f32 0.0, %v7125
      %v7127 = vpop.f32.mrb[0].mxu0
      %v7128 = vadd.f32 0.0, %v7127
      %7129 = vmatprep.mubr.bf16.mxu0 %v7045
      %7130 = vmatmul.mubr.bf16.gmra.mrb[0].mxu0 %v6879
      %v7131 = vpop.f32.mrb[0].mxu0
      %v7132 = vadd.f32 0.0, %v7131
      %v7133 = vpop.f32.mrb[0].mxu0
      %v7134 = vadd.f32 0.0, %v7133
      %v7135 = vpop.f32.mrb[0].mxu0
      %v7136 = vadd.f32 0.0, %v7135
      %v7137 = vpop.f32.mrb[0].mxu0
      %v7138 = vadd.f32 0.0, %v7137
      %7139 = vdwg.mxu0
      %v7140 = vadd.f32 %v6762, %v7082
      %v7141 = vadd.f32 %v6764, %v7084
      %v7142 = vadd.f32 %v6766, %v7086
      %v7143 = vadd.f32 %v6768, %v7088
      %v7144 = vadd.f32 %v6772, %v7092
      %v7145 = vadd.f32 %v6774, %v7094
      %v7146 = vadd.f32 %v6776, %v7096
      %v7147 = vadd.f32 %v6778, %v7098
      %v7148 = vadd.f32 %v6782, %v7102
      %v7149 = vadd.f32 %v6784, %v7104
      %v7150 = vadd.f32 %v6786, %v7106
      %v7151 = vadd.f32 %v6788, %v7108
      %v7152 = vadd.f32 %v6792, %v7112
      %v7153 = vadd.f32 %v6794, %v7114
      %v7154 = vadd.f32 %v6796, %v7116
      %v7155 = vadd.f32 %v6798, %v7118
      %v7156 = vadd.f32 %v6802, %v7122
      %v7157 = vadd.f32 %v6804, %v7124
      %v7158 = vadd.f32 %v6806, %v7126
      %v7159 = vadd.f32 %v6808, %v7128
      %v7160 = vadd.f32 %v6812, %v7132
      %v7161 = vadd.f32 %v6814, %v7134
      %v7162 = vadd.f32 %v6816, %v7136
      %v7163 = vadd.f32 %v6818, %v7138
      %v7164 = vld [vmem:[%s10] sm:$0x3]
      %v7166 = vlaneseq
      %v7167 = vshrl.u32 %v7166, 7
      %v7168 = vsub.s32 0, %v7167
      %v7169 = vrot.slane %v7164, %v7168
      %v7170 = vlaneseq
      %v7171 = vshrl.u32 %v7170, 7
      %v7172 = vsub.s32 1, %v7171
      %v7173 = vrot.slane %v7164, %v7172
      %v7176 = vadd.f32 %v7140, %v7169
      %v7177 = vadd.f32 %v7141, %v7173
      %v7178 = vadd.f32 %v7142, %v7169
      %v7179 = vadd.f32 %v7143, %v7173
      %v7180 = vadd.f32 %v7144, %v7169
      %v7181 = vadd.f32 %v7145, %v7173
      %v7182 = vadd.f32 %v7146, %v7169
      %v7183 = vadd.f32 %v7147, %v7173
      %v7184 = vadd.f32 %v7148, %v7169
      %v7185 = vadd.f32 %v7149, %v7173
      %v7186 = vadd.f32 %v7150, %v7169
      %v7187 = vadd.f32 %v7151, %v7173
      %v7188 = vadd.f32 %v7152, %v7169
      %v7189 = vadd.f32 %v7153, %v7173
      %v7190 = vadd.f32 %v7154, %v7169
      %v7191 = vadd.f32 %v7155, %v7173
      %v7192 = vadd.f32 %v7156, %v7169
      %v7193 = vadd.f32 %v7157, %v7173
      %v7194 = vadd.f32 %v7158, %v7169
      %v7195 = vadd.f32 %v7159, %v7173
      %v7196 = vadd.f32 %v7160, %v7169
      %v7197 = vadd.f32 %v7161, %v7173
      %v7198 = vadd.f32 %v7162, %v7169
      %v7199 = vadd.f32 %v7163, %v7173
      %v7200 = vmax.f32 %v7176, 0.0
      %v7201 = vmax.f32 %v7177, 0.0
      %v7202 = vmax.f32 %v7178, 0.0
      %v7203 = vmax.f32 %v7179, 0.0
      %v7204 = vmax.f32 %v7180, 0.0
      %v7205 = vmax.f32 %v7181, 0.0
      %v7206 = vmax.f32 %v7182, 0.0
      %v7207 = vmax.f32 %v7183, 0.0
      %v7208 = vmax.f32 %v7184, 0.0
      %v7209 = vmax.f32 %v7185, 0.0
      %v7210 = vmax.f32 %v7186, 0.0
      %v7211 = vmax.f32 %v7187, 0.0
      %v7212 = vmax.f32 %v7188, 0.0
      %v7213 = vmax.f32 %v7189, 0.0
      %v7214 = vmax.f32 %v7190, 0.0
      %v7215 = vmax.f32 %v7191, 0.0
      %v7216 = vmax.f32 %v7192, 0.0
      %v7217 = vmax.f32 %v7193, 0.0
      %v7218 = vmax.f32 %v7194, 0.0
      %v7219 = vmax.f32 %v7195, 0.0
      %v7220 = vmax.f32 %v7196, 0.0
      %v7221 = vmax.f32 %v7197, 0.0
      %v7222 = vmax.f32 %v7198, 0.0
      %v7223 = vmax.f32 %v7199, 0.0
      %v7224 = vpack.c.bf16 %v7202, %v7200
      %v7225 = vpack.c.bf16 %v7203, %v7201
      %v7226 = vpack.c.bf16 %v7206, %v7204
      %v7227 = vpack.c.bf16 %v7207, %v7205
      %v7228 = vpack.c.bf16 %v7210, %v7208
      %v7229 = vpack.c.bf16 %v7211, %v7209
      %v7230 = vpack.c.bf16 %v7214, %v7212
      %v7231 = vpack.c.bf16 %v7215, %v7213
      %v7232 = vpack.c.bf16 %v7218, %v7216
      %v7233 = vpack.c.bf16 %v7219, %v7217
      %v7234 = vpack.c.bf16 %v7222, %v7220
      %v7235 = vpack.c.bf16 %v7223, %v7221
      %v7236 = vld [vmem:[%s11] sm:$0xf]
      %v7237 = vld [vmem:[%s11 + $0x4] sm:$0xf]
      %v7238 = vld [vmem:[%s11 + $0x8] sm:$0xf]
      %v7239 = vld [vmem:[%s11 + $0xc] sm:$0xf]
      %v7240 = vld [vmem:[%s11 + $0x10] sm:$0xf]
      %v7241 = vld [vmem:[%s11 + $0x14] sm:$0xf]
      %v7242 = vld [vmem:[%s11 + $0x18] sm:$0xf]
      %v7243 = vld [vmem:[%s11 + $0x1c] sm:$0xf]
      %v7244 = vld [vmem:[%s11 + $0x20] sm:$0xf]
      %v7245 = vld [vmem:[%s11 + $0x24] sm:$0xf]
      %v7246 = vld [vmem:[%s11 + $0x28] sm:$0xf]
      %v7247 = vld [vmem:[%s11 + $0x2c] sm:$0xf]
      %v7248 = vld [vmem:[%s11 + $0x30] sm:$0xf]
      %v7249 = vld [vmem:[%s11 + $0x34] sm:$0xf]
      %v7250 = vld [vmem:[%s11 + $0x38] sm:$0xf]
      %v7251 = vld [vmem:[%s11 + $0x3c] sm:$0xf]
      %v7252 = vld [vmem:[%s11 + $0x40] sm:$0xf]
      %v7253 = vld [vmem:[%s11 + $0x44] sm:$0xf]
      %v7254 = vld [vmem:[%s11 + $0x48] sm:$0xf]
      %v7255 = vld [vmem:[%s11 + $0x4c] sm:$0xf]
      %s7256 = scalar_lea.vmem %s11, 80
      %v7257 = vld [vmem:[%s7256] sm:$0xf]
      %v7258 = vld [vmem:[%s7256 + $0x4] sm:$0xf]
      %v7259 = vld [vmem:[%s7256 + $0x8] sm:$0xf]
      %v7260 = vld [vmem:[%s7256 + $0xc] sm:$0xf]
      %v7261 = vld [vmem:[%s7256 + $0x10] sm:$0xf]
      %v7262 = vld [vmem:[%s7256 + $0x14] sm:$0xf]
      %v7263 = vld [vmem:[%s7256 + $0x18] sm:$0xf]
      %v7264 = vld [vmem:[%s7256 + $0x1c] sm:$0xf]
      %v7265 = vld [vmem:[%s7256 + $0x20] sm:$0xf]
      %v7266 = vld [vmem:[%s7256 + $0x24] sm:$0xf]
      %v7267 = vld [vmem:[%s7256 + $0x28] sm:$0xf]
      %v7268 = vld [vmem:[%s7256 + $0x2c] sm:$0xf]
      %v7269 = vld [vmem:[%s7256 + $0x30] sm:$0xf]
      %v7270 = vld [vmem:[%s7256 + $0x34] sm:$0xf]
      %v7271 = vld [vmem:[%s7256 + $0x38] sm:$0xf]
      %v7272 = vld [vmem:[%s7256 + $0x3c] sm:$0xf]
      %v7273 = vld [vmem:[%s7256 + $0x40] sm:$0xf]
      %v7274 = vld [vmem:[%s7256 + $0x44] sm:$0xf]
      %v7275 = vld [vmem:[%s7256 + $0x48] sm:$0xf]
      %v7276 = vld [vmem:[%s7256 + $0x4c] sm:$0xf]
      %v7278 = vshrl.u32 %v7224, 16
      %v7280 = vshll.u32 %v7224, 16
      %v7282 = vrot.slane %v7280, 1
      %v7283 = vor.u32 %v7278, %v7282
      %v7285 = vshll.u32 %v7226, 16
      %v7287 = vrot.slane %v7285, 1
      %v7288 = vsel %vm1365, %v7283, %v7287
      %v7290 = vshrl.u32 %v7225, 16
      %v7292 = vshll.u32 %v7225, 16
      %v7294 = vrot.slane %v7292, 1
      %v7295 = vor.u32 %v7290, %v7294
      %v7297 = vshll.u32 %v7227, 16
      %v7299 = vrot.slane %v7297, 1
      %v7300 = vsel %vm1365, %v7295, %v7299
      %v7301 = vshrl.u32 %v7226, 16
      %v7303 = vor.u32 %v7301, %v7287
      %v7305 = vshll.u32 %v7228, 16
      %v7307 = vrot.slane %v7305, 1
      %v7308 = vsel %vm1365, %v7303, %v7307
      %v7309 = vshrl.u32 %v7227, 16
      %v7311 = vor.u32 %v7309, %v7299
      %v7313 = vshll.u32 %v7229, 16
      %v7315 = vrot.slane %v7313, 1
      %v7316 = vsel %vm1365, %v7311, %v7315
      %v7317 = vshrl.u32 %v7228, 16
      %v7319 = vor.u32 %v7317, %v7307
      %v7321 = vshll.u32 %v7230, 16
      %v7323 = vrot.slane %v7321, 1
      %v7324 = vsel %vm1365, %v7319, %v7323
      %v7325 = vshrl.u32 %v7229, 16
      %v7327 = vor.u32 %v7325, %v7315
      %v7329 = vshll.u32 %v7231, 16
      %v7331 = vrot.slane %v7329, 1
      %v7332 = vsel %vm1365, %v7327, %v7331
      %v7333 = vshrl.u32 %v7230, 16
      %v7335 = vor.u32 %v7333, %v7323
      %v7337 = vshll.u32 %v7232, 16
      %v7339 = vrot.slane %v7337, 1
      %v7340 = vsel %vm1365, %v7335, %v7339
      %v7341 = vshrl.u32 %v7231, 16
      %v7343 = vor.u32 %v7341, %v7331
      %v7345 = vshll.u32 %v7233, 16
      %v7347 = vrot.slane %v7345, 1
      %v7348 = vsel %vm1365, %v7343, %v7347
      %v7349 = vshrl.u32 %v7232, 16
      %v7351 = vor.u32 %v7349, %v7339
      %v7353 = vshll.u32 %v7234, 16
      %v7355 = vrot.slane %v7353, 1
      %v7356 = vsel %vm1365, %v7351, %v7355
      %v7357 = vshrl.u32 %v7233, 16
      %v7359 = vor.u32 %v7357, %v7347
      %v7361 = vshll.u32 %v7235, 16
      %v7363 = vrot.slane %v7361, 1
      %v7364 = vsel %vm1365, %v7359, %v7363
      %v7365 = vshrl.u32 %v7234, 16
      %v7367 = vor.u32 %v7365, %v7355
      %v7368 = vshrl.u32 %v7235, 16
      %v7370 = vor.u32 %v7368, %v7363
      %v7397 = vunpack.c.l.b16 %v7257
      %v7398 = vunpack.c.l.b16 %v7258
      %v7399 = vunpack.c.l.b16 %v7259
      %v7400 = vunpack.c.l.b16 %v7260
      %v7401 = vunpack.c.l.b16 %v7261
      %v7402 = vunpack.c.l.b16 %v7262
      %v7403 = vunpack.c.l.b16 %v7263
      %v7404 = vunpack.c.l.b16 %v7264
      %v7405 = vunpack.c.l.b16 %v7265
      %v7406 = vunpack.c.l.b16 %v7266
      %v7407 = vunpack.c.l.b16 %v7267
      %v7408 = vunpack.c.l.b16 %v7268
      %v7409 = vunpack.c.l.b16 %v7269
      %v7410 = vunpack.c.l.b16 %v7270
      %v7411 = vunpack.c.l.b16 %v7271
      %v7412 = vunpack.c.l.b16 %v7272
      %v7413 = vunpack.c.l.b16 %v7273
      %v7414 = vunpack.c.l.b16 %v7274
      %v7415 = vunpack.c.l.b16 %v7275
      %v7416 = vunpack.c.l.b16 %v7276
      %v7417 = vpack.c.b16 %v7398, %v7397
      %v7418 = vpack.c.b16 %v7400, %v7399
      %v7419 = vpack.c.b16 %v7402, %v7401
      %v7420 = vpack.c.b16 %v7404, %v7403
      %v7421 = vpack.c.b16 %v7406, %v7405
      %v7422 = vpack.c.b16 %v7408, %v7407
      %v7423 = vpack.c.b16 %v7410, %v7409
      %v7424 = vpack.c.b16 %v7412, %v7411
      %v7425 = vpack.c.b16 %v7414, %v7413
      %v7426 = vpack.c.b16 %v7416, %v7415
      %v7438 = vsel %vm5004, %v7300, 0
      %v7441 = vsel %vm5004, %v7316, 0
      %v7444 = vsel %vm5004, %v7332, 0
      %v7447 = vsel %vm5004, %v7348, 0
      %v7450 = vsel %vm5004, %v7364, 0
      %v7453 = vsel %vm5004, %v7370, 0
      %7455 = vmatprep.subr.bf16.mxu0 0
      %7456 = vmatpush1.bf16.msra.mxu0 %v7417
      %7457 = vmatprep.subr.bf16.mxu0 0
      %7458 = vmatpush1.bf16.msra.mxu0 %v7418
      %7459 = vmatprep.subr.bf16.mxu0 0
      %7460 = vmatpush1.bf16.msra.mxu0 %v7419
      %7461 = vmatprep.subr.bf16.mxu0 0
      %7462 = vmatpush1.bf16.msra.mxu0 %v7420
      %7463 = vmatprep.subr.bf16.mxu0 0
      %7464 = vmatpush1.bf16.msra.mxu0 %v7421
      %7465 = vmatprep.subr.bf16.mxu0 0
      %7466 = vmatpush1.bf16.msra.mxu0 %v7422
      %7467 = vmatprep.subr.bf16.mxu0 0
      %7468 = vmatpush1.bf16.msra.mxu0 %v7423
      %7469 = vmatprep.subr.bf16.mxu0 0
      %7470 = vmatpush1.bf16.msra.mxu0 %v7424
      %7471 = vmatprep.subr.bf16.mxu0 0
      %7472 = vmatpush1.bf16.msra.mxu0 %v7425
      %7473 = vmatprep.subr.bf16.mxu0 0
      %7474 = vmatpush1.bf16.msra.mxu0 %v7426
      %7475 = vmatprep.subr.bf16.mxu0 0
      %7476 = vmatpush1.bf16.msra.mxu0 0
      %7477 = vmatprep.subr.bf16.mxu0 0
      %7478 = vmatpush1.bf16.msra.mxu0 0
      %7479 = vmatprep.subr.bf16.mxu0 0
      %7480 = vmatpush1.bf16.msra.mxu0 0
      %7481 = vmatprep.subr.bf16.mxu0 0
      %7482 = vmatpush1.bf16.msra.mxu0 0
      %7483 = vmatprep.subr.bf16.mxu0 0
      %7484 = vmatpush1.bf16.msra.mxu0 0
      %7485 = vmatprep.subr.bf16.mxu0 0
      %7486 = vmatpush1.bf16.msra.mxu0 0
      %7487 = vmatprep.mubr.bf16.mxu0 %v7438
      %7488 = vmatmul.mubr.bf16.gmra.mrb[0].mxu0 %v7288
      %v7489 = vpop.f32.mrb[0].mxu0
      %v7490 = vadd.f32 0.0, %v7489
      %v7491 = vpop.f32.mrb[0].mxu0
      %v7492 = vpop.f32.mrb[0].mxu0
      %v7493 = vadd.f32 0.0, %v7492
      %v7494 = vpop.f32.mrb[0].mxu0
      %7495 = vmatprep.mubr.bf16.mxu0 %v7441
      %7496 = vmatmul.mubr.bf16.gmra.mrb[0].mxu0 %v7308
      %v7497 = vpop.f32.mrb[0].mxu0
      %v7498 = vadd.f32 0.0, %v7497
      %v7499 = vpop.f32.mrb[0].mxu0
      %v7500 = vpop.f32.mrb[0].mxu0
      %v7501 = vadd.f32 0.0, %v7500
      %v7502 = vpop.f32.mrb[0].mxu0
      %7503 = vmatprep.mubr.bf16.mxu0 %v7444
      %7504 = vmatmul.mubr.bf16.gmra.mrb[0].mxu0 %v7324
      %v7505 = vpop.f32.mrb[0].mxu0
      %v7506 = vadd.f32 0.0, %v7505
      %v7507 = vpop.f32.mrb[0].mxu0
      %v7508 = vpop.f32.mrb[0].mxu0
      %v7509 = vadd.f32 0.0, %v7508
      %v7510 = vpop.f32.mrb[0].mxu0
      %7511 = vmatprep.mubr.bf16.mxu0 %v7447
      %7512 = vmatmul.mubr.bf16.gmra.mrb[0].mxu0 %v7340
      %v7513 = vpop.f32.mrb[0].mxu0
      %v7514 = vadd.f32 0.0, %v7513
      %v7515 = vpop.f32.mrb[0].mxu0
      %v7516 = vpop.f32.mrb[0].mxu0
      %v7517 = vadd.f32 0.0, %v7516
      %v7518 = vpop.f32.mrb[0].mxu0
      %7519 = vmatprep.mubr.bf16.mxu0 %v7450
      %7520 = vmatmul.mubr.bf16.gmra.mrb[0].mxu0 %v7356
      %v7521 = vpop.f32.mrb[0].mxu0
      %v7522 = vadd.f32 0.0, %v7521
      %v7523 = vpop.f32.mrb[0].mxu0
      %v7524 = vpop.f32.mrb[0].mxu0
      %v7525 = vadd.f32 0.0, %v7524
      %v7526 = vpop.f32.mrb[0].mxu0
      %7527 = vmatprep.mubr.bf16.mxu0 %v7453
      %7528 = vmatmul.mubr.bf16.gmra.mrb[0].mxu0 %v7367
      %v7529 = vpop.f32.mrb[0].mxu0
      %v7530 = vadd.f32 0.0, %v7529
      %v7531 = vpop.f32.mrb[0].mxu0
      %v7532 = vpop.f32.mrb[0].mxu0
      %v7533 = vpop.f32.mrb[0].mxu0
      %7534 = vdwg.mxu0
      %v7555 = vunpack.c.l.b16 %v7236
      %v7556 = vunpack.c.l.b16 %v7237
      %v7557 = vunpack.c.l.b16 %v7238
      %v7558 = vunpack.c.l.b16 %v7239
      %v7559 = vunpack.c.l.b16 %v7240
      %v7560 = vunpack.c.l.b16 %v7241
      %v7561 = vunpack.c.l.b16 %v7242
      %v7562 = vunpack.c.l.b16 %v7243
      %v7563 = vunpack.c.l.b16 %v7244
      %v7564 = vunpack.c.l.b16 %v7245
      %v7565 = vunpack.c.l.b16 %v7246
      %v7566 = vunpack.c.l.b16 %v7247
      %v7567 = vunpack.c.l.b16 %v7248
      %v7568 = vunpack.c.l.b16 %v7249
      %v7569 = vunpack.c.l.b16 %v7250
      %v7570 = vunpack.c.l.b16 %v7251
      %v7571 = vunpack.c.l.b16 %v7252
      %v7572 = vunpack.c.l.b16 %v7253
      %v7573 = vunpack.c.l.b16 %v7254
      %v7574 = vunpack.c.l.b16 %v7255
      %v7575 = vpack.c.b16 %v7556, %v7555
      %v7576 = vpack.c.b16 %v7558, %v7557
      %v7577 = vpack.c.b16 %v7560, %v7559
      %v7578 = vpack.c.b16 %v7562, %v7561
      %v7579 = vpack.c.b16 %v7564, %v7563
      %v7580 = vpack.c.b16 %v7566, %v7565
      %v7581 = vpack.c.b16 %v7568, %v7567
      %v7582 = vpack.c.b16 %v7570, %v7569
      %v7583 = vpack.c.b16 %v7572, %v7571
      %v7584 = vpack.c.b16 %v7574, %v7573
      %v7595 = vsel %vm5004, %v7225, 0
      %v7597 = vsel %vm5004, %v7227, 0
      %v7599 = vsel %vm5004, %v7229, 0
      %v7601 = vsel %vm5004, %v7231, 0
      %v7603 = vsel %vm5004, %v7233, 0
      %v7605 = vsel %vm5004, %v7235, 0
      %7607 = vmatprep.subr.bf16.mxu0 0
      %7608 = vmatpush1.bf16.msra.mxu0 %v7575
      %7609 = vmatprep.subr.bf16.mxu0 0
      %7610 = vmatpush1.bf16.msra.mxu0 %v7576
      %7611 = vmatprep.subr.bf16.mxu0 0
      %7612 = vmatpush1.bf16.msra.mxu0 %v7577
      %7613 = vmatprep.subr.bf16.mxu0 0
      %7614 = vmatpush1.bf16.msra.mxu0 %v7578
      %7615 = vmatprep.subr.bf16.mxu0 0
      %7616 = vmatpush1.bf16.msra.mxu0 %v7579
      %7617 = vmatprep.subr.bf16.mxu0 0
      %7618 = vmatpush1.bf16.msra.mxu0 %v7580
      %7619 = vmatprep.subr.bf16.mxu0 0
      %7620 = vmatpush1.bf16.msra.mxu0 %v7581
      %7621 = vmatprep.subr.bf16.mxu0 0
      %7622 = vmatpush1.bf16.msra.mxu0 %v7582
      %7623 = vmatprep.subr.bf16.mxu0 0
      %7624 = vmatpush1.bf16.msra.mxu0 %v7583
      %7625 = vmatprep.subr.bf16.mxu0 0
      %7626 = vmatpush1.bf16.msra.mxu0 %v7584
      %7627 = vmatprep.subr.bf16.mxu0 0
      %7628 = vmatpush1.bf16.msra.mxu0 0
      %7629 = vmatprep.subr.bf16.mxu0 0
      %7630 = vmatpush1.bf16.msra.mxu0 0
      %7631 = vmatprep.subr.bf16.mxu0 0
      %7632 = vmatpush1.bf16.msra.mxu0 0
      %7633 = vmatprep.subr.bf16.mxu0 0
      %7634 = vmatpush1.bf16.msra.mxu0 0
      %7635 = vmatprep.subr.bf16.mxu0 0
      %7636 = vmatpush1.bf16.msra.mxu0 0
      %7637 = vmatprep.subr.bf16.mxu0 0
      %7638 = vmatpush1.bf16.msra.mxu0 0
      %7639 = vmatprep.mubr.bf16.mxu0 %v7595
      %7640 = vmatmul.mubr.bf16.gmra.mrb[0].mxu0 %v7224
      %v7641 = vpop.f32.mrb[0].mxu0
      %v7642 = vadd.f32 %v7490, %v7641
      %v7643 = vpop.f32.mrb[0].mxu0
      %v7644 = vpop.f32.mrb[0].mxu0
      %v7645 = vadd.f32 %v7493, %v7644
      %v7646 = vpop.f32.mrb[0].mxu0
      %7647 = vmatprep.mubr.bf16.mxu0 %v7597
      %7648 = vmatmul.mubr.bf16.gmra.mrb[0].mxu0 %v7226
      %v7649 = vpop.f32.mrb[0].mxu0
      %v7650 = vadd.f32 %v7498, %v7649
      %v7651 = vpop.f32.mrb[0].mxu0
      %v7652 = vpop.f32.mrb[0].mxu0
      %v7653 = vadd.f32 %v7501, %v7652
      %v7654 = vpop.f32.mrb[0].mxu0
      %7655 = vmatprep.mubr.bf16.mxu0 %v7599
      %7656 = vmatmul.mubr.bf16.gmra.mrb[0].mxu0 %v7228
      %v7657 = vpop.f32.mrb[0].mxu0
      %v7658 = vadd.f32 %v7506, %v7657
      %v7659 = vpop.f32.mrb[0].mxu0
      %v7660 = vpop.f32.mrb[0].mxu0
      %v7661 = vadd.f32 %v7509, %v7660
      %v7662 = vpop.f32.mrb[0].mxu0
      %7663 = vmatprep.mubr.bf16.mxu0 %v7601
      %7664 = vmatmul.mubr.bf16.gmra.mrb[0].mxu0 %v7230
      %v7665 = vpop.f32.mrb[0].mxu0
      %v7666 = vadd.f32 %v7514, %v7665
      %v7667 = vpop.f32.mrb[0].mxu0
      %v7668 = vpop.f32.mrb[0].mxu0
      %v7669 = vadd.f32 %v7517, %v7668
      %v7670 = vpop.f32.mrb[0].mxu0
      %7671 = vmatprep.mubr.bf16.mxu0 %v7603
      %7672 = vmatmul.mubr.bf16.gmra.mrb[0].mxu0 %v7232
      %v7673 = vpop.f32.mrb[0].mxu0
      %v7674 = vadd.f32 %v7522, %v7673
      %v7675 = vpop.f32.mrb[0].mxu0
      %v7676 = vpop.f32.mrb[0].mxu0
      %v7677 = vadd.f32 %v7525, %v7676
      %v7678 = vpop.f32.mrb[0].mxu0
      %7679 = vmatprep.mubr.bf16.mxu0 %v7605
      %7680 = vmatmul.mubr.bf16.gmra.mrb[0].mxu0 %v7234
      %v7681 = vpop.f32.mrb[0].mxu0
      %v7682 = vadd.f32 %v7530, %v7681
      %v7683 = vpop.f32.mrb[0].mxu0
      %v7684 = vpop.f32.mrb[0].mxu0
      %v7685 = vpop.f32.mrb[0].mxu0
      %7686 = vdwg.mxu0
      %s7687 = scalar_lea.vmem %s11, 160
      %v7688 = vld [vmem:[%s7687] sm:$0xf]
      %v7689 = vld [vmem:[%s7687 + $0x4] sm:$0xf]
      %v7690 = vld [vmem:[%s7687 + $0x8] sm:$0xf]
      %v7691 = vld [vmem:[%s7687 + $0xc] sm:$0xf]
      %v7692 = vld [vmem:[%s7687 + $0x10] sm:$0xf]
      %v7693 = vld [vmem:[%s7687 + $0x14] sm:$0xf]
      %v7694 = vld [vmem:[%s7687 + $0x18] sm:$0xf]
      %v7695 = vld [vmem:[%s7687 + $0x1c] sm:$0xf]
      %v7696 = vld [vmem:[%s7687 + $0x20] sm:$0xf]
      %v7697 = vld [vmem:[%s7687 + $0x24] sm:$0xf]
      %v7698 = vld [vmem:[%s7687 + $0x28] sm:$0xf]
      %v7699 = vld [vmem:[%s7687 + $0x2c] sm:$0xf]
      %v7700 = vld [vmem:[%s7687 + $0x30] sm:$0xf]
      %v7701 = vld [vmem:[%s7687 + $0x34] sm:$0xf]
      %v7702 = vld [vmem:[%s7687 + $0x38] sm:$0xf]
      %v7703 = vld [vmem:[%s7687 + $0x3c] sm:$0xf]
      %v7704 = vld [vmem:[%s7687 + $0x40] sm:$0xf]
      %v7705 = vld [vmem:[%s7687 + $0x44] sm:$0xf]
      %v7706 = vld [vmem:[%s7687 + $0x48] sm:$0xf]
      %v7707 = vld [vmem:[%s7687 + $0x4c] sm:$0xf]
      %v7720 = vrot.slane %v7224, 1
      %v7721 = vrot.slane %v7226, 1
      %v7722 = vsel %vm3691, %v7720, %v7721
      %v7723 = vrot.slane %v7225, 1
      %v7724 = vrot.slane %v7227, 1
      %v7725 = vsel %vm3691, %v7723, %v7724
      %v7726 = vrot.slane %v7228, 1
      %v7727 = vsel %vm3691, %v7721, %v7726
      %v7728 = vrot.slane %v7229, 1
      %v7729 = vsel %vm3691, %v7724, %v7728
      %v7730 = vrot.slane %v7230, 1
      %v7731 = vsel %vm3691, %v7726, %v7730
      %v7732 = vrot.slane %v7231, 1
      %v7733 = vsel %vm3691, %v7728, %v7732
      %v7734 = vrot.slane %v7232, 1
      %v7735 = vsel %vm3691, %v7730, %v7734
      %v7736 = vrot.slane %v7233, 1
      %v7737 = vsel %vm3691, %v7732, %v7736
      %v7738 = vrot.slane %v7234, 1
      %v7739 = vsel %vm3691, %v7734, %v7738
      %v7740 = vrot.slane %v7235, 1
      %v7741 = vsel %vm3691, %v7736, %v7740
      %v7768 = vunpack.c.l.b16 %v7688
      %v7769 = vunpack.c.l.b16 %v7689
      %v7770 = vunpack.c.l.b16 %v7690
      %v7771 = vunpack.c.l.b16 %v7691
      %v7772 = vunpack.c.l.b16 %v7692
      %v7773 = vunpack.c.l.b16 %v7693
      %v7774 = vunpack.c.l.b16 %v7694
      %v7775 = vunpack.c.l.b16 %v7695
      %v7776 = vunpack.c.l.b16 %v7696
      %v7777 = vunpack.c.l.b16 %v7697
      %v7778 = vunpack.c.l.b16 %v7698
      %v7779 = vunpack.c.l.b16 %v7699
      %v7780 = vunpack.c.l.b16 %v7700
      %v7781 = vunpack.c.l.b16 %v7701
      %v7782 = vunpack.c.l.b16 %v7702
      %v7783 = vunpack.c.l.b16 %v7703
      %v7784 = vunpack.c.l.b16 %v7704
      %v7785 = vunpack.c.l.b16 %v7705
      %v7786 = vunpack.c.l.b16 %v7706
      %v7787 = vunpack.c.l.b16 %v7707
      %v7788 = vpack.c.b16 %v7769, %v7768
      %v7789 = vpack.c.b16 %v7771, %v7770
      %v7790 = vpack.c.b16 %v7773, %v7772
      %v7791 = vpack.c.b16 %v7775, %v7774
      %v7792 = vpack.c.b16 %v7777, %v7776
      %v7793 = vpack.c.b16 %v7779, %v7778
      %v7794 = vpack.c.b16 %v7781, %v7780
      %v7795 = vpack.c.b16 %v7783, %v7782
      %v7796 = vpack.c.b16 %v7785, %v7784
      %v7797 = vpack.c.b16 %v7787, %v7786
      %v7809 = vsel %vm5004, %v7725, 0
      %v7812 = vsel %vm5004, %v7729, 0
      %v7815 = vsel %vm5004, %v7733, 0
      %v7818 = vsel %vm5004, %v7737, 0
      %v7821 = vsel %vm5004, %v7741, 0
      %v7824 = vsel %vm5004, %v7740, 0
      %7826 = vmatprep.subr.bf16.mxu0 0
      %7827 = vmatpush1.bf16.msra.mxu0 %v7788
      %7828 = vmatprep.subr.bf16.mxu0 0
      %7829 = vmatpush1.bf16.msra.mxu0 %v7789
      %7830 = vmatprep.subr.bf16.mxu0 0
      %7831 = vmatpush1.bf16.msra.mxu0 %v7790
      %7832 = vmatprep.subr.bf16.mxu0 0
      %7833 = vmatpush1.bf16.msra.mxu0 %v7791
      %7834 = vmatprep.subr.bf16.mxu0 0
      %7835 = vmatpush1.bf16.msra.mxu0 %v7792
      %7836 = vmatprep.subr.bf16.mxu0 0
      %7837 = vmatpush1.bf16.msra.mxu0 %v7793
      %7838 = vmatprep.subr.bf16.mxu0 0
      %7839 = vmatpush1.bf16.msra.mxu0 %v7794
      %7840 = vmatprep.subr.bf16.mxu0 0
      %7841 = vmatpush1.bf16.msra.mxu0 %v7795
      %7842 = vmatprep.subr.bf16.mxu0 0
      %7843 = vmatpush1.bf16.msra.mxu0 %v7796
      %7844 = vmatprep.subr.bf16.mxu0 0
      %7845 = vmatpush1.bf16.msra.mxu0 %v7797
      %7846 = vmatprep.subr.bf16.mxu0 0
      %7847 = vmatpush1.bf16.msra.mxu0 0
      %7848 = vmatprep.subr.bf16.mxu0 0
      %7849 = vmatpush1.bf16.msra.mxu0 0
      %7850 = vmatprep.subr.bf16.mxu0 0
      %7851 = vmatpush1.bf16.msra.mxu0 0
      %7852 = vmatprep.subr.bf16.mxu0 0
      %7853 = vmatpush1.bf16.msra.mxu0 0
      %7854 = vmatprep.subr.bf16.mxu0 0
      %7855 = vmatpush1.bf16.msra.mxu0 0
      %7856 = vmatprep.subr.bf16.mxu0 0
      %7857 = vmatpush1.bf16.msra.mxu0 0
      %7858 = vmatprep.mubr.bf16.mxu0 %v7809
      %7859 = vmatmul.mubr.bf16.gmra.mrb[0].mxu0 %v7722
      %v7860 = vpop.f32.mrb[0].mxu0
      %v7861 = vadd.f32 0.0, %v7860
      %v7862 = vpop.f32.mrb[0].mxu0
      %v7863 = vpop.f32.mrb[0].mxu0
      %v7864 = vadd.f32 0.0, %v7863
      %v7865 = vpop.f32.mrb[0].mxu0
      %7866 = vmatprep.mubr.bf16.mxu0 %v7812
      %7867 = vmatmul.mubr.bf16.gmra.mrb[0].mxu0 %v7727
      %v7868 = vpop.f32.mrb[0].mxu0
      %v7869 = vadd.f32 0.0, %v7868
      %v7870 = vpop.f32.mrb[0].mxu0
      %v7871 = vpop.f32.mrb[0].mxu0
      %v7872 = vadd.f32 0.0, %v7871
      %v7873 = vpop.f32.mrb[0].mxu0
      %7874 = vmatprep.mubr.bf16.mxu0 %v7815
      %7875 = vmatmul.mubr.bf16.gmra.mrb[0].mxu0 %v7731
      %v7876 = vpop.f32.mrb[0].mxu0
      %v7877 = vadd.f32 0.0, %v7876
      %v7878 = vpop.f32.mrb[0].mxu0
      %v7879 = vpop.f32.mrb[0].mxu0
      %v7880 = vadd.f32 0.0, %v7879
      %v7881 = vpop.f32.mrb[0].mxu0
      %7882 = vmatprep.mubr.bf16.mxu0 %v7818
      %7883 = vmatmul.mubr.bf16.gmra.mrb[0].mxu0 %v7735
      %v7884 = vpop.f32.mrb[0].mxu0
      %v7885 = vadd.f32 0.0, %v7884
      %v7886 = vpop.f32.mrb[0].mxu0
      %v7887 = vpop.f32.mrb[0].mxu0
      %v7888 = vadd.f32 0.0, %v7887
      %v7889 = vpop.f32.mrb[0].mxu0
      %7890 = vmatprep.mubr.bf16.mxu0 %v7821
      %7891 = vmatmul.mubr.bf16.gmra.mrb[0].mxu0 %v7739
      %v7892 = vpop.f32.mrb[0].mxu0
      %v7893 = vadd.f32 0.0, %v7892
      %v7894 = vpop.f32.mrb[0].mxu0
      %v7895 = vpop.f32.mrb[0].mxu0
      %v7896 = vadd.f32 0.0, %v7895
      %v7897 = vpop.f32.mrb[0].mxu0
      %7898 = vmatprep.mubr.bf16.mxu0 %v7824
      %7899 = vmatmul.mubr.bf16.gmra.mrb[0].mxu0 %v7738
      %v7900 = vpop.f32.mrb[0].mxu0
      %v7901 = vadd.f32 0.0, %v7900
      %v7902 = vpop.f32.mrb[0].mxu0
      %v7903 = vpop.f32.mrb[0].mxu0
      %v7904 = vpop.f32.mrb[0].mxu0
      %7905 = vdwg.mxu0
      %v7906 = vadd.f32 %v7642, %v7861
      %v7907 = vadd.f32 %v7645, %v7864
      %v7908 = vadd.f32 %v7650, %v7869
      %v7909 = vadd.f32 %v7653, %v7872
      %v7910 = vadd.f32 %v7658, %v7877
      %v7911 = vadd.f32 %v7661, %v7880
      %v7912 = vadd.f32 %v7666, %v7885
      %v7913 = vadd.f32 %v7669, %v7888
      %v7914 = vadd.f32 %v7674, %v7893
      %v7915 = vadd.f32 %v7677, %v7896
      %v7916 = vadd.f32 %v7682, %v7901
      %s7917 = scalar_lea.vmem %s11, 240
      %v7918 = vld [vmem:[%s7917] sm:$0xf]
      %v7919 = vld [vmem:[%s7917 + $0x4] sm:$0xf]
      %v7920 = vld [vmem:[%s7917 + $0x8] sm:$0xf]
      %v7921 = vld [vmem:[%s7917 + $0xc] sm:$0xf]
      %v7922 = vld [vmem:[%s7917 + $0x10] sm:$0xf]
      %v7923 = vld [vmem:[%s7917 + $0x14] sm:$0xf]
      %v7924 = vld [vmem:[%s7917 + $0x18] sm:$0xf]
      %v7925 = vld [vmem:[%s7917 + $0x1c] sm:$0xf]
      %v7926 = vld [vmem:[%s7917 + $0x20] sm:$0xf]
      %v7927 = vld [vmem:[%s7917 + $0x24] sm:$0xf]
      %v7928 = vld [vmem:[%s7917 + $0x28] sm:$0xf]
      %v7929 = vld [vmem:[%s7917 + $0x2c] sm:$0xf]
      %v7930 = vld [vmem:[%s7917 + $0x30] sm:$0xf]
      %v7931 = vld [vmem:[%s7917 + $0x34] sm:$0xf]
      %v7932 = vld [vmem:[%s7917 + $0x38] sm:$0xf]
      %v7933 = vld [vmem:[%s7917 + $0x3c] sm:$0xf]
      %v7934 = vld [vmem:[%s7917 + $0x40] sm:$0xf]
      %v7935 = vld [vmem:[%s7917 + $0x44] sm:$0xf]
      %v7936 = vld [vmem:[%s7917 + $0x48] sm:$0xf]
      %v7937 = vld [vmem:[%s7917 + $0x4c] sm:$0xf]
      %vm7938 = vsmask.f32 6400
      %v7939 = vrot.slane %v7278, 1
      %v7940 = vrot.slane %v7280, 2
      %v7941 = vor.u32 %v7939, %v7940
      %v7942 = vrot.slane %v7301, 1
      %v7943 = vrot.slane %v7285, 2
      %v7944 = vor.u32 %v7942, %v7943
      %v7945 = vsel %vm7938, %v7941, %v7944
      %v7946 = vrot.slane %v7290, 1
      %v7947 = vrot.slane %v7292, 2
      %v7948 = vor.u32 %v7946, %v7947
      %v7949 = vrot.slane %v7309, 1
      %v7950 = vrot.slane %v7297, 2
      %v7951 = vor.u32 %v7949, %v7950
      %v7952 = vsel %vm7938, %v7948, %v7951
      %v7953 = vrot.slane %v7317, 1
      %v7954 = vrot.slane %v7305, 2
      %v7955 = vor.u32 %v7953, %v7954
      %v7956 = vsel %vm7938, %v7944, %v7955
      %v7957 = vrot.slane %v7325, 1
      %v7958 = vrot.slane %v7313, 2
      %v7959 = vor.u32 %v7957, %v7958
      %v7960 = vsel %vm7938, %v7951, %v7959
      %v7961 = vrot.slane %v7333, 1
      %v7962 = vrot.slane %v7321, 2
      %v7963 = vor.u32 %v7961, %v7962
      %v7964 = vsel %vm7938, %v7955, %v7963
      %v7965 = vrot.slane %v7341, 1
      %v7966 = vrot.slane %v7329, 2
      %v7967 = vor.u32 %v7965, %v7966
      %v7968 = vsel %vm7938, %v7959, %v7967
      %v7969 = vrot.slane %v7349, 1
      %v7970 = vrot.slane %v7337, 2
      %v7971 = vor.u32 %v7969, %v7970
      %v7972 = vsel %vm7938, %v7963, %v7971
      %v7973 = vrot.slane %v7357, 1
      %v7974 = vrot.slane %v7345, 2
      %v7975 = vor.u32 %v7973, %v7974
      %v7976 = vsel %vm7938, %v7967, %v7975
      %v7977 = vrot.slane %v7365, 1
      %v7978 = vrot.slane %v7353, 2
      %v7979 = vor.u32 %v7977, %v7978
      %v7980 = vsel %vm7938, %v7971, %v7979
      %v7981 = vrot.slane %v7368, 1
      %v7982 = vrot.slane %v7361, 2
      %v7983 = vor.u32 %v7981, %v7982
      %v7984 = vsel %vm7938, %v7975, %v7983
      %v8011 = vunpack.c.l.b16 %v7918
      %v8012 = vunpack.c.l.b16 %v7919
      %v8013 = vunpack.c.l.b16 %v7920
      %v8014 = vunpack.c.l.b16 %v7921
      %v8015 = vunpack.c.l.b16 %v7922
      %v8016 = vunpack.c.l.b16 %v7923
      %v8017 = vunpack.c.l.b16 %v7924
      %v8018 = vunpack.c.l.b16 %v7925
      %v8019 = vunpack.c.l.b16 %v7926
      %v8020 = vunpack.c.l.b16 %v7927
      %v8021 = vunpack.c.l.b16 %v7928
      %v8022 = vunpack.c.l.b16 %v7929
      %v8023 = vunpack.c.l.b16 %v7930
      %v8024 = vunpack.c.l.b16 %v7931
      %v8025 = vunpack.c.l.b16 %v7932
      %v8026 = vunpack.c.l.b16 %v7933
      %v8027 = vunpack.c.l.b16 %v7934
      %v8028 = vunpack.c.l.b16 %v7935
      %v8029 = vunpack.c.l.b16 %v7936
      %v8030 = vunpack.c.l.b16 %v7937
      %v8031 = vpack.c.b16 %v8012, %v8011
      %v8032 = vpack.c.b16 %v8014, %v8013
      %v8033 = vpack.c.b16 %v8016, %v8015
      %v8034 = vpack.c.b16 %v8018, %v8017
      %v8035 = vpack.c.b16 %v8020, %v8019
      %v8036 = vpack.c.b16 %v8022, %v8021
      %v8037 = vpack.c.b16 %v8024, %v8023
      %v8038 = vpack.c.b16 %v8026, %v8025
      %v8039 = vpack.c.b16 %v8028, %v8027
      %v8040 = vpack.c.b16 %v8030, %v8029
      %v8052 = vsel %vm5004, %v7952, 0
      %v8055 = vsel %vm5004, %v7960, 0
      %v8058 = vsel %vm5004, %v7968, 0
      %v8061 = vsel %vm5004, %v7976, 0
      %v8064 = vsel %vm5004, %v7984, 0
      %v8067 = vsel %vm5004, %v7983, 0
      %8069 = vmatprep.subr.bf16.mxu0 0
      %8070 = vmatpush1.bf16.msra.mxu0 %v8031
      %8071 = vmatprep.subr.bf16.mxu0 0
      %8072 = vmatpush1.bf16.msra.mxu0 %v8032
      %8073 = vmatprep.subr.bf16.mxu0 0
      %8074 = vmatpush1.bf16.msra.mxu0 %v8033
      %8075 = vmatprep.subr.bf16.mxu0 0
      %8076 = vmatpush1.bf16.msra.mxu0 %v8034
      %8077 = vmatprep.subr.bf16.mxu0 0
      %8078 = vmatpush1.bf16.msra.mxu0 %v8035
      %8079 = vmatprep.subr.bf16.mxu0 0
      %8080 = vmatpush1.bf16.msra.mxu0 %v8036
      %8081 = vmatprep.subr.bf16.mxu0 0
      %8082 = vmatpush1.bf16.msra.mxu0 %v8037
      %8083 = vmatprep.subr.bf16.mxu0 0
      %8084 = vmatpush1.bf16.msra.mxu0 %v8038
      %8085 = vmatprep.subr.bf16.mxu0 0
      %8086 = vmatpush1.bf16.msra.mxu0 %v8039
      %8087 = vmatprep.subr.bf16.mxu0 0
      %8088 = vmatpush1.bf16.msra.mxu0 %v8040
      %8089 = vmatprep.subr.bf16.mxu0 0
      %8090 = vmatpush1.bf16.msra.mxu0 0
      %8091 = vmatprep.subr.bf16.mxu0 0
      %8092 = vmatpush1.bf16.msra.mxu0 0
      %8093 = vmatprep.subr.bf16.mxu0 0
      %8094 = vmatpush1.bf16.msra.mxu0 0
      %8095 = vmatprep.subr.bf16.mxu0 0
      %8096 = vmatpush1.bf16.msra.mxu0 0
      %8097 = vmatprep.subr.bf16.mxu0 0
      %8098 = vmatpush1.bf16.msra.mxu0 0
      %8099 = vmatprep.subr.bf16.mxu0 0
      %8100 = vmatpush1.bf16.msra.mxu0 0
      %8101 = vmatprep.mubr.bf16.mxu0 %v8052
      %8102 = vmatmul.mubr.bf16.gmra.mrb[0].mxu0 %v7945
      %v8103 = vpop.f32.mrb[0].mxu0
      %v8104 = vadd.f32 0.0, %v8103
      %v8105 = vpop.f32.mrb[0].mxu0
      %v8106 = vpop.f32.mrb[0].mxu0
      %v8107 = vadd.f32 0.0, %v8106
      %v8108 = vpop.f32.mrb[0].mxu0
      %8109 = vmatprep.mubr.bf16.mxu0 %v8055
      %8110 = vmatmul.mubr.bf16.gmra.mrb[0].mxu0 %v7956
      %v8111 = vpop.f32.mrb[0].mxu0
      %v8112 = vadd.f32 0.0, %v8111
      %v8113 = vpop.f32.mrb[0].mxu0
      %v8114 = vpop.f32.mrb[0].mxu0
      %v8115 = vadd.f32 0.0, %v8114
      %v8116 = vpop.f32.mrb[0].mxu0
      %8117 = vmatprep.mubr.bf16.mxu0 %v8058
      %8118 = vmatmul.mubr.bf16.gmra.mrb[0].mxu0 %v7964
      %v8119 = vpop.f32.mrb[0].mxu0
      %v8120 = vadd.f32 0.0, %v8119
      %v8121 = vpop.f32.mrb[0].mxu0
      %v8122 = vpop.f32.mrb[0].mxu0
      %v8123 = vadd.f32 0.0, %v8122
      %v8124 = vpop.f32.mrb[0].mxu0
      %8125 = vmatprep.mubr.bf16.mxu0 %v8061
      %8126 = vmatmul.mubr.bf16.gmra.mrb[0].mxu0 %v7972
      %v8127 = vpop.f32.mrb[0].mxu0
      %v8128 = vadd.f32 0.0, %v8127
      %v8129 = vpop.f32.mrb[0].mxu0
      %v8130 = vpop.f32.mrb[0].mxu0
      %v8131 = vadd.f32 0.0, %v8130
      %v8132 = vpop.f32.mrb[0].mxu0
      %8133 = vmatprep.mubr.bf16.mxu0 %v8064
      %8134 = vmatmul.mubr.bf16.gmra.mrb[0].mxu0 %v7980
      %v8135 = vpop.f32.mrb[0].mxu0
      %v8136 = vadd.f32 0.0, %v8135
      %v8137 = vpop.f32.mrb[0].mxu0
      %v8138 = vpop.f32.mrb[0].mxu0
      %v8139 = vadd.f32 0.0, %v8138
      %v8140 = vpop.f32.mrb[0].mxu0
      %8141 = vmatprep.mubr.bf16.mxu0 %v8067
      %8142 = vmatmul.mubr.bf16.gmra.mrb[0].mxu0 %v7979
      %v8143 = vpop.f32.mrb[0].mxu0
      %v8144 = vadd.f32 0.0, %v8143
      %v8145 = vpop.f32.mrb[0].mxu0
      %v8146 = vpop.f32.mrb[0].mxu0
      %v8147 = vpop.f32.mrb[0].mxu0
      %8148 = vdwg.mxu0
      %v8149 = vadd.f32 %v7906, %v8104
      %v8150 = vadd.f32 %v7907, %v8107
      %v8151 = vadd.f32 %v7908, %v8112
      %v8152 = vadd.f32 %v7909, %v8115
      %v8153 = vadd.f32 %v7910, %v8120
      %v8154 = vadd.f32 %v7911, %v8123
      %v8155 = vadd.f32 %v7912, %v8128
      %v8156 = vadd.f32 %v7913, %v8131
      %v8157 = vadd.f32 %v7914, %v8136
      %v8158 = vadd.f32 %v7915, %v8139
      %v8159 = vadd.f32 %v7916, %v8144
      %s8160 = scalar_lea.vmem %s11, 320
      %v8161 = vld [vmem:[%s8160] sm:$0xf]
      %v8162 = vld [vmem:[%s8160 + $0x4] sm:$0xf]
      %v8163 = vld [vmem:[%s8160 + $0x8] sm:$0xf]
      %v8164 = vld [vmem:[%s8160 + $0xc] sm:$0xf]
      %v8165 = vld [vmem:[%s8160 + $0x10] sm:$0xf]
      %v8166 = vld [vmem:[%s8160 + $0x14] sm:$0xf]
      %v8167 = vld [vmem:[%s8160 + $0x18] sm:$0xf]
      %v8168 = vld [vmem:[%s8160 + $0x1c] sm:$0xf]
      %v8169 = vld [vmem:[%s8160 + $0x20] sm:$0xf]
      %v8170 = vld [vmem:[%s8160 + $0x24] sm:$0xf]
      %v8171 = vld [vmem:[%s8160 + $0x28] sm:$0xf]
      %v8172 = vld [vmem:[%s8160 + $0x2c] sm:$0xf]
      %v8173 = vld [vmem:[%s8160 + $0x30] sm:$0xf]
      %v8174 = vld [vmem:[%s8160 + $0x34] sm:$0xf]
      %v8175 = vld [vmem:[%s8160 + $0x38] sm:$0xf]
      %v8176 = vld [vmem:[%s8160 + $0x3c] sm:$0xf]
      %v8177 = vld [vmem:[%s8160 + $0x40] sm:$0xf]
      %v8178 = vld [vmem:[%s8160 + $0x44] sm:$0xf]
      %v8179 = vld [vmem:[%s8160 + $0x48] sm:$0xf]
      %v8180 = vld [vmem:[%s8160 + $0x4c] sm:$0xf]
      %vm8181 = vcmask 1045504
      %v8182 = vrot.slane %v7224, 2
      %v8183 = vrot.slane %v7226, 2
      %v8184 = vsel %vm8181, %v8182, %v8183
      %v8185 = vrot.slane %v7225, 2
      %v8186 = vrot.slane %v7227, 2
      %v8187 = vsel %vm8181, %v8185, %v8186
      %v8188 = vrot.slane %v7228, 2
      %v8189 = vsel %vm8181, %v8183, %v8188
      %v8190 = vrot.slane %v7229, 2
      %v8191 = vsel %vm8181, %v8186, %v8190
      %v8192 = vrot.slane %v7230, 2
      %v8193 = vsel %vm8181, %v8188, %v8192
      %v8194 = vrot.slane %v7231, 2
      %v8195 = vsel %vm8181, %v8190, %v8194
      %v8196 = vrot.slane %v7232, 2
      %v8197 = vsel %vm8181, %v8192, %v8196
      %v8198 = vrot.slane %v7233, 2
      %v8199 = vsel %vm8181, %v8194, %v8198
      %v8200 = vrot.slane %v7234, 2
      %v8201 = vsel %vm8181, %v8196, %v8200
      %v8202 = vrot.slane %v7235, 2
      %v8203 = vsel %vm8181, %v8198, %v8202
      %v8230 = vunpack.c.l.b16 %v8161
      %v8231 = vunpack.c.l.b16 %v8162
      %v8232 = vunpack.c.l.b16 %v8163
      %v8233 = vunpack.c.l.b16 %v8164
      %v8234 = vunpack.c.l.b16 %v8165
      %v8235 = vunpack.c.l.b16 %v8166
      %v8236 = vunpack.c.l.b16 %v8167
      %v8237 = vunpack.c.l.b16 %v8168
      %v8238 = vunpack.c.l.b16 %v8169
      %v8239 = vunpack.c.l.b16 %v8170
      %v8240 = vunpack.c.l.b16 %v8171
      %v8241 = vunpack.c.l.b16 %v8172
      %v8242 = vunpack.c.l.b16 %v8173
      %v8243 = vunpack.c.l.b16 %v8174
      %v8244 = vunpack.c.l.b16 %v8175
      %v8245 = vunpack.c.l.b16 %v8176
      %v8246 = vunpack.c.l.b16 %v8177
      %v8247 = vunpack.c.l.b16 %v8178
      %v8248 = vunpack.c.l.b16 %v8179
      %v8249 = vunpack.c.l.b16 %v8180
      %v8250 = vpack.c.b16 %v8231, %v8230
      %v8251 = vpack.c.b16 %v8233, %v8232
      %v8252 = vpack.c.b16 %v8235, %v8234
      %v8253 = vpack.c.b16 %v8237, %v8236
      %v8254 = vpack.c.b16 %v8239, %v8238
      %v8255 = vpack.c.b16 %v8241, %v8240
      %v8256 = vpack.c.b16 %v8243, %v8242
      %v8257 = vpack.c.b16 %v8245, %v8244
      %v8258 = vpack.c.b16 %v8247, %v8246
      %v8259 = vpack.c.b16 %v8249, %v8248
      %v8271 = vsel %vm5004, %v8187, 0
      %v8274 = vsel %vm5004, %v8191, 0
      %v8277 = vsel %vm5004, %v8195, 0
      %v8280 = vsel %vm5004, %v8199, 0
      %v8283 = vsel %vm5004, %v8203, 0
      %v8286 = vsel %vm5004, %v8202, 0
      %8288 = vmatprep.subr.bf16.mxu0 0
      %8289 = vmatpush1.bf16.msra.mxu0 %v8250
      %8290 = vmatprep.subr.bf16.mxu0 0
      %8291 = vmatpush1.bf16.msra.mxu0 %v8251
      %8292 = vmatprep.subr.bf16.mxu0 0
      %8293 = vmatpush1.bf16.msra.mxu0 %v8252
      %8294 = vmatprep.subr.bf16.mxu0 0
      %8295 = vmatpush1.bf16.msra.mxu0 %v8253
      %8296 = vmatprep.subr.bf16.mxu0 0
      %8297 = vmatpush1.bf16.msra.mxu0 %v8254
      %8298 = vmatprep.subr.bf16.mxu0 0
      %8299 = vmatpush1.bf16.msra.mxu0 %v8255
      %8300 = vmatprep.subr.bf16.mxu0 0
      %8301 = vmatpush1.bf16.msra.mxu0 %v8256
      %8302 = vmatprep.subr.bf16.mxu0 0
      %8303 = vmatpush1.bf16.msra.mxu0 %v8257
      %8304 = vmatprep.subr.bf16.mxu0 0
      %8305 = vmatpush1.bf16.msra.mxu0 %v8258
      %8306 = vmatprep.subr.bf16.mxu0 0
      %8307 = vmatpush1.bf16.msra.mxu0 %v8259
      %8308 = vmatprep.subr.bf16.mxu0 0
      %8309 = vmatpush1.bf16.msra.mxu0 0
      %8310 = vmatprep.subr.bf16.mxu0 0
      %8311 = vmatpush1.bf16.msra.mxu0 0
      %8312 = vmatprep.subr.bf16.mxu0 0
      %8313 = vmatpush1.bf16.msra.mxu0 0
      %8314 = vmatprep.subr.bf16.mxu0 0
      %8315 = vmatpush1.bf16.msra.mxu0 0
      %8316 = vmatprep.subr.bf16.mxu0 0
      %8317 = vmatpush1.bf16.msra.mxu0 0
      %8318 = vmatprep.subr.bf16.mxu0 0
      %8319 = vmatpush1.bf16.msra.mxu0 0
      %8320 = vmatprep.mubr.bf16.mxu0 %v8271
      %8321 = vmatmul.mubr.bf16.gmra.mrb[0].mxu0 %v8184
      %v8322 = vpop.f32.mrb[0].mxu0
      %v8323 = vadd.f32 0.0, %v8322
      %v8324 = vpop.f32.mrb[0].mxu0
      %v8325 = vpop.f32.mrb[0].mxu0
      %v8326 = vadd.f32 0.0, %v8325
      %v8327 = vpop.f32.mrb[0].mxu0
      %8328 = vmatprep.mubr.bf16.mxu0 %v8274
      %8329 = vmatmul.mubr.bf16.gmra.mrb[0].mxu0 %v8189
      %v8330 = vpop.f32.mrb[0].mxu0
      %v8331 = vadd.f32 0.0, %v8330
      %v8332 = vpop.f32.mrb[0].mxu0
      %v8333 = vpop.f32.mrb[0].mxu0
      %v8334 = vadd.f32 0.0, %v8333
      %v8335 = vpop.f32.mrb[0].mxu0
      %8336 = vmatprep.mubr.bf16.mxu0 %v8277
      %8337 = vmatmul.mubr.bf16.gmra.mrb[0].mxu0 %v8193
      %v8338 = vpop.f32.mrb[0].mxu0
      %v8339 = vadd.f32 0.0, %v8338
      %v8340 = vpop.f32.mrb[0].mxu0
      %v8341 = vpop.f32.mrb[0].mxu0
      %v8342 = vadd.f32 0.0, %v8341
      %v8343 = vpop.f32.mrb[0].mxu0
      %8344 = vmatprep.mubr.bf16.mxu0 %v8280
      %8345 = vmatmul.mubr.bf16.gmra.mrb[0].mxu0 %v8197
      %v8346 = vpop.f32.mrb[0].mxu0
      %v8347 = vadd.f32 0.0, %v8346
      %v8348 = vpop.f32.mrb[0].mxu0
      %v8349 = vpop.f32.mrb[0].mxu0
      %v8350 = vadd.f32 0.0, %v8349
      %v8351 = vpop.f32.mrb[0].mxu0
      %8352 = vmatprep.mubr.bf16.mxu0 %v8283
      %8353 = vmatmul.mubr.bf16.gmra.mrb[0].mxu0 %v8201
      %v8354 = vpop.f32.mrb[0].mxu0
      %v8355 = vadd.f32 0.0, %v8354
      %v8356 = vpop.f32.mrb[0].mxu0
      %v8357 = vpop.f32.mrb[0].mxu0
      %v8358 = vadd.f32 0.0, %v8357
      %v8359 = vpop.f32.mrb[0].mxu0
      %8360 = vmatprep.mubr.bf16.mxu0 %v8286
      %8361 = vmatmul.mubr.bf16.gmra.mrb[0].mxu0 %v8200
      %v8362 = vpop.f32.mrb[0].mxu0
      %v8363 = vadd.f32 0.0, %v8362
      %v8364 = vpop.f32.mrb[0].mxu0
      %v8365 = vpop.f32.mrb[0].mxu0
      %v8366 = vpop.f32.mrb[0].mxu0
      %8367 = vdwg.mxu0
      %v8368 = vadd.f32 %v8149, %v8323
      %v8369 = vadd.f32 %v8150, %v8326
      %v8370 = vadd.f32 %v8151, %v8331
      %v8371 = vadd.f32 %v8152, %v8334
      %v8372 = vadd.f32 %v8153, %v8339
      %v8373 = vadd.f32 %v8154, %v8342
      %v8374 = vadd.f32 %v8155, %v8347
      %v8375 = vadd.f32 %v8156, %v8350
      %v8376 = vadd.f32 %v8157, %v8355
      %v8377 = vadd.f32 %v8158, %v8358
      %v8378 = vadd.f32 %v8159, %v8363
      %v8379 = vld [vmem:[%s12] sm:$0x1]
      %v8381 = vlaneseq
      %v8382 = vshrl.u32 %v8381, 7
      %v8383 = vsub.s32 0, %v8382
      %v8384 = vrot.slane %v8379, %v8383
      %v8386 = vadd.f32 %v8368, %v8384
      %v8387 = vadd.f32 %v8369, %v8384
      %v8388 = vadd.f32 %v8370, %v8384
      %v8389 = vadd.f32 %v8371, %v8384
      %v8390 = vadd.f32 %v8372, %v8384
      %v8391 = vadd.f32 %v8373, %v8384
      %v8392 = vadd.f32 %v8374, %v8384
      %v8393 = vadd.f32 %v8375, %v8384
      %v8394 = vadd.f32 %v8376, %v8384
      %v8395 = vadd.f32 %v8377, %v8384
      %v8396 = vadd.f32 %v8378, %v8384
      %v8397 = vsel %vm5004, %v8386, 0.0
      %8398 = vadd.xlane.f32.xlu0 %v8397
      %v8399 = vpop.xlane.xlu0 %8398
      %v8400 = vsel %vm5004, %v8387, 0.0
      %8401 = vadd.xlane.f32.xlu0 %v8400
      %v8402 = vpop.xlane.xlu0 %8401
      %v8403 = vsel %vm5004, %v8388, 0.0
      %8404 = vadd.xlane.f32.xlu0 %v8403
      %v8405 = vpop.xlane.xlu0 %8404
      %v8406 = vsel %vm5004, %v8389, 0.0
      %8407 = vadd.xlane.f32.xlu0 %v8406
      %v8408 = vpop.xlane.xlu0 %8407
      %v8409 = vsel %vm5004, %v8390, 0.0
      %8410 = vadd.xlane.f32.xlu0 %v8409
      %v8411 = vpop.xlane.xlu0 %8410
      %v8412 = vsel %vm5004, %v8391, 0.0
      %8413 = vadd.xlane.f32.xlu0 %v8412
      %v8414 = vpop.xlane.xlu0 %8413
      %v8415 = vsel %vm5004, %v8392, 0.0
      %8416 = vadd.xlane.f32.xlu0 %v8415
      %v8417 = vpop.xlane.xlu0 %8416
      %v8418 = vsel %vm5004, %v8393, 0.0
      %8419 = vadd.xlane.f32.xlu0 %v8418
      %v8420 = vpop.xlane.xlu0 %8419
      %v8421 = vsel %vm5004, %v8394, 0.0
      %8422 = vadd.xlane.f32.xlu0 %v8421
      %v8423 = vpop.xlane.xlu0 %8422
      %v8424 = vsel %vm5004, %v8395, 0.0
      %8425 = vadd.xlane.f32.xlu0 %v8424
      %v8426 = vpop.xlane.xlu0 %8425
      %vm8427 = vcmask 258048
      %v8428 = vsel %vm8427, %v8396, 0.0
      %8429 = vadd.xlane.f32.xlu0 %v8428
      %v8430 = vpop.xlane.xlu0 %8429
      %v8431 = vrcp.pop 32.0
      %v8432 = vmul.f32 %v8399, %v8431
      %v8433 = vmul.f32 %v8402, %v8431
      %v8434 = vmul.f32 %v8405, %v8431
      %v8435 = vmul.f32 %v8408, %v8431
      %v8436 = vmul.f32 %v8411, %v8431
      %v8437 = vmul.f32 %v8414, %v8431
      %v8438 = vmul.f32 %v8417, %v8431
      %v8439 = vmul.f32 %v8420, %v8431
      %v8440 = vmul.f32 %v8423, %v8431
      %v8441 = vmul.f32 %v8426, %v8431
      %v8442 = vmul.f32 %v8430, %v8431
      %v8443 = vsub.f32 %v8386, %v8432
      %v8444 = vsub.f32 %v8387, %v8433
      %v8445 = vsub.f32 %v8388, %v8434
      %v8446 = vsub.f32 %v8389, %v8435
      %v8447 = vsub.f32 %v8390, %v8436
      %v8448 = vsub.f32 %v8391, %v8437
      %v8449 = vsub.f32 %v8392, %v8438
      %v8450 = vsub.f32 %v8393, %v8439
      %v8451 = vsub.f32 %v8394, %v8440
      %v8452 = vsub.f32 %v8395, %v8441
      %v8453 = vsub.f32 %v8396, %v8442
      %v8454 = vmul.f32 %v8443, %v8443
      %v8455 = vmul.f32 %v8444, %v8444
      %v8456 = vmul.f32 %v8445, %v8445
      %v8457 = vmul.f32 %v8446, %v8446
      %v8458 = vmul.f32 %v8447, %v8447
      %v8459 = vmul.f32 %v8448, %v8448
      %v8460 = vmul.f32 %v8449, %v8449
      %v8461 = vmul.f32 %v8450, %v8450
      %v8462 = vmul.f32 %v8451, %v8451
      %v8463 = vmul.f32 %v8452, %v8452
      %v8464 = vmul.f32 %v8453, %v8453
      %v8465 = vsel %vm5004, %v8454, 0.0
      %8466 = vadd.xlane.f32.xlu0 %v8465
      %v8467 = vpop.xlane.xlu0 %8466
      %v8468 = vsel %vm5004, %v8455, 0.0
      %8469 = vadd.xlane.f32.xlu0 %v8468
      %v8470 = vpop.xlane.xlu0 %8469
      %v8471 = vsel %vm5004, %v8456, 0.0
      %8472 = vadd.xlane.f32.xlu0 %v8471
      %v8473 = vpop.xlane.xlu0 %8472
      %v8474 = vsel %vm5004, %v8457, 0.0
      %8475 = vadd.xlane.f32.xlu0 %v8474
      %v8476 = vpop.xlane.xlu0 %8475
      %v8477 = vsel %vm5004, %v8458, 0.0
      %8478 = vadd.xlane.f32.xlu0 %v8477
      %v8479 = vpop.xlane.xlu0 %8478
      %v8480 = vsel %vm5004, %v8459, 0.0
      %8481 = vadd.xlane.f32.xlu0 %v8480
      %v8482 = vpop.xlane.xlu0 %8481
      %v8483 = vsel %vm5004, %v8460, 0.0
      %8484 = vadd.xlane.f32.xlu0 %v8483
      %v8485 = vpop.xlane.xlu0 %8484
      %v8486 = vsel %vm5004, %v8461, 0.0
      %8487 = vadd.xlane.f32.xlu0 %v8486
      %v8488 = vpop.xlane.xlu0 %8487
      %v8489 = vsel %vm5004, %v8462, 0.0
      %8490 = vadd.xlane.f32.xlu0 %v8489
      %v8491 = vpop.xlane.xlu0 %8490
      %v8492 = vsel %vm5004, %v8463, 0.0
      %8493 = vadd.xlane.f32.xlu0 %v8492
      %v8494 = vpop.xlane.xlu0 %8493
      %v8495 = vsel %vm8427, %v8464, 0.0
      %8496 = vadd.xlane.f32.xlu0 %v8495
      %v8497 = vpop.xlane.xlu0 %8496
      %v8498 = vmul.f32 %v8467, %v8431
      %v8499 = vmul.f32 %v8470, %v8431
      %v8500 = vmul.f32 %v8473, %v8431
      %v8501 = vmul.f32 %v8476, %v8431
      %v8502 = vmul.f32 %v8479, %v8431
      %v8503 = vmul.f32 %v8482, %v8431
      %v8504 = vmul.f32 %v8485, %v8431
      %v8505 = vmul.f32 %v8488, %v8431
      %v8506 = vmul.f32 %v8491, %v8431
      %v8507 = vmul.f32 %v8494, %v8431
      %v8508 = vmul.f32 %v8497, %v8431
      %v8509 = vadd.f32 %v8498, 1e-05
      %v8510 = vadd.f32 %v8499, 1e-05
      %v8511 = vadd.f32 %v8500, 1e-05
      %v8512 = vadd.f32 %v8501, 1e-05
      %v8513 = vadd.f32 %v8502, 1e-05
      %v8514 = vadd.f32 %v8503, 1e-05
      %v8515 = vadd.f32 %v8504, 1e-05
      %v8516 = vadd.f32 %v8505, 1e-05
      %v8517 = vadd.f32 %v8506, 1e-05
      %v8518 = vadd.f32 %v8507, 1e-05
      %v8519 = vadd.f32 %v8508, 1e-05
      %v8520 = vrsqrt.pop %v8509
      %v8521 = vrsqrt.pop %v8510
      %v8522 = vrsqrt.pop %v8511
      %v8523 = vrsqrt.pop %v8512
      %v8524 = vrsqrt.pop %v8513
      %v8525 = vrsqrt.pop %v8514
      %v8526 = vrsqrt.pop %v8515
      %v8527 = vrsqrt.pop %v8516
      %v8528 = vrsqrt.pop %v8517
      %v8529 = vrsqrt.pop %v8518
      %v8530 = vrsqrt.pop %v8519
      %v8531 = vmul.f32 %v8443, %v8520
      %v8532 = vmul.f32 %v8444, %v8521
      %v8533 = vmul.f32 %v8445, %v8522
      %v8534 = vmul.f32 %v8446, %v8523
      %v8535 = vmul.f32 %v8447, %v8524
      %v8536 = vmul.f32 %v8448, %v8525
      %v8537 = vmul.f32 %v8449, %v8526
      %v8538 = vmul.f32 %v8450, %v8527
      %v8539 = vmul.f32 %v8451, %v8528
      %v8540 = vmul.f32 %v8452, %v8529
      %v8541 = vmul.f32 %v8453, %v8530
      %v8542 = vld [vmem:[%s13] sm:$0x1]
      %v8544 = vlaneseq
      %v8545 = vshrl.u32 %v8544, 7
      %v8546 = vsub.s32 0, %v8545
      %v8547 = vrot.slane %v8542, %v8546
      %v8549 = vmul.f32 %v8531, %v8547
      %v8550 = vmul.f32 %v8532, %v8547
      %v8551 = vmul.f32 %v8533, %v8547
      %v8552 = vmul.f32 %v8534, %v8547
      %v8553 = vmul.f32 %v8535, %v8547
      %v8554 = vmul.f32 %v8536, %v8547
      %v8555 = vmul.f32 %v8537, %v8547
      %v8556 = vmul.f32 %v8538, %v8547
      %v8557 = vmul.f32 %v8539, %v8547
      %v8558 = vmul.f32 %v8540, %v8547
      %v8559 = vmul.f32 %v8541, %v8547
      %v8560 = vld [vmem:[%s14] sm:$0x1]
      %v8562 = vlaneseq
      %v8563 = vshrl.u32 %v8562, 7
      %v8564 = vsub.s32 0, %v8563
      %v8565 = vrot.slane %v8560, %v8564
      %v8567 = vadd.f32 %v8549, %v8565
      %v8568 = vadd.f32 %v8550, %v8565
      %v8569 = vadd.f32 %v8551, %v8565
      %v8570 = vadd.f32 %v8552, %v8565
      %v8571 = vadd.f32 %v8553, %v8565
      %v8572 = vadd.f32 %v8554, %v8565
      %v8573 = vadd.f32 %v8555, %v8565
      %v8574 = vadd.f32 %v8556, %v8565
      %v8575 = vadd.f32 %v8557, %v8565
      %v8576 = vadd.f32 %v8558, %v8565
      %v8577 = vadd.f32 %v8559, %v8565
      %v8578 = vtanh.pop %v8567
      %v8579 = vtanh.pop %v8568
      %v8580 = vtanh.pop %v8569
      %v8581 = vtanh.pop %v8570
      %v8582 = vtanh.pop %v8571
      %v8583 = vtanh.pop %v8572
      %v8584 = vtanh.pop %v8573
      %v8585 = vtanh.pop %v8574
      %v8586 = vtanh.pop %v8575
      %v8587 = vtanh.pop %v8576
      %v8588 = vtanh.pop %v8577
      %v8589 = vld [vmem:[%s718] sm:$0xff]
      %v8590 = vld [vmem:[%s718 + $0x8] sm:$0xff]
      %v8591 = vld [vmem:[%s718 + $0x10] sm:$0xff]
      %v8592 = vld [vmem:[%s718 + $0x18] sm:$0xff]
      %v8593 = vld [vmem:[%s718 + $0x20] sm:$0xff]
      %v8594 = vld [vmem:[%s718 + $0x28] sm:$0xff]
      %v8595 = vld [vmem:[%s718 + $0x30] sm:$0xff]
      %v8596 = vld [vmem:[%s718 + $0x38] sm:$0xff]
      %v8597 = vld [vmem:[%s718 + $0x40] sm:$0xff]
      %v8598 = vld [vmem:[%s718 + $0x48] sm:$0xff]
      %v8599 = vld [vmem:[%s718 + $0x50] sm:$0xff]
      %v8600 = vld [vmem:[%s718 + $0x58] sm:$0xff]
      %v8601 = vpack.c.bf16 %v8590, %v8589
      %v8602 = vpack.c.bf16 %v8592, %v8591
      %v8603 = vpack.c.bf16 %v8594, %v8593
      %v8604 = vpack.c.bf16 %v8596, %v8595
      %v8605 = vpack.c.bf16 %v8598, %v8597
      %v8606 = vpack.c.bf16 %v8600, %v8599
      %v8607 = vpack.c.bf16 %v8579, %v8578
      %v8608 = vpack.c.bf16 %v8581, %v8580
      %v8609 = vpack.c.bf16 %v8583, %v8582
      %v8610 = vpack.c.bf16 %v8585, %v8584
      %v8611 = vpack.c.bf16 %v8587, %v8586
      %v8612 = vpack.c.bf16 %v8588, %v8588
      %v8613 = vld [vmem:[%s15] sm:$0xf]
      %v8614 = vld [vmem:[%s15 + $0x4] sm:$0xf]
      %v8615 = vld [vmem:[%s15 + $0x8] sm:$0xf]
      %v8616 = vld [vmem:[%s15 + $0xc] sm:$0xf]
      %v8617 = vld [vmem:[%s16] sm:$0xf]
      %vm8618 = vcmask 64512
      %v8620 = vsel %vm8618, %v8601, 0
      %v8623 = vsel %vm8618, %v8602, 0
      %v8626 = vsel %vm8618, %v8603, 0
      %v8629 = vsel %vm8618, %v8604, 0
      %v8632 = vsel %vm8618, %v8605, 0
      %v8635 = vsel %vm8618, %v8606, 0
      %v8638 = vsel %vm889, %v8617, 0
      %8640 = vmatprep.subr.bf16.mxu0 0
      %8641 = vmatpush1.bf16.msra.mxu0 %v8638
      %8642 = vmatprep.subr.bf16.mxu0 0
      %8643 = vmatpush1.bf16.msra.mxu0 0
      %8644 = vmatprep.subr.bf16.mxu0 0
      %8645 = vmatpush1.bf16.msra.mxu0 0
      %8646 = vmatprep.subr.bf16.mxu0 0
      %8647 = vmatpush1.bf16.msra.mxu0 0
      %8648 = vmatprep.subr.bf16.mxu0 0
      %8649 = vmatpush1.bf16.msra.mxu0 0
      %8650 = vmatprep.subr.bf16.mxu0 0
      %8651 = vmatpush1.bf16.msra.mxu0 0
      %8652 = vmatprep.subr.bf16.mxu0 0
      %8653 = vmatpush1.bf16.msra.mxu0 0
      %8654 = vmatprep.subr.bf16.mxu0 0
      %8655 = vmatpush1.bf16.msra.mxu0 0
      %8656 = vmatprep.subr.bf16.mxu0 0
      %8657 = vmatpush1.bf16.msra.mxu0 0
      %8658 = vmatprep.subr.bf16.mxu0 0
      %8659 = vmatpush1.bf16.msra.mxu0 0
      %8660 = vmatprep.subr.bf16.mxu0 0
      %8661 = vmatpush1.bf16.msra.mxu0 0
      %8662 = vmatprep.subr.bf16.mxu0 0
      %8663 = vmatpush1.bf16.msra.mxu0 0
      %8664 = vmatprep.subr.bf16.mxu0 0
      %8665 = vmatpush1.bf16.msra.mxu0 0
      %8666 = vmatprep.subr.bf16.mxu0 0
      %8667 = vmatpush1.bf16.msra.mxu0 0
      %8668 = vmatprep.subr.bf16.mxu0 0
      %8669 = vmatpush1.bf16.msra.mxu0 0
      %8670 = vmatprep.subr.bf16.mxu0 0
      %8671 = vmatpush1.bf16.msra.mxu0 0
      %8672 = vmatprep.mubr.bf16.mxu0 0
      %8673 = vmatmul.mubr.bf16.gmra.mrb[0].mxu0 %v8620
      %v8674 = vpop.f32.mrb[0].mxu0
      %v8675 = vadd.f32 0.0, %v8674
      %v8676 = vpop.f32.mrb[0].mxu0
      %v8677 = vpop.f32.mrb[0].mxu0
      %v8678 = vadd.f32 0.0, %v8677
      %v8679 = vpop.f32.mrb[0].mxu0
      %8680 = vmatprep.mubr.bf16.mxu0 0
      %8681 = vmatmul.mubr.bf16.gmra.mrb[0].mxu0 %v8623
      %v8682 = vpop.f32.mrb[0].mxu0
      %v8683 = vadd.f32 0.0, %v8682
      %v8684 = vpop.f32.mrb[0].mxu0
      %v8685 = vpop.f32.mrb[0].mxu0
      %v8686 = vadd.f32 0.0, %v8685
      %v8687 = vpop.f32.mrb[0].mxu0
      %8688 = vmatprep.mubr.bf16.mxu0 0
      %8689 = vmatmul.mubr.bf16.gmra.mrb[0].mxu0 %v8626
      %v8690 = vpop.f32.mrb[0].mxu0
      %v8691 = vadd.f32 0.0, %v8690
      %v8692 = vpop.f32.mrb[0].mxu0
      %v8693 = vpop.f32.mrb[0].mxu0
      %v8694 = vadd.f32 0.0, %v8693
      %v8695 = vpop.f32.mrb[0].mxu0
      %8696 = vmatprep.mubr.bf16.mxu0 0
      %8697 = vmatmul.mubr.bf16.gmra.mrb[0].mxu0 %v8629
      %v8698 = vpop.f32.mrb[0].mxu0
      %v8699 = vadd.f32 0.0, %v8698
      %v8700 = vpop.f32.mrb[0].mxu0
      %v8701 = vpop.f32.mrb[0].mxu0
      %v8702 = vadd.f32 0.0, %v8701
      %v8703 = vpop.f32.mrb[0].mxu0
      %8704 = vmatprep.mubr.bf16.mxu0 0
      %8705 = vmatmul.mubr.bf16.gmra.mrb[0].mxu0 %v8632
      %v8706 = vpop.f32.mrb[0].mxu0
      %v8707 = vadd.f32 0.0, %v8706
      %v8708 = vpop.f32.mrb[0].mxu0
      %v8709 = vpop.f32.mrb[0].mxu0
      %v8710 = vadd.f32 0.0, %v8709
      %v8711 = vpop.f32.mrb[0].mxu0
      %8712 = vmatprep.mubr.bf16.mxu0 0
      %8713 = vmatmul.mubr.bf16.gmra.mrb[0].mxu0 %v8635
      %v8714 = vpop.f32.mrb[0].mxu0
      %v8715 = vadd.f32 0.0, %v8714
      %v8716 = vpop.f32.mrb[0].mxu0
      %v8717 = vpop.f32.mrb[0].mxu0
      %v8718 = vpop.f32.mrb[0].mxu0
      %8719 = vdwg.mxu0
      %v8724 = vunpack.c.l.b16 %v8613
      %v8725 = vunpack.c.l.b16 %v8614
      %v8726 = vunpack.c.l.b16 %v8615
      %v8727 = vunpack.c.l.b16 %v8616
      %v8728 = vpack.c.b16 %v8725, %v8724
      %v8729 = vpack.c.b16 %v8727, %v8726
      %v8733 = vsel %vm5004, %v8607, 0
      %v8736 = vsel %vm5004, %v8608, 0
      %v8739 = vsel %vm5004, %v8609, 0
      %v8742 = vsel %vm5004, %v8610, 0
      %v8745 = vsel %vm5004, %v8611, 0
      %v8748 = vsel %vm5004, %v8612, 0
      %8750 = vmatprep.subr.bf16.mxu0 0
      %8751 = vmatpush1.bf16.msra.mxu0 %v8728
      %8752 = vmatprep.subr.bf16.mxu0 0
      %8753 = vmatpush1.bf16.msra.mxu0 %v8729
      %8754 = vmatprep.subr.bf16.mxu0 0
      %8755 = vmatpush1.bf16.msra.mxu0 0
      %8756 = vmatprep.subr.bf16.mxu0 0
      %8757 = vmatpush1.bf16.msra.mxu0 0
      %8758 = vmatprep.subr.bf16.mxu0 0
      %8759 = vmatpush1.bf16.msra.mxu0 0
      %8760 = vmatprep.subr.bf16.mxu0 0
      %8761 = vmatpush1.bf16.msra.mxu0 0
      %8762 = vmatprep.subr.bf16.mxu0 0
      %8763 = vmatpush1.bf16.msra.mxu0 0
      %8764 = vmatprep.subr.bf16.mxu0 0
      %8765 = vmatpush1.bf16.msra.mxu0 0
      %8766 = vmatprep.subr.bf16.mxu0 0
      %8767 = vmatpush1.bf16.msra.mxu0 0
      %8768 = vmatprep.subr.bf16.mxu0 0
      %8769 = vmatpush1.bf16.msra.mxu0 0
      %8770 = vmatprep.subr.bf16.mxu0 0
      %8771 = vmatpush1.bf16.msra.mxu0 0
      %8772 = vmatprep.subr.bf16.mxu0 0
      %8773 = vmatpush1.bf16.msra.mxu0 0
      %8774 = vmatprep.subr.bf16.mxu0 0
      %8775 = vmatpush1.bf16.msra.mxu0 0
      %8776 = vmatprep.subr.bf16.mxu0 0
      %8777 = vmatpush1.bf16.msra.mxu0 0
      %8778 = vmatprep.subr.bf16.mxu0 0
      %8779 = vmatpush1.bf16.msra.mxu0 0
      %8780 = vmatprep.subr.bf16.mxu0 0
      %8781 = vmatpush1.bf16.msra.mxu0 0
      %8782 = vmatprep.mubr.bf16.mxu0 0
      %8783 = vmatmul.mubr.bf16.gmra.mrb[0].mxu0 %v8733
      %v8784 = vpop.f32.mrb[0].mxu0
      %v8785 = vadd.f32 %v8675, %v8784
      %v8786 = vpop.f32.mrb[0].mxu0
      %v8787 = vpop.f32.mrb[0].mxu0
      %v8788 = vadd.f32 %v8678, %v8787
      %v8789 = vpop.f32.mrb[0].mxu0
      %8790 = vmatprep.mubr.bf16.mxu0 0
      %8791 = vmatmul.mubr.bf16.gmra.mrb[0].mxu0 %v8736
      %v8792 = vpop.f32.mrb[0].mxu0
      %v8793 = vadd.f32 %v8683, %v8792
      %v8794 = vpop.f32.mrb[0].mxu0
      %v8795 = vpop.f32.mrb[0].mxu0
      %v8796 = vadd.f32 %v8686, %v8795
      %v8797 = vpop.f32.mrb[0].mxu0
      %8798 = vmatprep.mubr.bf16.mxu0 0
      %8799 = vmatmul.mubr.bf16.gmra.mrb[0].mxu0 %v8739
      %v8800 = vpop.f32.mrb[0].mxu0
      %v8801 = vadd.f32 %v8691, %v8800
      %v8802 = vpop.f32.mrb[0].mxu0
      %v8803 = vpop.f32.mrb[0].mxu0
      %v8804 = vadd.f32 %v8694, %v8803
      %v8805 = vpop.f32.mrb[0].mxu0
      %8806 = vmatprep.mubr.bf16.mxu0 0
      %8807 = vmatmul.mubr.bf16.gmra.mrb[0].mxu0 %v8742
      %v8808 = vpop.f32.mrb[0].mxu0
      %v8809 = vadd.f32 %v8699, %v8808
      %v8810 = vpop.f32.mrb[0].mxu0
      %v8811 = vpop.f32.mrb[0].mxu0
      %v8812 = vadd.f32 %v8702, %v8811
      %v8813 = vpop.f32.mrb[0].mxu0
      %8814 = vmatprep.mubr.bf16.mxu0 0
      %8815 = vmatmul.mubr.bf16.gmra.mrb[0].mxu0 %v8745
      %v8816 = vpop.f32.mrb[0].mxu0
      %v8817 = vadd.f32 %v8707, %v8816
      %v8818 = vpop.f32.mrb[0].mxu0
      %v8819 = vpop.f32.mrb[0].mxu0
      %v8820 = vadd.f32 %v8710, %v8819
      %v8821 = vpop.f32.mrb[0].mxu0
      %8822 = vmatprep.mubr.bf16.mxu0 0
      %8823 = vmatmul.mubr.bf16.gmra.mrb[0].mxu0 %v8748
      %v8824 = vpop.f32.mrb[0].mxu0
      %v8825 = vadd.f32 %v8715, %v8824
      %v8826 = vpop.f32.mrb[0].mxu0
      %v8827 = vpop.f32.mrb[0].mxu0
      %v8828 = vpop.f32.mrb[0].mxu0
      %8829 = vdwg.mxu0
      %v8830 = vld [vmem:[%s17] sm:$0x1]
      %v8832 = vlaneseq
      %v8833 = vshrl.u32 %v8832, 7
      %v8834 = vsub.s32 0, %v8833
      %v8835 = vrot.slane %v8830, %v8834
      %v8837 = vadd.f32 %v8785, %v8835
      %v8838 = vadd.f32 %v8788, %v8835
      %v8839 = vadd.f32 %v8793, %v8835
      %v8840 = vadd.f32 %v8796, %v8835
      %v8841 = vadd.f32 %v8801, %v8835
      %v8842 = vadd.f32 %v8804, %v8835
      %v8843 = vadd.f32 %v8809, %v8835
      %v8844 = vadd.f32 %v8812, %v8835
      %v8845 = vadd.f32 %v8817, %v8835
      %v8846 = vadd.f32 %v8820, %v8835
      %v8847 = vadd.f32 %v8825, %v8835
      %v8848 = vmax.f32 %v8837, 0.0
      %v8849 = vmax.f32 %v8838, 0.0
      %v8850 = vmax.f32 %v8839, 0.0
      %v8851 = vmax.f32 %v8840, 0.0
      %v8852 = vmax.f32 %v8841, 0.0
      %v8853 = vmax.f32 %v8842, 0.0
      %v8854 = vmax.f32 %v8843, 0.0
      %v8855 = vmax.f32 %v8844, 0.0
      %v8856 = vmax.f32 %v8845, 0.0
      %v8857 = vmax.f32 %v8846, 0.0
      %v8858 = vmax.f32 %v8847, 0.0
      %v8859 = vpack.c.bf16 %v8849, %v8848
      %v8860 = vpack.c.bf16 %v8851, %v8850
      %v8861 = vpack.c.bf16 %v8853, %v8852
      %v8862 = vpack.c.bf16 %v8855, %v8854
      %v8863 = vpack.c.bf16 %v8857, %v8856
      %v8864 = vpack.c.bf16 %v8858, %v8858
      %v8865 = vld [vmem:[%s18] sm:$0xf]
      %v8866 = vld [vmem:[%s18 + $0x4] sm:$0xf]
      %v8867 = vld [vmem:[%s18 + $0x8] sm:$0xf]
      %v8868 = vld [vmem:[%s18 + $0xc] sm:$0xf]
      %v8869 = vld [vmem:[%s18 + $0x10] sm:$0xf]
      %v8870 = vld [vmem:[%s18 + $0x14] sm:$0xf]
      %v8871 = vld [vmem:[%s18 + $0x18] sm:$0xf]
      %v8872 = vld [vmem:[%s18 + $0x1c] sm:$0xf]
      %v8873 = vld [vmem:[%s18 + $0x20] sm:$0xf]
      %v8874 = vld [vmem:[%s18 + $0x24] sm:$0xf]
      %v8875 = vld [vmem:[%s18 + $0x28] sm:$0xf]
      %v8876 = vld [vmem:[%s18 + $0x2c] sm:$0xf]
      %v8877 = vld [vmem:[%s18 + $0x30] sm:$0xf]
      %v8878 = vld [vmem:[%s18 + $0x34] sm:$0xf]
      %v8879 = vld [vmem:[%s18 + $0x38] sm:$0xf]
      %v8880 = vld [vmem:[%s18 + $0x3c] sm:$0xf]
      %v8881 = vld [vmem:[%s19] sm:$0x1]
      %v8883 = vlaneseq
      %v8884 = vshrl.u32 %v8883, 7
      %v8885 = vsub.s32 0, %v8884
      %v8886 = vrot.slane %v8881, %v8885
      %v8904 = vunpack.c.l.b16 %v8865
      %v8905 = vunpack.c.l.b16 %v8866
      %v8906 = vunpack.c.l.b16 %v8867
      %v8907 = vunpack.c.l.b16 %v8868
      %v8908 = vunpack.c.l.b16 %v8869
      %v8909 = vunpack.c.l.b16 %v8870
      %v8910 = vunpack.c.l.b16 %v8871
      %v8911 = vunpack.c.l.b16 %v8872
      %v8912 = vunpack.c.l.b16 %v8873
      %v8913 = vunpack.c.l.b16 %v8874
      %v8914 = vunpack.c.l.b16 %v8875
      %v8915 = vunpack.c.l.b16 %v8876
      %v8916 = vunpack.c.l.b16 %v8877
      %v8917 = vunpack.c.l.b16 %v8878
      %v8918 = vunpack.c.l.b16 %v8879
      %v8919 = vunpack.c.l.b16 %v8880
      %v8920 = vpack.c.b16 %v8905, %v8904
      %v8921 = vpack.c.b16 %v8907, %v8906
      %v8922 = vpack.c.b16 %v8909, %v8908
      %v8923 = vpack.c.b16 %v8911, %v8910
      %v8924 = vpack.c.b16 %v8913, %v8912
      %v8925 = vpack.c.b16 %v8915, %v8914
      %v8926 = vpack.c.b16 %v8917, %v8916
      %v8927 = vpack.c.b16 %v8919, %v8918
      %8936 = vmatprep.subr.bf16.mxu0 0
      %8937 = vmatpush1.bf16.msra.mxu0 %v8920
      %8938 = vmatprep.subr.bf16.mxu0 0
      %8939 = vmatpush1.bf16.msra.mxu0 %v8921
      %8940 = vmatprep.subr.bf16.mxu0 0
      %8941 = vmatpush1.bf16.msra.mxu0 %v8922
      %8942 = vmatprep.subr.bf16.mxu0 0
      %8943 = vmatpush1.bf16.msra.mxu0 %v8923
      %8944 = vmatprep.subr.bf16.mxu0 0
      %8945 = vmatpush1.bf16.msra.mxu0 %v8924
      %8946 = vmatprep.subr.bf16.mxu0 0
      %8947 = vmatpush1.bf16.msra.mxu0 %v8925
      %8948 = vmatprep.subr.bf16.mxu0 0
      %8949 = vmatpush1.bf16.msra.mxu0 %v8926
      %8950 = vmatprep.subr.bf16.mxu0 0
      %8951 = vmatpush1.bf16.msra.mxu0 %v8927
      %8952 = vmatprep.subr.bf16.mxu0 0
      %8953 = vmatpush1.bf16.msra.mxu0 0
      %8954 = vmatprep.subr.bf16.mxu0 0
      %8955 = vmatpush1.bf16.msra.mxu0 0
      %8956 = vmatprep.subr.bf16.mxu0 0
      %8957 = vmatpush1.bf16.msra.mxu0 0
      %8958 = vmatprep.subr.bf16.mxu0 0
      %8959 = vmatpush1.bf16.msra.mxu0 0
      %8960 = vmatprep.subr.bf16.mxu0 0
      %8961 = vmatpush1.bf16.msra.mxu0 0
      %8962 = vmatprep.subr.bf16.mxu0 0
      %8963 = vmatpush1.bf16.msra.mxu0 0
      %8964 = vmatprep.subr.bf16.mxu0 0
      %8965 = vmatpush1.bf16.msra.mxu0 0
      %8966 = vmatprep.subr.bf16.mxu0 0
      %8967 = vmatpush1.bf16.msra.mxu0 0
      %8968 = vmatprep.mubr.bf16.mxu0 0
      %8969 = vmatmul.mubr.bf16.gmra.mrb[0].mxu0 %v8859
      %v8970 = vpop.f32.mrb[0].mxu0
      %v8971 = vadd.f32 %v8886, %v8970
      %v8972 = vpop.f32.mrb[0].mxu0
      %v8973 = vpop.f32.mrb[0].mxu0
      %v8974 = vadd.f32 %v8886, %v8973
      %v8975 = vpop.f32.mrb[0].mxu0
      %8976 = vmatprep.mubr.bf16.mxu0 0
      %8977 = vmatmul.mubr.bf16.gmra.mrb[0].mxu0 %v8860
      %v8978 = vpop.f32.mrb[0].mxu0
      %v8979 = vadd.f32 %v8886, %v8978
      %v8980 = vpop.f32.mrb[0].mxu0
      %v8981 = vpop.f32.mrb[0].mxu0
      %v8982 = vadd.f32 %v8886, %v8981
      %v8983 = vpop.f32.mrb[0].mxu0
      %8984 = vmatprep.mubr.bf16.mxu0 0
      %8985 = vmatmul.mubr.bf16.gmra.mrb[0].mxu0 %v8861
      %v8986 = vpop.f32.mrb[0].mxu0
      %v8987 = vadd.f32 %v8886, %v8986
      %v8988 = vpop.f32.mrb[0].mxu0
      %v8989 = vpop.f32.mrb[0].mxu0
      %v8990 = vadd.f32 %v8886, %v8989
      %v8991 = vpop.f32.mrb[0].mxu0
      %8992 = vmatprep.mubr.bf16.mxu0 0
      %8993 = vmatmul.mubr.bf16.gmra.mrb[0].mxu0 %v8862
      %v8994 = vpop.f32.mrb[0].mxu0
      %v8995 = vadd.f32 %v8886, %v8994
      %v8996 = vpop.f32.mrb[0].mxu0
      %v8997 = vpop.f32.mrb[0].mxu0
      %v8998 = vadd.f32 %v8886, %v8997
      %v8999 = vpop.f32.mrb[0].mxu0
      %9000 = vmatprep.mubr.bf16.mxu0 0
      %9001 = vmatmul.mubr.bf16.gmra.mrb[0].mxu0 %v8863
      %v9002 = vpop.f32.mrb[0].mxu0
      %v9003 = vadd.f32 %v8886, %v9002
      %v9004 = vpop.f32.mrb[0].mxu0
      %v9005 = vpop.f32.mrb[0].mxu0
      %v9006 = vadd.f32 %v8886, %v9005
      %v9007 = vpop.f32.mrb[0].mxu0
      %9008 = vmatprep.mubr.bf16.mxu0 0
      %9009 = vmatmul.mubr.bf16.gmra.mrb[0].mxu0 %v8864
      %v9010 = vpop.f32.mrb[0].mxu0
      %v9011 = vadd.f32 %v8886, %v9010
      %v9012 = vpop.f32.mrb[0].mxu0
      %v9013 = vpop.f32.mrb[0].mxu0
      %v9014 = vpop.f32.mrb[0].mxu0
      %9015 = vdwg.mxu0
      %v9016 = vmax.f32 %v8971, 0.0
      %v9017 = vmax.f32 %v8974, 0.0
      %v9018 = vmax.f32 %v8979, 0.0
      %v9019 = vmax.f32 %v8982, 0.0
      %v9020 = vmax.f32 %v8987, 0.0
      %v9021 = vmax.f32 %v8990, 0.0
      %v9022 = vmax.f32 %v8995, 0.0
      %v9023 = vmax.f32 %v8998, 0.0
      %v9024 = vmax.f32 %v9003, 0.0
      %v9025 = vmax.f32 %v9006, 0.0
      %v9026 = vmax.f32 %v9011, 0.0
      %v9027 = vpack.c.bf16 %v9017, %v9016
      %v9028 = vpack.c.bf16 %v9019, %v9018
      %v9029 = vpack.c.bf16 %v9021, %v9020
      %v9030 = vpack.c.bf16 %v9023, %v9022
      %v9031 = vpack.c.bf16 %v9025, %v9024
      %v9032 = vpack.c.bf16 %v9026, %v9026
      %v9033 = vld [vmem:[%s20] sm:$0xf]
      %v9034 = vld [vmem:[%s20 + $0x4] sm:$0xf]
      %v9035 = vld [vmem:[%s20 + $0x8] sm:$0xf]
      %v9036 = vld [vmem:[%s20 + $0xc] sm:$0xf]
      %v9037 = vld [vmem:[%s20 + $0x10] sm:$0xf]
      %v9038 = vld [vmem:[%s20 + $0x14] sm:$0xf]
      %v9039 = vld [vmem:[%s20 + $0x18] sm:$0xf]
      %v9040 = vld [vmem:[%s20 + $0x1c] sm:$0xf]
      %v9041 = vld [vmem:[%s20 + $0x20] sm:$0xf]
      %v9042 = vld [vmem:[%s20 + $0x24] sm:$0xf]
      %v9043 = vld [vmem:[%s20 + $0x28] sm:$0xf]
      %v9044 = vld [vmem:[%s20 + $0x2c] sm:$0xf]
      %v9045 = vld [vmem:[%s20 + $0x30] sm:$0xf]
      %v9046 = vld [vmem:[%s20 + $0x34] sm:$0xf]
      %v9047 = vld [vmem:[%s20 + $0x38] sm:$0xf]
      %v9048 = vld [vmem:[%s20 + $0x3c] sm:$0xf]
      %v9049 = vld [vmem:[%s21] sm:$0x1]
      %v9051 = vlaneseq
      %v9052 = vshrl.u32 %v9051, 7
      %v9053 = vsub.s32 0, %v9052
      %v9054 = vrot.slane %v9049, %v9053
      %v9072 = vunpack.c.l.b16 %v9033
      %v9073 = vunpack.c.l.b16 %v9034
      %v9074 = vunpack.c.l.b16 %v9035
      %v9075 = vunpack.c.l.b16 %v9036
      %v9076 = vunpack.c.l.b16 %v9037
      %v9077 = vunpack.c.l.b16 %v9038
      %v9078 = vunpack.c.l.b16 %v9039
      %v9079 = vunpack.c.l.b16 %v9040
      %v9080 = vunpack.c.l.b16 %v9041
      %v9081 = vunpack.c.l.b16 %v9042
      %v9082 = vunpack.c.l.b16 %v9043
      %v9083 = vunpack.c.l.b16 %v9044
      %v9084 = vunpack.c.l.b16 %v9045
      %v9085 = vunpack.c.l.b16 %v9046
      %v9086 = vunpack.c.l.b16 %v9047
      %v9087 = vunpack.c.l.b16 %v9048
      %v9088 = vpack.c.b16 %v9073, %v9072
      %v9089 = vpack.c.b16 %v9075, %v9074
      %v9090 = vpack.c.b16 %v9077, %v9076
      %v9091 = vpack.c.b16 %v9079, %v9078
      %v9092 = vpack.c.b16 %v9081, %v9080
      %v9093 = vpack.c.b16 %v9083, %v9082
      %v9094 = vpack.c.b16 %v9085, %v9084
      %v9095 = vpack.c.b16 %v9087, %v9086
      %9104 = vmatprep.subr.bf16.mxu0 0
      %9105 = vmatpush1.bf16.msra.mxu0 %v9088
      %9106 = vmatprep.subr.bf16.mxu0 0
      %9107 = vmatpush1.bf16.msra.mxu0 %v9089
      %9108 = vmatprep.subr.bf16.mxu0 0
      %9109 = vmatpush1.bf16.msra.mxu0 %v9090
      %9110 = vmatprep.subr.bf16.mxu0 0
      %9111 = vmatpush1.bf16.msra.mxu0 %v9091
      %9112 = vmatprep.subr.bf16.mxu0 0
      %9113 = vmatpush1.bf16.msra.mxu0 %v9092
      %9114 = vmatprep.subr.bf16.mxu0 0
      %9115 = vmatpush1.bf16.msra.mxu0 %v9093
      %9116 = vmatprep.subr.bf16.mxu0 0
      %9117 = vmatpush1.bf16.msra.mxu0 %v9094
      %9118 = vmatprep.subr.bf16.mxu0 0
      %9119 = vmatpush1.bf16.msra.mxu0 %v9095
      %9120 = vmatprep.subr.bf16.mxu0 0
      %9121 = vmatpush1.bf16.msra.mxu0 0
      %9122 = vmatprep.subr.bf16.mxu0 0
      %9123 = vmatpush1.bf16.msra.mxu0 0
      %9124 = vmatprep.subr.bf16.mxu0 0
      %9125 = vmatpush1.bf16.msra.mxu0 0
      %9126 = vmatprep.subr.bf16.mxu0 0
      %9127 = vmatpush1.bf16.msra.mxu0 0
      %9128 = vmatprep.subr.bf16.mxu0 0
      %9129 = vmatpush1.bf16.msra.mxu0 0
      %9130 = vmatprep.subr.bf16.mxu0 0
      %9131 = vmatpush1.bf16.msra.mxu0 0
      %9132 = vmatprep.subr.bf16.mxu0 0
      %9133 = vmatpush1.bf16.msra.mxu0 0
      %9134 = vmatprep.subr.bf16.mxu0 0
      %9135 = vmatpush1.bf16.msra.mxu0 0
      %9136 = vmatprep.mubr.bf16.mxu0 0
      %9137 = vmatmul.mubr.bf16.gmra.mrb[0].mxu0 %v9027
      %v9138 = vpop.f32.mrb[0].mxu0
      %v9139 = vadd.f32 %v9054, %v9138
      %v9140 = vpop.f32.mrb[0].mxu0
      %v9141 = vpop.f32.mrb[0].mxu0
      %v9142 = vadd.f32 %v9054, %v9141
      %v9143 = vpop.f32.mrb[0].mxu0
      %9144 = vmatprep.mubr.bf16.mxu0 0
      %9145 = vmatmul.mubr.bf16.gmra.mrb[0].mxu0 %v9028
      %v9146 = vpop.f32.mrb[0].mxu0
      %v9147 = vadd.f32 %v9054, %v9146
      %v9148 = vpop.f32.mrb[0].mxu0
      %v9149 = vpop.f32.mrb[0].mxu0
      %v9150 = vadd.f32 %v9054, %v9149
      %v9151 = vpop.f32.mrb[0].mxu0
      %9152 = vmatprep.mubr.bf16.mxu0 0
      %9153 = vmatmul.mubr.bf16.gmra.mrb[0].mxu0 %v9029
      %v9154 = vpop.f32.mrb[0].mxu0
      %v9155 = vadd.f32 %v9054, %v9154
      %v9156 = vpop.f32.mrb[0].mxu0
      %v9157 = vpop.f32.mrb[0].mxu0
      %v9158 = vadd.f32 %v9054, %v9157
      %v9159 = vpop.f32.mrb[0].mxu0
      %9160 = vmatprep.mubr.bf16.mxu0 0
      %9161 = vmatmul.mubr.bf16.gmra.mrb[0].mxu0 %v9030
      %v9162 = vpop.f32.mrb[0].mxu0
      %v9163 = vadd.f32 %v9054, %v9162
      %v9164 = vpop.f32.mrb[0].mxu0
      %v9165 = vpop.f32.mrb[0].mxu0
      %v9166 = vadd.f32 %v9054, %v9165
      %v9167 = vpop.f32.mrb[0].mxu0
      %9168 = vmatprep.mubr.bf16.mxu0 0
      %9169 = vmatmul.mubr.bf16.gmra.mrb[0].mxu0 %v9031
      %v9170 = vpop.f32.mrb[0].mxu0
      %v9171 = vadd.f32 %v9054, %v9170
      %v9172 = vpop.f32.mrb[0].mxu0
      %v9173 = vpop.f32.mrb[0].mxu0
      %v9174 = vadd.f32 %v9054, %v9173
      %v9175 = vpop.f32.mrb[0].mxu0
      %9176 = vmatprep.mubr.bf16.mxu0 0
      %9177 = vmatmul.mubr.bf16.gmra.mrb[0].mxu0 %v9032
      %v9178 = vpop.f32.mrb[0].mxu0
      %v9179 = vadd.f32 %v9054, %v9178
      %v9180 = vpop.f32.mrb[0].mxu0
      %v9181 = vpop.f32.mrb[0].mxu0
      %v9182 = vpop.f32.mrb[0].mxu0
      %9183 = vdwg.mxu0
      %vm9184 = vcmask 15360
      %9185 = vst.msk [vmem:[%s723] sm:$0xff] %vm9184, %v9139
      %9186 = vst.msk [vmem:[%s723 + $0x8] sm:$0xff] %vm9184, %v9142
      %9187 = vst.msk [vmem:[%s723 + $0x10] sm:$0xff] %vm9184, %v9147
      %9188 = vst.msk [vmem:[%s723 + $0x18] sm:$0xff] %vm9184, %v9150
      %9189 = vst.msk [vmem:[%s723 + $0x20] sm:$0xff] %vm9184, %v9155
      %9190 = vst.msk [vmem:[%s723 + $0x28] sm:$0xff] %vm9184, %v9158
      %9191 = vst.msk [vmem:[%s723 + $0x30] sm:$0xff] %vm9184, %v9163
      %9192 = vst.msk [vmem:[%s723 + $0x38] sm:$0xff] %vm9184, %v9166
      %9193 = vst.msk [vmem:[%s723 + $0x40] sm:$0xff] %vm9184, %v9171
      %9194 = vst.msk [vmem:[%s723 + $0x48] sm:$0xff] %vm9184, %v9174
      %vm9195 = vcmask 12288
      %9196 = vst.msk [vmem:[%s723 + $0x50] sm:$0x1f] %vm9195, %v9179
      %p9197 = scmp.lt.s32.totalorder %s33, 1
      %s9198 = scalar_select %p9197, %s33, 1
      %s9199 = smul.addr %s9198, 11
      %s9200 = smul.addr %s9199, 8
      %s9201 = scalar_lea.vmem %s22, %s9200
      // Predicated region
      $region109: #{_lambda_.1} parent=107 // pred_check
        %p9202 = pneg %p528
      $region110: #{_lambda_.1} parent=107 // pred_check_branch
        %9204 = sbr.rel (%p9202) target = $region112
      $region111: #{_lambda_.1} parent=107 // pred_region
        _
      $region112: #{_lambda_.1} parent=107 // pred_fallthru
        _
    $region108: #{_lambda_.1} parent=5 // pred_fallthru
      _
    %p9205 = scmp.le.s32.totalorder 2, %s28
    // Predicated region
    $region113: #{_lambda_.1} parent=5 // pred_check
      %p9206 = pneg %p9205
    $region114: #{_lambda_.1} parent=5 // pred_check_branch
      %9208 = sbr.rel (%p9206) target = $region116
    $region115: #{_lambda_.1} parent=5 // pred_region
      %s9209 = ssub.s32 %s28, 2
      // Predicated region
      $region117: #{_lambda_.1} parent=115 // pred_check
        %p9210 = pneg %p534
      $region118: #{_lambda_.1} parent=115 // pred_check_branch
        %9212 = sbr.rel (%p9210) target = $region120
      $region119: #{_lambda_.1} parent=115 // pred_region
        %p9213 = scmp.lt.s32.totalorder %s34, 1
        %s9214 = scalar_select %p9213, %s34, 1
        %s9215 = smul.addr %s9214, 11
        %s9216 = smul.addr %s9215, 8
        %s9217 = scalar_lea.vmem %s22, %s9216
      $region120: #{_lambda_.1} parent=115 // pred_fallthru
        _
    $region116: #{_lambda_.1} parent=5 // pred_fallthru
      _
  $region6: #{_lambda_.1} parent=0 // loop_footer
    %s32 = sadd.s32 1, %s28
  $region7: #{_lambda_.1} parent=0 // loop_footer_branch
    %27 = sbr.rel target = $region3
  $region8: #{_lambda_.1} parent=0 // loop_exit
    _

</llo_original>
